<compile_context>
chip_gen: v7x
topology: tpu7x:2x2x1
jax: 0.10.0
libtpu: 0.0.40
codegen_flags: <defaults>
</compile_context>

<pallas_src>
import functools

import jax
import jax.numpy as jnp
from jax.experimental import pallas as pl
from jax.experimental.pallas import tpu as pltpu

_K = 5                      # conv kernel size
_MAX_TILE_M = 512           # M-tile (patch rows) per grid step
_ENC_SPECS = [(3, 8), (8, 16), (16, 32), (32, 64)]   # Conv2d(cin, cout, 5, 1, 2)
_DEC_SPECS = [(64, 32), (32, 16), (16, 8), (8, 3)]   # ConvTranspose2d(cin, cout, 5, 2, 2, 1)


# ----------------------------------------------------------------------------
# Pallas kernels
# ----------------------------------------------------------------------------
def _conv_relu_pool_kernel(pa_ref, pb_ref, pc_ref, pd_ref, w_ref, b_ref, o_ref):
    """Fused conv(as matmul) + bias + ReLU + 2x2 max-pool.

    pa..pd hold the im2col patch rows of the four positions inside each 2x2
    pooling window; the weight tile is loaded once and reused for all four MXU
    matmuls, the max-reduction happens in VMEM and only the pooled tile is
    stored.
    """
    w = w_ref[...]            # (K, Cout) bf16, pinned across the M grid
    b = b_ref[...]            # (1, Cout) f32

    def corner(p_ref):
        acc = jnp.dot(p_ref[...], w, preferred_element_type=jnp.float32)
        return jnp.maximum(acc + b, 0.0)

    pooled = jnp.maximum(jnp.maximum(corner(pa_ref), corner(pb_ref)),
                         jnp.maximum(corner(pc_ref), corner(pd_ref)))
    o_ref[...] = pooled.astype(o_ref.dtype)


def _convt_relu_kernel(p_ref, w_ref, b_ref, o_ref, *, final):
    """Fused sub-pixel transposed conv + bias + ReLU (+ Sigmoid).

    One 3x3 patch tile of the un-dilated input is loaded once and multiplied
    by the 4 sub-pixel weight matrices; the 4 results are stored side-by-side
    and pixel-shuffled back to NHWC outside the kernel.
    """
    p = p_ref[...]            # (TM, 9*Cin) bf16
    b = b_ref[...]            # (1, Cout) f32
    cout = w_ref.shape[2]
    for s in range(4):        # sub-pixel position (r, t) = (s // 2, s % 2)
        acc = jnp.dot(p, w_ref[s], preferred_element_type=jnp.float32) + b
        acc = jnp.maximum(acc, 0.0)
        if final:
            acc = jax.nn.sigmoid(acc)
        o_ref[:, s * cout:(s + 1) * cout] = acc.astype(o_ref.dtype)


# ----------------------------------------------------------------------------
# Layer wrappers (patch extraction / pixel shuffle are thin XLA layout glue)
# ----------------------------------------------------------------------------
def _patches(xpad, k, ho, wo):
    """xpad: (N, Hp, Wp, C) padded NHWC -> (N, ho, wo, k*k*C) stride-1 patches."""
    cols = [xpad[:, i:i + ho, j:j + wo, :] for i in range(k) for j in range(k)]
    return jnp.concatenate(cols, axis=-1)


def _tile_m(m):
    # full-array block for small M (always legal), 512-row tiles otherwise
    return m if m <= _MAX_TILE_M else _MAX_TILE_M


def conv5x5_relu_pool(x, w_mat, b2):
    """Conv2d(k=5, s=1, p=2) + ReLU + MaxPool2d(2) as one Pallas call. NHWC in/out."""
    n, h, w, _ = x.shape
    k_dim, cout = w_mat.shape
    hp, wp = h // 2, w // 2
    xpad = jnp.pad(x, ((0, 0), (2, 2), (2, 2), (0, 0)))
    pat = _patches(xpad, _K, h, w)                        # (N, H, W, 25*Cin)
    mp = n * hp * wp
    corners = [pat[:, di::2, dj::2, :].reshape(mp, k_dim)
               for di in (0, 1) for dj in (0, 1)]
    tm = _tile_m(mp)
    out = pl.pallas_call(
        _conv_relu_pool_kernel,
        out_shape=jax.ShapeDtypeStruct((mp, cout), x.dtype),
        grid=(pl.cdiv(mp, tm),),
        in_specs=[pl.BlockSpec((tm, k_dim), lambda i: (i, 0))] * 4 + [
            pl.BlockSpec((k_dim, cout), lambda i: (0, 0)),
            pl.BlockSpec((1, cout), lambda i: (0, 0)),
        ],
        out_specs=pl.BlockSpec((tm, cout), lambda i: (i, 0)),
        compiler_params=pltpu.CompilerParams(
            dimension_semantics=("parallel",)),
    )(*corners, w_mat, b2)
    return out.reshape(n, hp, wp, cout)


def convt5x5_s2_relu(x, w_sub, b2, *, final):
    """ConvTranspose2d(k=5, s=2, p=2, op=1) + ReLU (+Sigmoid) as one Pallas call."""
    n, h, w, _ = x.shape
    k_dim, cout = w_sub.shape[1], w_sub.shape[2]
    xpad = jnp.pad(x, ((0, 0), (1, 1), (1, 1), (0, 0)))
    m = n * h * w
    pat = _patches(xpad, 3, h, w).reshape(m, k_dim)       # (M, 9*Cin)
    tm = _tile_m(m)
    out_dtype = jnp.float32 if final else x.dtype
    out = pl.pallas_call(
        functools.partial(_convt_relu_kernel, final=final),
        out_shape=jax.ShapeDtypeStruct((m, 4 * cout), out_dtype),
        grid=(pl.cdiv(m, tm),),
        in_specs=[
            pl.BlockSpec((tm, k_dim), lambda i: (i, 0)),
            pl.BlockSpec((4, k_dim, cout), lambda i: (0, 0, 0)),
            pl.BlockSpec((1, cout), lambda i: (0, 0)),
        ],
        out_specs=pl.BlockSpec((tm, 4 * cout), lambda i: (i, 0)),
        compiler_params=pltpu.CompilerParams(
            dimension_semantics=("parallel",)),
    )(pat, w_sub, b2)
    # pixel-shuffle the 4 sub-pixel outputs back into (N, 2H, 2W, Cout)
    out = out.reshape(n, h, w, 2, 2, cout)
    return jnp.transpose(out, (0, 1, 3, 2, 4, 5)).reshape(n, 2 * h, 2 * w, cout)


# ----------------------------------------------------------------------------
# One-time parameter prep (weight transforms hoisted out of the forward pass)
# ----------------------------------------------------------------------------
def _prep_conv_weight(w):
    """torch Conv2d weight (Cout, Cin, 5, 5) -> bf16 (25*Cin, Cout) matmul matrix."""
    cout, cin = w.shape[0], w.shape[1]
    return (jnp.transpose(w, (2, 3, 1, 0))
            .reshape(_K * _K * cin, cout).astype(jnp.bfloat16))


# kernel tap used by sub-window index i for output parity r (None = no tap)
_SUBPIXEL_TAPS = {0: (4, 2, 0), 1: (None, 3, 1)}


def _prep_convt_weight(w):
    """torch ConvTranspose2d weight (Cin, Cout, 5, 5) -> bf16 (4, 9*Cin, Cout).

    Sub-pixel decomposition of the stride-2 transposed conv: output pixel
    (2m+r, 2n+t) is a stride-1 conv over a 3x3 window of the input (padded by
    1) with taps w[kh, kw], kh = _SUBPIXEL_TAPS[r][i], kw = _SUBPIXEL_TAPS[t][j].
    """
    cin, cout = w.shape[0], w.shape[1]
    wk = jnp.transpose(w, (2, 3, 0, 1))                  # (5, 5, Cin, Cout)
    zero = jnp.zeros((cin, cout), w.dtype)
    subs = []
    for r in (0, 1):
        for t in (0, 1):
            rows = []
            for i in range(3):
                kh = _SUBPIXEL_TAPS[r][i]
                row = []
                for j in range(3):
                    kw = _SUBPIXEL_TAPS[t][j]
                    row.append(zero if (kh is None or kw is None) else wk[kh, kw])
                rows.append(jnp.stack(row, axis=0))
            sub = jnp.stack(rows, axis=0)                # (3, 3, Cin, Cout)
            subs.append(sub.reshape(9 * cin, cout))
    return jnp.stack(subs, axis=0).astype(jnp.bfloat16)  # (4, 9*Cin, Cout)


def prepare_params(enc_params, dec_params):
    enc = [(_prep_conv_weight(w), b.reshape(1, -1).astype(jnp.float32))
           for w, b in enc_params]
    dec = [(_prep_convt_weight(w), b.reshape(1, -1).astype(jnp.float32))
           for w, b in dec_params]
    return enc, dec


def init_params(key):
    keys = jax.random.split(key, 2 * (len(_ENC_SPECS) + len(_DEC_SPECS)))
    it = iter(keys)
    enc, dec = [], []
    for cin, cout in _ENC_SPECS:
        bound = 1.0 / (cin * _K * _K) ** 0.5
        w = jax.random.uniform(next(it), (cout, cin, _K, _K), jnp.float32, -bound, bound)
        b = jax.random.uniform(next(it), (cout,), jnp.float32, -bound, bound)
        enc.append((w, b))
    for cin, cout in _DEC_SPECS:
        bound = 1.0 / (cin * _K * _K) ** 0.5
        w = jax.random.uniform(next(it), (cin, cout, _K, _K), jnp.float32, -bound, bound)
        b = jax.random.uniform(next(it), (cout,), jnp.float32, -bound, bound)
        dec.append((w, b))
    return enc, dec


# ----------------------------------------------------------------------------
# Forward pass (matches ConvAutoencoder.forward; NCHW in/out)
# ----------------------------------------------------------------------------
def conv_autoencoder_forward(x_nchw, enc_prepped, dec_prepped):
    x = jnp.transpose(x_nchw, (0, 2, 3, 1)).astype(jnp.bfloat16)   # NCHW -> NHWC bf16
    for w_mat, b2 in enc_prepped:                                  # encoder x4
        x = conv5x5_relu_pool(x, w_mat, b2)
    for i, (w_sub, b2) in enumerate(dec_prepped):                  # decoder x4
        x = convt5x5_s2_relu(x, w_sub, b2, final=(i == len(dec_prepped) - 1))
    return jnp.transpose(x, (0, 3, 1, 2)).astype(jnp.float32)      # NHWC -> NCHW


if __name__ == "__main__":
    key = jax.random.PRNGKey(0)
    pkey, xkey = jax.random.split(key)
    enc_params, dec_params = init_params(pkey)
    enc_prepped, dec_prepped = prepare_params(enc_params, dec_params)

    # small NCHW input; spatial must be divisible by 16 (four 2x pools)
    x = jax.random.uniform(xkey, (2, 3, 16, 16), jnp.float32)

    fwd = jax.jit(lambda inp: conv_autoencoder_forward(inp, enc_prepped, dec_prepped))
    out = fwd(x)
    jax.block_until_ready(out)

    assert out.shape == (2, 3, 16, 16), out.shape
    assert out.dtype == jnp.float32
    assert bool(jnp.all(jnp.isfinite(out)))
    # decoder tail is Sigmoid(ReLU(.)) => every output lies in [0.5, 1)
    assert bool(jnp.all(out >= 0.5)) and bool(jnp.all(out <= 1.0))
    print("KERNEL_OK")
</pallas_src>

<mosaic_0001>
module attributes {stable_mosaic.version = 11 : i64} {
  func.func @_conv_relu_pool_kernel(%arg0: i32, %arg1: memref<128x75xbf16, #tpu.memory_space<vmem>>, %arg2: memref<128x75xbf16, #tpu.memory_space<vmem>>, %arg3: memref<128x75xbf16, #tpu.memory_space<vmem>>, %arg4: memref<128x75xbf16, #tpu.memory_space<vmem>>, %arg5: memref<75x8xbf16, #tpu.memory_space<vmem>>, %arg6: memref<1x8xf32, #tpu.memory_space<vmem>>, %arg7: memref<128x8xbf16, #tpu.memory_space<vmem>>) attributes {dimension_semantics = [#tpu.dimension_semantics<parallel>], iteration_bounds = array<i64: 1>, scalar_prefetch = 0 : i64, scratch_operands = 0 : i64, tpu.core_type = #tpu.core_type<tc>, window_params = [{transform_indices = @transform_0, window_bounds = array<i64: 128, 75>}, {transform_indices = @transform_1, window_bounds = array<i64: 128, 75>}, {transform_indices = @transform_2, window_bounds = array<i64: 128, 75>}, {transform_indices = @transform_3, window_bounds = array<i64: 128, 75>}, {pipeline_mode = #tpu.pipeline_mode<synchronous>, transform_indices = @transform_4, window_bounds = array<i64: 75, 8>}, {pipeline_mode = #tpu.pipeline_mode<synchronous>, transform_indices = @transform_5, window_bounds = array<i64: 1, 8>}, {transform_indices = @transform_6, window_bounds = array<i64: 128, 8>}]} {
    %c0 = arith.constant 0 : index
    %c0_0 = arith.constant 0 : index
    %0 = vector.load %arg5[%c0, %c0_0] : memref<75x8xbf16, #tpu.memory_space<vmem>>, vector<75x8xbf16>
    %c0_1 = arith.constant 0 : index
    %c0_2 = arith.constant 0 : index
    %1 = vector.load %arg6[%c0_1, %c0_2] : memref<1x8xf32, #tpu.memory_space<vmem>>, vector<1x8xf32>
    %c0_3 = arith.constant 0 : index
    %c0_4 = arith.constant 0 : index
    %2 = vector.load %arg1[%c0_3, %c0_4] : memref<128x75xbf16, #tpu.memory_space<vmem>>, vector<128x75xbf16>
    %cst = arith.constant dense<0.000000e+00> : vector<128x8xf32>
    %3 = tpu.matmul %2, %0, %cst {dimension_numbers = #tpu.dot_dimension_numbers<[1], [0], [0], [1], [0, 0, 1, 1], [], []>} : vector<128x75xbf16>, vector<75x8xbf16>, vector<128x8xf32> -> vector<128x8xf32>
    %4 = vector.broadcast %1 : vector<1x8xf32> to vector<128x8xf32>
    %5 = arith.addf %3, %4 : vector<128x8xf32>
    %cst_5 = arith.constant 0.000000e+00 : f32
    %6 = vector.broadcast %cst_5 : f32 to vector<128x8xf32>
    %7 = arith.maximumf %5, %6 : vector<128x8xf32>
    %c0_6 = arith.constant 0 : index
    %c0_7 = arith.constant 0 : index
    %8 = vector.load %arg2[%c0_6, %c0_7] : memref<128x75xbf16, #tpu.memory_space<vmem>>, vector<128x75xbf16>
    %cst_8 = arith.constant dense<0.000000e+00> : vector<128x8xf32>
    %9 = tpu.matmul %8, %0, %cst_8 {dimension_numbers = #tpu.dot_dimension_numbers<[1], [0], [0], [1], [0, 0, 1, 1], [], []>} : vector<128x75xbf16>, vector<75x8xbf16>, vector<128x8xf32> -> vector<128x8xf32>
    %10 = vector.broadcast %1 : vector<1x8xf32> to vector<128x8xf32>
    %11 = arith.addf %9, %10 : vector<128x8xf32>
    %cst_9 = arith.constant 0.000000e+00 : f32
    %12 = vector.broadcast %cst_9 : f32 to vector<128x8xf32>
    %13 = arith.maximumf %11, %12 : vector<128x8xf32>
    %14 = arith.maximumf %7, %13 : vector<128x8xf32>
    %c0_10 = arith.constant 0 : index
    %c0_11 = arith.constant 0 : index
    %15 = vector.load %arg3[%c0_10, %c0_11] : memref<128x75xbf16, #tpu.memory_space<vmem>>, vector<128x75xbf16>
    %cst_12 = arith.constant dense<0.000000e+00> : vector<128x8xf32>
    %16 = tpu.matmul %15, %0, %cst_12 {dimension_numbers = #tpu.dot_dimension_numbers<[1], [0], [0], [1], [0, 0, 1, 1], [], []>} : vector<128x75xbf16>, vector<75x8xbf16>, vector<128x8xf32> -> vector<128x8xf32>
    %17 = vector.broadcast %1 : vector<1x8xf32> to vector<128x8xf32>
    %18 = arith.addf %16, %17 : vector<128x8xf32>
    %cst_13 = arith.constant 0.000000e+00 : f32
    %19 = vector.broadcast %cst_13 : f32 to vector<128x8xf32>
    %20 = arith.maximumf %18, %19 : vector<128x8xf32>
    %c0_14 = arith.constant 0 : index
    %c0_15 = arith.constant 0 : index
    %21 = vector.load %arg4[%c0_14, %c0_15] : memref<128x75xbf16, #tpu.memory_space<vmem>>, vector<128x75xbf16>
    %cst_16 = arith.constant dense<0.000000e+00> : vector<128x8xf32>
    %22 = tpu.matmul %21, %0, %cst_16 {dimension_numbers = #tpu.dot_dimension_numbers<[1], [0], [0], [1], [0, 0, 1, 1], [], []>} : vector<128x75xbf16>, vector<75x8xbf16>, vector<128x8xf32> -> vector<128x8xf32>
    %23 = vector.broadcast %1 : vector<1x8xf32> to vector<128x8xf32>
    %24 = arith.addf %22, %23 : vector<128x8xf32>
    %cst_17 = arith.constant 0.000000e+00 : f32
    %25 = vector.broadcast %cst_17 : f32 to vector<128x8xf32>
    %26 = arith.maximumf %24, %25 : vector<128x8xf32>
    %27 = arith.maximumf %20, %26 : vector<128x8xf32>
    %28 = arith.maximumf %14, %27 : vector<128x8xf32>
    %29 = arith.truncf %28 : vector<128x8xf32> to vector<128x8xbf16>
    %c0_18 = arith.constant 0 : index
    %c0_19 = arith.constant 0 : index
    %30 = vector.load %arg7[%c0_18, %c0_19] : memref<128x8xbf16, #tpu.memory_space<vmem>>, vector<128x8xbf16>
    tpu.vector_store %arg7[%c0_18, %c0_19], %29 {strides = array<i32>} : memref<128x8xbf16, #tpu.memory_space<vmem>>, vector<128x8xbf16>,
    return
  }
  func.func @transform_0(%arg0: i32) -> (i32, i32) {
    %c0_i32 = arith.constant 0 : i32
    %c0_i32_0 = arith.constant 0 : i32
    return %arg0, %c0_i32 : i32, i32
  }
  func.func @transform_1(%arg0: i32) -> (i32, i32) {
    %c0_i32 = arith.constant 0 : i32
    %c0_i32_0 = arith.constant 0 : i32
    return %arg0, %c0_i32 : i32, i32
  }
  func.func @transform_2(%arg0: i32) -> (i32, i32) {
    %c0_i32 = arith.constant 0 : i32
    %c0_i32_0 = arith.constant 0 : i32
    return %arg0, %c0_i32 : i32, i32
  }
  func.func @transform_3(%arg0: i32) -> (i32, i32) {
    %c0_i32 = arith.constant 0 : i32
    %c0_i32_0 = arith.constant 0 : i32
    return %arg0, %c0_i32 : i32, i32
  }
  func.func @transform_4(%arg0: i32) -> (i32, i32) {
    %c0_i32 = arith.constant 0 : i32
    %c0_i32_0 = arith.constant 0 : i32
    %c0_i32_1 = arith.constant 0 : i32
    return %c0_i32, %c0_i32_0 : i32, i32
  }
  func.func @transform_5(%arg0: i32) -> (i32, i32) {
    %c0_i32 = arith.constant 0 : i32
    %c0_i32_0 = arith.constant 0 : i32
    %c0_i32_1 = arith.constant 0 : i32
    return %c0_i32, %c0_i32_0 : i32, i32
  }
  func.func @transform_6(%arg0: i32) -> (i32, i32) {
    %c0_i32 = arith.constant 0 : i32
    %c0_i32_0 = arith.constant 0 : i32
    return %arg0, %c0_i32 : i32, i32
  }
}

module attributes {stable_mosaic.version = 11 : i64} {
  func.func @_conv_relu_pool_kernel(%arg0: i32, %arg1: memref<32x200xbf16, #tpu.memory_space<vmem>>, %arg2: memref<32x200xbf16, #tpu.memory_space<vmem>>, %arg3: memref<32x200xbf16, #tpu.memory_space<vmem>>, %arg4: memref<32x200xbf16, #tpu.memory_space<vmem>>, %arg5: memref<200x16xbf16, #tpu.memory_space<vmem>>, %arg6: memref<1x16xf32, #tpu.memory_space<vmem>>, %arg7: memref<32x16xbf16, #tpu.memory_space<vmem>>) attributes {dimension_semantics = [#tpu.dimension_semantics<parallel>], iteration_bounds = array<i64: 1>, scalar_prefetch = 0 : i64, scratch_operands = 0 : i64, tpu.core_type = #tpu.core_type<tc>, window_params = [{transform_indices = @transform_0, window_bounds = array<i64: 32, 200>}, {transform_indices = @transform_1, window_bounds = array<i64: 32, 200>}, {transform_indices = @transform_2, window_bounds = array<i64: 32, 200>}, {transform_indices = @transform_3, window_bounds = array<i64: 32, 200>}, {pipeline_mode = #tpu.pipeline_mode<synchronous>, transform_indices = @transform_4, window_bounds = array<i64: 200, 16>}, {pipeline_mode = #tpu.pipeline_mode<synchronous>, transform_indices = @transform_5, window_bounds = array<i64: 1, 16>}, {transform_indices = @transform_6, window_bounds = array<i64: 32, 16>}]} {
    %c0 = arith.constant 0 : index
    %c0_0 = arith.constant 0 : index
    %0 = vector.load %arg5[%c0, %c0_0] : memref<200x16xbf16, #tpu.memory_space<vmem>>, vector<200x16xbf16>
    %c0_1 = arith.constant 0 : index
    %c0_2 = arith.constant 0 : index
    %1 = vector.load %arg6[%c0_1, %c0_2] : memref<1x16xf32, #tpu.memory_space<vmem>>, vector<1x16xf32>
    %c0_3 = arith.constant 0 : index
    %c0_4 = arith.constant 0 : index
    %2 = vector.load %arg1[%c0_3, %c0_4] : memref<32x200xbf16, #tpu.memory_space<vmem>>, vector<32x200xbf16>
    %cst = arith.constant dense<0.000000e+00> : vector<32x16xf32>
    %3 = tpu.matmul %2, %0, %cst {dimension_numbers = #tpu.dot_dimension_numbers<[1], [0], [0], [1], [0, 0, 1, 1], [], []>} : vector<32x200xbf16>, vector<200x16xbf16>, vector<32x16xf32> -> vector<32x16xf32>
    %4 = vector.broadcast %1 : vector<1x16xf32> to vector<32x16xf32>
    %5 = arith.addf %3, %4 : vector<32x16xf32>
    %cst_5 = arith.constant 0.000000e+00 : f32
    %6 = vector.broadcast %cst_5 : f32 to vector<32x16xf32>
    %7 = arith.maximumf %5, %6 : vector<32x16xf32>
    %c0_6 = arith.constant 0 : index
    %c0_7 = arith.constant 0 : index
    %8 = vector.load %arg2[%c0_6, %c0_7] : memref<32x200xbf16, #tpu.memory_space<vmem>>, vector<32x200xbf16>
    %cst_8 = arith.constant dense<0.000000e+00> : vector<32x16xf32>
    %9 = tpu.matmul %8, %0, %cst_8 {dimension_numbers = #tpu.dot_dimension_numbers<[1], [0], [0], [1], [0, 0, 1, 1], [], []>} : vector<32x200xbf16>, vector<200x16xbf16>, vector<32x16xf32> -> vector<32x16xf32>
    %10 = vector.broadcast %1 : vector<1x16xf32> to vector<32x16xf32>
    %11 = arith.addf %9, %10 : vector<32x16xf32>
    %cst_9 = arith.constant 0.000000e+00 : f32
    %12 = vector.broadcast %cst_9 : f32 to vector<32x16xf32>
    %13 = arith.maximumf %11, %12 : vector<32x16xf32>
    %14 = arith.maximumf %7, %13 : vector<32x16xf32>
    %c0_10 = arith.constant 0 : index
    %c0_11 = arith.constant 0 : index
    %15 = vector.load %arg3[%c0_10, %c0_11] : memref<32x200xbf16, #tpu.memory_space<vmem>>, vector<32x200xbf16>
    %cst_12 = arith.constant dense<0.000000e+00> : vector<32x16xf32>
    %16 = tpu.matmul %15, %0, %cst_12 {dimension_numbers = #tpu.dot_dimension_numbers<[1], [0], [0], [1], [0, 0, 1, 1], [], []>} : vector<32x200xbf16>, vector<200x16xbf16>, vector<32x16xf32> -> vector<32x16xf32>
    %17 = vector.broadcast %1 : vector<1x16xf32> to vector<32x16xf32>
    %18 = arith.addf %16, %17 : vector<32x16xf32>
    %cst_13 = arith.constant 0.000000e+00 : f32
    %19 = vector.broadcast %cst_13 : f32 to vector<32x16xf32>
    %20 = arith.maximumf %18, %19 : vector<32x16xf32>
    %c0_14 = arith.constant 0 : index
    %c0_15 = arith.constant 0 : index
    %21 = vector.load %arg4[%c0_14, %c0_15] : memref<32x200xbf16, #tpu.memory_space<vmem>>, vector<32x200xbf16>
    %cst_16 = arith.constant dense<0.000000e+00> : vector<32x16xf32>
    %22 = tpu.matmul %21, %0, %cst_16 {dimension_numbers = #tpu.dot_dimension_numbers<[1], [0], [0], [1], [0, 0, 1, 1], [], []>} : vector<32x200xbf16>, vector<200x16xbf16>, vector<32x16xf32> -> vector<32x16xf32>
    %23 = vector.broadcast %1 : vector<1x16xf32> to vector<32x16xf32>
    %24 = arith.addf %22, %23 : vector<32x16xf32>
    %cst_17 = arith.constant 0.000000e+00 : f32
    %25 = vector.broadcast %cst_17 : f32 to vector<32x16xf32>
    %26 = arith.maximumf %24, %25 : vector<32x16xf32>
    %27 = arith.maximumf %20, %26 : vector<32x16xf32>
    %28 = arith.maximumf %14, %27 : vector<32x16xf32>
    %29 = arith.truncf %28 : vector<32x16xf32> to vector<32x16xbf16>
    %c0_18 = arith.constant 0 : index
    %c0_19 = arith.constant 0 : index
    %30 = vector.load %arg7[%c0_18, %c0_19] : memref<32x16xbf16, #tpu.memory_space<vmem>>, vector<32x16xbf16>
    tpu.vector_store %arg7[%c0_18, %c0_19], %29 {strides = array<i32>} : memref<32x16xbf16, #tpu.memory_space<vmem>>, vector<32x16xbf16>,
    return
  }
  func.func @transform_0(%arg0: i32) -> (i32, i32) {
    %c0_i32 = arith.constant 0 : i32
    %c0_i32_0 = arith.constant 0 : i32
    return %arg0, %c0_i32 : i32, i32
  }
  func.func @transform_1(%arg0: i32) -> (i32, i32) {
    %c0_i32 = arith.constant 0 : i32
    %c0_i32_0 = arith.constant 0 : i32
    return %arg0, %c0_i32 : i32, i32
  }
  func.func @transform_2(%arg0: i32) -> (i32, i32) {
    %c0_i32 = arith.constant 0 : i32
    %c0_i32_0 = arith.constant 0 : i32
    return %arg0, %c0_i32 : i32, i32
  }
  func.func @transform_3(%arg0: i32) -> (i32, i32) {
    %c0_i32 = arith.constant 0 : i32
    %c0_i32_0 = arith.constant 0 : i32
    return %arg0, %c0_i32 : i32, i32
  }
  func.func @transform_4(%arg0: i32) -> (i32, i32) {
    %c0_i32 = arith.constant 0 : i32
    %c0_i32_0 = arith.constant 0 : i32
    %c0_i32_1 = arith.constant 0 : i32
    return %c0_i32, %c0_i32_0 : i32, i32
  }
  func.func @transform_5(%arg0: i32) -> (i32, i32) {
    %c0_i32 = arith.constant 0 : i32
    %c0_i32_0 = arith.constant 0 : i32
    %c0_i32_1 = arith.constant 0 : i32
    return %c0_i32, %c0_i32_0 : i32, i32
  }
  func.func @transform_6(%arg0: i32) -> (i32, i32) {
    %c0_i32 = arith.constant 0 : i32
    %c0_i32_0 = arith.constant 0 : i32
    return %arg0, %c0_i32 : i32, i32
  }
}

module attributes {stable_mosaic.version = 11 : i64} {
  func.func @_conv_relu_pool_kernel(%arg0: i32, %arg1: memref<8x400xbf16, #tpu.memory_space<vmem>>, %arg2: memref<8x400xbf16, #tpu.memory_space<vmem>>, %arg3: memref<8x400xbf16, #tpu.memory_space<vmem>>, %arg4: memref<8x400xbf16, #tpu.memory_space<vmem>>, %arg5: memref<400x32xbf16, #tpu.memory_space<vmem>>, %arg6: memref<1x32xf32, #tpu.memory_space<vmem>>, %arg7: memref<8x32xbf16, #tpu.memory_space<vmem>>) attributes {dimension_semantics = [#tpu.dimension_semantics<parallel>], iteration_bounds = array<i64: 1>, scalar_prefetch = 0 : i64, scratch_operands = 0 : i64, tpu.core_type = #tpu.core_type<tc>, window_params = [{transform_indices = @transform_0, window_bounds = array<i64: 8, 400>}, {transform_indices = @transform_1, window_bounds = array<i64: 8, 400>}, {transform_indices = @transform_2, window_bounds = array<i64: 8, 400>}, {transform_indices = @transform_3, window_bounds = array<i64: 8, 400>}, {pipeline_mode = #tpu.pipeline_mode<synchronous>, transform_indices = @transform_4, window_bounds = array<i64: 400, 32>}, {pipeline_mode = #tpu.pipeline_mode<synchronous>, transform_indices = @transform_5, window_bounds = array<i64: 1, 32>}, {transform_indices = @transform_6, window_bounds = array<i64: 8, 32>}]} {
    %c0 = arith.constant 0 : index
    %c0_0 = arith.constant 0 : index
    %0 = vector.load %arg5[%c0, %c0_0] : memref<400x32xbf16, #tpu.memory_space<vmem>>, vector<400x32xbf16>
    %c0_1 = arith.constant 0 : index
    %c0_2 = arith.constant 0 : index
    %1 = vector.load %arg6[%c0_1, %c0_2] : memref<1x32xf32, #tpu.memory_space<vmem>>, vector<1x32xf32>
    %c0_3 = arith.constant 0 : index
    %c0_4 = arith.constant 0 : index
    %2 = vector.load %arg1[%c0_3, %c0_4] : memref<8x400xbf16, #tpu.memory_space<vmem>>, vector<8x400xbf16>
    %cst = arith.constant dense<0.000000e+00> : vector<8x32xf32>
    %3 = tpu.matmul %2, %0, %cst {dimension_numbers = #tpu.dot_dimension_numbers<[1], [0], [0], [1], [0, 0, 1, 1], [], []>} : vector<8x400xbf16>, vector<400x32xbf16>, vector<8x32xf32> -> vector<8x32xf32>
    %4 = vector.broadcast %1 : vector<1x32xf32> to vector<8x32xf32>
    %5 = arith.addf %3, %4 : vector<8x32xf32>
    %cst_5 = arith.constant 0.000000e+00 : f32
    %6 = vector.broadcast %cst_5 : f32 to vector<8x32xf32>
    %7 = arith.maximumf %5, %6 : vector<8x32xf32>
    %c0_6 = arith.constant 0 : index
    %c0_7 = arith.constant 0 : index
    %8 = vector.load %arg2[%c0_6, %c0_7] : memref<8x400xbf16, #tpu.memory_space<vmem>>, vector<8x400xbf16>
    %cst_8 = arith.constant dense<0.000000e+00> : vector<8x32xf32>
    %9 = tpu.matmul %8, %0, %cst_8 {dimension_numbers = #tpu.dot_dimension_numbers<[1], [0], [0], [1], [0, 0, 1, 1], [], []>} : vector<8x400xbf16>, vector<400x32xbf16>, vector<8x32xf32> -> vector<8x32xf32>
    %10 = vector.broadcast %1 : vector<1x32xf32> to vector<8x32xf32>
    %11 = arith.addf %9, %10 : vector<8x32xf32>
    %cst_9 = arith.constant 0.000000e+00 : f32
    %12 = vector.broadcast %cst_9 : f32 to vector<8x32xf32>
    %13 = arith.maximumf %11, %12 : vector<8x32xf32>
    %14 = arith.maximumf %7, %13 : vector<8x32xf32>
    %c0_10 = arith.constant 0 : index
    %c0_11 = arith.constant 0 : index
    %15 = vector.load %arg3[%c0_10, %c0_11] : memref<8x400xbf16, #tpu.memory_space<vmem>>, vector<8x400xbf16>
    %cst_12 = arith.constant dense<0.000000e+00> : vector<8x32xf32>
    %16 = tpu.matmul %15, %0, %cst_12 {dimension_numbers = #tpu.dot_dimension_numbers<[1], [0], [0], [1], [0, 0, 1, 1], [], []>} : vector<8x400xbf16>, vector<400x32xbf16>, vector<8x32xf32> -> vector<8x32xf32>
    %17 = vector.broadcast %1 : vector<1x32xf32> to vector<8x32xf32>
    %18 = arith.addf %16, %17 : vector<8x32xf32>
    %cst_13 = arith.constant 0.000000e+00 : f32
    %19 = vector.broadcast %cst_13 : f32 to vector<8x32xf32>
    %20 = arith.maximumf %18, %19 : vector<8x32xf32>
    %c0_14 = arith.constant 0 : index
    %c0_15 = arith.constant 0 : index
    %21 = vector.load %arg4[%c0_14, %c0_15] : memref<8x400xbf16, #tpu.memory_space<vmem>>, vector<8x400xbf16>
    %cst_16 = arith.constant dense<0.000000e+00> : vector<8x32xf32>
    %22 = tpu.matmul %21, %0, %cst_16 {dimension_numbers = #tpu.dot_dimension_numbers<[1], [0], [0], [1], [0, 0, 1, 1], [], []>} : vector<8x400xbf16>, vector<400x32xbf16>, vector<8x32xf32> -> vector<8x32xf32>
    %23 = vector.broadcast %1 : vector<1x32xf32> to vector<8x32xf32>
    %24 = arith.addf %22, %23 : vector<8x32xf32>
    %cst_17 = arith.constant 0.000000e+00 : f32
    %25 = vector.broadcast %cst_17 : f32 to vector<8x32xf32>
    %26 = arith.maximumf %24, %25 : vector<8x32xf32>
    %27 = arith.maximumf %20, %26 : vector<8x32xf32>
    %28 = arith.maximumf %14, %27 : vector<8x32xf32>
    %29 = arith.truncf %28 : vector<8x32xf32> to vector<8x32xbf16>
    %c0_18 = arith.constant 0 : index
    %c0_19 = arith.constant 0 : index
    %30 = vector.load %arg7[%c0_18, %c0_19] : memref<8x32xbf16, #tpu.memory_space<vmem>>, vector<8x32xbf16>
    tpu.vector_store %arg7[%c0_18, %c0_19], %29 {strides = array<i32>} : memref<8x32xbf16, #tpu.memory_space<vmem>>, vector<8x32xbf16>,
    return
  }
  func.func @transform_0(%arg0: i32) -> (i32, i32) {
    %c0_i32 = arith.constant 0 : i32
    %c0_i32_0 = arith.constant 0 : i32
    return %arg0, %c0_i32 : i32, i32
  }
  func.func @transform_1(%arg0: i32) -> (i32, i32) {
    %c0_i32 = arith.constant 0 : i32
    %c0_i32_0 = arith.constant 0 : i32
    return %arg0, %c0_i32 : i32, i32
  }
  func.func @transform_2(%arg0: i32) -> (i32, i32) {
    %c0_i32 = arith.constant 0 : i32
    %c0_i32_0 = arith.constant 0 : i32
    return %arg0, %c0_i32 : i32, i32
  }
  func.func @transform_3(%arg0: i32) -> (i32, i32) {
    %c0_i32 = arith.constant 0 : i32
    %c0_i32_0 = arith.constant 0 : i32
    return %arg0, %c0_i32 : i32, i32
  }
  func.func @transform_4(%arg0: i32) -> (i32, i32) {
    %c0_i32 = arith.constant 0 : i32
    %c0_i32_0 = arith.constant 0 : i32
    %c0_i32_1 = arith.constant 0 : i32
    return %c0_i32, %c0_i32_0 : i32, i32
  }
  func.func @transform_5(%arg0: i32) -> (i32, i32) {
    %c0_i32 = arith.constant 0 : i32
    %c0_i32_0 = arith.constant 0 : i32
    %c0_i32_1 = arith.constant 0 : i32
    return %c0_i32, %c0_i32_0 : i32, i32
  }
  func.func @transform_6(%arg0: i32) -> (i32, i32) {
    %c0_i32 = arith.constant 0 : i32
    %c0_i32_0 = arith.constant 0 : i32
    return %arg0, %c0_i32 : i32, i32
  }
}

module attributes {stable_mosaic.version = 11 : i64} {
  func.func @_conv_relu_pool_kernel(%arg0: i32, %arg1: memref<2x800xbf16, #tpu.memory_space<vmem>>, %arg2: memref<2x800xbf16, #tpu.memory_space<vmem>>, %arg3: memref<2x800xbf16, #tpu.memory_space<vmem>>, %arg4: memref<2x800xbf16, #tpu.memory_space<vmem>>, %arg5: memref<800x64xbf16, #tpu.memory_space<vmem>>, %arg6: memref<1x64xf32, #tpu.memory_space<vmem>>, %arg7: memref<2x64xbf16, #tpu.memory_space<vmem>>) attributes {dimension_semantics = [#tpu.dimension_semantics<parallel>], iteration_bounds = array<i64: 1>, scalar_prefetch = 0 : i64, scratch_operands = 0 : i64, tpu.core_type = #tpu.core_type<tc>, window_params = [{transform_indices = @transform_0, window_bounds = array<i64: 2, 800>}, {transform_indices = @transform_1, window_bounds = array<i64: 2, 800>}, {transform_indices = @transform_2, window_bounds = array<i64: 2, 800>}, {transform_indices = @transform_3, window_bounds = array<i64: 2, 800>}, {pipeline_mode = #tpu.pipeline_mode<synchronous>, transform_indices = @transform_4, window_bounds = array<i64: 800, 64>}, {pipeline_mode = #tpu.pipeline_mode<synchronous>, transform_indices = @transform_5, window_bounds = array<i64: 1, 64>}, {transform_indices = @transform_6, window_bounds = array<i64: 2, 64>}]} {
    %c0 = arith.constant 0 : index
    %c0_0 = arith.constant 0 : index
    %0 = vector.load %arg5[%c0, %c0_0] : memref<800x64xbf16, #tpu.memory_space<vmem>>, vector<800x64xbf16>
    %c0_1 = arith.constant 0 : index
    %c0_2 = arith.constant 0 : index
    %1 = vector.load %arg6[%c0_1, %c0_2] : memref<1x64xf32, #tpu.memory_space<vmem>>, vector<1x64xf32>
    %c0_3 = arith.constant 0 : index
    %c0_4 = arith.constant 0 : index
    %2 = vector.load %arg1[%c0_3, %c0_4] : memref<2x800xbf16, #tpu.memory_space<vmem>>, vector<2x800xbf16>
    %cst = arith.constant dense<0.000000e+00> : vector<2x64xf32>
    %3 = tpu.matmul %2, %0, %cst {dimension_numbers = #tpu.dot_dimension_numbers<[1], [0], [0], [1], [0, 0, 1, 1], [], []>} : vector<2x800xbf16>, vector<800x64xbf16>, vector<2x64xf32> -> vector<2x64xf32>
    %4 = vector.broadcast %1 : vector<1x64xf32> to vector<2x64xf32>
    %5 = arith.addf %3, %4 : vector<2x64xf32>
    %cst_5 = arith.constant 0.000000e+00 : f32
    %6 = vector.broadcast %cst_5 : f32 to vector<2x64xf32>
    %7 = arith.maximumf %5, %6 : vector<2x64xf32>
    %c0_6 = arith.constant 0 : index
    %c0_7 = arith.constant 0 : index
    %8 = vector.load %arg2[%c0_6, %c0_7] : memref<2x800xbf16, #tpu.memory_space<vmem>>, vector<2x800xbf16>
    %cst_8 = arith.constant dense<0.000000e+00> : vector<2x64xf32>
    %9 = tpu.matmul %8, %0, %cst_8 {dimension_numbers = #tpu.dot_dimension_numbers<[1], [0], [0], [1], [0, 0, 1, 1], [], []>} : vector<2x800xbf16>, vector<800x64xbf16>, vector<2x64xf32> -> vector<2x64xf32>
    %10 = vector.broadcast %1 : vector<1x64xf32> to vector<2x64xf32>
    %11 = arith.addf %9, %10 : vector<2x64xf32>
    %cst_9 = arith.constant 0.000000e+00 : f32
    %12 = vector.broadcast %cst_9 : f32 to vector<2x64xf32>
    %13 = arith.maximumf %11, %12 : vector<2x64xf32>
    %14 = arith.maximumf %7, %13 : vector<2x64xf32>
    %c0_10 = arith.constant 0 : index
    %c0_11 = arith.constant 0 : index
    %15 = vector.load %arg3[%c0_10, %c0_11] : memref<2x800xbf16, #tpu.memory_space<vmem>>, vector<2x800xbf16>
    %cst_12 = arith.constant dense<0.000000e+00> : vector<2x64xf32>
    %16 = tpu.matmul %15, %0, %cst_12 {dimension_numbers = #tpu.dot_dimension_numbers<[1], [0], [0], [1], [0, 0, 1, 1], [], []>} : vector<2x800xbf16>, vector<800x64xbf16>, vector<2x64xf32> -> vector<2x64xf32>
    %17 = vector.broadcast %1 : vector<1x64xf32> to vector<2x64xf32>
    %18 = arith.addf %16, %17 : vector<2x64xf32>
    %cst_13 = arith.constant 0.000000e+00 : f32
    %19 = vector.broadcast %cst_13 : f32 to vector<2x64xf32>
    %20 = arith.maximumf %18, %19 : vector<2x64xf32>
    %c0_14 = arith.constant 0 : index
    %c0_15 = arith.constant 0 : index
    %21 = vector.load %arg4[%c0_14, %c0_15] : memref<2x800xbf16, #tpu.memory_space<vmem>>, vector<2x800xbf16>
    %cst_16 = arith.constant dense<0.000000e+00> : vector<2x64xf32>
    %22 = tpu.matmul %21, %0, %cst_16 {dimension_numbers = #tpu.dot_dimension_numbers<[1], [0], [0], [1], [0, 0, 1, 1], [], []>} : vector<2x800xbf16>, vector<800x64xbf16>, vector<2x64xf32> -> vector<2x64xf32>
    %23 = vector.broadcast %1 : vector<1x64xf32> to vector<2x64xf32>
    %24 = arith.addf %22, %23 : vector<2x64xf32>
    %cst_17 = arith.constant 0.000000e+00 : f32
    %25 = vector.broadcast %cst_17 : f32 to vector<2x64xf32>
    %26 = arith.maximumf %24, %25 : vector<2x64xf32>
    %27 = arith.maximumf %20, %26 : vector<2x64xf32>
    %28 = arith.maximumf %14, %27 : vector<2x64xf32>
    %29 = arith.truncf %28 : vector<2x64xf32> to vector<2x64xbf16>
    %c0_18 = arith.constant 0 : index
    %c0_19 = arith.constant 0 : index
    %30 = vector.load %arg7[%c0_18, %c0_19] : memref<2x64xbf16, #tpu.memory_space<vmem>>, vector<2x64xbf16>
    tpu.vector_store %arg7[%c0_18, %c0_19], %29 {strides = array<i32>} : memref<2x64xbf16, #tpu.memory_space<vmem>>, vector<2x64xbf16>,
    return
  }
  func.func @transform_0(%arg0: i32) -> (i32, i32) {
    %c0_i32 = arith.constant 0 : i32
    %c0_i32_0 = arith.constant 0 : i32
    return %arg0, %c0_i32 : i32, i32
  }
  func.func @transform_1(%arg0: i32) -> (i32, i32) {
    %c0_i32 = arith.constant 0 : i32
    %c0_i32_0 = arith.constant 0 : i32
    return %arg0, %c0_i32 : i32, i32
  }
  func.func @transform_2(%arg0: i32) -> (i32, i32) {
    %c0_i32 = arith.constant 0 : i32
    %c0_i32_0 = arith.constant 0 : i32
    return %arg0, %c0_i32 : i32, i32
  }
  func.func @transform_3(%arg0: i32) -> (i32, i32) {
    %c0_i32 = arith.constant 0 : i32
    %c0_i32_0 = arith.constant 0 : i32
    return %arg0, %c0_i32 : i32, i32
  }
  func.func @transform_4(%arg0: i32) -> (i32, i32) {
    %c0_i32 = arith.constant 0 : i32
    %c0_i32_0 = arith.constant 0 : i32
    %c0_i32_1 = arith.constant 0 : i32
    return %c0_i32, %c0_i32_0 : i32, i32
  }
  func.func @transform_5(%arg0: i32) -> (i32, i32) {
    %c0_i32 = arith.constant 0 : i32
    %c0_i32_0 = arith.constant 0 : i32
    %c0_i32_1 = arith.constant 0 : i32
    return %c0_i32, %c0_i32_0 : i32, i32
  }
  func.func @transform_6(%arg0: i32) -> (i32, i32) {
    %c0_i32 = arith.constant 0 : i32
    %c0_i32_0 = arith.constant 0 : i32
    return %arg0, %c0_i32 : i32, i32
  }
}

module attributes {stable_mosaic.version = 11 : i64} {
  func.func @_convt_relu_kernel(%arg0: i32, %arg1: memref<2x576xbf16, #tpu.memory_space<vmem>>, %arg2: memref<4x576x32xbf16, #tpu.memory_space<vmem>>, %arg3: memref<1x32xf32, #tpu.memory_space<vmem>>, %arg4: memref<2x128xbf16, #tpu.memory_space<vmem>>) attributes {dimension_semantics = [#tpu.dimension_semantics<parallel>], iteration_bounds = array<i64: 1>, scalar_prefetch = 0 : i64, scratch_operands = 0 : i64, tpu.core_type = #tpu.core_type<tc>, window_params = [{transform_indices = @transform_0, window_bounds = array<i64: 2, 576>}, {pipeline_mode = #tpu.pipeline_mode<synchronous>, transform_indices = @transform_1, window_bounds = array<i64: 4, 576, 32>}, {pipeline_mode = #tpu.pipeline_mode<synchronous>, transform_indices = @transform_2, window_bounds = array<i64: 1, 32>}, {transform_indices = @transform_3, window_bounds = array<i64: 2, 128>}]} {
    %c0 = arith.constant 0 : index
    %c0_0 = arith.constant 0 : index
    %0 = vector.load %arg1[%c0, %c0_0] : memref<2x576xbf16, #tpu.memory_space<vmem>>, vector<2x576xbf16>
    %c0_1 = arith.constant 0 : index
    %c0_2 = arith.constant 0 : index
    %1 = vector.load %arg3[%c0_1, %c0_2] : memref<1x32xf32, #tpu.memory_space<vmem>>, vector<1x32xf32>
    %c0_3 = arith.constant 0 : index
    %c0_4 = arith.constant 0 : index
    %c0_5 = arith.constant 0 : index
    %2 = vector.load %arg2[%c0_3, %c0_4, %c0_5] : memref<4x576x32xbf16, #tpu.memory_space<vmem>>, vector<1x576x32xbf16>
    %3 = vector.shape_cast %2 : vector<1x576x32xbf16> to vector<576x32xbf16>
    %cst = arith.constant dense<0.000000e+00> : vector<2x32xf32>
    %4 = tpu.matmul %0, %3, %cst {dimension_numbers = #tpu.dot_dimension_numbers<[1], [0], [0], [1], [0, 0, 1, 1], [], []>} : vector<2x576xbf16>, vector<576x32xbf16>, vector<2x32xf32> -> vector<2x32xf32>
    %5 = vector.broadcast %1 : vector<1x32xf32> to vector<2x32xf32>
    %6 = arith.addf %4, %5 : vector<2x32xf32>
    %cst_6 = arith.constant 0.000000e+00 : f32
    %7 = vector.broadcast %cst_6 : f32 to vector<2x32xf32>
    %8 = arith.maximumf %6, %7 : vector<2x32xf32>
    %9 = arith.truncf %8 : vector<2x32xf32> to vector<2x32xbf16>
    %c0_7 = arith.constant 0 : index
    %c0_8 = arith.constant 0 : index
    %10 = vector.load %arg4[%c0_7, %c0_8] : memref<2x128xbf16, #tpu.memory_space<vmem>>, vector<2x32xbf16>
    tpu.vector_store %arg4[%c0_7, %c0_8], %9 {strides = array<i32>} : memref<2x128xbf16, #tpu.memory_space<vmem>>, vector<2x32xbf16>,
    %c1 = arith.constant 1 : index
    %c0_9 = arith.constant 0 : index
    %c0_10 = arith.constant 0 : index
    %11 = vector.load %arg2[%c1, %c0_9, %c0_10] : memref<4x576x32xbf16, #tpu.memory_space<vmem>>, vector<1x576x32xbf16>
    %12 = vector.shape_cast %11 : vector<1x576x32xbf16> to vector<576x32xbf16>
    %cst_11 = arith.constant dense<0.000000e+00> : vector<2x32xf32>
    %13 = tpu.matmul %0, %12, %cst_11 {dimension_numbers = #tpu.dot_dimension_numbers<[1], [0], [0], [1], [0, 0, 1, 1], [], []>} : vector<2x576xbf16>, vector<576x32xbf16>, vector<2x32xf32> -> vector<2x32xf32>
    %14 = vector.broadcast %1 : vector<1x32xf32> to vector<2x32xf32>
    %15 = arith.addf %13, %14 : vector<2x32xf32>
    %cst_12 = arith.constant 0.000000e+00 : f32
    %16 = vector.broadcast %cst_12 : f32 to vector<2x32xf32>
    %17 = arith.maximumf %15, %16 : vector<2x32xf32>
    %18 = arith.truncf %17 : vector<2x32xf32> to vector<2x32xbf16>
    %c0_13 = arith.constant 0 : index
    %c32 = arith.constant 32 : index
    %19 = vector.load %arg4[%c0_13, %c32] : memref<2x128xbf16, #tpu.memory_space<vmem>>, vector<2x32xbf16>
    tpu.vector_store %arg4[%c0_13, %c32], %18 {strides = array<i32>} : memref<2x128xbf16, #tpu.memory_space<vmem>>, vector<2x32xbf16>,
    %c2 = arith.constant 2 : index
    %c0_14 = arith.constant 0 : index
    %c0_15 = arith.constant 0 : index
    %20 = vector.load %arg2[%c2, %c0_14, %c0_15] : memref<4x576x32xbf16, #tpu.memory_space<vmem>>, vector<1x576x32xbf16>
    %21 = vector.shape_cast %20 : vector<1x576x32xbf16> to vector<576x32xbf16>
    %cst_16 = arith.constant dense<0.000000e+00> : vector<2x32xf32>
    %22 = tpu.matmul %0, %21, %cst_16 {dimension_numbers = #tpu.dot_dimension_numbers<[1], [0], [0], [1], [0, 0, 1, 1], [], []>} : vector<2x576xbf16>, vector<576x32xbf16>, vector<2x32xf32> -> vector<2x32xf32>
    %23 = vector.broadcast %1 : vector<1x32xf32> to vector<2x32xf32>
    %24 = arith.addf %22, %23 : vector<2x32xf32>
    %cst_17 = arith.constant 0.000000e+00 : f32
    %25 = vector.broadcast %cst_17 : f32 to vector<2x32xf32>
    %26 = arith.maximumf %24, %25 : vector<2x32xf32>
    %27 = arith.truncf %26 : vector<2x32xf32> to vector<2x32xbf16>
    %c0_18 = arith.constant 0 : index
    %c64 = arith.constant 64 : index
    %28 = vector.load %arg4[%c0_18, %c64] : memref<2x128xbf16, #tpu.memory_space<vmem>>, vector<2x32xbf16>
    tpu.vector_store %arg4[%c0_18, %c64], %27 {strides = array<i32>} : memref<2x128xbf16, #tpu.memory_space<vmem>>, vector<2x32xbf16>,
    %c3 = arith.constant 3 : index
    %c0_19 = arith.constant 0 : index
    %c0_20 = arith.constant 0 : index
    %29 = vector.load %arg2[%c3, %c0_19, %c0_20] : memref<4x576x32xbf16, #tpu.memory_space<vmem>>, vector<1x576x32xbf16>
    %30 = vector.shape_cast %29 : vector<1x576x32xbf16> to vector<576x32xbf16>
    %cst_21 = arith.constant dense<0.000000e+00> : vector<2x32xf32>
    %31 = tpu.matmul %0, %30, %cst_21 {dimension_numbers = #tpu.dot_dimension_numbers<[1], [0], [0], [1], [0, 0, 1, 1], [], []>} : vector<2x576xbf16>, vector<576x32xbf16>, vector<2x32xf32> -> vector<2x32xf32>
    %32 = vector.broadcast %1 : vector<1x32xf32> to vector<2x32xf32>
    %33 = arith.addf %31, %32 : vector<2x32xf32>
    %cst_22 = arith.constant 0.000000e+00 : f32
    %34 = vector.broadcast %cst_22 : f32 to vector<2x32xf32>
    %35 = arith.maximumf %33, %34 : vector<2x32xf32>
    %36 = arith.truncf %35 : vector<2x32xf32> to vector<2x32xbf16>
    %c0_23 = arith.constant 0 : index
    %c96 = arith.constant 96 : index
    %37 = vector.load %arg4[%c0_23, %c96] : memref<2x128xbf16, #tpu.memory_space<vmem>>, vector<2x32xbf16>
    tpu.vector_store %arg4[%c0_23, %c96], %36 {strides = array<i32>} : memref<2x128xbf16, #tpu.memory_space<vmem>>, vector<2x32xbf16>,
    return
  }
  func.func @transform_0(%arg0: i32) -> (i32, i32) {
    %c0_i32 = arith.constant 0 : i32
    %c0_i32_0 = arith.constant 0 : i32
    return %arg0, %c0_i32 : i32, i32
  }
  func.func @transform_1(%arg0: i32) -> (i32, i32, i32) {
    %c0_i32 = arith.constant 0 : i32
    %c0_i32_0 = arith.constant 0 : i32
    %c0_i32_1 = arith.constant 0 : i32
    %c0_i32_2 = arith.constant 0 : i32
    return %c0_i32, %c0_i32_0, %c0_i32_1 : i32, i32, i32
  }
  func.func @transform_2(%arg0: i32) -> (i32, i32) {
    %c0_i32 = arith.constant 0 : i32
    %c0_i32_0 = arith.constant 0 : i32
    %c0_i32_1 = arith.constant 0 : i32
    return %c0_i32, %c0_i32_0 : i32, i32
  }
  func.func @transform_3(%arg0: i32) -> (i32, i32) {
    %c0_i32 = arith.constant 0 : i32
    %c0_i32_0 = arith.constant 0 : i32
    return %arg0, %c0_i32 : i32, i32
  }
}

module attributes {stable_mosaic.version = 11 : i64} {
  func.func @_convt_relu_kernel(%arg0: i32, %arg1: memref<8x288xbf16, #tpu.memory_space<vmem>>, %arg2: memref<4x288x16xbf16, #tpu.memory_space<vmem>>, %arg3: memref<1x16xf32, #tpu.memory_space<vmem>>, %arg4: memref<8x64xbf16, #tpu.memory_space<vmem>>) attributes {dimension_semantics = [#tpu.dimension_semantics<parallel>], iteration_bounds = array<i64: 1>, scalar_prefetch = 0 : i64, scratch_operands = 0 : i64, tpu.core_type = #tpu.core_type<tc>, window_params = [{transform_indices = @transform_0, window_bounds = array<i64: 8, 288>}, {pipeline_mode = #tpu.pipeline_mode<synchronous>, transform_indices = @transform_1, window_bounds = array<i64: 4, 288, 16>}, {pipeline_mode = #tpu.pipeline_mode<synchronous>, transform_indices = @transform_2, window_bounds = array<i64: 1, 16>}, {transform_indices = @transform_3, window_bounds = array<i64: 8, 64>}]} {
    %c0 = arith.constant 0 : index
    %c0_0 = arith.constant 0 : index
    %0 = vector.load %arg1[%c0, %c0_0] : memref<8x288xbf16, #tpu.memory_space<vmem>>, vector<8x288xbf16>
    %c0_1 = arith.constant 0 : index
    %c0_2 = arith.constant 0 : index
    %1 = vector.load %arg3[%c0_1, %c0_2] : memref<1x16xf32, #tpu.memory_space<vmem>>, vector<1x16xf32>
    %c0_3 = arith.constant 0 : index
    %c0_4 = arith.constant 0 : index
    %c0_5 = arith.constant 0 : index
    %2 = vector.load %arg2[%c0_3, %c0_4, %c0_5] : memref<4x288x16xbf16, #tpu.memory_space<vmem>>, vector<1x288x16xbf16>
    %3 = vector.shape_cast %2 : vector<1x288x16xbf16> to vector<288x16xbf16>
    %cst = arith.constant dense<0.000000e+00> : vector<8x16xf32>
    %4 = tpu.matmul %0, %3, %cst {dimension_numbers = #tpu.dot_dimension_numbers<[1], [0], [0], [1], [0, 0, 1, 1], [], []>} : vector<8x288xbf16>, vector<288x16xbf16>, vector<8x16xf32> -> vector<8x16xf32>
    %5 = vector.broadcast %1 : vector<1x16xf32> to vector<8x16xf32>
    %6 = arith.addf %4, %5 : vector<8x16xf32>
    %cst_6 = arith.constant 0.000000e+00 : f32
    %7 = vector.broadcast %cst_6 : f32 to vector<8x16xf32>
    %8 = arith.maximumf %6, %7 : vector<8x16xf32>
    %9 = arith.truncf %8 : vector<8x16xf32> to vector<8x16xbf16>
    %c0_7 = arith.constant 0 : index
    %c0_8 = arith.constant 0 : index
    %10 = vector.load %arg4[%c0_7, %c0_8] : memref<8x64xbf16, #tpu.memory_space<vmem>>, vector<8x16xbf16>
    tpu.vector_store %arg4[%c0_7, %c0_8], %9 {strides = array<i32>} : memref<8x64xbf16, #tpu.memory_space<vmem>>, vector<8x16xbf16>,
    %c1 = arith.constant 1 : index
    %c0_9 = arith.constant 0 : index
    %c0_10 = arith.constant 0 : index
    %11 = vector.load %arg2[%c1, %c0_9, %c0_10] : memref<4x288x16xbf16, #tpu.memory_space<vmem>>, vector<1x288x16xbf16>
    %12 = vector.shape_cast %11 : vector<1x288x16xbf16> to vector<288x16xbf16>
    %cst_11 = arith.constant dense<0.000000e+00> : vector<8x16xf32>
    %13 = tpu.matmul %0, %12, %cst_11 {dimension_numbers = #tpu.dot_dimension_numbers<[1], [0], [0], [1], [0, 0, 1, 1], [], []>} : vector<8x288xbf16>, vector<288x16xbf16>, vector<8x16xf32> -> vector<8x16xf32>
    %14 = vector.broadcast %1 : vector<1x16xf32> to vector<8x16xf32>
    %15 = arith.addf %13, %14 : vector<8x16xf32>
    %cst_12 = arith.constant 0.000000e+00 : f32
    %16 = vector.broadcast %cst_12 : f32 to vector<8x16xf32>
    %17 = arith.maximumf %15, %16 : vector<8x16xf32>
    %18 = arith.truncf %17 : vector<8x16xf32> to vector<8x16xbf16>
    %c0_13 = arith.constant 0 : index
    %c16 = arith.constant 16 : index
    %19 = vector.load %arg4[%c0_13, %c16] : memref<8x64xbf16, #tpu.memory_space<vmem>>, vector<8x16xbf16>
    tpu.vector_store %arg4[%c0_13, %c16], %18 {strides = array<i32>} : memref<8x64xbf16, #tpu.memory_space<vmem>>, vector<8x16xbf16>,
    %c2 = arith.constant 2 : index
    %c0_14 = arith.constant 0 : index
    %c0_15 = arith.constant 0 : index
    %20 = vector.load %arg2[%c2, %c0_14, %c0_15] : memref<4x288x16xbf16, #tpu.memory_space<vmem>>, vector<1x288x16xbf16>
    %21 = vector.shape_cast %20 : vector<1x288x16xbf16> to vector<288x16xbf16>
    %cst_16 = arith.constant dense<0.000000e+00> : vector<8x16xf32>
    %22 = tpu.matmul %0, %21, %cst_16 {dimension_numbers = #tpu.dot_dimension_numbers<[1], [0], [0], [1], [0, 0, 1, 1], [], []>} : vector<8x288xbf16>, vector<288x16xbf16>, vector<8x16xf32> -> vector<8x16xf32>
    %23 = vector.broadcast %1 : vector<1x16xf32> to vector<8x16xf32>
    %24 = arith.addf %22, %23 : vector<8x16xf32>
    %cst_17 = arith.constant 0.000000e+00 : f32
    %25 = vector.broadcast %cst_17 : f32 to vector<8x16xf32>
    %26 = arith.maximumf %24, %25 : vector<8x16xf32>
    %27 = arith.truncf %26 : vector<8x16xf32> to vector<8x16xbf16>
    %c0_18 = arith.constant 0 : index
    %c32 = arith.constant 32 : index
    %28 = vector.load %arg4[%c0_18, %c32] : memref<8x64xbf16, #tpu.memory_space<vmem>>, vector<8x16xbf16>
    tpu.vector_store %arg4[%c0_18, %c32], %27 {strides = array<i32>} : memref<8x64xbf16, #tpu.memory_space<vmem>>, vector<8x16xbf16>,
    %c3 = arith.constant 3 : index
    %c0_19 = arith.constant 0 : index
    %c0_20 = arith.constant 0 : index
    %29 = vector.load %arg2[%c3, %c0_19, %c0_20] : memref<4x288x16xbf16, #tpu.memory_space<vmem>>, vector<1x288x16xbf16>
    %30 = vector.shape_cast %29 : vector<1x288x16xbf16> to vector<288x16xbf16>
    %cst_21 = arith.constant dense<0.000000e+00> : vector<8x16xf32>
    %31 = tpu.matmul %0, %30, %cst_21 {dimension_numbers = #tpu.dot_dimension_numbers<[1], [0], [0], [1], [0, 0, 1, 1], [], []>} : vector<8x288xbf16>, vector<288x16xbf16>, vector<8x16xf32> -> vector<8x16xf32>
    %32 = vector.broadcast %1 : vector<1x16xf32> to vector<8x16xf32>
    %33 = arith.addf %31, %32 : vector<8x16xf32>
    %cst_22 = arith.constant 0.000000e+00 : f32
    %34 = vector.broadcast %cst_22 : f32 to vector<8x16xf32>
    %35 = arith.maximumf %33, %34 : vector<8x16xf32>
    %36 = arith.truncf %35 : vector<8x16xf32> to vector<8x16xbf16>
    %c0_23 = arith.constant 0 : index
    %c48 = arith.constant 48 : index
    %37 = vector.load %arg4[%c0_23, %c48] : memref<8x64xbf16, #tpu.memory_space<vmem>>, vector<8x16xbf16>
    tpu.vector_store %arg4[%c0_23, %c48], %36 {strides = array<i32>} : memref<8x64xbf16, #tpu.memory_space<vmem>>, vector<8x16xbf16>,
    return
  }
  func.func @transform_0(%arg0: i32) -> (i32, i32) {
    %c0_i32 = arith.constant 0 : i32
    %c0_i32_0 = arith.constant 0 : i32
    return %arg0, %c0_i32 : i32, i32
  }
  func.func @transform_1(%arg0: i32) -> (i32, i32, i32) {
    %c0_i32 = arith.constant 0 : i32
    %c0_i32_0 = arith.constant 0 : i32
    %c0_i32_1 = arith.constant 0 : i32
    %c0_i32_2 = arith.constant 0 : i32
    return %c0_i32, %c0_i32_0, %c0_i32_1 : i32, i32, i32
  }
  func.func @transform_2(%arg0: i32) -> (i32, i32) {
    %c0_i32 = arith.constant 0 : i32
    %c0_i32_0 = arith.constant 0 : i32
    %c0_i32_1 = arith.constant 0 : i32
    return %c0_i32, %c0_i32_0 : i32, i32
  }
  func.func @transform_3(%arg0: i32) -> (i32, i32) {
    %c0_i32 = arith.constant 0 : i32
    %c0_i32_0 = arith.constant 0 : i32
    return %arg0, %c0_i32 : i32, i32
  }
}

module attributes {stable_mosaic.version = 11 : i64} {
  func.func @_convt_relu_kernel(%arg0: i32, %arg1: memref<32x144xbf16, #tpu.memory_space<vmem>>, %arg2: memref<4x144x8xbf16, #tpu.memory_space<vmem>>, %arg3: memref<1x8xf32, #tpu.memory_space<vmem>>, %arg4: memref<32x32xbf16, #tpu.memory_space<vmem>>) attributes {dimension_semantics = [#tpu.dimension_semantics<parallel>], iteration_bounds = array<i64: 1>, scalar_prefetch = 0 : i64, scratch_operands = 0 : i64, tpu.core_type = #tpu.core_type<tc>, window_params = [{transform_indices = @transform_0, window_bounds = array<i64: 32, 144>}, {pipeline_mode = #tpu.pipeline_mode<synchronous>, transform_indices = @transform_1, window_bounds = array<i64: 4, 144, 8>}, {pipeline_mode = #tpu.pipeline_mode<synchronous>, transform_indices = @transform_2, window_bounds = array<i64: 1, 8>}, {transform_indices = @transform_3, window_bounds = array<i64: 32, 32>}]} {
    %c0 = arith.constant 0 : index
    %c0_0 = arith.constant 0 : index
    %0 = vector.load %arg1[%c0, %c0_0] : memref<32x144xbf16, #tpu.memory_space<vmem>>, vector<32x144xbf16>
    %c0_1 = arith.constant 0 : index
    %c0_2 = arith.constant 0 : index
    %1 = vector.load %arg3[%c0_1, %c0_2] : memref<1x8xf32, #tpu.memory_space<vmem>>, vector<1x8xf32>
    %c0_3 = arith.constant 0 : index
    %c0_4 = arith.constant 0 : index
    %c0_5 = arith.constant 0 : index
    %2 = vector.load %arg2[%c0_3, %c0_4, %c0_5] : memref<4x144x8xbf16, #tpu.memory_space<vmem>>, vector<1x144x8xbf16>
    %3 = vector.shape_cast %2 : vector<1x144x8xbf16> to vector<144x8xbf16>
    %cst = arith.constant dense<0.000000e+00> : vector<32x8xf32>
    %4 = tpu.matmul %0, %3, %cst {dimension_numbers = #tpu.dot_dimension_numbers<[1], [0], [0], [1], [0, 0, 1, 1], [], []>} : vector<32x144xbf16>, vector<144x8xbf16>, vector<32x8xf32> -> vector<32x8xf32>
    %5 = vector.broadcast %1 : vector<1x8xf32> to vector<32x8xf32>
    %6 = arith.addf %4, %5 : vector<32x8xf32>
    %cst_6 = arith.constant 0.000000e+00 : f32
    %7 = vector.broadcast %cst_6 : f32 to vector<32x8xf32>
    %8 = arith.maximumf %6, %7 : vector<32x8xf32>
    %9 = arith.truncf %8 : vector<32x8xf32> to vector<32x8xbf16>
    %c0_7 = arith.constant 0 : index
    %c0_8 = arith.constant 0 : index
    %10 = vector.load %arg4[%c0_7, %c0_8] : memref<32x32xbf16, #tpu.memory_space<vmem>>, vector<32x8xbf16>
    tpu.vector_store %arg4[%c0_7, %c0_8], %9 {strides = array<i32>} : memref<32x32xbf16, #tpu.memory_space<vmem>>, vector<32x8xbf16>,
    %c1 = arith.constant 1 : index
    %c0_9 = arith.constant 0 : index
    %c0_10 = arith.constant 0 : index
    %11 = vector.load %arg2[%c1, %c0_9, %c0_10] : memref<4x144x8xbf16, #tpu.memory_space<vmem>>, vector<1x144x8xbf16>
    %12 = vector.shape_cast %11 : vector<1x144x8xbf16> to vector<144x8xbf16>
    %cst_11 = arith.constant dense<0.000000e+00> : vector<32x8xf32>
    %13 = tpu.matmul %0, %12, %cst_11 {dimension_numbers = #tpu.dot_dimension_numbers<[1], [0], [0], [1], [0, 0, 1, 1], [], []>} : vector<32x144xbf16>, vector<144x8xbf16>, vector<32x8xf32> -> vector<32x8xf32>
    %14 = vector.broadcast %1 : vector<1x8xf32> to vector<32x8xf32>
    %15 = arith.addf %13, %14 : vector<32x8xf32>
    %cst_12 = arith.constant 0.000000e+00 : f32
    %16 = vector.broadcast %cst_12 : f32 to vector<32x8xf32>
    %17 = arith.maximumf %15, %16 : vector<32x8xf32>
    %18 = arith.truncf %17 : vector<32x8xf32> to vector<32x8xbf16>
    %c0_13 = arith.constant 0 : index
    %c8 = arith.constant 8 : index
    %19 = vector.load %arg4[%c0_13, %c8] : memref<32x32xbf16, #tpu.memory_space<vmem>>, vector<32x8xbf16>
    tpu.vector_store %arg4[%c0_13, %c8], %18 {strides = array<i32>} : memref<32x32xbf16, #tpu.memory_space<vmem>>, vector<32x8xbf16>,
    %c2 = arith.constant 2 : index
    %c0_14 = arith.constant 0 : index
    %c0_15 = arith.constant 0 : index
    %20 = vector.load %arg2[%c2, %c0_14, %c0_15] : memref<4x144x8xbf16, #tpu.memory_space<vmem>>, vector<1x144x8xbf16>
    %21 = vector.shape_cast %20 : vector<1x144x8xbf16> to vector<144x8xbf16>
    %cst_16 = arith.constant dense<0.000000e+00> : vector<32x8xf32>
    %22 = tpu.matmul %0, %21, %cst_16 {dimension_numbers = #tpu.dot_dimension_numbers<[1], [0], [0], [1], [0, 0, 1, 1], [], []>} : vector<32x144xbf16>, vector<144x8xbf16>, vector<32x8xf32> -> vector<32x8xf32>
    %23 = vector.broadcast %1 : vector<1x8xf32> to vector<32x8xf32>
    %24 = arith.addf %22, %23 : vector<32x8xf32>
    %cst_17 = arith.constant 0.000000e+00 : f32
    %25 = vector.broadcast %cst_17 : f32 to vector<32x8xf32>
    %26 = arith.maximumf %24, %25 : vector<32x8xf32>
    %27 = arith.truncf %26 : vector<32x8xf32> to vector<32x8xbf16>
    %c0_18 = arith.constant 0 : index
    %c16 = arith.constant 16 : index
    %28 = vector.load %arg4[%c0_18, %c16] : memref<32x32xbf16, #tpu.memory_space<vmem>>, vector<32x8xbf16>
    tpu.vector_store %arg4[%c0_18, %c16], %27 {strides = array<i32>} : memref<32x32xbf16, #tpu.memory_space<vmem>>, vector<32x8xbf16>,
    %c3 = arith.constant 3 : index
    %c0_19 = arith.constant 0 : index
    %c0_20 = arith.constant 0 : index
    %29 = vector.load %arg2[%c3, %c0_19, %c0_20] : memref<4x144x8xbf16, #tpu.memory_space<vmem>>, vector<1x144x8xbf16>
    %30 = vector.shape_cast %29 : vector<1x144x8xbf16> to vector<144x8xbf16>
    %cst_21 = arith.constant dense<0.000000e+00> : vector<32x8xf32>
    %31 = tpu.matmul %0, %30, %cst_21 {dimension_numbers = #tpu.dot_dimension_numbers<[1], [0], [0], [1], [0, 0, 1, 1], [], []>} : vector<32x144xbf16>, vector<144x8xbf16>, vector<32x8xf32> -> vector<32x8xf32>
    %32 = vector.broadcast %1 : vector<1x8xf32> to vector<32x8xf32>
    %33 = arith.addf %31, %32 : vector<32x8xf32>
    %cst_22 = arith.constant 0.000000e+00 : f32
    %34 = vector.broadcast %cst_22 : f32 to vector<32x8xf32>
    %35 = arith.maximumf %33, %34 : vector<32x8xf32>
    %36 = arith.truncf %35 : vector<32x8xf32> to vector<32x8xbf16>
    %c0_23 = arith.constant 0 : index
    %c24 = arith.constant 24 : index
    %37 = vector.load %arg4[%c0_23, %c24] : memref<32x32xbf16, #tpu.memory_space<vmem>>, vector<32x8xbf16>
    tpu.vector_store %arg4[%c0_23, %c24], %36 {strides = array<i32>} : memref<32x32xbf16, #tpu.memory_space<vmem>>, vector<32x8xbf16>,
    return
  }
  func.func @transform_0(%arg0: i32) -> (i32, i32) {
    %c0_i32 = arith.constant 0 : i32
    %c0_i32_0 = arith.constant 0 : i32
    return %arg0, %c0_i32 : i32, i32
  }
  func.func @transform_1(%arg0: i32) -> (i32, i32, i32) {
    %c0_i32 = arith.constant 0 : i32
    %c0_i32_0 = arith.constant 0 : i32
    %c0_i32_1 = arith.constant 0 : i32
    %c0_i32_2 = arith.constant 0 : i32
    return %c0_i32, %c0_i32_0, %c0_i32_1 : i32, i32, i32
  }
  func.func @transform_2(%arg0: i32) -> (i32, i32) {
    %c0_i32 = arith.constant 0 : i32
    %c0_i32_0 = arith.constant 0 : i32
    %c0_i32_1 = arith.constant 0 : i32
    return %c0_i32, %c0_i32_0 : i32, i32
  }
  func.func @transform_3(%arg0: i32) -> (i32, i32) {
    %c0_i32 = arith.constant 0 : i32
    %c0_i32_0 = arith.constant 0 : i32
    return %arg0, %c0_i32 : i32, i32
  }
}

module attributes {stable_mosaic.version = 11 : i64} {
  func.func @_convt_relu_kernel(%arg0: i32, %arg1: memref<128x72xbf16, #tpu.memory_space<vmem>>, %arg2: memref<4x72x3xbf16, #tpu.memory_space<vmem>>, %arg3: memref<1x3xf32, #tpu.memory_space<vmem>>, %arg4: memref<128x12xf32, #tpu.memory_space<vmem>>) attributes {dimension_semantics = [#tpu.dimension_semantics<parallel>], iteration_bounds = array<i64: 1>, scalar_prefetch = 0 : i64, scratch_operands = 0 : i64, tpu.core_type = #tpu.core_type<tc>, window_params = [{transform_indices = @transform_0, window_bounds = array<i64: 128, 72>}, {pipeline_mode = #tpu.pipeline_mode<synchronous>, transform_indices = @transform_1, window_bounds = array<i64: 4, 72, 3>}, {pipeline_mode = #tpu.pipeline_mode<synchronous>, transform_indices = @transform_2, window_bounds = array<i64: 1, 3>}, {transform_indices = @transform_3, window_bounds = array<i64: 128, 12>}]} {
    %c0 = arith.constant 0 : index
    %c0_0 = arith.constant 0 : index
    %0 = vector.load %arg1[%c0, %c0_0] : memref<128x72xbf16, #tpu.memory_space<vmem>>, vector<128x72xbf16>
    %c0_1 = arith.constant 0 : index
    %c0_2 = arith.constant 0 : index
    %1 = vector.load %arg3[%c0_1, %c0_2] : memref<1x3xf32, #tpu.memory_space<vmem>>, vector<1x3xf32>
    %c0_3 = arith.constant 0 : index
    %c0_4 = arith.constant 0 : index
    %c0_5 = arith.constant 0 : index
    %2 = vector.load %arg2[%c0_3, %c0_4, %c0_5] : memref<4x72x3xbf16, #tpu.memory_space<vmem>>, vector<1x72x3xbf16>
    %3 = vector.shape_cast %2 : vector<1x72x3xbf16> to vector<72x3xbf16>
    %cst = arith.constant dense<0.000000e+00> : vector<128x3xf32>
    %4 = tpu.matmul %0, %3, %cst {dimension_numbers = #tpu.dot_dimension_numbers<[1], [0], [0], [1], [0, 0, 1, 1], [], []>} : vector<128x72xbf16>, vector<72x3xbf16>, vector<128x3xf32> -> vector<128x3xf32>
    %5 = vector.broadcast %1 : vector<1x3xf32> to vector<128x3xf32>
    %6 = arith.addf %4, %5 : vector<128x3xf32>
    %cst_6 = arith.constant 0.000000e+00 : f32
    %7 = vector.broadcast %cst_6 : f32 to vector<128x3xf32>
    %8 = arith.maximumf %6, %7 : vector<128x3xf32>
    %9 = arith.negf %8 : vector<128x3xf32>
    %10 = math.exp %9 : vector<128x3xf32>
    %cst_7 = arith.constant 1.000000e+00 : f32
    %11 = vector.broadcast %cst_7 : f32 to vector<128x3xf32>
    %12 = arith.addf %11, %10 : vector<128x3xf32>
    %13 = arith.divf %11, %12 : vector<128x3xf32>
    %c0_8 = arith.constant 0 : index
    %c0_9 = arith.constant 0 : index
    %14 = vector.load %arg4[%c0_8, %c0_9] : memref<128x12xf32, #tpu.memory_space<vmem>>, vector<128x3xf32>
    tpu.vector_store %arg4[%c0_8, %c0_9], %13 {strides = array<i32>} : memref<128x12xf32, #tpu.memory_space<vmem>>, vector<128x3xf32>,
    %c1 = arith.constant 1 : index
    %c0_10 = arith.constant 0 : index
    %c0_11 = arith.constant 0 : index
    %15 = vector.load %arg2[%c1, %c0_10, %c0_11] : memref<4x72x3xbf16, #tpu.memory_space<vmem>>, vector<1x72x3xbf16>
    %16 = vector.shape_cast %15 : vector<1x72x3xbf16> to vector<72x3xbf16>
    %cst_12 = arith.constant dense<0.000000e+00> : vector<128x3xf32>
    %17 = tpu.matmul %0, %16, %cst_12 {dimension_numbers = #tpu.dot_dimension_numbers<[1], [0], [0], [1], [0, 0, 1, 1], [], []>} : vector<128x72xbf16>, vector<72x3xbf16>, vector<128x3xf32> -> vector<128x3xf32>
    %18 = vector.broadcast %1 : vector<1x3xf32> to vector<128x3xf32>
    %19 = arith.addf %17, %18 : vector<128x3xf32>
    %cst_13 = arith.constant 0.000000e+00 : f32
    %20 = vector.broadcast %cst_13 : f32 to vector<128x3xf32>
    %21 = arith.maximumf %19, %20 : vector<128x3xf32>
    %22 = arith.negf %21 : vector<128x3xf32>
    %23 = math.exp %22 : vector<128x3xf32>
    %cst_14 = arith.constant 1.000000e+00 : f32
    %24 = vector.broadcast %cst_14 : f32 to vector<128x3xf32>
    %25 = arith.addf %24, %23 : vector<128x3xf32>
    %26 = arith.divf %24, %25 : vector<128x3xf32>
    %c0_15 = arith.constant 0 : index
    %c3 = arith.constant 3 : index
    %27 = vector.load %arg4[%c0_15, %c3] : memref<128x12xf32, #tpu.memory_space<vmem>>, vector<128x3xf32>
    tpu.vector_store %arg4[%c0_15, %c3], %26 {strides = array<i32>} : memref<128x12xf32, #tpu.memory_space<vmem>>, vector<128x3xf32>,
    %c2 = arith.constant 2 : index
    %c0_16 = arith.constant 0 : index
    %c0_17 = arith.constant 0 : index
    %28 = vector.load %arg2[%c2, %c0_16, %c0_17] : memref<4x72x3xbf16, #tpu.memory_space<vmem>>, vector<1x72x3xbf16>
    %29 = vector.shape_cast %28 : vector<1x72x3xbf16> to vector<72x3xbf16>
    %cst_18 = arith.constant dense<0.000000e+00> : vector<128x3xf32>
    %30 = tpu.matmul %0, %29, %cst_18 {dimension_numbers = #tpu.dot_dimension_numbers<[1], [0], [0], [1], [0, 0, 1, 1], [], []>} : vector<128x72xbf16>, vector<72x3xbf16>, vector<128x3xf32> -> vector<128x3xf32>
    %31 = vector.broadcast %1 : vector<1x3xf32> to vector<128x3xf32>
    %32 = arith.addf %30, %31 : vector<128x3xf32>
    %cst_19 = arith.constant 0.000000e+00 : f32
    %33 = vector.broadcast %cst_19 : f32 to vector<128x3xf32>
    %34 = arith.maximumf %32, %33 : vector<128x3xf32>
    %35 = arith.negf %34 : vector<128x3xf32>
    %36 = math.exp %35 : vector<128x3xf32>
    %cst_20 = arith.constant 1.000000e+00 : f32
    %37 = vector.broadcast %cst_20 : f32 to vector<128x3xf32>
    %38 = arith.addf %37, %36 : vector<128x3xf32>
    %39 = arith.divf %37, %38 : vector<128x3xf32>
    %c0_21 = arith.constant 0 : index
    %c6 = arith.constant 6 : index
    %40 = vector.load %arg4[%c0_21, %c6] : memref<128x12xf32, #tpu.memory_space<vmem>>, vector<128x3xf32>
    tpu.vector_store %arg4[%c0_21, %c6], %39 {strides = array<i32>} : memref<128x12xf32, #tpu.memory_space<vmem>>, vector<128x3xf32>,
    %c3_22 = arith.constant 3 : index
    %c0_23 = arith.constant 0 : index
    %c0_24 = arith.constant 0 : index
    %41 = vector.load %arg2[%c3_22, %c0_23, %c0_24] : memref<4x72x3xbf16, #tpu.memory_space<vmem>>, vector<1x72x3xbf16>
    %42 = vector.shape_cast %41 : vector<1x72x3xbf16> to vector<72x3xbf16>
    %cst_25 = arith.constant dense<0.000000e+00> : vector<128x3xf32>
    %43 = tpu.matmul %0, %42, %cst_25 {dimension_numbers = #tpu.dot_dimension_numbers<[1], [0], [0], [1], [0, 0, 1, 1], [], []>} : vector<128x72xbf16>, vector<72x3xbf16>, vector<128x3xf32> -> vector<128x3xf32>
    %44 = vector.broadcast %1 : vector<1x3xf32> to vector<128x3xf32>
    %45 = arith.addf %43, %44 : vector<128x3xf32>
    %cst_26 = arith.constant 0.000000e+00 : f32
    %46 = vector.broadcast %cst_26 : f32 to vector<128x3xf32>
    %47 = arith.maximumf %45, %46 : vector<128x3xf32>
    %48 = arith.negf %47 : vector<128x3xf32>
    %49 = math.exp %48 : vector<128x3xf32>
    %cst_27 = arith.constant 1.000000e+00 : f32
    %50 = vector.broadcast %cst_27 : f32 to vector<128x3xf32>
    %51 = arith.addf %50, %49 : vector<128x3xf32>
    %52 = arith.divf %50, %51 : vector<128x3xf32>
    %c0_28 = arith.constant 0 : index
    %c9 = arith.constant 9 : index
    %53 = vector.load %arg4[%c0_28, %c9] : memref<128x12xf32, #tpu.memory_space<vmem>>, vector<128x3xf32>
    tpu.vector_store %arg4[%c0_28, %c9], %52 {strides = array<i32>} : memref<128x12xf32, #tpu.memory_space<vmem>>, vector<128x3xf32>,
    return
  }
  func.func @transform_0(%arg0: i32) -> (i32, i32) {
    %c0_i32 = arith.constant 0 : i32
    %c0_i32_0 = arith.constant 0 : i32
    return %arg0, %c0_i32 : i32, i32
  }
  func.func @transform_1(%arg0: i32) -> (i32, i32, i32) {
    %c0_i32 = arith.constant 0 : i32
    %c0_i32_0 = arith.constant 0 : i32
    %c0_i32_1 = arith.constant 0 : i32
    %c0_i32_2 = arith.constant 0 : i32
    return %c0_i32, %c0_i32_0, %c0_i32_1 : i32, i32, i32
  }
  func.func @transform_2(%arg0: i32) -> (i32, i32) {
    %c0_i32 = arith.constant 0 : i32
    %c0_i32_0 = arith.constant 0 : i32
    %c0_i32_1 = arith.constant 0 : i32
    return %c0_i32, %c0_i32_0 : i32, i32
  }
  func.func @transform_3(%arg0: i32) -> (i32, i32) {
    %c0_i32 = arith.constant 0 : i32
    %c0_i32_0 = arith.constant 0 : i32
    return %arg0, %c0_i32 : i32, i32
  }
}

</mosaic_0001>

<llo_original>
// kernel: _lambda_.8
$region0: #{_lambda_.8}
  #allocation0 [shape = 'u32[]', space=smem, size = 0x4, offset = 0x4, fixed_abs, tag = 'smem constant byte address 0x4 - core index']
  #allocation1 [shape = 'u32[144,128]{1,0:T(1,128)}', space=vmem, size = 0x12000, scoped, tag = 'internal scratch']
  %s0 = inlined_call_operand.vmem [shape: bf16[128,75], index: 0, kind: input, shape index: {}]
  %s1 = inlined_call_operand.vmem [shape: bf16[128,75], index: 1, kind: input, shape index: {}]
  %s2 = inlined_call_operand.vmem [shape: bf16[128,75], index: 2, kind: input, shape index: {}]
  %s3 = inlined_call_operand.vmem [shape: bf16[128,75], index: 3, kind: input, shape index: {}]
  %s4 = inlined_call_operand.vmem [shape: bf16[75,8], index: 4, kind: input, shape index: {}]
  %s5 = inlined_call_operand.vmem [shape: f32[1,8], index: 5, kind: input, shape index: {}]
  %s6 = inlined_call_operand.vmem [shape: bf16[128,8], index: 6, kind: output, shape index: {}]
  %s7 = sld [smem:[#allocation0]]
  $region34: #{_lambda_.8} parent=0
    _
  %s9 = ssub.s32 1, %s7
  %s10 = scalar_select 0, %s9, %s7
  // Predicated region
  $region2: #{_lambda_.8} parent=0 // pred_check
    _
  $region3: #{_lambda_.8} parent=0 // pred_check_branch
    %12 = sbr.rel (0) target = $region5
  $region4: #{_lambda_.8} parent=0 // pred_region
    _
  $region5: #{_lambda_.8} parent=0 // pred_fallthru
    _
  // Predicated region
  $region6: #{_lambda_.8} parent=0 // pred_check
    _
  $region7: #{_lambda_.8} parent=0 // pred_check_branch
    %14 = sbr.rel (0) target = $region9
  $region8: #{_lambda_.8} parent=0 // pred_region
    _
  $region9: #{_lambda_.8} parent=0 // pred_fallthru
    _
  // Predicated region
  $region10: #{_lambda_.8} parent=0 // pred_check
    _
  $region11: #{_lambda_.8} parent=0 // pred_check_branch
    %16 = sbr.rel (0) target = $region13
  $region12: #{_lambda_.8} parent=0 // pred_region
    _
  $region13: #{_lambda_.8} parent=0 // pred_fallthru
    _
  // Predicated region
  $region14: #{_lambda_.8} parent=0 // pred_check
    _
  $region15: #{_lambda_.8} parent=0 // pred_check_branch
    %18 = sbr.rel (0) target = $region17
  $region16: #{_lambda_.8} parent=0 // pred_region
    _
  $region17: #{_lambda_.8} parent=0 // pred_fallthru
    _
  // Predicated region
  $region18: #{_lambda_.8} parent=0 // pred_check
    _
  $region19: #{_lambda_.8} parent=0 // pred_check_branch
    %20 = sbr.rel (0) target = $region21
  $region20: #{_lambda_.8} parent=0 // pred_region
    _
  $region21: #{_lambda_.8} parent=0 // pred_fallthru
    _
  // Predicated region
  $region22: #{_lambda_.8} parent=0 // pred_check
    _
  $region23: #{_lambda_.8} parent=0 // pred_check_branch
    %22 = sbr.rel (0) target = $region25
  $region24: #{_lambda_.8} parent=0 // pred_region
    _
  $region25: #{_lambda_.8} parent=0 // pred_fallthru
    _
  %v24 = vld [vmem:[%s4] sm:$0xf]
  %v25 = vld [vmem:[%s4 + $0x4] sm:$0xf]
  %v26 = vld [vmem:[%s4 + $0x8] sm:$0xf]
  %v27 = vld [vmem:[%s4 + $0xc] sm:$0xf]
  %v28 = vld [vmem:[%s4 + $0x10] sm:$0xf]
  %v29 = vld [vmem:[%s4 + $0x14] sm:$0xf]
  %v30 = vld [vmem:[%s4 + $0x18] sm:$0xf]
  %v31 = vld [vmem:[%s4 + $0x1c] sm:$0xf]
  %v32 = vld [vmem:[%s4 + $0x20] sm:$0xf]
  %v33 = vld [vmem:[%s4 + $0x24] sm:$0x3]
  %v34 = vld [vmem:[%s5] sm:$0x1]
  %v35 = vld [vmem:[%s0] sm:$0xf]
  %v36 = vld [vmem:[%s0 + $0x4] sm:$0xf]
  %v37 = vld [vmem:[%s0 + $0x8] sm:$0xf]
  %v38 = vld [vmem:[%s0 + $0xc] sm:$0xf]
  %v39 = vld [vmem:[%s0 + $0x10] sm:$0xf]
  %v40 = vld [vmem:[%s0 + $0x14] sm:$0xf]
  %v41 = vld [vmem:[%s0 + $0x18] sm:$0xf]
  %v42 = vld [vmem:[%s0 + $0x1c] sm:$0xf]
  %v43 = vld [vmem:[%s0 + $0x20] sm:$0xf]
  %v44 = vld [vmem:[%s0 + $0x24] sm:$0xf]
  %v45 = vld [vmem:[%s0 + $0x28] sm:$0xf]
  %v46 = vld [vmem:[%s0 + $0x2c] sm:$0xf]
  %v47 = vld [vmem:[%s0 + $0x30] sm:$0xf]
  %v48 = vld [vmem:[%s0 + $0x34] sm:$0xf]
  %v49 = vld [vmem:[%s0 + $0x38] sm:$0xf]
  %v50 = vld [vmem:[%s0 + $0x3c] sm:$0xf]
  %v52 = vlaneseq
  %v53 = vshrl.u32 %v52, 7
  %v54 = vsub.s32 0, %v53
  %v55 = vrot.slane %v34, %v54
  %v73 = vunpack.c.l.b16 %v35
  %v74 = vunpack.c.l.b16 %v36
  %v75 = vunpack.c.l.b16 %v37
  %v76 = vunpack.c.l.b16 %v38
  %v77 = vunpack.c.l.b16 %v39
  %v78 = vunpack.c.l.b16 %v40
  %v79 = vunpack.c.l.b16 %v41
  %v80 = vunpack.c.l.b16 %v42
  %v81 = vunpack.c.l.b16 %v43
  %v82 = vunpack.c.l.b16 %v44
  %v83 = vunpack.c.l.b16 %v45
  %v84 = vunpack.c.l.b16 %v46
  %v85 = vunpack.c.l.b16 %v47
  %v86 = vunpack.c.l.b16 %v48
  %v87 = vunpack.c.l.b16 %v49
  %v88 = vunpack.c.l.b16 %v50
  %v89 = vpack.c.b16 %v74, %v73
  %v90 = vpack.c.b16 %v76, %v75
  %v91 = vpack.c.b16 %v78, %v77
  %v92 = vpack.c.b16 %v80, %v79
  %v93 = vpack.c.b16 %v82, %v81
  %v94 = vpack.c.b16 %v84, %v83
  %v95 = vpack.c.b16 %v86, %v85
  %v96 = vpack.c.b16 %v88, %v87
  %v107 = vunpack.c.l.b16 %v24
  %v108 = vunpack.c.l.b16 %v25
  %v109 = vunpack.c.l.b16 %v26
  %v110 = vunpack.c.l.b16 %v27
  %v111 = vunpack.c.l.b16 %v28
  %v112 = vunpack.c.l.b16 %v29
  %v113 = vunpack.c.l.b16 %v30
  %v114 = vunpack.c.l.b16 %v31
  %v115 = vunpack.c.l.b16 %v32
  %v116 = vunpack.c.l.b16 %v33
  %v117 = vpack.c.b16 %v108, %v107
  %v118 = vpack.c.b16 %v110, %v109
  %v119 = vpack.c.b16 %v112, %v111
  %v120 = vpack.c.b16 %v114, %v113
  %v121 = vpack.c.b16 %v116, %v115
  %vm126 = vcmask 613376
  %v128 = vsel %vm126, %v89, 0
  %v131 = vsel %vm126, %v90, 0
  %v134 = vsel %vm126, %v91, 0
  %v137 = vsel %vm126, %v92, 0
  %v140 = vsel %vm126, %v93, 0
  %v143 = vsel %vm126, %v94, 0
  %v146 = vsel %vm126, %v95, 0
  %v149 = vsel %vm126, %v96, 0
  %vm151 = vcmask 1044480
  %vm152 = vcmask 1045504
  %v153 = vsel %vm151, 4294967295, 65535
  %v154 = vsel %vm152, %v153, 0
  %v156 = vand.u32 %v121, %v154
  %158 = vmatprep.subr.bf16.mxu0 0
  %159 = vmatpush1.bf16.msra.mxu0 %v117
  %160 = vmatprep.subr.bf16.mxu0 0
  %161 = vmatpush1.bf16.msra.mxu0 %v118
  %162 = vmatprep.subr.bf16.mxu0 0
  %163 = vmatpush1.bf16.msra.mxu0 %v119
  %164 = vmatprep.subr.bf16.mxu0 0
  %165 = vmatpush1.bf16.msra.mxu0 %v120
  %166 = vmatprep.subr.bf16.mxu0 0
  %167 = vmatpush1.bf16.msra.mxu0 %v156
  %168 = vmatprep.subr.bf16.mxu0 0
  %169 = vmatpush1.bf16.msra.mxu0 0
  %170 = vmatprep.subr.bf16.mxu0 0
  %171 = vmatpush1.bf16.msra.mxu0 0
  %172 = vmatprep.subr.bf16.mxu0 0
  %173 = vmatpush1.bf16.msra.mxu0 0
  %174 = vmatprep.subr.bf16.mxu0 0
  %175 = vmatpush1.bf16.msra.mxu0 0
  %176 = vmatprep.subr.bf16.mxu0 0
  %177 = vmatpush1.bf16.msra.mxu0 0
  %178 = vmatprep.subr.bf16.mxu0 0
  %179 = vmatpush1.bf16.msra.mxu0 0
  %180 = vmatprep.subr.bf16.mxu0 0
  %181 = vmatpush1.bf16.msra.mxu0 0
  %182 = vmatprep.subr.bf16.mxu0 0
  %183 = vmatpush1.bf16.msra.mxu0 0
  %184 = vmatprep.subr.bf16.mxu0 0
  %185 = vmatpush1.bf16.msra.mxu0 0
  %186 = vmatprep.subr.bf16.mxu0 0
  %187 = vmatpush1.bf16.msra.mxu0 0
  %188 = vmatprep.subr.bf16.mxu0 0
  %189 = vmatpush1.bf16.msra.mxu0 0
  %190 = vmatprep.mubr.bf16.mxu0 0
  %191 = vmatmul.mubr.bf16.gmra.mrb[0].mxu0 %v128
  %v192 = vpop.f32.mrb[0].mxu0
  %v193 = vadd.f32 %v55, %v192
  %v194 = vpop.f32.mrb[0].mxu0
  %v195 = vpop.f32.mrb[0].mxu0
  %v196 = vadd.f32 %v55, %v195
  %v197 = vpop.f32.mrb[0].mxu0
  %198 = vmatprep.mubr.bf16.mxu0 0
  %199 = vmatmul.mubr.bf16.gmra.mrb[0].mxu0 %v131
  %v200 = vpop.f32.mrb[0].mxu0
  %v201 = vadd.f32 %v55, %v200
  %v202 = vpop.f32.mrb[0].mxu0
  %v203 = vpop.f32.mrb[0].mxu0
  %v204 = vadd.f32 %v55, %v203
  %v205 = vpop.f32.mrb[0].mxu0
  %206 = vmatprep.mubr.bf16.mxu0 0
  %207 = vmatmul.mubr.bf16.gmra.mrb[0].mxu0 %v134
  %v208 = vpop.f32.mrb[0].mxu0
  %v209 = vadd.f32 %v55, %v208
  %v210 = vpop.f32.mrb[0].mxu0
  %v211 = vpop.f32.mrb[0].mxu0
  %v212 = vadd.f32 %v55, %v211
  %v213 = vpop.f32.mrb[0].mxu0
  %214 = vmatprep.mubr.bf16.mxu0 0
  %215 = vmatmul.mubr.bf16.gmra.mrb[0].mxu0 %v137
  %v216 = vpop.f32.mrb[0].mxu0
  %v217 = vadd.f32 %v55, %v216
  %v218 = vpop.f32.mrb[0].mxu0
  %v219 = vpop.f32.mrb[0].mxu0
  %v220 = vadd.f32 %v55, %v219
  %v221 = vpop.f32.mrb[0].mxu0
  %222 = vmatprep.mubr.bf16.mxu0 0
  %223 = vmatmul.mubr.bf16.gmra.mrb[0].mxu0 %v140
  %v224 = vpop.f32.mrb[0].mxu0
  %v225 = vadd.f32 %v55, %v224
  %v226 = vpop.f32.mrb[0].mxu0
  %v227 = vpop.f32.mrb[0].mxu0
  %v228 = vadd.f32 %v55, %v227
  %v229 = vpop.f32.mrb[0].mxu0
  %230 = vmatprep.mubr.bf16.mxu0 0
  %231 = vmatmul.mubr.bf16.gmra.mrb[0].mxu0 %v143
  %v232 = vpop.f32.mrb[0].mxu0
  %v233 = vadd.f32 %v55, %v232
  %v234 = vpop.f32.mrb[0].mxu0
  %v235 = vpop.f32.mrb[0].mxu0
  %v236 = vadd.f32 %v55, %v235
  %v237 = vpop.f32.mrb[0].mxu0
  %238 = vmatprep.mubr.bf16.mxu0 0
  %239 = vmatmul.mubr.bf16.gmra.mrb[0].mxu0 %v146
  %v240 = vpop.f32.mrb[0].mxu0
  %v241 = vadd.f32 %v55, %v240
  %v242 = vpop.f32.mrb[0].mxu0
  %v243 = vpop.f32.mrb[0].mxu0
  %v244 = vadd.f32 %v55, %v243
  %v245 = vpop.f32.mrb[0].mxu0
  %246 = vmatprep.mubr.bf16.mxu0 0
  %247 = vmatmul.mubr.bf16.gmra.mrb[0].mxu0 %v149
  %v248 = vpop.f32.mrb[0].mxu0
  %v249 = vadd.f32 %v55, %v248
  %v250 = vpop.f32.mrb[0].mxu0
  %v251 = vpop.f32.mrb[0].mxu0
  %v252 = vadd.f32 %v55, %v251
  %v253 = vpop.f32.mrb[0].mxu0
  %254 = vdwg.mxu0
  %v255 = vmax.f32 %v193, 0.0
  %v256 = vmax.f32 %v196, 0.0
  %v257 = vmax.f32 %v201, 0.0
  %v258 = vmax.f32 %v204, 0.0
  %v259 = vmax.f32 %v209, 0.0
  %v260 = vmax.f32 %v212, 0.0
  %v261 = vmax.f32 %v217, 0.0
  %v262 = vmax.f32 %v220, 0.0
  %v263 = vmax.f32 %v225, 0.0
  %v264 = vmax.f32 %v228, 0.0
  %v265 = vmax.f32 %v233, 0.0
  %v266 = vmax.f32 %v236, 0.0
  %v267 = vmax.f32 %v241, 0.0
  %v268 = vmax.f32 %v244, 0.0
  %v269 = vmax.f32 %v249, 0.0
  %v270 = vmax.f32 %v252, 0.0
  %v271 = vld [vmem:[%s1] sm:$0xf]
  %v272 = vld [vmem:[%s1 + $0x4] sm:$0xf]
  %v273 = vld [vmem:[%s1 + $0x8] sm:$0xf]
  %v274 = vld [vmem:[%s1 + $0xc] sm:$0xf]
  %v275 = vld [vmem:[%s1 + $0x10] sm:$0xf]
  %v276 = vld [vmem:[%s1 + $0x14] sm:$0xf]
  %v277 = vld [vmem:[%s1 + $0x18] sm:$0xf]
  %v278 = vld [vmem:[%s1 + $0x1c] sm:$0xf]
  %v279 = vld [vmem:[%s1 + $0x20] sm:$0xf]
  %v280 = vld [vmem:[%s1 + $0x24] sm:$0xf]
  %v281 = vld [vmem:[%s1 + $0x28] sm:$0xf]
  %v282 = vld [vmem:[%s1 + $0x2c] sm:$0xf]
  %v283 = vld [vmem:[%s1 + $0x30] sm:$0xf]
  %v284 = vld [vmem:[%s1 + $0x34] sm:$0xf]
  %v285 = vld [vmem:[%s1 + $0x38] sm:$0xf]
  %v286 = vld [vmem:[%s1 + $0x3c] sm:$0xf]
  %v303 = vunpack.c.l.b16 %v271
  %v304 = vunpack.c.l.b16 %v272
  %v305 = vunpack.c.l.b16 %v273
  %v306 = vunpack.c.l.b16 %v274
  %v307 = vunpack.c.l.b16 %v275
  %v308 = vunpack.c.l.b16 %v276
  %v309 = vunpack.c.l.b16 %v277
  %v310 = vunpack.c.l.b16 %v278
  %v311 = vunpack.c.l.b16 %v279
  %v312 = vunpack.c.l.b16 %v280
  %v313 = vunpack.c.l.b16 %v281
  %v314 = vunpack.c.l.b16 %v282
  %v315 = vunpack.c.l.b16 %v283
  %v316 = vunpack.c.l.b16 %v284
  %v317 = vunpack.c.l.b16 %v285
  %v318 = vunpack.c.l.b16 %v286
  %v319 = vpack.c.b16 %v304, %v303
  %v320 = vpack.c.b16 %v306, %v305
  %v321 = vpack.c.b16 %v308, %v307
  %v322 = vpack.c.b16 %v310, %v309
  %v323 = vpack.c.b16 %v312, %v311
  %v324 = vpack.c.b16 %v314, %v313
  %v325 = vpack.c.b16 %v316, %v315
  %v326 = vpack.c.b16 %v318, %v317
  %v328 = vsel %vm126, %v319, 0
  %v331 = vsel %vm126, %v320, 0
  %v334 = vsel %vm126, %v321, 0
  %v337 = vsel %vm126, %v322, 0
  %v340 = vsel %vm126, %v323, 0
  %v343 = vsel %vm126, %v324, 0
  %v346 = vsel %vm126, %v325, 0
  %v349 = vsel %vm126, %v326, 0
  %351 = vmatprep.subr.bf16.mxu0 0
  %352 = vmatpush1.bf16.msra.mxu0 %v117
  %353 = vmatprep.subr.bf16.mxu0 0
  %354 = vmatpush1.bf16.msra.mxu0 %v118
  %355 = vmatprep.subr.bf16.mxu0 0
  %356 = vmatpush1.bf16.msra.mxu0 %v119
  %357 = vmatprep.subr.bf16.mxu0 0
  %358 = vmatpush1.bf16.msra.mxu0 %v120
  %359 = vmatprep.subr.bf16.mxu0 0
  %360 = vmatpush1.bf16.msra.mxu0 %v156
  %361 = vmatprep.subr.bf16.mxu0 0
  %362 = vmatpush1.bf16.msra.mxu0 0
  %363 = vmatprep.subr.bf16.mxu0 0
  %364 = vmatpush1.bf16.msra.mxu0 0
  %365 = vmatprep.subr.bf16.mxu0 0
  %366 = vmatpush1.bf16.msra.mxu0 0
  %367 = vmatprep.subr.bf16.mxu0 0
  %368 = vmatpush1.bf16.msra.mxu0 0
  %369 = vmatprep.subr.bf16.mxu0 0
  %370 = vmatpush1.bf16.msra.mxu0 0
  %371 = vmatprep.subr.bf16.mxu0 0
  %372 = vmatpush1.bf16.msra.mxu0 0
  %373 = vmatprep.subr.bf16.mxu0 0
  %374 = vmatpush1.bf16.msra.mxu0 0
  %375 = vmatprep.subr.bf16.mxu0 0
  %376 = vmatpush1.bf16.msra.mxu0 0
  %377 = vmatprep.subr.bf16.mxu0 0
  %378 = vmatpush1.bf16.msra.mxu0 0
  %379 = vmatprep.subr.bf16.mxu0 0
  %380 = vmatpush1.bf16.msra.mxu0 0
  %381 = vmatprep.subr.bf16.mxu0 0
  %382 = vmatpush1.bf16.msra.mxu0 0
  %383 = vmatprep.mubr.bf16.mxu0 0
  %384 = vmatmul.mubr.bf16.gmra.mrb[0].mxu0 %v328
  %v385 = vpop.f32.mrb[0].mxu0
  %v386 = vadd.f32 %v55, %v385
  %v387 = vpop.f32.mrb[0].mxu0
  %v388 = vpop.f32.mrb[0].mxu0
  %v389 = vadd.f32 %v55, %v388
  %v390 = vpop.f32.mrb[0].mxu0
  %391 = vmatprep.mubr.bf16.mxu0 0
  %392 = vmatmul.mubr.bf16.gmra.mrb[0].mxu0 %v331
  %v393 = vpop.f32.mrb[0].mxu0
  %v394 = vadd.f32 %v55, %v393
  %v395 = vpop.f32.mrb[0].mxu0
  %v396 = vpop.f32.mrb[0].mxu0
  %v397 = vadd.f32 %v55, %v396
  %v398 = vpop.f32.mrb[0].mxu0
  %399 = vmatprep.mubr.bf16.mxu0 0
  %400 = vmatmul.mubr.bf16.gmra.mrb[0].mxu0 %v334
  %v401 = vpop.f32.mrb[0].mxu0
  %v402 = vadd.f32 %v55, %v401
  %v403 = vpop.f32.mrb[0].mxu0
  %v404 = vpop.f32.mrb[0].mxu0
  %v405 = vadd.f32 %v55, %v404
  %v406 = vpop.f32.mrb[0].mxu0
  %407 = vmatprep.mubr.bf16.mxu0 0
  %408 = vmatmul.mubr.bf16.gmra.mrb[0].mxu0 %v337
  %v409 = vpop.f32.mrb[0].mxu0
  %v410 = vadd.f32 %v55, %v409
  %v411 = vpop.f32.mrb[0].mxu0
  %v412 = vpop.f32.mrb[0].mxu0
  %v413 = vadd.f32 %v55, %v412
  %v414 = vpop.f32.mrb[0].mxu0
  %415 = vmatprep.mubr.bf16.mxu0 0
  %416 = vmatmul.mubr.bf16.gmra.mrb[0].mxu0 %v340
  %v417 = vpop.f32.mrb[0].mxu0
  %v418 = vadd.f32 %v55, %v417
  %v419 = vpop.f32.mrb[0].mxu0
  %v420 = vpop.f32.mrb[0].mxu0
  %v421 = vadd.f32 %v55, %v420
  %v422 = vpop.f32.mrb[0].mxu0
  %423 = vmatprep.mubr.bf16.mxu0 0
  %424 = vmatmul.mubr.bf16.gmra.mrb[0].mxu0 %v343
  %v425 = vpop.f32.mrb[0].mxu0
  %v426 = vadd.f32 %v55, %v425
  %v427 = vpop.f32.mrb[0].mxu0
  %v428 = vpop.f32.mrb[0].mxu0
  %v429 = vadd.f32 %v55, %v428
  %v430 = vpop.f32.mrb[0].mxu0
  %431 = vmatprep.mubr.bf16.mxu0 0
  %432 = vmatmul.mubr.bf16.gmra.mrb[0].mxu0 %v346
  %v433 = vpop.f32.mrb[0].mxu0
  %v434 = vadd.f32 %v55, %v433
  %v435 = vpop.f32.mrb[0].mxu0
  %v436 = vpop.f32.mrb[0].mxu0
  %v437 = vadd.f32 %v55, %v436
  %v438 = vpop.f32.mrb[0].mxu0
  %439 = vmatprep.mubr.bf16.mxu0 0
  %440 = vmatmul.mubr.bf16.gmra.mrb[0].mxu0 %v349
  %v441 = vpop.f32.mrb[0].mxu0
  %v442 = vadd.f32 %v55, %v441
  %v443 = vpop.f32.mrb[0].mxu0
  %v444 = vpop.f32.mrb[0].mxu0
  %v445 = vadd.f32 %v55, %v444
  %v446 = vpop.f32.mrb[0].mxu0
  %447 = vdwg.mxu0
  %v448 = vmax.f32 %v386, 0.0
  %v449 = vmax.f32 %v389, 0.0
  %v450 = vmax.f32 %v394, 0.0
  %v451 = vmax.f32 %v397, 0.0
  %v452 = vmax.f32 %v402, 0.0
  %v453 = vmax.f32 %v405, 0.0
  %v454 = vmax.f32 %v410, 0.0
  %v455 = vmax.f32 %v413, 0.0
  %v456 = vmax.f32 %v418, 0.0
  %v457 = vmax.f32 %v421, 0.0
  %v458 = vmax.f32 %v426, 0.0
  %v459 = vmax.f32 %v429, 0.0
  %v460 = vmax.f32 %v434, 0.0
  %v461 = vmax.f32 %v437, 0.0
  %v462 = vmax.f32 %v442, 0.0
  %v463 = vmax.f32 %v445, 0.0
  %v464 = vmax.f32 %v255, %v448
  %v465 = vmax.f32 %v256, %v449
  %v466 = vmax.f32 %v257, %v450
  %v467 = vmax.f32 %v258, %v451
  %v468 = vmax.f32 %v259, %v452
  %v469 = vmax.f32 %v260, %v453
  %v470 = vmax.f32 %v261, %v454
  %v471 = vmax.f32 %v262, %v455
  %v472 = vmax.f32 %v263, %v456
  %v473 = vmax.f32 %v264, %v457
  %v474 = vmax.f32 %v265, %v458
  %v475 = vmax.f32 %v266, %v459
  %v476 = vmax.f32 %v267, %v460
  %v477 = vmax.f32 %v268, %v461
  %v478 = vmax.f32 %v269, %v462
  %v479 = vmax.f32 %v270, %v463
  %v480 = vld [vmem:[%s2] sm:$0xf]
  %v481 = vld [vmem:[%s2 + $0x4] sm:$0xf]
  %v482 = vld [vmem:[%s2 + $0x8] sm:$0xf]
  %v483 = vld [vmem:[%s2 + $0xc] sm:$0xf]
  %v484 = vld [vmem:[%s2 + $0x10] sm:$0xf]
  %v485 = vld [vmem:[%s2 + $0x14] sm:$0xf]
  %v486 = vld [vmem:[%s2 + $0x18] sm:$0xf]
  %v487 = vld [vmem:[%s2 + $0x1c] sm:$0xf]
  %v488 = vld [vmem:[%s2 + $0x20] sm:$0xf]
  %v489 = vld [vmem:[%s2 + $0x24] sm:$0xf]
  %v490 = vld [vmem:[%s2 + $0x28] sm:$0xf]
  %v491 = vld [vmem:[%s2 + $0x2c] sm:$0xf]
  %v492 = vld [vmem:[%s2 + $0x30] sm:$0xf]
  %v493 = vld [vmem:[%s2 + $0x34] sm:$0xf]
  %v494 = vld [vmem:[%s2 + $0x38] sm:$0xf]
  %v495 = vld [vmem:[%s2 + $0x3c] sm:$0xf]
  %v512 = vunpack.c.l.b16 %v480
  %v513 = vunpack.c.l.b16 %v481
  %v514 = vunpack.c.l.b16 %v482
  %v515 = vunpack.c.l.b16 %v483
  %v516 = vunpack.c.l.b16 %v484
  %v517 = vunpack.c.l.b16 %v485
  %v518 = vunpack.c.l.b16 %v486
  %v519 = vunpack.c.l.b16 %v487
  %v520 = vunpack.c.l.b16 %v488
  %v521 = vunpack.c.l.b16 %v489
  %v522 = vunpack.c.l.b16 %v490
  %v523 = vunpack.c.l.b16 %v491
  %v524 = vunpack.c.l.b16 %v492
  %v525 = vunpack.c.l.b16 %v493
  %v526 = vunpack.c.l.b16 %v494
  %v527 = vunpack.c.l.b16 %v495
  %v528 = vpack.c.b16 %v513, %v512
  %v529 = vpack.c.b16 %v515, %v514
  %v530 = vpack.c.b16 %v517, %v516
  %v531 = vpack.c.b16 %v519, %v518
  %v532 = vpack.c.b16 %v521, %v520
  %v533 = vpack.c.b16 %v523, %v522
  %v534 = vpack.c.b16 %v525, %v524
  %v535 = vpack.c.b16 %v527, %v526
  %v537 = vsel %vm126, %v528, 0
  %v540 = vsel %vm126, %v529, 0
  %v543 = vsel %vm126, %v530, 0
  %v546 = vsel %vm126, %v531, 0
  %v549 = vsel %vm126, %v532, 0
  %v552 = vsel %vm126, %v533, 0
  %v555 = vsel %vm126, %v534, 0
  %v558 = vsel %vm126, %v535, 0
  %560 = vmatprep.subr.bf16.mxu0 0
  %561 = vmatpush1.bf16.msra.mxu0 %v117
  %562 = vmatprep.subr.bf16.mxu0 0
  %563 = vmatpush1.bf16.msra.mxu0 %v118
  %564 = vmatprep.subr.bf16.mxu0 0
  %565 = vmatpush1.bf16.msra.mxu0 %v119
  %566 = vmatprep.subr.bf16.mxu0 0
  %567 = vmatpush1.bf16.msra.mxu0 %v120
  %568 = vmatprep.subr.bf16.mxu0 0
  %569 = vmatpush1.bf16.msra.mxu0 %v156
  %570 = vmatprep.subr.bf16.mxu0 0
  %571 = vmatpush1.bf16.msra.mxu0 0
  %572 = vmatprep.subr.bf16.mxu0 0
  %573 = vmatpush1.bf16.msra.mxu0 0
  %574 = vmatprep.subr.bf16.mxu0 0
  %575 = vmatpush1.bf16.msra.mxu0 0
  %576 = vmatprep.subr.bf16.mxu0 0
  %577 = vmatpush1.bf16.msra.mxu0 0
  %578 = vmatprep.subr.bf16.mxu0 0
  %579 = vmatpush1.bf16.msra.mxu0 0
  %580 = vmatprep.subr.bf16.mxu0 0
  %581 = vmatpush1.bf16.msra.mxu0 0
  %582 = vmatprep.subr.bf16.mxu0 0
  %583 = vmatpush1.bf16.msra.mxu0 0
  %584 = vmatprep.subr.bf16.mxu0 0
  %585 = vmatpush1.bf16.msra.mxu0 0
  %586 = vmatprep.subr.bf16.mxu0 0
  %587 = vmatpush1.bf16.msra.mxu0 0
  %588 = vmatprep.subr.bf16.mxu0 0
  %589 = vmatpush1.bf16.msra.mxu0 0
  %590 = vmatprep.subr.bf16.mxu0 0
  %591 = vmatpush1.bf16.msra.mxu0 0
  %592 = vmatprep.mubr.bf16.mxu0 0
  %593 = vmatmul.mubr.bf16.gmra.mrb[0].mxu0 %v537
  %v594 = vpop.f32.mrb[0].mxu0
  %v595 = vadd.f32 %v55, %v594
  %v596 = vpop.f32.mrb[0].mxu0
  %v597 = vpop.f32.mrb[0].mxu0
  %v598 = vadd.f32 %v55, %v597
  %v599 = vpop.f32.mrb[0].mxu0
  %600 = vmatprep.mubr.bf16.mxu0 0
  %601 = vmatmul.mubr.bf16.gmra.mrb[0].mxu0 %v540
  %v602 = vpop.f32.mrb[0].mxu0
  %v603 = vadd.f32 %v55, %v602
  %v604 = vpop.f32.mrb[0].mxu0
  %v605 = vpop.f32.mrb[0].mxu0
  %v606 = vadd.f32 %v55, %v605
  %v607 = vpop.f32.mrb[0].mxu0
  %608 = vmatprep.mubr.bf16.mxu0 0
  %609 = vmatmul.mubr.bf16.gmra.mrb[0].mxu0 %v543
  %v610 = vpop.f32.mrb[0].mxu0
  %v611 = vadd.f32 %v55, %v610
  %v612 = vpop.f32.mrb[0].mxu0
  %v613 = vpop.f32.mrb[0].mxu0
  %v614 = vadd.f32 %v55, %v613
  %v615 = vpop.f32.mrb[0].mxu0
  %616 = vmatprep.mubr.bf16.mxu0 0
  %617 = vmatmul.mubr.bf16.gmra.mrb[0].mxu0 %v546
  %v618 = vpop.f32.mrb[0].mxu0
  %v619 = vadd.f32 %v55, %v618
  %v620 = vpop.f32.mrb[0].mxu0
  %v621 = vpop.f32.mrb[0].mxu0
  %v622 = vadd.f32 %v55, %v621
  %v623 = vpop.f32.mrb[0].mxu0
  %624 = vmatprep.mubr.bf16.mxu0 0
  %625 = vmatmul.mubr.bf16.gmra.mrb[0].mxu0 %v549
  %v626 = vpop.f32.mrb[0].mxu0
  %v627 = vadd.f32 %v55, %v626
  %v628 = vpop.f32.mrb[0].mxu0
  %v629 = vpop.f32.mrb[0].mxu0
  %v630 = vadd.f32 %v55, %v629
  %v631 = vpop.f32.mrb[0].mxu0
  %632 = vmatprep.mubr.bf16.mxu0 0
  %633 = vmatmul.mubr.bf16.gmra.mrb[0].mxu0 %v552
  %v634 = vpop.f32.mrb[0].mxu0
  %v635 = vadd.f32 %v55, %v634
  %v636 = vpop.f32.mrb[0].mxu0
  %v637 = vpop.f32.mrb[0].mxu0
  %v638 = vadd.f32 %v55, %v637
  %v639 = vpop.f32.mrb[0].mxu0
  %640 = vmatprep.mubr.bf16.mxu0 0
  %641 = vmatmul.mubr.bf16.gmra.mrb[0].mxu0 %v555
  %v642 = vpop.f32.mrb[0].mxu0
  %v643 = vadd.f32 %v55, %v642
  %v644 = vpop.f32.mrb[0].mxu0
  %v645 = vpop.f32.mrb[0].mxu0
  %v646 = vadd.f32 %v55, %v645
  %v647 = vpop.f32.mrb[0].mxu0
  %648 = vmatprep.mubr.bf16.mxu0 0
  %649 = vmatmul.mubr.bf16.gmra.mrb[0].mxu0 %v558
  %v650 = vpop.f32.mrb[0].mxu0
  %v651 = vadd.f32 %v55, %v650
  %v652 = vpop.f32.mrb[0].mxu0
  %v653 = vpop.f32.mrb[0].mxu0
  %v654 = vadd.f32 %v55, %v653
  %v655 = vpop.f32.mrb[0].mxu0
  %656 = vdwg.mxu0
  %v657 = vmax.f32 %v595, 0.0
  %v658 = vmax.f32 %v598, 0.0
  %v659 = vmax.f32 %v603, 0.0
  %v660 = vmax.f32 %v606, 0.0
  %v661 = vmax.f32 %v611, 0.0
  %v662 = vmax.f32 %v614, 0.0
  %v663 = vmax.f32 %v619, 0.0
  %v664 = vmax.f32 %v622, 0.0
  %v665 = vmax.f32 %v627, 0.0
  %v666 = vmax.f32 %v630, 0.0
  %v667 = vmax.f32 %v635, 0.0
  %v668 = vmax.f32 %v638, 0.0
  %v669 = vmax.f32 %v643, 0.0
  %v670 = vmax.f32 %v646, 0.0
  %v671 = vmax.f32 %v651, 0.0
  %v672 = vmax.f32 %v654, 0.0
  %v673 = vld [vmem:[%s3] sm:$0xf]
  %v674 = vld [vmem:[%s3 + $0x4] sm:$0xf]
  %v675 = vld [vmem:[%s3 + $0x8] sm:$0xf]
  %v676 = vld [vmem:[%s3 + $0xc] sm:$0xf]
  %v677 = vld [vmem:[%s3 + $0x10] sm:$0xf]
  %v678 = vld [vmem:[%s3 + $0x14] sm:$0xf]
  %v679 = vld [vmem:[%s3 + $0x18] sm:$0xf]
  %v680 = vld [vmem:[%s3 + $0x1c] sm:$0xf]
  %v681 = vld [vmem:[%s3 + $0x20] sm:$0xf]
  %v682 = vld [vmem:[%s3 + $0x24] sm:$0xf]
  %v683 = vld [vmem:[%s3 + $0x28] sm:$0xf]
  %v684 = vld [vmem:[%s3 + $0x2c] sm:$0xf]
  %v685 = vld [vmem:[%s3 + $0x30] sm:$0xf]
  %v686 = vld [vmem:[%s3 + $0x34] sm:$0xf]
  %v687 = vld [vmem:[%s3 + $0x38] sm:$0xf]
  %v688 = vld [vmem:[%s3 + $0x3c] sm:$0xf]
  %v705 = vunpack.c.l.b16 %v673
  %v706 = vunpack.c.l.b16 %v674
  %v707 = vunpack.c.l.b16 %v675
  %v708 = vunpack.c.l.b16 %v676
  %v709 = vunpack.c.l.b16 %v677
  %v710 = vunpack.c.l.b16 %v678
  %v711 = vunpack.c.l.b16 %v679
  %v712 = vunpack.c.l.b16 %v680
  %v713 = vunpack.c.l.b16 %v681
  %v714 = vunpack.c.l.b16 %v682
  %v715 = vunpack.c.l.b16 %v683
  %v716 = vunpack.c.l.b16 %v684
  %v717 = vunpack.c.l.b16 %v685
  %v718 = vunpack.c.l.b16 %v686
  %v719 = vunpack.c.l.b16 %v687
  %v720 = vunpack.c.l.b16 %v688
  %v721 = vpack.c.b16 %v706, %v705
  %v722 = vpack.c.b16 %v708, %v707
  %v723 = vpack.c.b16 %v710, %v709
  %v724 = vpack.c.b16 %v712, %v711
  %v725 = vpack.c.b16 %v714, %v713
  %v726 = vpack.c.b16 %v716, %v715
  %v727 = vpack.c.b16 %v718, %v717
  %v728 = vpack.c.b16 %v720, %v719
  %v730 = vsel %vm126, %v721, 0
  %v733 = vsel %vm126, %v722, 0
  %v736 = vsel %vm126, %v723, 0
  %v739 = vsel %vm126, %v724, 0
  %v742 = vsel %vm126, %v725, 0
  %v745 = vsel %vm126, %v726, 0
  %v748 = vsel %vm126, %v727, 0
  %v751 = vsel %vm126, %v728, 0
  %753 = vmatprep.subr.bf16.mxu0 0
  %754 = vmatpush1.bf16.msra.mxu0 %v117
  %755 = vmatprep.subr.bf16.mxu0 0
  %756 = vmatpush1.bf16.msra.mxu0 %v118
  %757 = vmatprep.subr.bf16.mxu0 0
  %758 = vmatpush1.bf16.msra.mxu0 %v119
  %759 = vmatprep.subr.bf16.mxu0 0
  %760 = vmatpush1.bf16.msra.mxu0 %v120
  %761 = vmatprep.subr.bf16.mxu0 0
  %762 = vmatpush1.bf16.msra.mxu0 %v156
  %763 = vmatprep.subr.bf16.mxu0 0
  %764 = vmatpush1.bf16.msra.mxu0 0
  %765 = vmatprep.subr.bf16.mxu0 0
  %766 = vmatpush1.bf16.msra.mxu0 0
  %767 = vmatprep.subr.bf16.mxu0 0
  %768 = vmatpush1.bf16.msra.mxu0 0
  %769 = vmatprep.subr.bf16.mxu0 0
  %770 = vmatpush1.bf16.msra.mxu0 0
  %771 = vmatprep.subr.bf16.mxu0 0
  %772 = vmatpush1.bf16.msra.mxu0 0
  %773 = vmatprep.subr.bf16.mxu0 0
  %774 = vmatpush1.bf16.msra.mxu0 0
  %775 = vmatprep.subr.bf16.mxu0 0
  %776 = vmatpush1.bf16.msra.mxu0 0
  %777 = vmatprep.subr.bf16.mxu0 0
  %778 = vmatpush1.bf16.msra.mxu0 0
  %779 = vmatprep.subr.bf16.mxu0 0
  %780 = vmatpush1.bf16.msra.mxu0 0
  %781 = vmatprep.subr.bf16.mxu0 0
  %782 = vmatpush1.bf16.msra.mxu0 0
  %783 = vmatprep.subr.bf16.mxu0 0
  %784 = vmatpush1.bf16.msra.mxu0 0
  %785 = vmatprep.mubr.bf16.mxu0 0
  %786 = vmatmul.mubr.bf16.gmra.mrb[0].mxu0 %v730
  %v787 = vpop.f32.mrb[0].mxu0
  %v788 = vadd.f32 %v55, %v787
  %v789 = vpop.f32.mrb[0].mxu0
  %v790 = vpop.f32.mrb[0].mxu0
  %v791 = vadd.f32 %v55, %v790
  %v792 = vpop.f32.mrb[0].mxu0
  %793 = vmatprep.mubr.bf16.mxu0 0
  %794 = vmatmul.mubr.bf16.gmra.mrb[0].mxu0 %v733
  %v795 = vpop.f32.mrb[0].mxu0
  %v796 = vadd.f32 %v55, %v795
  %v797 = vpop.f32.mrb[0].mxu0
  %v798 = vpop.f32.mrb[0].mxu0
  %v799 = vadd.f32 %v55, %v798
  %v800 = vpop.f32.mrb[0].mxu0
  %801 = vmatprep.mubr.bf16.mxu0 0
  %802 = vmatmul.mubr.bf16.gmra.mrb[0].mxu0 %v736
  %v803 = vpop.f32.mrb[0].mxu0
  %v804 = vadd.f32 %v55, %v803
  %v805 = vpop.f32.mrb[0].mxu0
  %v806 = vpop.f32.mrb[0].mxu0
  %v807 = vadd.f32 %v55, %v806
  %v808 = vpop.f32.mrb[0].mxu0
  %809 = vmatprep.mubr.bf16.mxu0 0
  %810 = vmatmul.mubr.bf16.gmra.mrb[0].mxu0 %v739
  %v811 = vpop.f32.mrb[0].mxu0
  %v812 = vadd.f32 %v55, %v811
  %v813 = vpop.f32.mrb[0].mxu0
  %v814 = vpop.f32.mrb[0].mxu0
  %v815 = vadd.f32 %v55, %v814
  %v816 = vpop.f32.mrb[0].mxu0
  %817 = vmatprep.mubr.bf16.mxu0 0
  %818 = vmatmul.mubr.bf16.gmra.mrb[0].mxu0 %v742
  %v819 = vpop.f32.mrb[0].mxu0
  %v820 = vadd.f32 %v55, %v819
  %v821 = vpop.f32.mrb[0].mxu0
  %v822 = vpop.f32.mrb[0].mxu0
  %v823 = vadd.f32 %v55, %v822
  %v824 = vpop.f32.mrb[0].mxu0
  %825 = vmatprep.mubr.bf16.mxu0 0
  %826 = vmatmul.mubr.bf16.gmra.mrb[0].mxu0 %v745
  %v827 = vpop.f32.mrb[0].mxu0
  %v828 = vadd.f32 %v55, %v827
  %v829 = vpop.f32.mrb[0].mxu0
  %v830 = vpop.f32.mrb[0].mxu0
  %v831 = vadd.f32 %v55, %v830
  %v832 = vpop.f32.mrb[0].mxu0
  %833 = vmatprep.mubr.bf16.mxu0 0
  %834 = vmatmul.mubr.bf16.gmra.mrb[0].mxu0 %v748
  %v835 = vpop.f32.mrb[0].mxu0
  %v836 = vadd.f32 %v55, %v835
  %v837 = vpop.f32.mrb[0].mxu0
  %v838 = vpop.f32.mrb[0].mxu0
  %v839 = vadd.f32 %v55, %v838
  %v840 = vpop.f32.mrb[0].mxu0
  %841 = vmatprep.mubr.bf16.mxu0 0
  %842 = vmatmul.mubr.bf16.gmra.mrb[0].mxu0 %v751
  %v843 = vpop.f32.mrb[0].mxu0
  %v844 = vadd.f32 %v55, %v843
  %v845 = vpop.f32.mrb[0].mxu0
  %v846 = vpop.f32.mrb[0].mxu0
  %v847 = vadd.f32 %v55, %v846
  %v848 = vpop.f32.mrb[0].mxu0
  %849 = vdwg.mxu0
  %v850 = vmax.f32 %v788, 0.0
  %v851 = vmax.f32 %v791, 0.0
  %v852 = vmax.f32 %v796, 0.0
  %v853 = vmax.f32 %v799, 0.0
  %v854 = vmax.f32 %v804, 0.0
  %v855 = vmax.f32 %v807, 0.0
  %v856 = vmax.f32 %v812, 0.0
  %v857 = vmax.f32 %v815, 0.0
  %v858 = vmax.f32 %v820, 0.0
  %v859 = vmax.f32 %v823, 0.0
  %v860 = vmax.f32 %v828, 0.0
  %v861 = vmax.f32 %v831, 0.0
  %v862 = vmax.f32 %v836, 0.0
  %v863 = vmax.f32 %v839, 0.0
  %v864 = vmax.f32 %v844, 0.0
  %v865 = vmax.f32 %v847, 0.0
  %v866 = vmax.f32 %v657, %v850
  %v867 = vmax.f32 %v658, %v851
  %v868 = vmax.f32 %v659, %v852
  %v869 = vmax.f32 %v660, %v853
  %v870 = vmax.f32 %v661, %v854
  %v871 = vmax.f32 %v662, %v855
  %v872 = vmax.f32 %v663, %v856
  %v873 = vmax.f32 %v664, %v857
  %v874 = vmax.f32 %v665, %v858
  %v875 = vmax.f32 %v666, %v859
  %v876 = vmax.f32 %v667, %v860
  %v877 = vmax.f32 %v668, %v861
  %v878 = vmax.f32 %v669, %v862
  %v879 = vmax.f32 %v670, %v863
  %v880 = vmax.f32 %v671, %v864
  %v881 = vmax.f32 %v672, %v865
  %v882 = vmax.f32 %v464, %v866
  %v883 = vmax.f32 %v465, %v867
  %v884 = vmax.f32 %v466, %v868
  %v885 = vmax.f32 %v467, %v869
  %v886 = vmax.f32 %v468, %v870
  %v887 = vmax.f32 %v469, %v871
  %v888 = vmax.f32 %v470, %v872
  %v889 = vmax.f32 %v471, %v873
  %v890 = vmax.f32 %v472, %v874
  %v891 = vmax.f32 %v473, %v875
  %v892 = vmax.f32 %v474, %v876
  %v893 = vmax.f32 %v475, %v877
  %v894 = vmax.f32 %v476, %v878
  %v895 = vmax.f32 %v477, %v879
  %v896 = vmax.f32 %v478, %v880
  %v897 = vmax.f32 %v479, %v881
  %v898 = vpack.c.bf16 %v883, %v882
  %v899 = vpack.c.bf16 %v885, %v884
  %v900 = vpack.c.bf16 %v887, %v886
  %v901 = vpack.c.bf16 %v889, %v888
  %v902 = vpack.c.bf16 %v891, %v890
  %v903 = vpack.c.bf16 %v893, %v892
  %v904 = vpack.c.bf16 %v895, %v894
  %v905 = vpack.c.bf16 %v897, %v896
  %v914 = vunpack.c.l.b16 %v898
  %v915 = vunpack.c.h.b16 %v898
  %v916 = vunpack.c.l.b16 %v899
  %v917 = vunpack.c.h.b16 %v899
  %v918 = vunpack.c.l.b16 %v900
  %v919 = vunpack.c.h.b16 %v900
  %v920 = vunpack.c.l.b16 %v901
  %v921 = vunpack.c.h.b16 %v901
  %v922 = vunpack.c.l.b16 %v902
  %v923 = vunpack.c.h.b16 %v902
  %v924 = vunpack.c.l.b16 %v903
  %v925 = vunpack.c.h.b16 %v903
  %v926 = vunpack.c.l.b16 %v904
  %v927 = vunpack.c.h.b16 %v904
  %v928 = vunpack.c.l.b16 %v905
  %v929 = vunpack.c.h.b16 %v905
  %v930 = vpack.c.b16 %v914, %v914
  %v931 = vpack.c.b16 %v915, %v915
  %v932 = vpack.c.b16 %v916, %v916
  %v933 = vpack.c.b16 %v917, %v917
  %v934 = vpack.c.b16 %v918, %v918
  %v935 = vpack.c.b16 %v919, %v919
  %v936 = vpack.c.b16 %v920, %v920
  %v937 = vpack.c.b16 %v921, %v921
  %v938 = vpack.c.b16 %v922, %v922
  %v939 = vpack.c.b16 %v923, %v923
  %v940 = vpack.c.b16 %v924, %v924
  %v941 = vpack.c.b16 %v925, %v925
  %v942 = vpack.c.b16 %v926, %v926
  %v943 = vpack.c.b16 %v927, %v927
  %v944 = vpack.c.b16 %v928, %v928
  %v945 = vpack.c.b16 %v929, %v929
  %vm962 = vcmask 60416
  %963 = vst.msk [vmem:[%s6] sm:$0xf] %vm962, %v930
  %964 = vst.msk [vmem:[%s6 + $0x4] sm:$0xf] %vm962, %v931
  %965 = vst.msk [vmem:[%s6 + $0x8] sm:$0xf] %vm962, %v932
  %966 = vst.msk [vmem:[%s6 + $0xc] sm:$0xf] %vm962, %v933
  %967 = vst.msk [vmem:[%s6 + $0x10] sm:$0xf] %vm962, %v934
  %968 = vst.msk [vmem:[%s6 + $0x14] sm:$0xf] %vm962, %v935
  %969 = vst.msk [vmem:[%s6 + $0x18] sm:$0xf] %vm962, %v936
  %970 = vst.msk [vmem:[%s6 + $0x1c] sm:$0xf] %vm962, %v937
  %971 = vst.msk [vmem:[%s6 + $0x20] sm:$0xf] %vm962, %v938
  %972 = vst.msk [vmem:[%s6 + $0x24] sm:$0xf] %vm962, %v939
  %973 = vst.msk [vmem:[%s6 + $0x28] sm:$0xf] %vm962, %v940
  %974 = vst.msk [vmem:[%s6 + $0x2c] sm:$0xf] %vm962, %v941
  %975 = vst.msk [vmem:[%s6 + $0x30] sm:$0xf] %vm962, %v942
  %976 = vst.msk [vmem:[%s6 + $0x34] sm:$0xf] %vm962, %v943
  %977 = vst.msk [vmem:[%s6 + $0x38] sm:$0xf] %vm962, %v944
  %978 = vst.msk [vmem:[%s6 + $0x3c] sm:$0xf] %vm962, %v945
  // Predicated region
  $region26: #{_lambda_.8} parent=0 // pred_check
    _
  $region27: #{_lambda_.8} parent=0 // pred_check_branch
    %980 = sbr.rel (0) target = $region29
  $region28: #{_lambda_.8} parent=0 // pred_region
    _
  $region29: #{_lambda_.8} parent=0 // pred_fallthru
    _
  // Predicated region
  $region30: #{_lambda_.8} parent=0 // pred_check
    _
  $region31: #{_lambda_.8} parent=0 // pred_check_branch
    %982 = sbr.rel (0) target = $region33
  $region32: #{_lambda_.8} parent=0 // pred_region
    _
  $region33: #{_lambda_.8} parent=0 // pred_fallthru
    _

// kernel: _lambda_.9
$region0: #{_lambda_.9}
  #allocation0 [shape = 'u32[]', space=smem, size = 0x4, offset = 0x4, fixed_abs, tag = 'smem constant byte address 0x4 - core index']
  #allocation1 [shape = 'u32[144,128]{1,0:T(1,128)}', space=vmem, size = 0x12000, scoped, tag = 'internal scratch']
  %s0 = inlined_call_operand.vmem [shape: bf16[32,200], index: 0, kind: input, shape index: {}]
  %s1 = inlined_call_operand.vmem [shape: bf16[32,200], index: 1, kind: input, shape index: {}]
  %s2 = inlined_call_operand.vmem [shape: bf16[32,200], index: 2, kind: input, shape index: {}]
  %s3 = inlined_call_operand.vmem [shape: bf16[32,200], index: 3, kind: input, shape index: {}]
  %s4 = inlined_call_operand.vmem [shape: bf16[200,16], index: 4, kind: input, shape index: {}]
  %s5 = inlined_call_operand.vmem [shape: f32[1,16], index: 5, kind: input, shape index: {}]
  %s6 = inlined_call_operand.vmem [shape: bf16[32,16], index: 6, kind: output, shape index: {}]
  %s7 = sld [smem:[#allocation0]]
  $region34: #{_lambda_.9} parent=0
    _
  %s9 = ssub.s32 1, %s7
  %s10 = scalar_select 0, %s9, %s7
  // Predicated region
  $region2: #{_lambda_.9} parent=0 // pred_check
    _
  $region3: #{_lambda_.9} parent=0 // pred_check_branch
    %12 = sbr.rel (0) target = $region5
  $region4: #{_lambda_.9} parent=0 // pred_region
    _
  $region5: #{_lambda_.9} parent=0 // pred_fallthru
    _
  // Predicated region
  $region6: #{_lambda_.9} parent=0 // pred_check
    _
  $region7: #{_lambda_.9} parent=0 // pred_check_branch
    %14 = sbr.rel (0) target = $region9
  $region8: #{_lambda_.9} parent=0 // pred_region
    _
  $region9: #{_lambda_.9} parent=0 // pred_fallthru
    _
  // Predicated region
  $region10: #{_lambda_.9} parent=0 // pred_check
    _
  $region11: #{_lambda_.9} parent=0 // pred_check_branch
    %16 = sbr.rel (0) target = $region13
  $region12: #{_lambda_.9} parent=0 // pred_region
    _
  $region13: #{_lambda_.9} parent=0 // pred_fallthru
    _
  // Predicated region
  $region14: #{_lambda_.9} parent=0 // pred_check
    _
  $region15: #{_lambda_.9} parent=0 // pred_check_branch
    %18 = sbr.rel (0) target = $region17
  $region16: #{_lambda_.9} parent=0 // pred_region
    _
  $region17: #{_lambda_.9} parent=0 // pred_fallthru
    _
  // Predicated region
  $region18: #{_lambda_.9} parent=0 // pred_check
    _
  $region19: #{_lambda_.9} parent=0 // pred_check_branch
    %20 = sbr.rel (0) target = $region21
  $region20: #{_lambda_.9} parent=0 // pred_region
    _
  $region21: #{_lambda_.9} parent=0 // pred_fallthru
    _
  // Predicated region
  $region22: #{_lambda_.9} parent=0 // pred_check
    _
  $region23: #{_lambda_.9} parent=0 // pred_check_branch
    %22 = sbr.rel (0) target = $region25
  $region24: #{_lambda_.9} parent=0 // pred_region
    _
  $region25: #{_lambda_.9} parent=0 // pred_fallthru
    _
  %v24 = vld [vmem:[%s4] sm:$0xf]
  %v25 = vld [vmem:[%s4 + $0x4] sm:$0xf]
  %v26 = vld [vmem:[%s4 + $0x8] sm:$0xf]
  %v27 = vld [vmem:[%s4 + $0xc] sm:$0xf]
  %v28 = vld [vmem:[%s4 + $0x10] sm:$0xf]
  %v29 = vld [vmem:[%s4 + $0x14] sm:$0xf]
  %v30 = vld [vmem:[%s4 + $0x18] sm:$0xf]
  %v31 = vld [vmem:[%s4 + $0x1c] sm:$0xf]
  %v32 = vld [vmem:[%s4 + $0x20] sm:$0xf]
  %v33 = vld [vmem:[%s4 + $0x24] sm:$0xf]
  %v34 = vld [vmem:[%s4 + $0x28] sm:$0xf]
  %v35 = vld [vmem:[%s4 + $0x2c] sm:$0xf]
  %v36 = vld [vmem:[%s4 + $0x30] sm:$0xf]
  %v37 = vld [vmem:[%s4 + $0x34] sm:$0xf]
  %v38 = vld [vmem:[%s4 + $0x38] sm:$0xf]
  %v39 = vld [vmem:[%s4 + $0x3c] sm:$0xf]
  %v40 = vld [vmem:[%s4 + $0x40] sm:$0xf]
  %v41 = vld [vmem:[%s4 + $0x44] sm:$0xf]
  %v42 = vld [vmem:[%s4 + $0x48] sm:$0xf]
  %v43 = vld [vmem:[%s4 + $0x4c] sm:$0xf]
  %v44 = vld [vmem:[%s4 + $0x50] sm:$0xf]
  %v45 = vld [vmem:[%s4 + $0x54] sm:$0xf]
  %v46 = vld [vmem:[%s4 + $0x58] sm:$0xf]
  %v47 = vld [vmem:[%s4 + $0x5c] sm:$0xf]
  %v48 = vld [vmem:[%s4 + $0x60] sm:$0xf]
  %v49 = vld [vmem:[%s5] sm:$0x1]
  %v50 = vld [vmem:[%s0] sm:$0xff]
  %v51 = vld [vmem:[%s0 + $0x8] sm:$0xff]
  %v52 = vld [vmem:[%s0 + $0x10] sm:$0xff]
  %v53 = vld [vmem:[%s0 + $0x18] sm:$0xff]
  %v55 = vlaneseq
  %v56 = vshrl.u32 %v55, 7
  %v57 = vsub.s32 0, %v56
  %v58 = vrot.slane %v49, %v57
  %v64 = vunpack.c.l.b16 %v50
  %v65 = vunpack.c.h.b16 %v50
  %v66 = vunpack.c.l.b16 %v51
  %v67 = vunpack.c.h.b16 %v51
  %v68 = vunpack.c.l.b16 %v52
  %v69 = vunpack.c.h.b16 %v52
  %v70 = vunpack.c.l.b16 %v53
  %v71 = vunpack.c.h.b16 %v53
  %v72 = vpack.c.b16 %v66, %v64
  %v73 = vpack.c.b16 %v67, %v65
  %v74 = vpack.c.b16 %v70, %v68
  %v75 = vpack.c.b16 %v71, %v69
  %v103 = vunpack.c.l.b16 %v24
  %v104 = vunpack.c.l.b16 %v25
  %v105 = vunpack.c.l.b16 %v26
  %v106 = vunpack.c.l.b16 %v27
  %v107 = vunpack.c.l.b16 %v28
  %v108 = vunpack.c.l.b16 %v29
  %v109 = vunpack.c.l.b16 %v30
  %v110 = vunpack.c.l.b16 %v31
  %v111 = vunpack.c.l.b16 %v32
  %v112 = vunpack.c.l.b16 %v33
  %v113 = vunpack.c.l.b16 %v34
  %v114 = vunpack.c.l.b16 %v35
  %v115 = vunpack.c.l.b16 %v36
  %v116 = vunpack.c.l.b16 %v37
  %v117 = vunpack.c.l.b16 %v38
  %v118 = vunpack.c.l.b16 %v39
  %v119 = vunpack.c.l.b16 %v40
  %v120 = vunpack.c.l.b16 %v41
  %v121 = vunpack.c.l.b16 %v42
  %v122 = vunpack.c.l.b16 %v43
  %v123 = vunpack.c.l.b16 %v44
  %v124 = vunpack.c.l.b16 %v45
  %v125 = vunpack.c.l.b16 %v46
  %v126 = vunpack.c.l.b16 %v47
  %v127 = vunpack.c.l.b16 %v48
  %v128 = vpack.c.b16 %v104, %v103
  %v129 = vpack.c.b16 %v106, %v105
  %v130 = vpack.c.b16 %v108, %v107
  %v131 = vpack.c.b16 %v110, %v109
  %v132 = vpack.c.b16 %v112, %v111
  %v133 = vpack.c.b16 %v114, %v113
  %v134 = vpack.c.b16 %v116, %v115
  %v135 = vpack.c.b16 %v118, %v117
  %v136 = vpack.c.b16 %v120, %v119
  %v137 = vpack.c.b16 %v122, %v121
  %v138 = vpack.c.b16 %v124, %v123
  %v139 = vpack.c.b16 %v126, %v125
  %v140 = vpack.c.b16 %v127, %v127
  %vm153 = vcmask 588800
  %v155 = vsel %vm153, %v73, 0
  %v158 = vsel %vm153, %v75, 0
  %vm160 = vcmask 1043456
  %v162 = vsel %vm160, %v140, 0
  %164 = vmatprep.subr.bf16.mxu0 0
  %165 = vmatpush1.bf16.msra.mxu0 %v128
  %166 = vmatprep.subr.bf16.mxu0 0
  %167 = vmatpush1.bf16.msra.mxu0 %v129
  %168 = vmatprep.subr.bf16.mxu0 0
  %169 = vmatpush1.bf16.msra.mxu0 %v130
  %170 = vmatprep.subr.bf16.mxu0 0
  %171 = vmatpush1.bf16.msra.mxu0 %v131
  %172 = vmatprep.subr.bf16.mxu0 0
  %173 = vmatpush1.bf16.msra.mxu0 %v132
  %174 = vmatprep.subr.bf16.mxu0 0
  %175 = vmatpush1.bf16.msra.mxu0 %v133
  %176 = vmatprep.subr.bf16.mxu0 0
  %177 = vmatpush1.bf16.msra.mxu0 %v134
  %178 = vmatprep.subr.bf16.mxu0 0
  %179 = vmatpush1.bf16.msra.mxu0 %v135
  %180 = vmatprep.subr.bf16.mxu0 0
  %181 = vmatpush1.bf16.msra.mxu0 %v136
  %182 = vmatprep.subr.bf16.mxu0 0
  %183 = vmatpush1.bf16.msra.mxu0 %v137
  %184 = vmatprep.subr.bf16.mxu0 0
  %185 = vmatpush1.bf16.msra.mxu0 %v138
  %186 = vmatprep.subr.bf16.mxu0 0
  %187 = vmatpush1.bf16.msra.mxu0 %v139
  %188 = vmatprep.subr.bf16.mxu0 0
  %189 = vmatpush1.bf16.msra.mxu0 %v162
  %190 = vmatprep.subr.bf16.mxu0 0
  %191 = vmatpush1.bf16.msra.mxu0 0
  %192 = vmatprep.subr.bf16.mxu0 0
  %193 = vmatpush1.bf16.msra.mxu0 0
  %194 = vmatprep.subr.bf16.mxu0 0
  %195 = vmatpush1.bf16.msra.mxu0 0
  %196 = vmatprep.mubr.bf16.mxu0 %v155
  %197 = vmatmul.mubr.bf16.gmra.mrb[0].mxu0 %v72
  %v198 = vpop.f32.mrb[0].mxu0
  %v199 = vadd.f32 %v58, %v198
  %v200 = vpop.f32.mrb[0].mxu0
  %v201 = vpop.f32.mrb[0].mxu0
  %v202 = vadd.f32 %v58, %v201
  %v203 = vpop.f32.mrb[0].mxu0
  %204 = vmatprep.mubr.bf16.mxu0 %v158
  %205 = vmatmul.mubr.bf16.gmra.mrb[0].mxu0 %v74
  %v206 = vpop.f32.mrb[0].mxu0
  %v207 = vadd.f32 %v58, %v206
  %v208 = vpop.f32.mrb[0].mxu0
  %v209 = vpop.f32.mrb[0].mxu0
  %v210 = vadd.f32 %v58, %v209
  %v211 = vpop.f32.mrb[0].mxu0
  %212 = vdwg.mxu0
  %v213 = vmax.f32 %v199, 0.0
  %v214 = vmax.f32 %v202, 0.0
  %v215 = vmax.f32 %v207, 0.0
  %v216 = vmax.f32 %v210, 0.0
  %v217 = vld [vmem:[%s1] sm:$0xff]
  %v218 = vld [vmem:[%s1 + $0x8] sm:$0xff]
  %v219 = vld [vmem:[%s1 + $0x10] sm:$0xff]
  %v220 = vld [vmem:[%s1 + $0x18] sm:$0xff]
  %v225 = vunpack.c.l.b16 %v217
  %v226 = vunpack.c.h.b16 %v217
  %v227 = vunpack.c.l.b16 %v218
  %v228 = vunpack.c.h.b16 %v218
  %v229 = vunpack.c.l.b16 %v219
  %v230 = vunpack.c.h.b16 %v219
  %v231 = vunpack.c.l.b16 %v220
  %v232 = vunpack.c.h.b16 %v220
  %v233 = vpack.c.b16 %v227, %v225
  %v234 = vpack.c.b16 %v228, %v226
  %v235 = vpack.c.b16 %v231, %v229
  %v236 = vpack.c.b16 %v232, %v230
  %v240 = vsel %vm153, %v234, 0
  %v243 = vsel %vm153, %v236, 0
  %245 = vmatprep.subr.bf16.mxu0 0
  %246 = vmatpush1.bf16.msra.mxu0 %v128
  %247 = vmatprep.subr.bf16.mxu0 0
  %248 = vmatpush1.bf16.msra.mxu0 %v129
  %249 = vmatprep.subr.bf16.mxu0 0
  %250 = vmatpush1.bf16.msra.mxu0 %v130
  %251 = vmatprep.subr.bf16.mxu0 0
  %252 = vmatpush1.bf16.msra.mxu0 %v131
  %253 = vmatprep.subr.bf16.mxu0 0
  %254 = vmatpush1.bf16.msra.mxu0 %v132
  %255 = vmatprep.subr.bf16.mxu0 0
  %256 = vmatpush1.bf16.msra.mxu0 %v133
  %257 = vmatprep.subr.bf16.mxu0 0
  %258 = vmatpush1.bf16.msra.mxu0 %v134
  %259 = vmatprep.subr.bf16.mxu0 0
  %260 = vmatpush1.bf16.msra.mxu0 %v135
  %261 = vmatprep.subr.bf16.mxu0 0
  %262 = vmatpush1.bf16.msra.mxu0 %v136
  %263 = vmatprep.subr.bf16.mxu0 0
  %264 = vmatpush1.bf16.msra.mxu0 %v137
  %265 = vmatprep.subr.bf16.mxu0 0
  %266 = vmatpush1.bf16.msra.mxu0 %v138
  %267 = vmatprep.subr.bf16.mxu0 0
  %268 = vmatpush1.bf16.msra.mxu0 %v139
  %269 = vmatprep.subr.bf16.mxu0 0
  %270 = vmatpush1.bf16.msra.mxu0 %v162
  %271 = vmatprep.subr.bf16.mxu0 0
  %272 = vmatpush1.bf16.msra.mxu0 0
  %273 = vmatprep.subr.bf16.mxu0 0
  %274 = vmatpush1.bf16.msra.mxu0 0
  %275 = vmatprep.subr.bf16.mxu0 0
  %276 = vmatpush1.bf16.msra.mxu0 0
  %277 = vmatprep.mubr.bf16.mxu0 %v240
  %278 = vmatmul.mubr.bf16.gmra.mrb[0].mxu0 %v233
  %v279 = vpop.f32.mrb[0].mxu0
  %v280 = vadd.f32 %v58, %v279
  %v281 = vpop.f32.mrb[0].mxu0
  %v282 = vpop.f32.mrb[0].mxu0
  %v283 = vadd.f32 %v58, %v282
  %v284 = vpop.f32.mrb[0].mxu0
  %285 = vmatprep.mubr.bf16.mxu0 %v243
  %286 = vmatmul.mubr.bf16.gmra.mrb[0].mxu0 %v235
  %v287 = vpop.f32.mrb[0].mxu0
  %v288 = vadd.f32 %v58, %v287
  %v289 = vpop.f32.mrb[0].mxu0
  %v290 = vpop.f32.mrb[0].mxu0
  %v291 = vadd.f32 %v58, %v290
  %v292 = vpop.f32.mrb[0].mxu0
  %293 = vdwg.mxu0
  %v294 = vmax.f32 %v280, 0.0
  %v295 = vmax.f32 %v283, 0.0
  %v296 = vmax.f32 %v288, 0.0
  %v297 = vmax.f32 %v291, 0.0
  %v298 = vmax.f32 %v213, %v294
  %v299 = vmax.f32 %v214, %v295
  %v300 = vmax.f32 %v215, %v296
  %v301 = vmax.f32 %v216, %v297
  %v302 = vld [vmem:[%s2] sm:$0xff]
  %v303 = vld [vmem:[%s2 + $0x8] sm:$0xff]
  %v304 = vld [vmem:[%s2 + $0x10] sm:$0xff]
  %v305 = vld [vmem:[%s2 + $0x18] sm:$0xff]
  %v310 = vunpack.c.l.b16 %v302
  %v311 = vunpack.c.h.b16 %v302
  %v312 = vunpack.c.l.b16 %v303
  %v313 = vunpack.c.h.b16 %v303
  %v314 = vunpack.c.l.b16 %v304
  %v315 = vunpack.c.h.b16 %v304
  %v316 = vunpack.c.l.b16 %v305
  %v317 = vunpack.c.h.b16 %v305
  %v318 = vpack.c.b16 %v312, %v310
  %v319 = vpack.c.b16 %v313, %v311
  %v320 = vpack.c.b16 %v316, %v314
  %v321 = vpack.c.b16 %v317, %v315
  %v325 = vsel %vm153, %v319, 0
  %v328 = vsel %vm153, %v321, 0
  %330 = vmatprep.subr.bf16.mxu0 0
  %331 = vmatpush1.bf16.msra.mxu0 %v128
  %332 = vmatprep.subr.bf16.mxu0 0
  %333 = vmatpush1.bf16.msra.mxu0 %v129
  %334 = vmatprep.subr.bf16.mxu0 0
  %335 = vmatpush1.bf16.msra.mxu0 %v130
  %336 = vmatprep.subr.bf16.mxu0 0
  %337 = vmatpush1.bf16.msra.mxu0 %v131
  %338 = vmatprep.subr.bf16.mxu0 0
  %339 = vmatpush1.bf16.msra.mxu0 %v132
  %340 = vmatprep.subr.bf16.mxu0 0
  %341 = vmatpush1.bf16.msra.mxu0 %v133
  %342 = vmatprep.subr.bf16.mxu0 0
  %343 = vmatpush1.bf16.msra.mxu0 %v134
  %344 = vmatprep.subr.bf16.mxu0 0
  %345 = vmatpush1.bf16.msra.mxu0 %v135
  %346 = vmatprep.subr.bf16.mxu0 0
  %347 = vmatpush1.bf16.msra.mxu0 %v136
  %348 = vmatprep.subr.bf16.mxu0 0
  %349 = vmatpush1.bf16.msra.mxu0 %v137
  %350 = vmatprep.subr.bf16.mxu0 0
  %351 = vmatpush1.bf16.msra.mxu0 %v138
  %352 = vmatprep.subr.bf16.mxu0 0
  %353 = vmatpush1.bf16.msra.mxu0 %v139
  %354 = vmatprep.subr.bf16.mxu0 0
  %355 = vmatpush1.bf16.msra.mxu0 %v162
  %356 = vmatprep.subr.bf16.mxu0 0
  %357 = vmatpush1.bf16.msra.mxu0 0
  %358 = vmatprep.subr.bf16.mxu0 0
  %359 = vmatpush1.bf16.msra.mxu0 0
  %360 = vmatprep.subr.bf16.mxu0 0
  %361 = vmatpush1.bf16.msra.mxu0 0
  %362 = vmatprep.mubr.bf16.mxu0 %v325
  %363 = vmatmul.mubr.bf16.gmra.mrb[0].mxu0 %v318
  %v364 = vpop.f32.mrb[0].mxu0
  %v365 = vadd.f32 %v58, %v364
  %v366 = vpop.f32.mrb[0].mxu0
  %v367 = vpop.f32.mrb[0].mxu0
  %v368 = vadd.f32 %v58, %v367
  %v369 = vpop.f32.mrb[0].mxu0
  %370 = vmatprep.mubr.bf16.mxu0 %v328
  %371 = vmatmul.mubr.bf16.gmra.mrb[0].mxu0 %v320
  %v372 = vpop.f32.mrb[0].mxu0
  %v373 = vadd.f32 %v58, %v372
  %v374 = vpop.f32.mrb[0].mxu0
  %v375 = vpop.f32.mrb[0].mxu0
  %v376 = vadd.f32 %v58, %v375
  %v377 = vpop.f32.mrb[0].mxu0
  %378 = vdwg.mxu0
  %v379 = vmax.f32 %v365, 0.0
  %v380 = vmax.f32 %v368, 0.0
  %v381 = vmax.f32 %v373, 0.0
  %v382 = vmax.f32 %v376, 0.0
  %v383 = vld [vmem:[%s3] sm:$0xff]
  %v384 = vld [vmem:[%s3 + $0x8] sm:$0xff]
  %v385 = vld [vmem:[%s3 + $0x10] sm:$0xff]
  %v386 = vld [vmem:[%s3 + $0x18] sm:$0xff]
  %v391 = vunpack.c.l.b16 %v383
  %v392 = vunpack.c.h.b16 %v383
  %v393 = vunpack.c.l.b16 %v384
  %v394 = vunpack.c.h.b16 %v384
  %v395 = vunpack.c.l.b16 %v385
  %v396 = vunpack.c.h.b16 %v385
  %v397 = vunpack.c.l.b16 %v386
  %v398 = vunpack.c.h.b16 %v386
  %v399 = vpack.c.b16 %v393, %v391
  %v400 = vpack.c.b16 %v394, %v392
  %v401 = vpack.c.b16 %v397, %v395
  %v402 = vpack.c.b16 %v398, %v396
  %v406 = vsel %vm153, %v400, 0
  %v409 = vsel %vm153, %v402, 0
  %411 = vmatprep.subr.bf16.mxu0 0
  %412 = vmatpush1.bf16.msra.mxu0 %v128
  %413 = vmatprep.subr.bf16.mxu0 0
  %414 = vmatpush1.bf16.msra.mxu0 %v129
  %415 = vmatprep.subr.bf16.mxu0 0
  %416 = vmatpush1.bf16.msra.mxu0 %v130
  %417 = vmatprep.subr.bf16.mxu0 0
  %418 = vmatpush1.bf16.msra.mxu0 %v131
  %419 = vmatprep.subr.bf16.mxu0 0
  %420 = vmatpush1.bf16.msra.mxu0 %v132
  %421 = vmatprep.subr.bf16.mxu0 0
  %422 = vmatpush1.bf16.msra.mxu0 %v133
  %423 = vmatprep.subr.bf16.mxu0 0
  %424 = vmatpush1.bf16.msra.mxu0 %v134
  %425 = vmatprep.subr.bf16.mxu0 0
  %426 = vmatpush1.bf16.msra.mxu0 %v135
  %427 = vmatprep.subr.bf16.mxu0 0
  %428 = vmatpush1.bf16.msra.mxu0 %v136
  %429 = vmatprep.subr.bf16.mxu0 0
  %430 = vmatpush1.bf16.msra.mxu0 %v137
  %431 = vmatprep.subr.bf16.mxu0 0
  %432 = vmatpush1.bf16.msra.mxu0 %v138
  %433 = vmatprep.subr.bf16.mxu0 0
  %434 = vmatpush1.bf16.msra.mxu0 %v139
  %435 = vmatprep.subr.bf16.mxu0 0
  %436 = vmatpush1.bf16.msra.mxu0 %v162
  %437 = vmatprep.subr.bf16.mxu0 0
  %438 = vmatpush1.bf16.msra.mxu0 0
  %439 = vmatprep.subr.bf16.mxu0 0
  %440 = vmatpush1.bf16.msra.mxu0 0
  %441 = vmatprep.subr.bf16.mxu0 0
  %442 = vmatpush1.bf16.msra.mxu0 0
  %443 = vmatprep.mubr.bf16.mxu0 %v406
  %444 = vmatmul.mubr.bf16.gmra.mrb[0].mxu0 %v399
  %v445 = vpop.f32.mrb[0].mxu0
  %v446 = vadd.f32 %v58, %v445
  %v447 = vpop.f32.mrb[0].mxu0
  %v448 = vpop.f32.mrb[0].mxu0
  %v449 = vadd.f32 %v58, %v448
  %v450 = vpop.f32.mrb[0].mxu0
  %451 = vmatprep.mubr.bf16.mxu0 %v409
  %452 = vmatmul.mubr.bf16.gmra.mrb[0].mxu0 %v401
  %v453 = vpop.f32.mrb[0].mxu0
  %v454 = vadd.f32 %v58, %v453
  %v455 = vpop.f32.mrb[0].mxu0
  %v456 = vpop.f32.mrb[0].mxu0
  %v457 = vadd.f32 %v58, %v456
  %v458 = vpop.f32.mrb[0].mxu0
  %459 = vdwg.mxu0
  %v460 = vmax.f32 %v446, 0.0
  %v461 = vmax.f32 %v449, 0.0
  %v462 = vmax.f32 %v454, 0.0
  %v463 = vmax.f32 %v457, 0.0
  %v464 = vmax.f32 %v379, %v460
  %v465 = vmax.f32 %v380, %v461
  %v466 = vmax.f32 %v381, %v462
  %v467 = vmax.f32 %v382, %v463
  %v468 = vmax.f32 %v298, %v464
  %v469 = vmax.f32 %v299, %v465
  %v470 = vmax.f32 %v300, %v466
  %v471 = vmax.f32 %v301, %v467
  %v472 = vpack.c.bf16 %v469, %v468
  %v473 = vpack.c.bf16 %v471, %v470
  %v476 = vunpack.c.l.b16 %v472
  %v477 = vunpack.c.h.b16 %v472
  %v478 = vunpack.c.l.b16 %v473
  %v479 = vunpack.c.h.b16 %v473
  %v480 = vpack.c.b16 %v476, %v476
  %v481 = vpack.c.b16 %v477, %v477
  %v482 = vpack.c.b16 %v478, %v478
  %v483 = vpack.c.b16 %v479, %v479
  %vm488 = vcmask 125952
  %489 = vst.msk [vmem:[%s6] sm:$0xf] %vm488, %v480
  %490 = vst.msk [vmem:[%s6 + $0x4] sm:$0xf] %vm488, %v481
  %491 = vst.msk [vmem:[%s6 + $0x8] sm:$0xf] %vm488, %v482
  %492 = vst.msk [vmem:[%s6 + $0xc] sm:$0xf] %vm488, %v483
  // Predicated region
  $region26: #{_lambda_.9} parent=0 // pred_check
    _
  $region27: #{_lambda_.9} parent=0 // pred_check_branch
    %494 = sbr.rel (0) target = $region29
  $region28: #{_lambda_.9} parent=0 // pred_region
    _
  $region29: #{_lambda_.9} parent=0 // pred_fallthru
    _
  // Predicated region
  $region30: #{_lambda_.9} parent=0 // pred_check
    _
  $region31: #{_lambda_.9} parent=0 // pred_check_branch
    %496 = sbr.rel (0) target = $region33
  $region32: #{_lambda_.9} parent=0 // pred_region
    _
  $region33: #{_lambda_.9} parent=0 // pred_fallthru
    _

// kernel: _lambda_.10
$region0: #{_lambda_.10}
  #allocation0 [shape = 'u32[]', space=smem, size = 0x4, offset = 0x4, fixed_abs, tag = 'smem constant byte address 0x4 - core index']
  #allocation1 [shape = 'u32[144,128]{1,0:T(1,128)}', space=vmem, size = 0x12000, scoped, tag = 'internal scratch']
  %s0 = inlined_call_operand.vmem [shape: bf16[8,400], index: 0, kind: input, shape index: {}]
  %s1 = inlined_call_operand.vmem [shape: bf16[8,400], index: 1, kind: input, shape index: {}]
  %s2 = inlined_call_operand.vmem [shape: bf16[8,400], index: 2, kind: input, shape index: {}]
  %s3 = inlined_call_operand.vmem [shape: bf16[8,400], index: 3, kind: input, shape index: {}]
  %s4 = inlined_call_operand.vmem [shape: bf16[400,32], index: 4, kind: input, shape index: {}]
  %s5 = inlined_call_operand.vmem [shape: f32[1,32], index: 5, kind: input, shape index: {}]
  %s6 = inlined_call_operand.vmem [shape: bf16[8,32], index: 6, kind: output, shape index: {}]
  %s7 = sld [smem:[#allocation0]]
  $region34: #{_lambda_.10} parent=0
    _
  %s9 = ssub.s32 1, %s7
  %s10 = scalar_select 0, %s9, %s7
  // Predicated region
  $region2: #{_lambda_.10} parent=0 // pred_check
    _
  $region3: #{_lambda_.10} parent=0 // pred_check_branch
    %12 = sbr.rel (0) target = $region5
  $region4: #{_lambda_.10} parent=0 // pred_region
    _
  $region5: #{_lambda_.10} parent=0 // pred_fallthru
    _
  // Predicated region
  $region6: #{_lambda_.10} parent=0 // pred_check
    _
  $region7: #{_lambda_.10} parent=0 // pred_check_branch
    %14 = sbr.rel (0) target = $region9
  $region8: #{_lambda_.10} parent=0 // pred_region
    _
  $region9: #{_lambda_.10} parent=0 // pred_fallthru
    _
  // Predicated region
  $region10: #{_lambda_.10} parent=0 // pred_check
    _
  $region11: #{_lambda_.10} parent=0 // pred_check_branch
    %16 = sbr.rel (0) target = $region13
  $region12: #{_lambda_.10} parent=0 // pred_region
    _
  $region13: #{_lambda_.10} parent=0 // pred_fallthru
    _
  // Predicated region
  $region14: #{_lambda_.10} parent=0 // pred_check
    _
  $region15: #{_lambda_.10} parent=0 // pred_check_branch
    %18 = sbr.rel (0) target = $region17
  $region16: #{_lambda_.10} parent=0 // pred_region
    _
  $region17: #{_lambda_.10} parent=0 // pred_fallthru
    _
  // Predicated region
  $region18: #{_lambda_.10} parent=0 // pred_check
    _
  $region19: #{_lambda_.10} parent=0 // pred_check_branch
    %20 = sbr.rel (0) target = $region21
  $region20: #{_lambda_.10} parent=0 // pred_region
    _
  $region21: #{_lambda_.10} parent=0 // pred_fallthru
    _
  // Predicated region
  $region22: #{_lambda_.10} parent=0 // pred_check
    _
  $region23: #{_lambda_.10} parent=0 // pred_check_branch
    %22 = sbr.rel (0) target = $region25
  $region24: #{_lambda_.10} parent=0 // pred_region
    _
  $region25: #{_lambda_.10} parent=0 // pred_fallthru
    _
  %v24 = vld [vmem:[%s4] sm:$0xf]
  %v25 = vld [vmem:[%s4 + $0x4] sm:$0xf]
  %v26 = vld [vmem:[%s4 + $0x8] sm:$0xf]
  %v27 = vld [vmem:[%s4 + $0xc] sm:$0xf]
  %v28 = vld [vmem:[%s4 + $0x10] sm:$0xf]
  %v29 = vld [vmem:[%s4 + $0x14] sm:$0xf]
  %v30 = vld [vmem:[%s4 + $0x18] sm:$0xf]
  %v31 = vld [vmem:[%s4 + $0x1c] sm:$0xf]
  %v32 = vld [vmem:[%s4 + $0x20] sm:$0xf]
  %v33 = vld [vmem:[%s4 + $0x24] sm:$0xf]
  %v34 = vld [vmem:[%s4 + $0x28] sm:$0xf]
  %v35 = vld [vmem:[%s4 + $0x2c] sm:$0xf]
  %v36 = vld [vmem:[%s4 + $0x30] sm:$0xf]
  %v37 = vld [vmem:[%s4 + $0x34] sm:$0xf]
  %v38 = vld [vmem:[%s4 + $0x38] sm:$0xf]
  %v39 = vld [vmem:[%s4 + $0x3c] sm:$0xf]
  %v40 = vld [vmem:[%s4 + $0x40] sm:$0xf]
  %v41 = vld [vmem:[%s4 + $0x44] sm:$0xf]
  %v42 = vld [vmem:[%s4 + $0x48] sm:$0xf]
  %v43 = vld [vmem:[%s4 + $0x4c] sm:$0xf]
  %v44 = vld [vmem:[%s4 + $0x50] sm:$0xf]
  %v45 = vld [vmem:[%s4 + $0x54] sm:$0xf]
  %v46 = vld [vmem:[%s4 + $0x58] sm:$0xf]
  %v47 = vld [vmem:[%s4 + $0x5c] sm:$0xf]
  %v48 = vld [vmem:[%s4 + $0x60] sm:$0xf]
  %v49 = vld [vmem:[%s4 + $0x64] sm:$0xf]
  %v50 = vld [vmem:[%s4 + $0x68] sm:$0xf]
  %v51 = vld [vmem:[%s4 + $0x6c] sm:$0xf]
  %v52 = vld [vmem:[%s4 + $0x70] sm:$0xf]
  %v53 = vld [vmem:[%s4 + $0x74] sm:$0xf]
  %v54 = vld [vmem:[%s4 + $0x78] sm:$0xf]
  %v55 = vld [vmem:[%s4 + $0x7c] sm:$0xf]
  %v56 = vld [vmem:[%s4 + $0x80] sm:$0xf]
  %v57 = vld [vmem:[%s4 + $0x84] sm:$0xf]
  %v58 = vld [vmem:[%s4 + $0x88] sm:$0xf]
  %v59 = vld [vmem:[%s4 + $0x8c] sm:$0xf]
  %v60 = vld [vmem:[%s4 + $0x90] sm:$0xf]
  %v61 = vld [vmem:[%s4 + $0x94] sm:$0xf]
  %v62 = vld [vmem:[%s4 + $0x98] sm:$0xf]
  %v63 = vld [vmem:[%s4 + $0x9c] sm:$0xf]
  %v64 = vld [vmem:[%s4 + $0xa0] sm:$0xf]
  %v65 = vld [vmem:[%s4 + $0xa4] sm:$0xf]
  %v66 = vld [vmem:[%s4 + $0xa8] sm:$0xf]
  %v67 = vld [vmem:[%s4 + $0xac] sm:$0xf]
  %v68 = vld [vmem:[%s4 + $0xb0] sm:$0xf]
  %v69 = vld [vmem:[%s4 + $0xb4] sm:$0xf]
  %v70 = vld [vmem:[%s4 + $0xb8] sm:$0xf]
  %v71 = vld [vmem:[%s4 + $0xbc] sm:$0xf]
  %v72 = vld [vmem:[%s4 + $0xc0] sm:$0xf]
  %v73 = vld [vmem:[%s4 + $0xc4] sm:$0xf]
  %v74 = vld [vmem:[%s5] sm:$0x1]
  %v75 = vld [vmem:[%s0] sm:$0xff]
  %v76 = vld [vmem:[%s0 + $0x8] sm:$0xff]
  %v78 = vlaneseq
  %v79 = vshrl.u32 %v78, 7
  %v80 = vsub.s32 0, %v79
  %v81 = vrot.slane %v74, %v80
  %v85 = vunpack.c.l.b16 %v75
  %v86 = vunpack.c.h.b16 %v75
  %v87 = vunpack.c.l.b16 %v76
  %v88 = vunpack.c.h.b16 %v76
  %v89 = vpack.c.b16 %v85, %v85
  %v90 = vpack.c.b16 %v86, %v86
  %v91 = vpack.c.b16 %v87, %v87
  %v92 = vpack.c.b16 %v88, %v88
  %v146 = vunpack.c.l.b16 %v24
  %v147 = vunpack.c.l.b16 %v25
  %v148 = vunpack.c.l.b16 %v26
  %v149 = vunpack.c.l.b16 %v27
  %v150 = vunpack.c.l.b16 %v28
  %v151 = vunpack.c.l.b16 %v29
  %v152 = vunpack.c.l.b16 %v30
  %v153 = vunpack.c.l.b16 %v31
  %v154 = vunpack.c.l.b16 %v32
  %v155 = vunpack.c.l.b16 %v33
  %v156 = vunpack.c.l.b16 %v34
  %v157 = vunpack.c.l.b16 %v35
  %v158 = vunpack.c.l.b16 %v36
  %v159 = vunpack.c.l.b16 %v37
  %v160 = vunpack.c.l.b16 %v38
  %v161 = vunpack.c.l.b16 %v39
  %v162 = vunpack.c.l.b16 %v40
  %v163 = vunpack.c.l.b16 %v41
  %v164 = vunpack.c.l.b16 %v42
  %v165 = vunpack.c.l.b16 %v43
  %v166 = vunpack.c.l.b16 %v44
  %v167 = vunpack.c.l.b16 %v45
  %v168 = vunpack.c.l.b16 %v46
  %v169 = vunpack.c.l.b16 %v47
  %v170 = vunpack.c.l.b16 %v48
  %v171 = vunpack.c.l.b16 %v49
  %v172 = vunpack.c.l.b16 %v50
  %v173 = vunpack.c.l.b16 %v51
  %v174 = vunpack.c.l.b16 %v52
  %v175 = vunpack.c.l.b16 %v53
  %v176 = vunpack.c.l.b16 %v54
  %v177 = vunpack.c.l.b16 %v55
  %v178 = vunpack.c.l.b16 %v56
  %v179 = vunpack.c.l.b16 %v57
  %v180 = vunpack.c.l.b16 %v58
  %v181 = vunpack.c.l.b16 %v59
  %v182 = vunpack.c.l.b16 %v60
  %v183 = vunpack.c.l.b16 %v61
  %v184 = vunpack.c.l.b16 %v62
  %v185 = vunpack.c.l.b16 %v63
  %v186 = vunpack.c.l.b16 %v64
  %v187 = vunpack.c.l.b16 %v65
  %v188 = vunpack.c.l.b16 %v66
  %v189 = vunpack.c.l.b16 %v67
  %v190 = vunpack.c.l.b16 %v68
  %v191 = vunpack.c.l.b16 %v69
  %v192 = vunpack.c.l.b16 %v70
  %v193 = vunpack.c.l.b16 %v71
  %v194 = vunpack.c.l.b16 %v72
  %v195 = vunpack.c.l.b16 %v73
  %v196 = vpack.c.b16 %v147, %v146
  %v197 = vpack.c.b16 %v149, %v148
  %v198 = vpack.c.b16 %v151, %v150
  %v199 = vpack.c.b16 %v153, %v152
  %v200 = vpack.c.b16 %v155, %v154
  %v201 = vpack.c.b16 %v157, %v156
  %v202 = vpack.c.b16 %v159, %v158
  %v203 = vpack.c.b16 %v161, %v160
  %v204 = vpack.c.b16 %v163, %v162
  %v205 = vpack.c.b16 %v165, %v164
  %v206 = vpack.c.b16 %v167, %v166
  %v207 = vpack.c.b16 %v169, %v168
  %v208 = vpack.c.b16 %v171, %v170
  %v209 = vpack.c.b16 %v173, %v172
  %v210 = vpack.c.b16 %v175, %v174
  %v211 = vpack.c.b16 %v177, %v176
  %v212 = vpack.c.b16 %v179, %v178
  %v213 = vpack.c.b16 %v181, %v180
  %v214 = vpack.c.b16 %v183, %v182
  %v215 = vpack.c.b16 %v185, %v184
  %v216 = vpack.c.b16 %v187, %v186
  %v217 = vpack.c.b16 %v189, %v188
  %v218 = vpack.c.b16 %v191, %v190
  %v219 = vpack.c.b16 %v193, %v192
  %v220 = vpack.c.b16 %v195, %v194
  %vm246 = vcmask 130048
  %v248 = vsel %vm246, %v92, 0
  %250 = vmatprep.subr.bf16.mxu0 0
  %251 = vmatpush1.bf16.msra.mxu0 %v196
  %252 = vmatprep.subr.bf16.mxu0 0
  %253 = vmatpush1.bf16.msra.mxu0 %v197
  %254 = vmatprep.subr.bf16.mxu0 0
  %255 = vmatpush1.bf16.msra.mxu0 %v198
  %256 = vmatprep.subr.bf16.mxu0 0
  %257 = vmatpush1.bf16.msra.mxu0 %v199
  %258 = vmatprep.subr.bf16.mxu0 0
  %259 = vmatpush1.bf16.msra.mxu0 %v200
  %260 = vmatprep.subr.bf16.mxu0 0
  %261 = vmatpush1.bf16.msra.mxu0 %v201
  %262 = vmatprep.subr.bf16.mxu0 0
  %263 = vmatpush1.bf16.msra.mxu0 %v202
  %264 = vmatprep.subr.bf16.mxu0 0
  %265 = vmatpush1.bf16.msra.mxu0 %v203
  %266 = vmatprep.subr.bf16.mxu0 0
  %267 = vmatpush1.bf16.msra.mxu0 %v204
  %268 = vmatprep.subr.bf16.mxu0 0
  %269 = vmatpush1.bf16.msra.mxu0 %v205
  %270 = vmatprep.subr.bf16.mxu0 0
  %271 = vmatpush1.bf16.msra.mxu0 %v206
  %272 = vmatprep.subr.bf16.mxu0 0
  %273 = vmatpush1.bf16.msra.mxu0 %v207
  %274 = vmatprep.subr.bf16.mxu0 0
  %275 = vmatpush1.bf16.msra.mxu0 %v208
  %276 = vmatprep.subr.bf16.mxu0 0
  %277 = vmatpush1.bf16.msra.mxu0 %v209
  %278 = vmatprep.subr.bf16.mxu0 0
  %279 = vmatpush1.bf16.msra.mxu0 %v210
  %280 = vmatprep.subr.bf16.mxu0 0
  %281 = vmatpush1.bf16.msra.mxu0 %v211
  %282 = vmatprep.mubr.bf16.mxu0 %v90
  %283 = vmatmul.mubr.bf16.gmra.mrb[0].mxu0 %v89
  %v284 = vpop.f32.mrb[0].mxu0
  %v285 = vadd.f32 %v81, %v284
  %v286 = vpop.f32.mrb[0].mxu0
  %v287 = vpop.f32.mrb[0].mxu0
  %v288 = vpop.f32.mrb[0].mxu0
  %289 = vdwg.mxu0
  %290 = vmatprep.subr.bf16.mxu0 0
  %291 = vmatpush1.bf16.msra.mxu0 %v212
  %292 = vmatprep.subr.bf16.mxu0 0
  %293 = vmatpush1.bf16.msra.mxu0 %v213
  %294 = vmatprep.subr.bf16.mxu0 0
  %295 = vmatpush1.bf16.msra.mxu0 %v214
  %296 = vmatprep.subr.bf16.mxu0 0
  %297 = vmatpush1.bf16.msra.mxu0 %v215
  %298 = vmatprep.subr.bf16.mxu0 0
  %299 = vmatpush1.bf16.msra.mxu0 %v216
  %300 = vmatprep.subr.bf16.mxu0 0
  %301 = vmatpush1.bf16.msra.mxu0 %v217
  %302 = vmatprep.subr.bf16.mxu0 0
  %303 = vmatpush1.bf16.msra.mxu0 %v218
  %304 = vmatprep.subr.bf16.mxu0 0
  %305 = vmatpush1.bf16.msra.mxu0 %v219
  %306 = vmatprep.subr.bf16.mxu0 0
  %307 = vmatpush1.bf16.msra.mxu0 %v220
  %308 = vmatprep.subr.bf16.mxu0 0
  %309 = vmatpush1.bf16.msra.mxu0 0
  %310 = vmatprep.subr.bf16.mxu0 0
  %311 = vmatpush1.bf16.msra.mxu0 0
  %312 = vmatprep.subr.bf16.mxu0 0
  %313 = vmatpush1.bf16.msra.mxu0 0
  %314 = vmatprep.subr.bf16.mxu0 0
  %315 = vmatpush1.bf16.msra.mxu0 0
  %316 = vmatprep.subr.bf16.mxu0 0
  %317 = vmatpush1.bf16.msra.mxu0 0
  %318 = vmatprep.subr.bf16.mxu0 0
  %319 = vmatpush1.bf16.msra.mxu0 0
  %320 = vmatprep.subr.bf16.mxu0 0
  %321 = vmatpush1.bf16.msra.mxu0 0
  %322 = vmatprep.mubr.bf16.mxu0 %v248
  %323 = vmatmul.mubr.bf16.gmra.mrb[0].mxu0 %v91
  %v324 = vpop.f32.mrb[0].mxu0
  %v325 = vadd.f32 %v285, %v324
  %v326 = vpop.f32.mrb[0].mxu0
  %v327 = vpop.f32.mrb[0].mxu0
  %v328 = vpop.f32.mrb[0].mxu0
  %329 = vdwg.mxu0
  %v330 = vmax.f32 %v325, 0.0
  %v331 = vld [vmem:[%s1] sm:$0xff]
  %v332 = vld [vmem:[%s1 + $0x8] sm:$0xff]
  %v335 = vunpack.c.l.b16 %v331
  %v336 = vunpack.c.h.b16 %v331
  %v337 = vunpack.c.l.b16 %v332
  %v338 = vunpack.c.h.b16 %v332
  %v339 = vpack.c.b16 %v335, %v335
  %v340 = vpack.c.b16 %v336, %v336
  %v341 = vpack.c.b16 %v337, %v337
  %v342 = vpack.c.b16 %v338, %v338
  %v347 = vsel %vm246, %v342, 0
  %349 = vmatprep.subr.bf16.mxu0 0
  %350 = vmatpush1.bf16.msra.mxu0 %v196
  %351 = vmatprep.subr.bf16.mxu0 0
  %352 = vmatpush1.bf16.msra.mxu0 %v197
  %353 = vmatprep.subr.bf16.mxu0 0
  %354 = vmatpush1.bf16.msra.mxu0 %v198
  %355 = vmatprep.subr.bf16.mxu0 0
  %356 = vmatpush1.bf16.msra.mxu0 %v199
  %357 = vmatprep.subr.bf16.mxu0 0
  %358 = vmatpush1.bf16.msra.mxu0 %v200
  %359 = vmatprep.subr.bf16.mxu0 0
  %360 = vmatpush1.bf16.msra.mxu0 %v201
  %361 = vmatprep.subr.bf16.mxu0 0
  %362 = vmatpush1.bf16.msra.mxu0 %v202
  %363 = vmatprep.subr.bf16.mxu0 0
  %364 = vmatpush1.bf16.msra.mxu0 %v203
  %365 = vmatprep.subr.bf16.mxu0 0
  %366 = vmatpush1.bf16.msra.mxu0 %v204
  %367 = vmatprep.subr.bf16.mxu0 0
  %368 = vmatpush1.bf16.msra.mxu0 %v205
  %369 = vmatprep.subr.bf16.mxu0 0
  %370 = vmatpush1.bf16.msra.mxu0 %v206
  %371 = vmatprep.subr.bf16.mxu0 0
  %372 = vmatpush1.bf16.msra.mxu0 %v207
  %373 = vmatprep.subr.bf16.mxu0 0
  %374 = vmatpush1.bf16.msra.mxu0 %v208
  %375 = vmatprep.subr.bf16.mxu0 0
  %376 = vmatpush1.bf16.msra.mxu0 %v209
  %377 = vmatprep.subr.bf16.mxu0 0
  %378 = vmatpush1.bf16.msra.mxu0 %v210
  %379 = vmatprep.subr.bf16.mxu0 0
  %380 = vmatpush1.bf16.msra.mxu0 %v211
  %381 = vmatprep.mubr.bf16.mxu0 %v340
  %382 = vmatmul.mubr.bf16.gmra.mrb[0].mxu0 %v339
  %v383 = vpop.f32.mrb[0].mxu0
  %v384 = vadd.f32 %v81, %v383
  %v385 = vpop.f32.mrb[0].mxu0
  %v386 = vpop.f32.mrb[0].mxu0
  %v387 = vpop.f32.mrb[0].mxu0
  %388 = vdwg.mxu0
  %389 = vmatprep.subr.bf16.mxu0 0
  %390 = vmatpush1.bf16.msra.mxu0 %v212
  %391 = vmatprep.subr.bf16.mxu0 0
  %392 = vmatpush1.bf16.msra.mxu0 %v213
  %393 = vmatprep.subr.bf16.mxu0 0
  %394 = vmatpush1.bf16.msra.mxu0 %v214
  %395 = vmatprep.subr.bf16.mxu0 0
  %396 = vmatpush1.bf16.msra.mxu0 %v215
  %397 = vmatprep.subr.bf16.mxu0 0
  %398 = vmatpush1.bf16.msra.mxu0 %v216
  %399 = vmatprep.subr.bf16.mxu0 0
  %400 = vmatpush1.bf16.msra.mxu0 %v217
  %401 = vmatprep.subr.bf16.mxu0 0
  %402 = vmatpush1.bf16.msra.mxu0 %v218
  %403 = vmatprep.subr.bf16.mxu0 0
  %404 = vmatpush1.bf16.msra.mxu0 %v219
  %405 = vmatprep.subr.bf16.mxu0 0
  %406 = vmatpush1.bf16.msra.mxu0 %v220
  %407 = vmatprep.subr.bf16.mxu0 0
  %408 = vmatpush1.bf16.msra.mxu0 0
  %409 = vmatprep.subr.bf16.mxu0 0
  %410 = vmatpush1.bf16.msra.mxu0 0
  %411 = vmatprep.subr.bf16.mxu0 0
  %412 = vmatpush1.bf16.msra.mxu0 0
  %413 = vmatprep.subr.bf16.mxu0 0
  %414 = vmatpush1.bf16.msra.mxu0 0
  %415 = vmatprep.subr.bf16.mxu0 0
  %416 = vmatpush1.bf16.msra.mxu0 0
  %417 = vmatprep.subr.bf16.mxu0 0
  %418 = vmatpush1.bf16.msra.mxu0 0
  %419 = vmatprep.subr.bf16.mxu0 0
  %420 = vmatpush1.bf16.msra.mxu0 0
  %421 = vmatprep.mubr.bf16.mxu0 %v347
  %422 = vmatmul.mubr.bf16.gmra.mrb[0].mxu0 %v341
  %v423 = vpop.f32.mrb[0].mxu0
  %v424 = vadd.f32 %v384, %v423
  %v425 = vpop.f32.mrb[0].mxu0
  %v426 = vpop.f32.mrb[0].mxu0
  %v427 = vpop.f32.mrb[0].mxu0
  %428 = vdwg.mxu0
  %v429 = vmax.f32 %v424, 0.0
  %v430 = vmax.f32 %v330, %v429
  %v431 = vld [vmem:[%s2] sm:$0xff]
  %v432 = vld [vmem:[%s2 + $0x8] sm:$0xff]
  %v435 = vunpack.c.l.b16 %v431
  %v436 = vunpack.c.h.b16 %v431
  %v437 = vunpack.c.l.b16 %v432
  %v438 = vunpack.c.h.b16 %v432
  %v439 = vpack.c.b16 %v435, %v435
  %v440 = vpack.c.b16 %v436, %v436
  %v441 = vpack.c.b16 %v437, %v437
  %v442 = vpack.c.b16 %v438, %v438
  %v447 = vsel %vm246, %v442, 0
  %449 = vmatprep.subr.bf16.mxu0 0
  %450 = vmatpush1.bf16.msra.mxu0 %v196
  %451 = vmatprep.subr.bf16.mxu0 0
  %452 = vmatpush1.bf16.msra.mxu0 %v197
  %453 = vmatprep.subr.bf16.mxu0 0
  %454 = vmatpush1.bf16.msra.mxu0 %v198
  %455 = vmatprep.subr.bf16.mxu0 0
  %456 = vmatpush1.bf16.msra.mxu0 %v199
  %457 = vmatprep.subr.bf16.mxu0 0
  %458 = vmatpush1.bf16.msra.mxu0 %v200
  %459 = vmatprep.subr.bf16.mxu0 0
  %460 = vmatpush1.bf16.msra.mxu0 %v201
  %461 = vmatprep.subr.bf16.mxu0 0
  %462 = vmatpush1.bf16.msra.mxu0 %v202
  %463 = vmatprep.subr.bf16.mxu0 0
  %464 = vmatpush1.bf16.msra.mxu0 %v203
  %465 = vmatprep.subr.bf16.mxu0 0
  %466 = vmatpush1.bf16.msra.mxu0 %v204
  %467 = vmatprep.subr.bf16.mxu0 0
  %468 = vmatpush1.bf16.msra.mxu0 %v205
  %469 = vmatprep.subr.bf16.mxu0 0
  %470 = vmatpush1.bf16.msra.mxu0 %v206
  %471 = vmatprep.subr.bf16.mxu0 0
  %472 = vmatpush1.bf16.msra.mxu0 %v207
  %473 = vmatprep.subr.bf16.mxu0 0
  %474 = vmatpush1.bf16.msra.mxu0 %v208
  %475 = vmatprep.subr.bf16.mxu0 0
  %476 = vmatpush1.bf16.msra.mxu0 %v209
  %477 = vmatprep.subr.bf16.mxu0 0
  %478 = vmatpush1.bf16.msra.mxu0 %v210
  %479 = vmatprep.subr.bf16.mxu0 0
  %480 = vmatpush1.bf16.msra.mxu0 %v211
  %481 = vmatprep.mubr.bf16.mxu0 %v440
  %482 = vmatmul.mubr.bf16.gmra.mrb[0].mxu0 %v439
  %v483 = vpop.f32.mrb[0].mxu0
  %v484 = vadd.f32 %v81, %v483
  %v485 = vpop.f32.mrb[0].mxu0
  %v486 = vpop.f32.mrb[0].mxu0
  %v487 = vpop.f32.mrb[0].mxu0
  %488 = vdwg.mxu0
  %489 = vmatprep.subr.bf16.mxu0 0
  %490 = vmatpush1.bf16.msra.mxu0 %v212
  %491 = vmatprep.subr.bf16.mxu0 0
  %492 = vmatpush1.bf16.msra.mxu0 %v213
  %493 = vmatprep.subr.bf16.mxu0 0
  %494 = vmatpush1.bf16.msra.mxu0 %v214
  %495 = vmatprep.subr.bf16.mxu0 0
  %496 = vmatpush1.bf16.msra.mxu0 %v215
  %497 = vmatprep.subr.bf16.mxu0 0
  %498 = vmatpush1.bf16.msra.mxu0 %v216
  %499 = vmatprep.subr.bf16.mxu0 0
  %500 = vmatpush1.bf16.msra.mxu0 %v217
  %501 = vmatprep.subr.bf16.mxu0 0
  %502 = vmatpush1.bf16.msra.mxu0 %v218
  %503 = vmatprep.subr.bf16.mxu0 0
  %504 = vmatpush1.bf16.msra.mxu0 %v219
  %505 = vmatprep.subr.bf16.mxu0 0
  %506 = vmatpush1.bf16.msra.mxu0 %v220
  %507 = vmatprep.subr.bf16.mxu0 0
  %508 = vmatpush1.bf16.msra.mxu0 0
  %509 = vmatprep.subr.bf16.mxu0 0
  %510 = vmatpush1.bf16.msra.mxu0 0
  %511 = vmatprep.subr.bf16.mxu0 0
  %512 = vmatpush1.bf16.msra.mxu0 0
  %513 = vmatprep.subr.bf16.mxu0 0
  %514 = vmatpush1.bf16.msra.mxu0 0
  %515 = vmatprep.subr.bf16.mxu0 0
  %516 = vmatpush1.bf16.msra.mxu0 0
  %517 = vmatprep.subr.bf16.mxu0 0
  %518 = vmatpush1.bf16.msra.mxu0 0
  %519 = vmatprep.subr.bf16.mxu0 0
  %520 = vmatpush1.bf16.msra.mxu0 0
  %521 = vmatprep.mubr.bf16.mxu0 %v447
  %522 = vmatmul.mubr.bf16.gmra.mrb[0].mxu0 %v441
  %v523 = vpop.f32.mrb[0].mxu0
  %v524 = vadd.f32 %v484, %v523
  %v525 = vpop.f32.mrb[0].mxu0
  %v526 = vpop.f32.mrb[0].mxu0
  %v527 = vpop.f32.mrb[0].mxu0
  %528 = vdwg.mxu0
  %v529 = vmax.f32 %v524, 0.0
  %v530 = vld [vmem:[%s3] sm:$0xff]
  %v531 = vld [vmem:[%s3 + $0x8] sm:$0xff]
  %v534 = vunpack.c.l.b16 %v530
  %v535 = vunpack.c.h.b16 %v530
  %v536 = vunpack.c.l.b16 %v531
  %v537 = vunpack.c.h.b16 %v531
  %v538 = vpack.c.b16 %v534, %v534
  %v539 = vpack.c.b16 %v535, %v535
  %v540 = vpack.c.b16 %v536, %v536
  %v541 = vpack.c.b16 %v537, %v537
  %v546 = vsel %vm246, %v541, 0
  %548 = vmatprep.subr.bf16.mxu0 0
  %549 = vmatpush1.bf16.msra.mxu0 %v196
  %550 = vmatprep.subr.bf16.mxu0 0
  %551 = vmatpush1.bf16.msra.mxu0 %v197
  %552 = vmatprep.subr.bf16.mxu0 0
  %553 = vmatpush1.bf16.msra.mxu0 %v198
  %554 = vmatprep.subr.bf16.mxu0 0
  %555 = vmatpush1.bf16.msra.mxu0 %v199
  %556 = vmatprep.subr.bf16.mxu0 0
  %557 = vmatpush1.bf16.msra.mxu0 %v200
  %558 = vmatprep.subr.bf16.mxu0 0
  %559 = vmatpush1.bf16.msra.mxu0 %v201
  %560 = vmatprep.subr.bf16.mxu0 0
  %561 = vmatpush1.bf16.msra.mxu0 %v202
  %562 = vmatprep.subr.bf16.mxu0 0
  %563 = vmatpush1.bf16.msra.mxu0 %v203
  %564 = vmatprep.subr.bf16.mxu0 0
  %565 = vmatpush1.bf16.msra.mxu0 %v204
  %566 = vmatprep.subr.bf16.mxu0 0
  %567 = vmatpush1.bf16.msra.mxu0 %v205
  %568 = vmatprep.subr.bf16.mxu0 0
  %569 = vmatpush1.bf16.msra.mxu0 %v206
  %570 = vmatprep.subr.bf16.mxu0 0
  %571 = vmatpush1.bf16.msra.mxu0 %v207
  %572 = vmatprep.subr.bf16.mxu0 0
  %573 = vmatpush1.bf16.msra.mxu0 %v208
  %574 = vmatprep.subr.bf16.mxu0 0
  %575 = vmatpush1.bf16.msra.mxu0 %v209
  %576 = vmatprep.subr.bf16.mxu0 0
  %577 = vmatpush1.bf16.msra.mxu0 %v210
  %578 = vmatprep.subr.bf16.mxu0 0
  %579 = vmatpush1.bf16.msra.mxu0 %v211
  %580 = vmatprep.mubr.bf16.mxu0 %v539
  %581 = vmatmul.mubr.bf16.gmra.mrb[0].mxu0 %v538
  %v582 = vpop.f32.mrb[0].mxu0
  %v583 = vadd.f32 %v81, %v582
  %v584 = vpop.f32.mrb[0].mxu0
  %v585 = vpop.f32.mrb[0].mxu0
  %v586 = vpop.f32.mrb[0].mxu0
  %587 = vdwg.mxu0
  %588 = vmatprep.subr.bf16.mxu0 0
  %589 = vmatpush1.bf16.msra.mxu0 %v212
  %590 = vmatprep.subr.bf16.mxu0 0
  %591 = vmatpush1.bf16.msra.mxu0 %v213
  %592 = vmatprep.subr.bf16.mxu0 0
  %593 = vmatpush1.bf16.msra.mxu0 %v214
  %594 = vmatprep.subr.bf16.mxu0 0
  %595 = vmatpush1.bf16.msra.mxu0 %v215
  %596 = vmatprep.subr.bf16.mxu0 0
  %597 = vmatpush1.bf16.msra.mxu0 %v216
  %598 = vmatprep.subr.bf16.mxu0 0
  %599 = vmatpush1.bf16.msra.mxu0 %v217
  %600 = vmatprep.subr.bf16.mxu0 0
  %601 = vmatpush1.bf16.msra.mxu0 %v218
  %602 = vmatprep.subr.bf16.mxu0 0
  %603 = vmatpush1.bf16.msra.mxu0 %v219
  %604 = vmatprep.subr.bf16.mxu0 0
  %605 = vmatpush1.bf16.msra.mxu0 %v220
  %606 = vmatprep.subr.bf16.mxu0 0
  %607 = vmatpush1.bf16.msra.mxu0 0
  %608 = vmatprep.subr.bf16.mxu0 0
  %609 = vmatpush1.bf16.msra.mxu0 0
  %610 = vmatprep.subr.bf16.mxu0 0
  %611 = vmatpush1.bf16.msra.mxu0 0
  %612 = vmatprep.subr.bf16.mxu0 0
  %613 = vmatpush1.bf16.msra.mxu0 0
  %614 = vmatprep.subr.bf16.mxu0 0
  %615 = vmatpush1.bf16.msra.mxu0 0
  %616 = vmatprep.subr.bf16.mxu0 0
  %617 = vmatpush1.bf16.msra.mxu0 0
  %618 = vmatprep.subr.bf16.mxu0 0
  %619 = vmatpush1.bf16.msra.mxu0 0
  %620 = vmatprep.mubr.bf16.mxu0 %v546
  %621 = vmatmul.mubr.bf16.gmra.mrb[0].mxu0 %v540
  %v622 = vpop.f32.mrb[0].mxu0
  %v623 = vadd.f32 %v583, %v622
  %v624 = vpop.f32.mrb[0].mxu0
  %v625 = vpop.f32.mrb[0].mxu0
  %v626 = vpop.f32.mrb[0].mxu0
  %627 = vdwg.mxu0
  %v628 = vmax.f32 %v623, 0.0
  %v629 = vmax.f32 %v529, %v628
  %v630 = vmax.f32 %v430, %v629
  %v631 = vpack.c.bf16 %v630, %v630
  %vm632 = vcmask 257024
  %633 = vst.msk [vmem:[%s6] sm:$0xf] %vm632, %v631
  // Predicated region
  $region26: #{_lambda_.10} parent=0 // pred_check
    _
  $region27: #{_lambda_.10} parent=0 // pred_check_branch
    %635 = sbr.rel (0) target = $region29
  $region28: #{_lambda_.10} parent=0 // pred_region
    _
  $region29: #{_lambda_.10} parent=0 // pred_fallthru
    _
  // Predicated region
  $region30: #{_lambda_.10} parent=0 // pred_check
    _
  $region31: #{_lambda_.10} parent=0 // pred_check_branch
    %637 = sbr.rel (0) target = $region33
  $region32: #{_lambda_.10} parent=0 // pred_region
    _
  $region33: #{_lambda_.10} parent=0 // pred_fallthru
    _

// kernel: _lambda_.11
$region0: #{_lambda_.11}
  #allocation0 [shape = 'u32[]', space=smem, size = 0x4, offset = 0x4, fixed_abs, tag = 'smem constant byte address 0x4 - core index']
  #allocation1 [shape = 'u32[144,128]{1,0:T(1,128)}', space=vmem, size = 0x12000, scoped, tag = 'internal scratch']
  %s0 = inlined_call_operand.vmem [shape: bf16[2,800], index: 0, kind: input, shape index: {}]
  %s1 = inlined_call_operand.vmem [shape: bf16[2,800], index: 1, kind: input, shape index: {}]
  %s2 = inlined_call_operand.vmem [shape: bf16[2,800], index: 2, kind: input, shape index: {}]
  %s3 = inlined_call_operand.vmem [shape: bf16[2,800], index: 3, kind: input, shape index: {}]
  %s4 = inlined_call_operand.vmem [shape: bf16[800,64], index: 4, kind: input, shape index: {}]
  %s5 = inlined_call_operand.vmem [shape: f32[1,64], index: 5, kind: input, shape index: {}]
  %s6 = inlined_call_operand.vmem [shape: bf16[2,64], index: 6, kind: output, shape index: {}]
  %s7 = sld [smem:[#allocation0]]
  $region34: #{_lambda_.11} parent=0
    _
  %s9 = ssub.s32 1, %s7
  %s10 = scalar_select 0, %s9, %s7
  // Predicated region
  $region2: #{_lambda_.11} parent=0 // pred_check
    _
  $region3: #{_lambda_.11} parent=0 // pred_check_branch
    %12 = sbr.rel (0) target = $region5
  $region4: #{_lambda_.11} parent=0 // pred_region
    _
  $region5: #{_lambda_.11} parent=0 // pred_fallthru
    _
  // Predicated region
  $region6: #{_lambda_.11} parent=0 // pred_check
    _
  $region7: #{_lambda_.11} parent=0 // pred_check_branch
    %14 = sbr.rel (0) target = $region9
  $region8: #{_lambda_.11} parent=0 // pred_region
    _
  $region9: #{_lambda_.11} parent=0 // pred_fallthru
    _
  // Predicated region
  $region10: #{_lambda_.11} parent=0 // pred_check
    _
  $region11: #{_lambda_.11} parent=0 // pred_check_branch
    %16 = sbr.rel (0) target = $region13
  $region12: #{_lambda_.11} parent=0 // pred_region
    _
  $region13: #{_lambda_.11} parent=0 // pred_fallthru
    _
  // Predicated region
  $region14: #{_lambda_.11} parent=0 // pred_check
    _
  $region15: #{_lambda_.11} parent=0 // pred_check_branch
    %18 = sbr.rel (0) target = $region17
  $region16: #{_lambda_.11} parent=0 // pred_region
    _
  $region17: #{_lambda_.11} parent=0 // pred_fallthru
    _
  // Predicated region
  $region18: #{_lambda_.11} parent=0 // pred_check
    _
  $region19: #{_lambda_.11} parent=0 // pred_check_branch
    %20 = sbr.rel (0) target = $region21
  $region20: #{_lambda_.11} parent=0 // pred_region
    _
  $region21: #{_lambda_.11} parent=0 // pred_fallthru
    _
  // Predicated region
  $region22: #{_lambda_.11} parent=0 // pred_check
    _
  $region23: #{_lambda_.11} parent=0 // pred_check_branch
    %22 = sbr.rel (0) target = $region25
  $region24: #{_lambda_.11} parent=0 // pred_region
    _
  $region25: #{_lambda_.11} parent=0 // pred_fallthru
    _
  %v24 = vld [vmem:[%s4] sm:$0xf]
  %v25 = vld [vmem:[%s4 + $0x4] sm:$0xf]
  %v26 = vld [vmem:[%s4 + $0x8] sm:$0xf]
  %v27 = vld [vmem:[%s4 + $0xc] sm:$0xf]
  %v28 = vld [vmem:[%s4 + $0x10] sm:$0xf]
  %v29 = vld [vmem:[%s4 + $0x14] sm:$0xf]
  %v30 = vld [vmem:[%s4 + $0x18] sm:$0xf]
  %v31 = vld [vmem:[%s4 + $0x1c] sm:$0xf]
  %v32 = vld [vmem:[%s4 + $0x20] sm:$0xf]
  %v33 = vld [vmem:[%s4 + $0x24] sm:$0xf]
  %v34 = vld [vmem:[%s4 + $0x28] sm:$0xf]
  %v35 = vld [vmem:[%s4 + $0x2c] sm:$0xf]
  %v36 = vld [vmem:[%s4 + $0x30] sm:$0xf]
  %v37 = vld [vmem:[%s4 + $0x34] sm:$0xf]
  %v38 = vld [vmem:[%s4 + $0x38] sm:$0xf]
  %v39 = vld [vmem:[%s4 + $0x3c] sm:$0xf]
  %v40 = vld [vmem:[%s4 + $0x40] sm:$0xf]
  %v41 = vld [vmem:[%s4 + $0x44] sm:$0xf]
  %v42 = vld [vmem:[%s4 + $0x48] sm:$0xf]
  %v43 = vld [vmem:[%s4 + $0x4c] sm:$0xf]
  %v44 = vld [vmem:[%s4 + $0x50] sm:$0xf]
  %v45 = vld [vmem:[%s4 + $0x54] sm:$0xf]
  %v46 = vld [vmem:[%s4 + $0x58] sm:$0xf]
  %v47 = vld [vmem:[%s4 + $0x5c] sm:$0xf]
  %v48 = vld [vmem:[%s4 + $0x60] sm:$0xf]
  %v49 = vld [vmem:[%s4 + $0x64] sm:$0xf]
  %v50 = vld [vmem:[%s4 + $0x68] sm:$0xf]
  %v51 = vld [vmem:[%s4 + $0x6c] sm:$0xf]
  %v52 = vld [vmem:[%s4 + $0x70] sm:$0xf]
  %v53 = vld [vmem:[%s4 + $0x74] sm:$0xf]
  %v54 = vld [vmem:[%s4 + $0x78] sm:$0xf]
  %v55 = vld [vmem:[%s4 + $0x7c] sm:$0xf]
  %v56 = vld [vmem:[%s4 + $0x80] sm:$0xf]
  %v57 = vld [vmem:[%s4 + $0x84] sm:$0xf]
  %v58 = vld [vmem:[%s4 + $0x88] sm:$0xf]
  %v59 = vld [vmem:[%s4 + $0x8c] sm:$0xf]
  %v60 = vld [vmem:[%s4 + $0x90] sm:$0xf]
  %v61 = vld [vmem:[%s4 + $0x94] sm:$0xf]
  %v62 = vld [vmem:[%s4 + $0x98] sm:$0xf]
  %v63 = vld [vmem:[%s4 + $0x9c] sm:$0xf]
  %v64 = vld [vmem:[%s4 + $0xa0] sm:$0xf]
  %v65 = vld [vmem:[%s4 + $0xa4] sm:$0xf]
  %v66 = vld [vmem:[%s4 + $0xa8] sm:$0xf]
  %v67 = vld [vmem:[%s4 + $0xac] sm:$0xf]
  %v68 = vld [vmem:[%s4 + $0xb0] sm:$0xf]
  %v69 = vld [vmem:[%s4 + $0xb4] sm:$0xf]
  %v70 = vld [vmem:[%s4 + $0xb8] sm:$0xf]
  %v71 = vld [vmem:[%s4 + $0xbc] sm:$0xf]
  %v72 = vld [vmem:[%s4 + $0xc0] sm:$0xf]
  %v73 = vld [vmem:[%s4 + $0xc4] sm:$0xf]
  %v74 = vld [vmem:[%s4 + $0xc8] sm:$0xf]
  %v75 = vld [vmem:[%s4 + $0xcc] sm:$0xf]
  %v76 = vld [vmem:[%s4 + $0xd0] sm:$0xf]
  %v77 = vld [vmem:[%s4 + $0xd4] sm:$0xf]
  %v78 = vld [vmem:[%s4 + $0xd8] sm:$0xf]
  %v79 = vld [vmem:[%s4 + $0xdc] sm:$0xf]
  %v80 = vld [vmem:[%s4 + $0xe0] sm:$0xf]
  %v81 = vld [vmem:[%s4 + $0xe4] sm:$0xf]
  %v82 = vld [vmem:[%s4 + $0xe8] sm:$0xf]
  %v83 = vld [vmem:[%s4 + $0xec] sm:$0xf]
  %v84 = vld [vmem:[%s4 + $0xf0] sm:$0xf]
  %v85 = vld [vmem:[%s4 + $0xf4] sm:$0xf]
  %v86 = vld [vmem:[%s4 + $0xf8] sm:$0xf]
  %v87 = vld [vmem:[%s4 + $0xfc] sm:$0xf]
  %v88 = vld [vmem:[%s4 + $0x100] sm:$0xf]
  %v89 = vld [vmem:[%s4 + $0x104] sm:$0xf]
  %v90 = vld [vmem:[%s4 + $0x108] sm:$0xf]
  %v91 = vld [vmem:[%s4 + $0x10c] sm:$0xf]
  %v92 = vld [vmem:[%s4 + $0x110] sm:$0xf]
  %v93 = vld [vmem:[%s4 + $0x114] sm:$0xf]
  %v94 = vld [vmem:[%s4 + $0x118] sm:$0xf]
  %v95 = vld [vmem:[%s4 + $0x11c] sm:$0xf]
  %v96 = vld [vmem:[%s4 + $0x120] sm:$0xf]
  %v97 = vld [vmem:[%s4 + $0x124] sm:$0xf]
  %v98 = vld [vmem:[%s4 + $0x128] sm:$0xf]
  %v99 = vld [vmem:[%s4 + $0x12c] sm:$0xf]
  %v100 = vld [vmem:[%s4 + $0x130] sm:$0xf]
  %v101 = vld [vmem:[%s4 + $0x134] sm:$0xf]
  %v102 = vld [vmem:[%s4 + $0x138] sm:$0xf]
  %v103 = vld [vmem:[%s4 + $0x13c] sm:$0xf]
  %v104 = vld [vmem:[%s4 + $0x140] sm:$0xf]
  %v105 = vld [vmem:[%s4 + $0x144] sm:$0xf]
  %v106 = vld [vmem:[%s4 + $0x148] sm:$0xf]
  %v107 = vld [vmem:[%s4 + $0x14c] sm:$0xf]
  %v108 = vld [vmem:[%s4 + $0x150] sm:$0xf]
  %v109 = vld [vmem:[%s4 + $0x154] sm:$0xf]
  %v110 = vld [vmem:[%s4 + $0x158] sm:$0xf]
  %v111 = vld [vmem:[%s4 + $0x15c] sm:$0xf]
  %v112 = vld [vmem:[%s4 + $0x160] sm:$0xf]
  %v113 = vld [vmem:[%s4 + $0x164] sm:$0xf]
  %v114 = vld [vmem:[%s4 + $0x168] sm:$0xf]
  %v115 = vld [vmem:[%s4 + $0x16c] sm:$0xf]
  %v116 = vld [vmem:[%s4 + $0x170] sm:$0xf]
  %v117 = vld [vmem:[%s4 + $0x174] sm:$0xf]
  %v118 = vld [vmem:[%s4 + $0x178] sm:$0xf]
  %v119 = vld [vmem:[%s4 + $0x17c] sm:$0xf]
  %v120 = vld [vmem:[%s4 + $0x180] sm:$0xf]
  %v121 = vld [vmem:[%s4 + $0x184] sm:$0xf]
  %v122 = vld [vmem:[%s4 + $0x188] sm:$0xf]
  %v123 = vld [vmem:[%s4 + $0x18c] sm:$0xf]
  %v124 = vld [vmem:[%s5] sm:$0x1]
  %v125 = vld [vmem:[%s0] sm:$0x7f]
  %v127 = vlaneseq
  %v128 = vshrl.u32 %v127, 7
  %v129 = vsub.s32 0, %v128
  %v130 = vrot.slane %v124, %v129
  %v133 = vcombine.high %v125, %v125
  %v135 = vunpack.c.l.s4 1966171168
  %v136 = vunpack.c.0.s8 %v135
  %v137 = vlaneseq
  %v138 = vshrl.u32 %v137, 7
  %v139 = vsub.s32 %v136, %v138
  %v140 = vrot.slane %v125, %v139
  %v142 = vunpack.c.l.s4 1966171168
  %v143 = vunpack.c.0.s8 %v142
  %v144 = vlaneseq
  %v145 = vshrl.u32 %v144, 7
  %v146 = vsub.s32 %v143, %v145
  %v147 = vrot.slane %v133, %v146
  %v148 = vcombine.high %v140, %v140
  %v149 = vcombine.high %v147, %v147
  %v151 = vunpack.c.l.s4 1966171168
  %v152 = vunpack.c.0.s8 %v151
  %v153 = vlaneseq
  %v154 = vshrl.u32 %v153, 7
  %v155 = vsub.s32 %v152, %v154
  %v156 = vrot.slane %v140, %v155
  %v158 = vunpack.c.l.s4 1966171168
  %v159 = vunpack.c.0.s8 %v158
  %v160 = vlaneseq
  %v161 = vshrl.u32 %v160, 7
  %v162 = vsub.s32 %v159, %v161
  %v163 = vrot.slane %v147, %v162
  %v165 = vunpack.c.l.s4 1966171168
  %v166 = vunpack.c.0.s8 %v165
  %v167 = vlaneseq
  %v168 = vshrl.u32 %v167, 7
  %v169 = vsub.s32 %v166, %v168
  %v170 = vrot.slane %v148, %v169
  %v172 = vunpack.c.l.s4 1966171168
  %v173 = vunpack.c.0.s8 %v172
  %v174 = vlaneseq
  %v175 = vshrl.u32 %v174, 7
  %v176 = vsub.s32 %v173, %v175
  %v177 = vrot.slane %v149, %v176
  %v178 = vcombine.high %v156, %v156
  %v179 = vcombine.high %v163, %v163
  %v180 = vcombine.high %v170, %v170
  %v287 = vunpack.c.l.b16 %v24
  %v288 = vunpack.c.l.b16 %v25
  %v289 = vunpack.c.l.b16 %v26
  %v290 = vunpack.c.l.b16 %v27
  %v291 = vunpack.c.l.b16 %v28
  %v292 = vunpack.c.l.b16 %v29
  %v293 = vunpack.c.l.b16 %v30
  %v294 = vunpack.c.l.b16 %v31
  %v295 = vunpack.c.l.b16 %v32
  %v296 = vunpack.c.l.b16 %v33
  %v297 = vunpack.c.l.b16 %v34
  %v298 = vunpack.c.l.b16 %v35
  %v299 = vunpack.c.l.b16 %v36
  %v300 = vunpack.c.l.b16 %v37
  %v301 = vunpack.c.l.b16 %v38
  %v302 = vunpack.c.l.b16 %v39
  %v303 = vunpack.c.l.b16 %v40
  %v304 = vunpack.c.l.b16 %v41
  %v305 = vunpack.c.l.b16 %v42
  %v306 = vunpack.c.l.b16 %v43
  %v307 = vunpack.c.l.b16 %v44
  %v308 = vunpack.c.l.b16 %v45
  %v309 = vunpack.c.l.b16 %v46
  %v310 = vunpack.c.l.b16 %v47
  %v311 = vunpack.c.l.b16 %v48
  %v312 = vunpack.c.l.b16 %v49
  %v313 = vunpack.c.l.b16 %v50
  %v314 = vunpack.c.l.b16 %v51
  %v315 = vunpack.c.l.b16 %v52
  %v316 = vunpack.c.l.b16 %v53
  %v317 = vunpack.c.l.b16 %v54
  %v318 = vunpack.c.l.b16 %v55
  %v319 = vunpack.c.l.b16 %v56
  %v320 = vunpack.c.l.b16 %v57
  %v321 = vunpack.c.l.b16 %v58
  %v322 = vunpack.c.l.b16 %v59
  %v323 = vunpack.c.l.b16 %v60
  %v324 = vunpack.c.l.b16 %v61
  %v325 = vunpack.c.l.b16 %v62
  %v326 = vunpack.c.l.b16 %v63
  %v327 = vunpack.c.l.b16 %v64
  %v328 = vunpack.c.l.b16 %v65
  %v329 = vunpack.c.l.b16 %v66
  %v330 = vunpack.c.l.b16 %v67
  %v331 = vunpack.c.l.b16 %v68
  %v332 = vunpack.c.l.b16 %v69
  %v333 = vunpack.c.l.b16 %v70
  %v334 = vunpack.c.l.b16 %v71
  %v335 = vunpack.c.l.b16 %v72
  %v336 = vunpack.c.l.b16 %v73
  %v337 = vunpack.c.l.b16 %v74
  %v338 = vunpack.c.l.b16 %v75
  %v339 = vunpack.c.l.b16 %v76
  %v340 = vunpack.c.l.b16 %v77
  %v341 = vunpack.c.l.b16 %v78
  %v342 = vunpack.c.l.b16 %v79
  %v343 = vunpack.c.l.b16 %v80
  %v344 = vunpack.c.l.b16 %v81
  %v345 = vunpack.c.l.b16 %v82
  %v346 = vunpack.c.l.b16 %v83
  %v347 = vunpack.c.l.b16 %v84
  %v348 = vunpack.c.l.b16 %v85
  %v349 = vunpack.c.l.b16 %v86
  %v350 = vunpack.c.l.b16 %v87
  %v351 = vunpack.c.l.b16 %v88
  %v352 = vunpack.c.l.b16 %v89
  %v353 = vunpack.c.l.b16 %v90
  %v354 = vunpack.c.l.b16 %v91
  %v355 = vunpack.c.l.b16 %v92
  %v356 = vunpack.c.l.b16 %v93
  %v357 = vunpack.c.l.b16 %v94
  %v358 = vunpack.c.l.b16 %v95
  %v359 = vunpack.c.l.b16 %v96
  %v360 = vunpack.c.l.b16 %v97
  %v361 = vunpack.c.l.b16 %v98
  %v362 = vunpack.c.l.b16 %v99
  %v363 = vunpack.c.l.b16 %v100
  %v364 = vunpack.c.l.b16 %v101
  %v365 = vunpack.c.l.b16 %v102
  %v366 = vunpack.c.l.b16 %v103
  %v367 = vunpack.c.l.b16 %v104
  %v368 = vunpack.c.l.b16 %v105
  %v369 = vunpack.c.l.b16 %v106
  %v370 = vunpack.c.l.b16 %v107
  %v371 = vunpack.c.l.b16 %v108
  %v372 = vunpack.c.l.b16 %v109
  %v373 = vunpack.c.l.b16 %v110
  %v374 = vunpack.c.l.b16 %v111
  %v375 = vunpack.c.l.b16 %v112
  %v376 = vunpack.c.l.b16 %v113
  %v377 = vunpack.c.l.b16 %v114
  %v378 = vunpack.c.l.b16 %v115
  %v379 = vunpack.c.l.b16 %v116
  %v380 = vunpack.c.l.b16 %v117
  %v381 = vunpack.c.l.b16 %v118
  %v382 = vunpack.c.l.b16 %v119
  %v383 = vunpack.c.l.b16 %v120
  %v384 = vunpack.c.l.b16 %v121
  %v385 = vunpack.c.l.b16 %v122
  %v386 = vunpack.c.l.b16 %v123
  %v387 = vpack.c.b16 %v288, %v287
  %v388 = vpack.c.b16 %v290, %v289
  %v389 = vpack.c.b16 %v292, %v291
  %v390 = vpack.c.b16 %v294, %v293
  %v391 = vpack.c.b16 %v296, %v295
  %v392 = vpack.c.b16 %v298, %v297
  %v393 = vpack.c.b16 %v300, %v299
  %v394 = vpack.c.b16 %v302, %v301
  %v395 = vpack.c.b16 %v304, %v303
  %v396 = vpack.c.b16 %v306, %v305
  %v397 = vpack.c.b16 %v308, %v307
  %v398 = vpack.c.b16 %v310, %v309
  %v399 = vpack.c.b16 %v312, %v311
  %v400 = vpack.c.b16 %v314, %v313
  %v401 = vpack.c.b16 %v316, %v315
  %v402 = vpack.c.b16 %v318, %v317
  %v403 = vpack.c.b16 %v320, %v319
  %v404 = vpack.c.b16 %v322, %v321
  %v405 = vpack.c.b16 %v324, %v323
  %v406 = vpack.c.b16 %v326, %v325
  %v407 = vpack.c.b16 %v328, %v327
  %v408 = vpack.c.b16 %v330, %v329
  %v409 = vpack.c.b16 %v332, %v331
  %v410 = vpack.c.b16 %v334, %v333
  %v411 = vpack.c.b16 %v336, %v335
  %v412 = vpack.c.b16 %v338, %v337
  %v413 = vpack.c.b16 %v340, %v339
  %v414 = vpack.c.b16 %v342, %v341
  %v415 = vpack.c.b16 %v344, %v343
  %v416 = vpack.c.b16 %v346, %v345
  %v417 = vpack.c.b16 %v348, %v347
  %v418 = vpack.c.b16 %v350, %v349
  %v419 = vpack.c.b16 %v352, %v351
  %v420 = vpack.c.b16 %v354, %v353
  %v421 = vpack.c.b16 %v356, %v355
  %v422 = vpack.c.b16 %v358, %v357
  %v423 = vpack.c.b16 %v360, %v359
  %v424 = vpack.c.b16 %v362, %v361
  %v425 = vpack.c.b16 %v364, %v363
  %v426 = vpack.c.b16 %v366, %v365
  %v427 = vpack.c.b16 %v368, %v367
  %v428 = vpack.c.b16 %v370, %v369
  %v429 = vpack.c.b16 %v372, %v371
  %v430 = vpack.c.b16 %v374, %v373
  %v431 = vpack.c.b16 %v376, %v375
  %v432 = vpack.c.b16 %v378, %v377
  %v433 = vpack.c.b16 %v380, %v379
  %v434 = vpack.c.b16 %v382, %v381
  %v435 = vpack.c.b16 %v384, %v383
  %v436 = vpack.c.b16 %v386, %v385
  %vm487 = vcmask 261120
  %v489 = vsel %vm487, %v179, 0
  %491 = vmatprep.subr.bf16.mxu0 0
  %492 = vmatpush1.bf16.msra.mxu0 %v387
  %493 = vmatprep.subr.bf16.mxu0 0
  %494 = vmatpush1.bf16.msra.mxu0 %v388
  %495 = vmatprep.subr.bf16.mxu0 0
  %496 = vmatpush1.bf16.msra.mxu0 %v389
  %497 = vmatprep.subr.bf16.mxu0 0
  %498 = vmatpush1.bf16.msra.mxu0 %v390
  %499 = vmatprep.subr.bf16.mxu0 0
  %500 = vmatpush1.bf16.msra.mxu0 %v391
  %501 = vmatprep.subr.bf16.mxu0 0
  %502 = vmatpush1.bf16.msra.mxu0 %v392
  %503 = vmatprep.subr.bf16.mxu0 0
  %504 = vmatpush1.bf16.msra.mxu0 %v393
  %505 = vmatprep.subr.bf16.mxu0 0
  %506 = vmatpush1.bf16.msra.mxu0 %v394
  %507 = vmatprep.subr.bf16.mxu0 0
  %508 = vmatpush1.bf16.msra.mxu0 %v395
  %509 = vmatprep.subr.bf16.mxu0 0
  %510 = vmatpush1.bf16.msra.mxu0 %v396
  %511 = vmatprep.subr.bf16.mxu0 0
  %512 = vmatpush1.bf16.msra.mxu0 %v397
  %513 = vmatprep.subr.bf16.mxu0 0
  %514 = vmatpush1.bf16.msra.mxu0 %v398
  %515 = vmatprep.subr.bf16.mxu0 0
  %516 = vmatpush1.bf16.msra.mxu0 %v399
  %517 = vmatprep.subr.bf16.mxu0 0
  %518 = vmatpush1.bf16.msra.mxu0 %v400
  %519 = vmatprep.subr.bf16.mxu0 0
  %520 = vmatpush1.bf16.msra.mxu0 %v401
  %521 = vmatprep.subr.bf16.mxu0 0
  %522 = vmatpush1.bf16.msra.mxu0 %v402
  %523 = vmatprep.mubr.bf16.mxu0 %v170
  %524 = vmatmul.mubr.bf16.gmra.mrb[0].mxu0 %v156
  %v525 = vpop.f32.mrb[0].mxu0
  %v526 = vadd.f32 %v130, %v525
  %v527 = vpop.f32.mrb[0].mxu0
  %v528 = vpop.f32.mrb[0].mxu0
  %v529 = vpop.f32.mrb[0].mxu0
  %530 = vdwg.mxu0
  %531 = vmatprep.subr.bf16.mxu0 0
  %532 = vmatpush1.bf16.msra.mxu0 %v403
  %533 = vmatprep.subr.bf16.mxu0 0
  %534 = vmatpush1.bf16.msra.mxu0 %v404
  %535 = vmatprep.subr.bf16.mxu0 0
  %536 = vmatpush1.bf16.msra.mxu0 %v405
  %537 = vmatprep.subr.bf16.mxu0 0
  %538 = vmatpush1.bf16.msra.mxu0 %v406
  %539 = vmatprep.subr.bf16.mxu0 0
  %540 = vmatpush1.bf16.msra.mxu0 %v407
  %541 = vmatprep.subr.bf16.mxu0 0
  %542 = vmatpush1.bf16.msra.mxu0 %v408
  %543 = vmatprep.subr.bf16.mxu0 0
  %544 = vmatpush1.bf16.msra.mxu0 %v409
  %545 = vmatprep.subr.bf16.mxu0 0
  %546 = vmatpush1.bf16.msra.mxu0 %v410
  %547 = vmatprep.subr.bf16.mxu0 0
  %548 = vmatpush1.bf16.msra.mxu0 %v411
  %549 = vmatprep.subr.bf16.mxu0 0
  %550 = vmatpush1.bf16.msra.mxu0 %v412
  %551 = vmatprep.subr.bf16.mxu0 0
  %552 = vmatpush1.bf16.msra.mxu0 %v413
  %553 = vmatprep.subr.bf16.mxu0 0
  %554 = vmatpush1.bf16.msra.mxu0 %v414
  %555 = vmatprep.subr.bf16.mxu0 0
  %556 = vmatpush1.bf16.msra.mxu0 %v415
  %557 = vmatprep.subr.bf16.mxu0 0
  %558 = vmatpush1.bf16.msra.mxu0 %v416
  %559 = vmatprep.subr.bf16.mxu0 0
  %560 = vmatpush1.bf16.msra.mxu0 %v417
  %561 = vmatprep.subr.bf16.mxu0 0
  %562 = vmatpush1.bf16.msra.mxu0 %v418
  %563 = vmatprep.mubr.bf16.mxu0 %v180
  %564 = vmatmul.mubr.bf16.gmra.mrb[0].mxu0 %v178
  %v565 = vpop.f32.mrb[0].mxu0
  %v566 = vadd.f32 %v526, %v565
  %v567 = vpop.f32.mrb[0].mxu0
  %v568 = vpop.f32.mrb[0].mxu0
  %v569 = vpop.f32.mrb[0].mxu0
  %570 = vdwg.mxu0
  %571 = vmatprep.subr.bf16.mxu0 0
  %572 = vmatpush1.bf16.msra.mxu0 %v419
  %573 = vmatprep.subr.bf16.mxu0 0
  %574 = vmatpush1.bf16.msra.mxu0 %v420
  %575 = vmatprep.subr.bf16.mxu0 0
  %576 = vmatpush1.bf16.msra.mxu0 %v421
  %577 = vmatprep.subr.bf16.mxu0 0
  %578 = vmatpush1.bf16.msra.mxu0 %v422
  %579 = vmatprep.subr.bf16.mxu0 0
  %580 = vmatpush1.bf16.msra.mxu0 %v423
  %581 = vmatprep.subr.bf16.mxu0 0
  %582 = vmatpush1.bf16.msra.mxu0 %v424
  %583 = vmatprep.subr.bf16.mxu0 0
  %584 = vmatpush1.bf16.msra.mxu0 %v425
  %585 = vmatprep.subr.bf16.mxu0 0
  %586 = vmatpush1.bf16.msra.mxu0 %v426
  %587 = vmatprep.subr.bf16.mxu0 0
  %588 = vmatpush1.bf16.msra.mxu0 %v427
  %589 = vmatprep.subr.bf16.mxu0 0
  %590 = vmatpush1.bf16.msra.mxu0 %v428
  %591 = vmatprep.subr.bf16.mxu0 0
  %592 = vmatpush1.bf16.msra.mxu0 %v429
  %593 = vmatprep.subr.bf16.mxu0 0
  %594 = vmatpush1.bf16.msra.mxu0 %v430
  %595 = vmatprep.subr.bf16.mxu0 0
  %596 = vmatpush1.bf16.msra.mxu0 %v431
  %597 = vmatprep.subr.bf16.mxu0 0
  %598 = vmatpush1.bf16.msra.mxu0 %v432
  %599 = vmatprep.subr.bf16.mxu0 0
  %600 = vmatpush1.bf16.msra.mxu0 %v433
  %601 = vmatprep.subr.bf16.mxu0 0
  %602 = vmatpush1.bf16.msra.mxu0 %v434
  %603 = vmatprep.mubr.bf16.mxu0 %v177
  %604 = vmatmul.mubr.bf16.gmra.mrb[0].mxu0 %v163
  %v605 = vpop.f32.mrb[0].mxu0
  %v606 = vadd.f32 %v566, %v605
  %v607 = vpop.f32.mrb[0].mxu0
  %v608 = vpop.f32.mrb[0].mxu0
  %v609 = vpop.f32.mrb[0].mxu0
  %610 = vdwg.mxu0
  %611 = vmatprep.subr.bf16.mxu0 0
  %612 = vmatpush1.bf16.msra.mxu0 %v435
  %613 = vmatprep.subr.bf16.mxu0 0
  %614 = vmatpush1.bf16.msra.mxu0 %v436
  %615 = vmatprep.subr.bf16.mxu0 0
  %616 = vmatpush1.bf16.msra.mxu0 0
  %617 = vmatprep.subr.bf16.mxu0 0
  %618 = vmatpush1.bf16.msra.mxu0 0
  %619 = vmatprep.subr.bf16.mxu0 0
  %620 = vmatpush1.bf16.msra.mxu0 0
  %621 = vmatprep.subr.bf16.mxu0 0
  %622 = vmatpush1.bf16.msra.mxu0 0
  %623 = vmatprep.subr.bf16.mxu0 0
  %624 = vmatpush1.bf16.msra.mxu0 0
  %625 = vmatprep.subr.bf16.mxu0 0
  %626 = vmatpush1.bf16.msra.mxu0 0
  %627 = vmatprep.subr.bf16.mxu0 0
  %628 = vmatpush1.bf16.msra.mxu0 0
  %629 = vmatprep.subr.bf16.mxu0 0
  %630 = vmatpush1.bf16.msra.mxu0 0
  %631 = vmatprep.subr.bf16.mxu0 0
  %632 = vmatpush1.bf16.msra.mxu0 0
  %633 = vmatprep.subr.bf16.mxu0 0
  %634 = vmatpush1.bf16.msra.mxu0 0
  %635 = vmatprep.subr.bf16.mxu0 0
  %636 = vmatpush1.bf16.msra.mxu0 0
  %637 = vmatprep.subr.bf16.mxu0 0
  %638 = vmatpush1.bf16.msra.mxu0 0
  %639 = vmatprep.subr.bf16.mxu0 0
  %640 = vmatpush1.bf16.msra.mxu0 0
  %641 = vmatprep.subr.bf16.mxu0 0
  %642 = vmatpush1.bf16.msra.mxu0 0
  %643 = vmatprep.mubr.bf16.mxu0 0
  %644 = vmatmul.mubr.bf16.gmra.mrb[0].mxu0 %v489
  %v645 = vpop.f32.mrb[0].mxu0
  %v646 = vadd.f32 %v606, %v645
  %v647 = vpop.f32.mrb[0].mxu0
  %v648 = vpop.f32.mrb[0].mxu0
  %v649 = vpop.f32.mrb[0].mxu0
  %650 = vdwg.mxu0
  %v651 = vmax.f32 %v646, 0.0
  %v652 = vld [vmem:[%s1] sm:$0x7f]
  %v654 = vcombine.high %v652, %v652
  %v656 = vunpack.c.l.s4 1966171168
  %v657 = vunpack.c.0.s8 %v656
  %v658 = vlaneseq
  %v659 = vshrl.u32 %v658, 7
  %v660 = vsub.s32 %v657, %v659
  %v661 = vrot.slane %v652, %v660
  %v663 = vunpack.c.l.s4 1966171168
  %v664 = vunpack.c.0.s8 %v663
  %v665 = vlaneseq
  %v666 = vshrl.u32 %v665, 7
  %v667 = vsub.s32 %v664, %v666
  %v668 = vrot.slane %v654, %v667
  %v669 = vcombine.high %v661, %v661
  %v670 = vcombine.high %v668, %v668
  %v672 = vunpack.c.l.s4 1966171168
  %v673 = vunpack.c.0.s8 %v672
  %v674 = vlaneseq
  %v675 = vshrl.u32 %v674, 7
  %v676 = vsub.s32 %v673, %v675
  %v677 = vrot.slane %v661, %v676
  %v679 = vunpack.c.l.s4 1966171168
  %v680 = vunpack.c.0.s8 %v679
  %v681 = vlaneseq
  %v682 = vshrl.u32 %v681, 7
  %v683 = vsub.s32 %v680, %v682
  %v684 = vrot.slane %v668, %v683
  %v686 = vunpack.c.l.s4 1966171168
  %v687 = vunpack.c.0.s8 %v686
  %v688 = vlaneseq
  %v689 = vshrl.u32 %v688, 7
  %v690 = vsub.s32 %v687, %v689
  %v691 = vrot.slane %v669, %v690
  %v693 = vunpack.c.l.s4 1966171168
  %v694 = vunpack.c.0.s8 %v693
  %v695 = vlaneseq
  %v696 = vshrl.u32 %v695, 7
  %v697 = vsub.s32 %v694, %v696
  %v698 = vrot.slane %v670, %v697
  %v699 = vcombine.high %v677, %v677
  %v700 = vcombine.high %v684, %v684
  %v701 = vcombine.high %v691, %v691
  %v709 = vsel %vm487, %v700, 0
  %711 = vmatprep.subr.bf16.mxu0 0
  %712 = vmatpush1.bf16.msra.mxu0 %v387
  %713 = vmatprep.subr.bf16.mxu0 0
  %714 = vmatpush1.bf16.msra.mxu0 %v388
  %715 = vmatprep.subr.bf16.mxu0 0
  %716 = vmatpush1.bf16.msra.mxu0 %v389
  %717 = vmatprep.subr.bf16.mxu0 0
  %718 = vmatpush1.bf16.msra.mxu0 %v390
  %719 = vmatprep.subr.bf16.mxu0 0
  %720 = vmatpush1.bf16.msra.mxu0 %v391
  %721 = vmatprep.subr.bf16.mxu0 0
  %722 = vmatpush1.bf16.msra.mxu0 %v392
  %723 = vmatprep.subr.bf16.mxu0 0
  %724 = vmatpush1.bf16.msra.mxu0 %v393
  %725 = vmatprep.subr.bf16.mxu0 0
  %726 = vmatpush1.bf16.msra.mxu0 %v394
  %727 = vmatprep.subr.bf16.mxu0 0
  %728 = vmatpush1.bf16.msra.mxu0 %v395
  %729 = vmatprep.subr.bf16.mxu0 0
  %730 = vmatpush1.bf16.msra.mxu0 %v396
  %731 = vmatprep.subr.bf16.mxu0 0
  %732 = vmatpush1.bf16.msra.mxu0 %v397
  %733 = vmatprep.subr.bf16.mxu0 0
  %734 = vmatpush1.bf16.msra.mxu0 %v398
  %735 = vmatprep.subr.bf16.mxu0 0
  %736 = vmatpush1.bf16.msra.mxu0 %v399
  %737 = vmatprep.subr.bf16.mxu0 0
  %738 = vmatpush1.bf16.msra.mxu0 %v400
  %739 = vmatprep.subr.bf16.mxu0 0
  %740 = vmatpush1.bf16.msra.mxu0 %v401
  %741 = vmatprep.subr.bf16.mxu0 0
  %742 = vmatpush1.bf16.msra.mxu0 %v402
  %743 = vmatprep.mubr.bf16.mxu0 %v691
  %744 = vmatmul.mubr.bf16.gmra.mrb[0].mxu0 %v677
  %v745 = vpop.f32.mrb[0].mxu0
  %v746 = vadd.f32 %v130, %v745
  %v747 = vpop.f32.mrb[0].mxu0
  %v748 = vpop.f32.mrb[0].mxu0
  %v749 = vpop.f32.mrb[0].mxu0
  %750 = vdwg.mxu0
  %751 = vmatprep.subr.bf16.mxu0 0
  %752 = vmatpush1.bf16.msra.mxu0 %v403
  %753 = vmatprep.subr.bf16.mxu0 0
  %754 = vmatpush1.bf16.msra.mxu0 %v404
  %755 = vmatprep.subr.bf16.mxu0 0
  %756 = vmatpush1.bf16.msra.mxu0 %v405
  %757 = vmatprep.subr.bf16.mxu0 0
  %758 = vmatpush1.bf16.msra.mxu0 %v406
  %759 = vmatprep.subr.bf16.mxu0 0
  %760 = vmatpush1.bf16.msra.mxu0 %v407
  %761 = vmatprep.subr.bf16.mxu0 0
  %762 = vmatpush1.bf16.msra.mxu0 %v408
  %763 = vmatprep.subr.bf16.mxu0 0
  %764 = vmatpush1.bf16.msra.mxu0 %v409
  %765 = vmatprep.subr.bf16.mxu0 0
  %766 = vmatpush1.bf16.msra.mxu0 %v410
  %767 = vmatprep.subr.bf16.mxu0 0
  %768 = vmatpush1.bf16.msra.mxu0 %v411
  %769 = vmatprep.subr.bf16.mxu0 0
  %770 = vmatpush1.bf16.msra.mxu0 %v412
  %771 = vmatprep.subr.bf16.mxu0 0
  %772 = vmatpush1.bf16.msra.mxu0 %v413
  %773 = vmatprep.subr.bf16.mxu0 0
  %774 = vmatpush1.bf16.msra.mxu0 %v414
  %775 = vmatprep.subr.bf16.mxu0 0
  %776 = vmatpush1.bf16.msra.mxu0 %v415
  %777 = vmatprep.subr.bf16.mxu0 0
  %778 = vmatpush1.bf16.msra.mxu0 %v416
  %779 = vmatprep.subr.bf16.mxu0 0
  %780 = vmatpush1.bf16.msra.mxu0 %v417
  %781 = vmatprep.subr.bf16.mxu0 0
  %782 = vmatpush1.bf16.msra.mxu0 %v418
  %783 = vmatprep.mubr.bf16.mxu0 %v701
  %784 = vmatmul.mubr.bf16.gmra.mrb[0].mxu0 %v699
  %v785 = vpop.f32.mrb[0].mxu0
  %v786 = vadd.f32 %v746, %v785
  %v787 = vpop.f32.mrb[0].mxu0
  %v788 = vpop.f32.mrb[0].mxu0
  %v789 = vpop.f32.mrb[0].mxu0
  %790 = vdwg.mxu0
  %791 = vmatprep.subr.bf16.mxu0 0
  %792 = vmatpush1.bf16.msra.mxu0 %v419
  %793 = vmatprep.subr.bf16.mxu0 0
  %794 = vmatpush1.bf16.msra.mxu0 %v420
  %795 = vmatprep.subr.bf16.mxu0 0
  %796 = vmatpush1.bf16.msra.mxu0 %v421
  %797 = vmatprep.subr.bf16.mxu0 0
  %798 = vmatpush1.bf16.msra.mxu0 %v422
  %799 = vmatprep.subr.bf16.mxu0 0
  %800 = vmatpush1.bf16.msra.mxu0 %v423
  %801 = vmatprep.subr.bf16.mxu0 0
  %802 = vmatpush1.bf16.msra.mxu0 %v424
  %803 = vmatprep.subr.bf16.mxu0 0
  %804 = vmatpush1.bf16.msra.mxu0 %v425
  %805 = vmatprep.subr.bf16.mxu0 0
  %806 = vmatpush1.bf16.msra.mxu0 %v426
  %807 = vmatprep.subr.bf16.mxu0 0
  %808 = vmatpush1.bf16.msra.mxu0 %v427
  %809 = vmatprep.subr.bf16.mxu0 0
  %810 = vmatpush1.bf16.msra.mxu0 %v428
  %811 = vmatprep.subr.bf16.mxu0 0
  %812 = vmatpush1.bf16.msra.mxu0 %v429
  %813 = vmatprep.subr.bf16.mxu0 0
  %814 = vmatpush1.bf16.msra.mxu0 %v430
  %815 = vmatprep.subr.bf16.mxu0 0
  %816 = vmatpush1.bf16.msra.mxu0 %v431
  %817 = vmatprep.subr.bf16.mxu0 0
  %818 = vmatpush1.bf16.msra.mxu0 %v432
  %819 = vmatprep.subr.bf16.mxu0 0
  %820 = vmatpush1.bf16.msra.mxu0 %v433
  %821 = vmatprep.subr.bf16.mxu0 0
  %822 = vmatpush1.bf16.msra.mxu0 %v434
  %823 = vmatprep.mubr.bf16.mxu0 %v698
  %824 = vmatmul.mubr.bf16.gmra.mrb[0].mxu0 %v684
  %v825 = vpop.f32.mrb[0].mxu0
  %v826 = vadd.f32 %v786, %v825
  %v827 = vpop.f32.mrb[0].mxu0
  %v828 = vpop.f32.mrb[0].mxu0
  %v829 = vpop.f32.mrb[0].mxu0
  %830 = vdwg.mxu0
  %831 = vmatprep.subr.bf16.mxu0 0
  %832 = vmatpush1.bf16.msra.mxu0 %v435
  %833 = vmatprep.subr.bf16.mxu0 0
  %834 = vmatpush1.bf16.msra.mxu0 %v436
  %835 = vmatprep.subr.bf16.mxu0 0
  %836 = vmatpush1.bf16.msra.mxu0 0
  %837 = vmatprep.subr.bf16.mxu0 0
  %838 = vmatpush1.bf16.msra.mxu0 0
  %839 = vmatprep.subr.bf16.mxu0 0
  %840 = vmatpush1.bf16.msra.mxu0 0
  %841 = vmatprep.subr.bf16.mxu0 0
  %842 = vmatpush1.bf16.msra.mxu0 0
  %843 = vmatprep.subr.bf16.mxu0 0
  %844 = vmatpush1.bf16.msra.mxu0 0
  %845 = vmatprep.subr.bf16.mxu0 0
  %846 = vmatpush1.bf16.msra.mxu0 0
  %847 = vmatprep.subr.bf16.mxu0 0
  %848 = vmatpush1.bf16.msra.mxu0 0
  %849 = vmatprep.subr.bf16.mxu0 0
  %850 = vmatpush1.bf16.msra.mxu0 0
  %851 = vmatprep.subr.bf16.mxu0 0
  %852 = vmatpush1.bf16.msra.mxu0 0
  %853 = vmatprep.subr.bf16.mxu0 0
  %854 = vmatpush1.bf16.msra.mxu0 0
  %855 = vmatprep.subr.bf16.mxu0 0
  %856 = vmatpush1.bf16.msra.mxu0 0
  %857 = vmatprep.subr.bf16.mxu0 0
  %858 = vmatpush1.bf16.msra.mxu0 0
  %859 = vmatprep.subr.bf16.mxu0 0
  %860 = vmatpush1.bf16.msra.mxu0 0
  %861 = vmatprep.subr.bf16.mxu0 0
  %862 = vmatpush1.bf16.msra.mxu0 0
  %863 = vmatprep.mubr.bf16.mxu0 0
  %864 = vmatmul.mubr.bf16.gmra.mrb[0].mxu0 %v709
  %v865 = vpop.f32.mrb[0].mxu0
  %v866 = vadd.f32 %v826, %v865
  %v867 = vpop.f32.mrb[0].mxu0
  %v868 = vpop.f32.mrb[0].mxu0
  %v869 = vpop.f32.mrb[0].mxu0
  %870 = vdwg.mxu0
  %v871 = vmax.f32 %v866, 0.0
  %v872 = vmax.f32 %v651, %v871
  %v873 = vld [vmem:[%s2] sm:$0x7f]
  %v875 = vcombine.high %v873, %v873
  %v877 = vunpack.c.l.s4 1966171168
  %v878 = vunpack.c.0.s8 %v877
  %v879 = vlaneseq
  %v880 = vshrl.u32 %v879, 7
  %v881 = vsub.s32 %v878, %v880
  %v882 = vrot.slane %v873, %v881
  %v884 = vunpack.c.l.s4 1966171168
  %v885 = vunpack.c.0.s8 %v884
  %v886 = vlaneseq
  %v887 = vshrl.u32 %v886, 7
  %v888 = vsub.s32 %v885, %v887
  %v889 = vrot.slane %v875, %v888
  %v890 = vcombine.high %v882, %v882
  %v891 = vcombine.high %v889, %v889
  %v893 = vunpack.c.l.s4 1966171168
  %v894 = vunpack.c.0.s8 %v893
  %v895 = vlaneseq
  %v896 = vshrl.u32 %v895, 7
  %v897 = vsub.s32 %v894, %v896
  %v898 = vrot.slane %v882, %v897
  %v900 = vunpack.c.l.s4 1966171168
  %v901 = vunpack.c.0.s8 %v900
  %v902 = vlaneseq
  %v903 = vshrl.u32 %v902, 7
  %v904 = vsub.s32 %v901, %v903
  %v905 = vrot.slane %v889, %v904
  %v907 = vunpack.c.l.s4 1966171168
  %v908 = vunpack.c.0.s8 %v907
  %v909 = vlaneseq
  %v910 = vshrl.u32 %v909, 7
  %v911 = vsub.s32 %v908, %v910
  %v912 = vrot.slane %v890, %v911
  %v914 = vunpack.c.l.s4 1966171168
  %v915 = vunpack.c.0.s8 %v914
  %v916 = vlaneseq
  %v917 = vshrl.u32 %v916, 7
  %v918 = vsub.s32 %v915, %v917
  %v919 = vrot.slane %v891, %v918
  %v920 = vcombine.high %v898, %v898
  %v921 = vcombine.high %v905, %v905
  %v922 = vcombine.high %v912, %v912
  %v930 = vsel %vm487, %v921, 0
  %932 = vmatprep.subr.bf16.mxu0 0
  %933 = vmatpush1.bf16.msra.mxu0 %v387
  %934 = vmatprep.subr.bf16.mxu0 0
  %935 = vmatpush1.bf16.msra.mxu0 %v388
  %936 = vmatprep.subr.bf16.mxu0 0
  %937 = vmatpush1.bf16.msra.mxu0 %v389
  %938 = vmatprep.subr.bf16.mxu0 0
  %939 = vmatpush1.bf16.msra.mxu0 %v390
  %940 = vmatprep.subr.bf16.mxu0 0
  %941 = vmatpush1.bf16.msra.mxu0 %v391
  %942 = vmatprep.subr.bf16.mxu0 0
  %943 = vmatpush1.bf16.msra.mxu0 %v392
  %944 = vmatprep.subr.bf16.mxu0 0
  %945 = vmatpush1.bf16.msra.mxu0 %v393
  %946 = vmatprep.subr.bf16.mxu0 0
  %947 = vmatpush1.bf16.msra.mxu0 %v394
  %948 = vmatprep.subr.bf16.mxu0 0
  %949 = vmatpush1.bf16.msra.mxu0 %v395
  %950 = vmatprep.subr.bf16.mxu0 0
  %951 = vmatpush1.bf16.msra.mxu0 %v396
  %952 = vmatprep.subr.bf16.mxu0 0
  %953 = vmatpush1.bf16.msra.mxu0 %v397
  %954 = vmatprep.subr.bf16.mxu0 0
  %955 = vmatpush1.bf16.msra.mxu0 %v398
  %956 = vmatprep.subr.bf16.mxu0 0
  %957 = vmatpush1.bf16.msra.mxu0 %v399
  %958 = vmatprep.subr.bf16.mxu0 0
  %959 = vmatpush1.bf16.msra.mxu0 %v400
  %960 = vmatprep.subr.bf16.mxu0 0
  %961 = vmatpush1.bf16.msra.mxu0 %v401
  %962 = vmatprep.subr.bf16.mxu0 0
  %963 = vmatpush1.bf16.msra.mxu0 %v402
  %964 = vmatprep.mubr.bf16.mxu0 %v912
  %965 = vmatmul.mubr.bf16.gmra.mrb[0].mxu0 %v898
  %v966 = vpop.f32.mrb[0].mxu0
  %v967 = vadd.f32 %v130, %v966
  %v968 = vpop.f32.mrb[0].mxu0
  %v969 = vpop.f32.mrb[0].mxu0
  %v970 = vpop.f32.mrb[0].mxu0
  %971 = vdwg.mxu0
  %972 = vmatprep.subr.bf16.mxu0 0
  %973 = vmatpush1.bf16.msra.mxu0 %v403
  %974 = vmatprep.subr.bf16.mxu0 0
  %975 = vmatpush1.bf16.msra.mxu0 %v404
  %976 = vmatprep.subr.bf16.mxu0 0
  %977 = vmatpush1.bf16.msra.mxu0 %v405
  %978 = vmatprep.subr.bf16.mxu0 0
  %979 = vmatpush1.bf16.msra.mxu0 %v406
  %980 = vmatprep.subr.bf16.mxu0 0
  %981 = vmatpush1.bf16.msra.mxu0 %v407
  %982 = vmatprep.subr.bf16.mxu0 0
  %983 = vmatpush1.bf16.msra.mxu0 %v408
  %984 = vmatprep.subr.bf16.mxu0 0
  %985 = vmatpush1.bf16.msra.mxu0 %v409
  %986 = vmatprep.subr.bf16.mxu0 0
  %987 = vmatpush1.bf16.msra.mxu0 %v410
  %988 = vmatprep.subr.bf16.mxu0 0
  %989 = vmatpush1.bf16.msra.mxu0 %v411
  %990 = vmatprep.subr.bf16.mxu0 0
  %991 = vmatpush1.bf16.msra.mxu0 %v412
  %992 = vmatprep.subr.bf16.mxu0 0
  %993 = vmatpush1.bf16.msra.mxu0 %v413
  %994 = vmatprep.subr.bf16.mxu0 0
  %995 = vmatpush1.bf16.msra.mxu0 %v414
  %996 = vmatprep.subr.bf16.mxu0 0
  %997 = vmatpush1.bf16.msra.mxu0 %v415
  %998 = vmatprep.subr.bf16.mxu0 0
  %999 = vmatpush1.bf16.msra.mxu0 %v416
  %1000 = vmatprep.subr.bf16.mxu0 0
  %1001 = vmatpush1.bf16.msra.mxu0 %v417
  %1002 = vmatprep.subr.bf16.mxu0 0
  %1003 = vmatpush1.bf16.msra.mxu0 %v418
  %1004 = vmatprep.mubr.bf16.mxu0 %v922
  %1005 = vmatmul.mubr.bf16.gmra.mrb[0].mxu0 %v920
  %v1006 = vpop.f32.mrb[0].mxu0
  %v1007 = vadd.f32 %v967, %v1006
  %v1008 = vpop.f32.mrb[0].mxu0
  %v1009 = vpop.f32.mrb[0].mxu0
  %v1010 = vpop.f32.mrb[0].mxu0
  %1011 = vdwg.mxu0
  %1012 = vmatprep.subr.bf16.mxu0 0
  %1013 = vmatpush1.bf16.msra.mxu0 %v419
  %1014 = vmatprep.subr.bf16.mxu0 0
  %1015 = vmatpush1.bf16.msra.mxu0 %v420
  %1016 = vmatprep.subr.bf16.mxu0 0
  %1017 = vmatpush1.bf16.msra.mxu0 %v421
  %1018 = vmatprep.subr.bf16.mxu0 0
  %1019 = vmatpush1.bf16.msra.mxu0 %v422
  %1020 = vmatprep.subr.bf16.mxu0 0
  %1021 = vmatpush1.bf16.msra.mxu0 %v423
  %1022 = vmatprep.subr.bf16.mxu0 0
  %1023 = vmatpush1.bf16.msra.mxu0 %v424
  %1024 = vmatprep.subr.bf16.mxu0 0
  %1025 = vmatpush1.bf16.msra.mxu0 %v425
  %1026 = vmatprep.subr.bf16.mxu0 0
  %1027 = vmatpush1.bf16.msra.mxu0 %v426
  %1028 = vmatprep.subr.bf16.mxu0 0
  %1029 = vmatpush1.bf16.msra.mxu0 %v427
  %1030 = vmatprep.subr.bf16.mxu0 0
  %1031 = vmatpush1.bf16.msra.mxu0 %v428
  %1032 = vmatprep.subr.bf16.mxu0 0
  %1033 = vmatpush1.bf16.msra.mxu0 %v429
  %1034 = vmatprep.subr.bf16.mxu0 0
  %1035 = vmatpush1.bf16.msra.mxu0 %v430
  %1036 = vmatprep.subr.bf16.mxu0 0
  %1037 = vmatpush1.bf16.msra.mxu0 %v431
  %1038 = vmatprep.subr.bf16.mxu0 0
  %1039 = vmatpush1.bf16.msra.mxu0 %v432
  %1040 = vmatprep.subr.bf16.mxu0 0
  %1041 = vmatpush1.bf16.msra.mxu0 %v433
  %1042 = vmatprep.subr.bf16.mxu0 0
  %1043 = vmatpush1.bf16.msra.mxu0 %v434
  %1044 = vmatprep.mubr.bf16.mxu0 %v919
  %1045 = vmatmul.mubr.bf16.gmra.mrb[0].mxu0 %v905
  %v1046 = vpop.f32.mrb[0].mxu0
  %v1047 = vadd.f32 %v1007, %v1046
  %v1048 = vpop.f32.mrb[0].mxu0
  %v1049 = vpop.f32.mrb[0].mxu0
  %v1050 = vpop.f32.mrb[0].mxu0
  %1051 = vdwg.mxu0
  %1052 = vmatprep.subr.bf16.mxu0 0
  %1053 = vmatpush1.bf16.msra.mxu0 %v435
  %1054 = vmatprep.subr.bf16.mxu0 0
  %1055 = vmatpush1.bf16.msra.mxu0 %v436
  %1056 = vmatprep.subr.bf16.mxu0 0
  %1057 = vmatpush1.bf16.msra.mxu0 0
  %1058 = vmatprep.subr.bf16.mxu0 0
  %1059 = vmatpush1.bf16.msra.mxu0 0
  %1060 = vmatprep.subr.bf16.mxu0 0
  %1061 = vmatpush1.bf16.msra.mxu0 0
  %1062 = vmatprep.subr.bf16.mxu0 0
  %1063 = vmatpush1.bf16.msra.mxu0 0
  %1064 = vmatprep.subr.bf16.mxu0 0
  %1065 = vmatpush1.bf16.msra.mxu0 0
  %1066 = vmatprep.subr.bf16.mxu0 0
  %1067 = vmatpush1.bf16.msra.mxu0 0
  %1068 = vmatprep.subr.bf16.mxu0 0
  %1069 = vmatpush1.bf16.msra.mxu0 0
  %1070 = vmatprep.subr.bf16.mxu0 0
  %1071 = vmatpush1.bf16.msra.mxu0 0
  %1072 = vmatprep.subr.bf16.mxu0 0
  %1073 = vmatpush1.bf16.msra.mxu0 0
  %1074 = vmatprep.subr.bf16.mxu0 0
  %1075 = vmatpush1.bf16.msra.mxu0 0
  %1076 = vmatprep.subr.bf16.mxu0 0
  %1077 = vmatpush1.bf16.msra.mxu0 0
  %1078 = vmatprep.subr.bf16.mxu0 0
  %1079 = vmatpush1.bf16.msra.mxu0 0
  %1080 = vmatprep.subr.bf16.mxu0 0
  %1081 = vmatpush1.bf16.msra.mxu0 0
  %1082 = vmatprep.subr.bf16.mxu0 0
  %1083 = vmatpush1.bf16.msra.mxu0 0
  %1084 = vmatprep.mubr.bf16.mxu0 0
  %1085 = vmatmul.mubr.bf16.gmra.mrb[0].mxu0 %v930
  %v1086 = vpop.f32.mrb[0].mxu0
  %v1087 = vadd.f32 %v1047, %v1086
  %v1088 = vpop.f32.mrb[0].mxu0
  %v1089 = vpop.f32.mrb[0].mxu0
  %v1090 = vpop.f32.mrb[0].mxu0
  %1091 = vdwg.mxu0
  %v1092 = vmax.f32 %v1087, 0.0
  %v1093 = vld [vmem:[%s3] sm:$0x7f]
  %v1095 = vcombine.high %v1093, %v1093
  %v1097 = vunpack.c.l.s4 1966171168
  %v1098 = vunpack.c.0.s8 %v1097
  %v1099 = vlaneseq
  %v1100 = vshrl.u32 %v1099, 7
  %v1101 = vsub.s32 %v1098, %v1100
  %v1102 = vrot.slane %v1093, %v1101
  %v1104 = vunpack.c.l.s4 1966171168
  %v1105 = vunpack.c.0.s8 %v1104
  %v1106 = vlaneseq
  %v1107 = vshrl.u32 %v1106, 7
  %v1108 = vsub.s32 %v1105, %v1107
  %v1109 = vrot.slane %v1095, %v1108
  %v1110 = vcombine.high %v1102, %v1102
  %v1111 = vcombine.high %v1109, %v1109
  %v1113 = vunpack.c.l.s4 1966171168
  %v1114 = vunpack.c.0.s8 %v1113
  %v1115 = vlaneseq
  %v1116 = vshrl.u32 %v1115, 7
  %v1117 = vsub.s32 %v1114, %v1116
  %v1118 = vrot.slane %v1102, %v1117
  %v1120 = vunpack.c.l.s4 1966171168
  %v1121 = vunpack.c.0.s8 %v1120
  %v1122 = vlaneseq
  %v1123 = vshrl.u32 %v1122, 7
  %v1124 = vsub.s32 %v1121, %v1123
  %v1125 = vrot.slane %v1109, %v1124
  %v1127 = vunpack.c.l.s4 1966171168
  %v1128 = vunpack.c.0.s8 %v1127
  %v1129 = vlaneseq
  %v1130 = vshrl.u32 %v1129, 7
  %v1131 = vsub.s32 %v1128, %v1130
  %v1132 = vrot.slane %v1110, %v1131
  %v1134 = vunpack.c.l.s4 1966171168
  %v1135 = vunpack.c.0.s8 %v1134
  %v1136 = vlaneseq
  %v1137 = vshrl.u32 %v1136, 7
  %v1138 = vsub.s32 %v1135, %v1137
  %v1139 = vrot.slane %v1111, %v1138
  %v1140 = vcombine.high %v1118, %v1118
  %v1141 = vcombine.high %v1125, %v1125
  %v1142 = vcombine.high %v1132, %v1132
  %v1150 = vsel %vm487, %v1141, 0
  %1152 = vmatprep.subr.bf16.mxu0 0
  %1153 = vmatpush1.bf16.msra.mxu0 %v387
  %1154 = vmatprep.subr.bf16.mxu0 0
  %1155 = vmatpush1.bf16.msra.mxu0 %v388
  %1156 = vmatprep.subr.bf16.mxu0 0
  %1157 = vmatpush1.bf16.msra.mxu0 %v389
  %1158 = vmatprep.subr.bf16.mxu0 0
  %1159 = vmatpush1.bf16.msra.mxu0 %v390
  %1160 = vmatprep.subr.bf16.mxu0 0
  %1161 = vmatpush1.bf16.msra.mxu0 %v391
  %1162 = vmatprep.subr.bf16.mxu0 0
  %1163 = vmatpush1.bf16.msra.mxu0 %v392
  %1164 = vmatprep.subr.bf16.mxu0 0
  %1165 = vmatpush1.bf16.msra.mxu0 %v393
  %1166 = vmatprep.subr.bf16.mxu0 0
  %1167 = vmatpush1.bf16.msra.mxu0 %v394
  %1168 = vmatprep.subr.bf16.mxu0 0
  %1169 = vmatpush1.bf16.msra.mxu0 %v395
  %1170 = vmatprep.subr.bf16.mxu0 0
  %1171 = vmatpush1.bf16.msra.mxu0 %v396
  %1172 = vmatprep.subr.bf16.mxu0 0
  %1173 = vmatpush1.bf16.msra.mxu0 %v397
  %1174 = vmatprep.subr.bf16.mxu0 0
  %1175 = vmatpush1.bf16.msra.mxu0 %v398
  %1176 = vmatprep.subr.bf16.mxu0 0
  %1177 = vmatpush1.bf16.msra.mxu0 %v399
  %1178 = vmatprep.subr.bf16.mxu0 0
  %1179 = vmatpush1.bf16.msra.mxu0 %v400
  %1180 = vmatprep.subr.bf16.mxu0 0
  %1181 = vmatpush1.bf16.msra.mxu0 %v401
  %1182 = vmatprep.subr.bf16.mxu0 0
  %1183 = vmatpush1.bf16.msra.mxu0 %v402
  %1184 = vmatprep.mubr.bf16.mxu0 %v1132
  %1185 = vmatmul.mubr.bf16.gmra.mrb[0].mxu0 %v1118
  %v1186 = vpop.f32.mrb[0].mxu0
  %v1187 = vadd.f32 %v130, %v1186
  %v1188 = vpop.f32.mrb[0].mxu0
  %v1189 = vpop.f32.mrb[0].mxu0
  %v1190 = vpop.f32.mrb[0].mxu0
  %1191 = vdwg.mxu0
  %1192 = vmatprep.subr.bf16.mxu0 0
  %1193 = vmatpush1.bf16.msra.mxu0 %v403
  %1194 = vmatprep.subr.bf16.mxu0 0
  %1195 = vmatpush1.bf16.msra.mxu0 %v404
  %1196 = vmatprep.subr.bf16.mxu0 0
  %1197 = vmatpush1.bf16.msra.mxu0 %v405
  %1198 = vmatprep.subr.bf16.mxu0 0
  %1199 = vmatpush1.bf16.msra.mxu0 %v406
  %1200 = vmatprep.subr.bf16.mxu0 0
  %1201 = vmatpush1.bf16.msra.mxu0 %v407
  %1202 = vmatprep.subr.bf16.mxu0 0
  %1203 = vmatpush1.bf16.msra.mxu0 %v408
  %1204 = vmatprep.subr.bf16.mxu0 0
  %1205 = vmatpush1.bf16.msra.mxu0 %v409
  %1206 = vmatprep.subr.bf16.mxu0 0
  %1207 = vmatpush1.bf16.msra.mxu0 %v410
  %1208 = vmatprep.subr.bf16.mxu0 0
  %1209 = vmatpush1.bf16.msra.mxu0 %v411
  %1210 = vmatprep.subr.bf16.mxu0 0
  %1211 = vmatpush1.bf16.msra.mxu0 %v412
  %1212 = vmatprep.subr.bf16.mxu0 0
  %1213 = vmatpush1.bf16.msra.mxu0 %v413
  %1214 = vmatprep.subr.bf16.mxu0 0
  %1215 = vmatpush1.bf16.msra.mxu0 %v414
  %1216 = vmatprep.subr.bf16.mxu0 0
  %1217 = vmatpush1.bf16.msra.mxu0 %v415
  %1218 = vmatprep.subr.bf16.mxu0 0
  %1219 = vmatpush1.bf16.msra.mxu0 %v416
  %1220 = vmatprep.subr.bf16.mxu0 0
  %1221 = vmatpush1.bf16.msra.mxu0 %v417
  %1222 = vmatprep.subr.bf16.mxu0 0
  %1223 = vmatpush1.bf16.msra.mxu0 %v418
  %1224 = vmatprep.mubr.bf16.mxu0 %v1142
  %1225 = vmatmul.mubr.bf16.gmra.mrb[0].mxu0 %v1140
  %v1226 = vpop.f32.mrb[0].mxu0
  %v1227 = vadd.f32 %v1187, %v1226
  %v1228 = vpop.f32.mrb[0].mxu0
  %v1229 = vpop.f32.mrb[0].mxu0
  %v1230 = vpop.f32.mrb[0].mxu0
  %1231 = vdwg.mxu0
  %1232 = vmatprep.subr.bf16.mxu0 0
  %1233 = vmatpush1.bf16.msra.mxu0 %v419
  %1234 = vmatprep.subr.bf16.mxu0 0
  %1235 = vmatpush1.bf16.msra.mxu0 %v420
  %1236 = vmatprep.subr.bf16.mxu0 0
  %1237 = vmatpush1.bf16.msra.mxu0 %v421
  %1238 = vmatprep.subr.bf16.mxu0 0
  %1239 = vmatpush1.bf16.msra.mxu0 %v422
  %1240 = vmatprep.subr.bf16.mxu0 0
  %1241 = vmatpush1.bf16.msra.mxu0 %v423
  %1242 = vmatprep.subr.bf16.mxu0 0
  %1243 = vmatpush1.bf16.msra.mxu0 %v424
  %1244 = vmatprep.subr.bf16.mxu0 0
  %1245 = vmatpush1.bf16.msra.mxu0 %v425
  %1246 = vmatprep.subr.bf16.mxu0 0
  %1247 = vmatpush1.bf16.msra.mxu0 %v426
  %1248 = vmatprep.subr.bf16.mxu0 0
  %1249 = vmatpush1.bf16.msra.mxu0 %v427
  %1250 = vmatprep.subr.bf16.mxu0 0
  %1251 = vmatpush1.bf16.msra.mxu0 %v428
  %1252 = vmatprep.subr.bf16.mxu0 0
  %1253 = vmatpush1.bf16.msra.mxu0 %v429
  %1254 = vmatprep.subr.bf16.mxu0 0
  %1255 = vmatpush1.bf16.msra.mxu0 %v430
  %1256 = vmatprep.subr.bf16.mxu0 0
  %1257 = vmatpush1.bf16.msra.mxu0 %v431
  %1258 = vmatprep.subr.bf16.mxu0 0
  %1259 = vmatpush1.bf16.msra.mxu0 %v432
  %1260 = vmatprep.subr.bf16.mxu0 0
  %1261 = vmatpush1.bf16.msra.mxu0 %v433
  %1262 = vmatprep.subr.bf16.mxu0 0
  %1263 = vmatpush1.bf16.msra.mxu0 %v434
  %1264 = vmatprep.mubr.bf16.mxu0 %v1139
  %1265 = vmatmul.mubr.bf16.gmra.mrb[0].mxu0 %v1125
  %v1266 = vpop.f32.mrb[0].mxu0
  %v1267 = vadd.f32 %v1227, %v1266
  %v1268 = vpop.f32.mrb[0].mxu0
  %v1269 = vpop.f32.mrb[0].mxu0
  %v1270 = vpop.f32.mrb[0].mxu0
  %1271 = vdwg.mxu0
  %1272 = vmatprep.subr.bf16.mxu0 0
  %1273 = vmatpush1.bf16.msra.mxu0 %v435
  %1274 = vmatprep.subr.bf16.mxu0 0
  %1275 = vmatpush1.bf16.msra.mxu0 %v436
  %1276 = vmatprep.subr.bf16.mxu0 0
  %1277 = vmatpush1.bf16.msra.mxu0 0
  %1278 = vmatprep.subr.bf16.mxu0 0
  %1279 = vmatpush1.bf16.msra.mxu0 0
  %1280 = vmatprep.subr.bf16.mxu0 0
  %1281 = vmatpush1.bf16.msra.mxu0 0
  %1282 = vmatprep.subr.bf16.mxu0 0
  %1283 = vmatpush1.bf16.msra.mxu0 0
  %1284 = vmatprep.subr.bf16.mxu0 0
  %1285 = vmatpush1.bf16.msra.mxu0 0
  %1286 = vmatprep.subr.bf16.mxu0 0
  %1287 = vmatpush1.bf16.msra.mxu0 0
  %1288 = vmatprep.subr.bf16.mxu0 0
  %1289 = vmatpush1.bf16.msra.mxu0 0
  %1290 = vmatprep.subr.bf16.mxu0 0
  %1291 = vmatpush1.bf16.msra.mxu0 0
  %1292 = vmatprep.subr.bf16.mxu0 0
  %1293 = vmatpush1.bf16.msra.mxu0 0
  %1294 = vmatprep.subr.bf16.mxu0 0
  %1295 = vmatpush1.bf16.msra.mxu0 0
  %1296 = vmatprep.subr.bf16.mxu0 0
  %1297 = vmatpush1.bf16.msra.mxu0 0
  %1298 = vmatprep.subr.bf16.mxu0 0
  %1299 = vmatpush1.bf16.msra.mxu0 0
  %1300 = vmatprep.subr.bf16.mxu0 0
  %1301 = vmatpush1.bf16.msra.mxu0 0
  %1302 = vmatprep.subr.bf16.mxu0 0
  %1303 = vmatpush1.bf16.msra.mxu0 0
  %1304 = vmatprep.mubr.bf16.mxu0 0
  %1305 = vmatmul.mubr.bf16.gmra.mrb[0].mxu0 %v1150
  %v1306 = vpop.f32.mrb[0].mxu0
  %v1307 = vadd.f32 %v1267, %v1306
  %v1308 = vpop.f32.mrb[0].mxu0
  %v1309 = vpop.f32.mrb[0].mxu0
  %v1310 = vpop.f32.mrb[0].mxu0
  %1311 = vdwg.mxu0
  %v1312 = vmax.f32 %v1307, 0.0
  %v1313 = vmax.f32 %v1092, %v1312
  %v1314 = vmax.f32 %v872, %v1313
  %v1315 = vpack.c.bf16 %v1314, %v1314
  %vm1316 = vcmask 516096
  %1317 = vst.msk [vmem:[%s6] sm:$0x1] %vm1316, %v1315
  // Predicated region
  $region26: #{_lambda_.11} parent=0 // pred_check
    _
  $region27: #{_lambda_.11} parent=0 // pred_check_branch
    %1319 = sbr.rel (0) target = $region29
  $region28: #{_lambda_.11} parent=0 // pred_region
    _
  $region29: #{_lambda_.11} parent=0 // pred_fallthru
    _
  // Predicated region
  $region30: #{_lambda_.11} parent=0 // pred_check
    _
  $region31: #{_lambda_.11} parent=0 // pred_check_branch
    %1321 = sbr.rel (0) target = $region33
  $region32: #{_lambda_.11} parent=0 // pred_region
    _
  $region33: #{_lambda_.11} parent=0 // pred_fallthru
    _

// kernel: _lambda_.13
$region0: #{_lambda_.13}
  #allocation0 [shape = 'u32[]', space=smem, size = 0x4, offset = 0x4, fixed_abs, tag = 'smem constant byte address 0x4 - core index']
  #allocation1 [shape = 'u32[144,128]{1,0:T(1,128)}', space=vmem, size = 0x12000, scoped, tag = 'internal scratch']
  %s0 = inlined_call_operand.vmem [shape: bf16[8,288], index: 0, kind: input, shape index: {}]
  %s1 = inlined_call_operand.vmem [shape: bf16[4,288,16], index: 1, kind: input, shape index: {}]
  %s2 = inlined_call_operand.vmem [shape: f32[1,16], index: 2, kind: input, shape index: {}]
  %s3 = inlined_call_operand.vmem [shape: bf16[8,64], index: 3, kind: output, shape index: {}]
  %s4 = sld [smem:[#allocation0]]
  $region22: #{_lambda_.13} parent=0
    _
  %s6 = ssub.s32 1, %s4
  %s7 = scalar_select 0, %s6, %s4
  // Predicated region
  $region2: #{_lambda_.13} parent=0 // pred_check
    _
  $region3: #{_lambda_.13} parent=0 // pred_check_branch
    %9 = sbr.rel (0) target = $region5
  $region4: #{_lambda_.13} parent=0 // pred_region
    _
  $region5: #{_lambda_.13} parent=0 // pred_fallthru
    _
  // Predicated region
  $region6: #{_lambda_.13} parent=0 // pred_check
    _
  $region7: #{_lambda_.13} parent=0 // pred_check_branch
    %11 = sbr.rel (0) target = $region9
  $region8: #{_lambda_.13} parent=0 // pred_region
    _
  $region9: #{_lambda_.13} parent=0 // pred_fallthru
    _
  // Predicated region
  $region10: #{_lambda_.13} parent=0 // pred_check
    _
  $region11: #{_lambda_.13} parent=0 // pred_check_branch
    %13 = sbr.rel (0) target = $region13
  $region12: #{_lambda_.13} parent=0 // pred_region
    _
  $region13: #{_lambda_.13} parent=0 // pred_fallthru
    _
  %v15 = vld [vmem:[%s0] sm:$0xff]
  %v16 = vld [vmem:[%s0 + $0x8] sm:$0xf]
  %v17 = vld [vmem:[%s2] sm:$0x1]
  %v18 = vld [vmem:[%s1] sm:$0xf]
  %v19 = vld [vmem:[%s1 + $0x4] sm:$0xf]
  %v20 = vld [vmem:[%s1 + $0x8] sm:$0xf]
  %v21 = vld [vmem:[%s1 + $0xc] sm:$0xf]
  %v22 = vld [vmem:[%s1 + $0x10] sm:$0xf]
  %v23 = vld [vmem:[%s1 + $0x14] sm:$0xf]
  %v24 = vld [vmem:[%s1 + $0x18] sm:$0xf]
  %v25 = vld [vmem:[%s1 + $0x1c] sm:$0xf]
  %v26 = vld [vmem:[%s1 + $0x20] sm:$0xf]
  %v27 = vld [vmem:[%s1 + $0x24] sm:$0xf]
  %v28 = vld [vmem:[%s1 + $0x28] sm:$0xf]
  %v29 = vld [vmem:[%s1 + $0x2c] sm:$0xf]
  %v30 = vld [vmem:[%s1 + $0x30] sm:$0xf]
  %v31 = vld [vmem:[%s1 + $0x34] sm:$0xf]
  %v32 = vld [vmem:[%s1 + $0x38] sm:$0xf]
  %v33 = vld [vmem:[%s1 + $0x3c] sm:$0xf]
  %v34 = vld [vmem:[%s1 + $0x40] sm:$0xf]
  %v35 = vld [vmem:[%s1 + $0x44] sm:$0xf]
  %v36 = vld [vmem:[%s1 + $0x48] sm:$0xf]
  %v37 = vld [vmem:[%s1 + $0x4c] sm:$0xf]
  %v38 = vld [vmem:[%s1 + $0x50] sm:$0xf]
  %v39 = vld [vmem:[%s1 + $0x54] sm:$0xf]
  %v40 = vld [vmem:[%s1 + $0x58] sm:$0xf]
  %v41 = vld [vmem:[%s1 + $0x5c] sm:$0xf]
  %v42 = vld [vmem:[%s1 + $0x60] sm:$0xf]
  %v43 = vld [vmem:[%s1 + $0x64] sm:$0xf]
  %v44 = vld [vmem:[%s1 + $0x68] sm:$0xf]
  %v45 = vld [vmem:[%s1 + $0x6c] sm:$0xf]
  %v46 = vld [vmem:[%s1 + $0x70] sm:$0xf]
  %v47 = vld [vmem:[%s1 + $0x74] sm:$0xf]
  %v48 = vld [vmem:[%s1 + $0x78] sm:$0xf]
  %v49 = vld [vmem:[%s1 + $0x7c] sm:$0xf]
  %v50 = vld [vmem:[%s1 + $0x80] sm:$0xf]
  %v51 = vld [vmem:[%s1 + $0x84] sm:$0xf]
  %v52 = vld [vmem:[%s1 + $0x88] sm:$0xf]
  %v53 = vld [vmem:[%s1 + $0x8c] sm:$0xf]
  %v55 = vlaneseq
  %v56 = vshrl.u32 %v55, 7
  %v57 = vsub.s32 0, %v56
  %v58 = vrot.slane %v17, %v57
  %v62 = vunpack.c.l.b16 %v15
  %v63 = vunpack.c.h.b16 %v15
  %v64 = vunpack.c.l.b16 %v16
  %v65 = vpack.c.b16 %v62, %v62
  %v66 = vpack.c.b16 %v63, %v63
  %v67 = vpack.c.b16 %v64, %v64
  %v106 = vunpack.c.l.b16 %v18
  %v107 = vunpack.c.l.b16 %v19
  %v108 = vunpack.c.l.b16 %v20
  %v109 = vunpack.c.l.b16 %v21
  %v110 = vunpack.c.l.b16 %v22
  %v111 = vunpack.c.l.b16 %v23
  %v112 = vunpack.c.l.b16 %v24
  %v113 = vunpack.c.l.b16 %v25
  %v114 = vunpack.c.l.b16 %v26
  %v115 = vunpack.c.l.b16 %v27
  %v116 = vunpack.c.l.b16 %v28
  %v117 = vunpack.c.l.b16 %v29
  %v118 = vunpack.c.l.b16 %v30
  %v119 = vunpack.c.l.b16 %v31
  %v120 = vunpack.c.l.b16 %v32
  %v121 = vunpack.c.l.b16 %v33
  %v122 = vunpack.c.l.b16 %v34
  %v123 = vunpack.c.l.b16 %v35
  %v124 = vunpack.c.l.b16 %v36
  %v125 = vunpack.c.l.b16 %v37
  %v126 = vunpack.c.l.b16 %v38
  %v127 = vunpack.c.l.b16 %v39
  %v128 = vunpack.c.l.b16 %v40
  %v129 = vunpack.c.l.b16 %v41
  %v130 = vunpack.c.l.b16 %v42
  %v131 = vunpack.c.l.b16 %v43
  %v132 = vunpack.c.l.b16 %v44
  %v133 = vunpack.c.l.b16 %v45
  %v134 = vunpack.c.l.b16 %v46
  %v135 = vunpack.c.l.b16 %v47
  %v136 = vunpack.c.l.b16 %v48
  %v137 = vunpack.c.l.b16 %v49
  %v138 = vunpack.c.l.b16 %v50
  %v139 = vunpack.c.l.b16 %v51
  %v140 = vunpack.c.l.b16 %v52
  %v141 = vunpack.c.l.b16 %v53
  %v142 = vpack.c.b16 %v107, %v106
  %v143 = vpack.c.b16 %v109, %v108
  %v144 = vpack.c.b16 %v111, %v110
  %v145 = vpack.c.b16 %v113, %v112
  %v146 = vpack.c.b16 %v115, %v114
  %v147 = vpack.c.b16 %v117, %v116
  %v148 = vpack.c.b16 %v119, %v118
  %v149 = vpack.c.b16 %v121, %v120
  %v150 = vpack.c.b16 %v123, %v122
  %v151 = vpack.c.b16 %v125, %v124
  %v152 = vpack.c.b16 %v127, %v126
  %v153 = vpack.c.b16 %v129, %v128
  %v154 = vpack.c.b16 %v131, %v130
  %v155 = vpack.c.b16 %v133, %v132
  %v156 = vpack.c.b16 %v135, %v134
  %v157 = vpack.c.b16 %v137, %v136
  %v158 = vpack.c.b16 %v139, %v138
  %v159 = vpack.c.b16 %v141, %v140
  %vm178 = vcmask 261120
  %v180 = vsel %vm178, %v67, 0
  %182 = vmatprep.subr.bf16.mxu0 0
  %183 = vmatpush1.bf16.msra.mxu0 %v142
  %184 = vmatprep.subr.bf16.mxu0 0
  %185 = vmatpush1.bf16.msra.mxu0 %v143
  %186 = vmatprep.subr.bf16.mxu0 0
  %187 = vmatpush1.bf16.msra.mxu0 %v144
  %188 = vmatprep.subr.bf16.mxu0 0
  %189 = vmatpush1.bf16.msra.mxu0 %v145
  %190 = vmatprep.subr.bf16.mxu0 0
  %191 = vmatpush1.bf16.msra.mxu0 %v146
  %192 = vmatprep.subr.bf16.mxu0 0
  %193 = vmatpush1.bf16.msra.mxu0 %v147
  %194 = vmatprep.subr.bf16.mxu0 0
  %195 = vmatpush1.bf16.msra.mxu0 %v148
  %196 = vmatprep.subr.bf16.mxu0 0
  %197 = vmatpush1.bf16.msra.mxu0 %v149
  %198 = vmatprep.subr.bf16.mxu0 0
  %199 = vmatpush1.bf16.msra.mxu0 %v150
  %200 = vmatprep.subr.bf16.mxu0 0
  %201 = vmatpush1.bf16.msra.mxu0 %v151
  %202 = vmatprep.subr.bf16.mxu0 0
  %203 = vmatpush1.bf16.msra.mxu0 %v152
  %204 = vmatprep.subr.bf16.mxu0 0
  %205 = vmatpush1.bf16.msra.mxu0 %v153
  %206 = vmatprep.subr.bf16.mxu0 0
  %207 = vmatpush1.bf16.msra.mxu0 %v154
  %208 = vmatprep.subr.bf16.mxu0 0
  %209 = vmatpush1.bf16.msra.mxu0 %v155
  %210 = vmatprep.subr.bf16.mxu0 0
  %211 = vmatpush1.bf16.msra.mxu0 %v156
  %212 = vmatprep.subr.bf16.mxu0 0
  %213 = vmatpush1.bf16.msra.mxu0 %v157
  %214 = vmatprep.mubr.bf16.mxu0 %v66
  %215 = vmatmul.mubr.bf16.gmra.mrb[0].mxu0 %v65
  %v216 = vpop.f32.mrb[0].mxu0
  %v217 = vadd.f32 %v58, %v216
  %v218 = vpop.f32.mrb[0].mxu0
  %v219 = vpop.f32.mrb[0].mxu0
  %v220 = vpop.f32.mrb[0].mxu0
  %221 = vdwg.mxu0
  %222 = vmatprep.subr.bf16.mxu0 0
  %223 = vmatpush1.bf16.msra.mxu0 %v158
  %224 = vmatprep.subr.bf16.mxu0 0
  %225 = vmatpush1.bf16.msra.mxu0 %v159
  %226 = vmatprep.subr.bf16.mxu0 0
  %227 = vmatpush1.bf16.msra.mxu0 0
  %228 = vmatprep.subr.bf16.mxu0 0
  %229 = vmatpush1.bf16.msra.mxu0 0
  %230 = vmatprep.subr.bf16.mxu0 0
  %231 = vmatpush1.bf16.msra.mxu0 0
  %232 = vmatprep.subr.bf16.mxu0 0
  %233 = vmatpush1.bf16.msra.mxu0 0
  %234 = vmatprep.subr.bf16.mxu0 0
  %235 = vmatpush1.bf16.msra.mxu0 0
  %236 = vmatprep.subr.bf16.mxu0 0
  %237 = vmatpush1.bf16.msra.mxu0 0
  %238 = vmatprep.subr.bf16.mxu0 0
  %239 = vmatpush1.bf16.msra.mxu0 0
  %240 = vmatprep.subr.bf16.mxu0 0
  %241 = vmatpush1.bf16.msra.mxu0 0
  %242 = vmatprep.subr.bf16.mxu0 0
  %243 = vmatpush1.bf16.msra.mxu0 0
  %244 = vmatprep.subr.bf16.mxu0 0
  %245 = vmatpush1.bf16.msra.mxu0 0
  %246 = vmatprep.subr.bf16.mxu0 0
  %247 = vmatpush1.bf16.msra.mxu0 0
  %248 = vmatprep.subr.bf16.mxu0 0
  %249 = vmatpush1.bf16.msra.mxu0 0
  %250 = vmatprep.subr.bf16.mxu0 0
  %251 = vmatpush1.bf16.msra.mxu0 0
  %252 = vmatprep.subr.bf16.mxu0 0
  %253 = vmatpush1.bf16.msra.mxu0 0
  %254 = vmatprep.mubr.bf16.mxu0 0
  %255 = vmatmul.mubr.bf16.gmra.mrb[0].mxu0 %v180
  %v256 = vpop.f32.mrb[0].mxu0
  %v257 = vadd.f32 %v217, %v256
  %v258 = vpop.f32.mrb[0].mxu0
  %v259 = vpop.f32.mrb[0].mxu0
  %v260 = vpop.f32.mrb[0].mxu0
  %261 = vdwg.mxu0
  %v262 = vmax.f32 %v257, 0.0
  %v263 = vpack.c.bf16 %v262, %v262
  %vm264 = vcmask 125952
  %265 = vst.msk [vmem:[%s3] sm:$0xf] %vm264, %v263
  %s266 = scalar_lea.vmem %s1, 144
  %v267 = vld [vmem:[%s266] sm:$0xf]
  %v268 = vld [vmem:[%s266 + $0x4] sm:$0xf]
  %v269 = vld [vmem:[%s266 + $0x8] sm:$0xf]
  %v270 = vld [vmem:[%s266 + $0xc] sm:$0xf]
  %v271 = vld [vmem:[%s266 + $0x10] sm:$0xf]
  %v272 = vld [vmem:[%s266 + $0x14] sm:$0xf]
  %v273 = vld [vmem:[%s266 + $0x18] sm:$0xf]
  %v274 = vld [vmem:[%s266 + $0x1c] sm:$0xf]
  %v275 = vld [vmem:[%s266 + $0x20] sm:$0xf]
  %v276 = vld [vmem:[%s266 + $0x24] sm:$0xf]
  %v277 = vld [vmem:[%s266 + $0x28] sm:$0xf]
  %v278 = vld [vmem:[%s266 + $0x2c] sm:$0xf]
  %v279 = vld [vmem:[%s266 + $0x30] sm:$0xf]
  %v280 = vld [vmem:[%s266 + $0x34] sm:$0xf]
  %v281 = vld [vmem:[%s266 + $0x38] sm:$0xf]
  %v282 = vld [vmem:[%s266 + $0x3c] sm:$0xf]
  %v283 = vld [vmem:[%s266 + $0x40] sm:$0xf]
  %v284 = vld [vmem:[%s266 + $0x44] sm:$0xf]
  %v285 = vld [vmem:[%s266 + $0x48] sm:$0xf]
  %v286 = vld [vmem:[%s266 + $0x4c] sm:$0xf]
  %v287 = vld [vmem:[%s266 + $0x50] sm:$0xf]
  %v288 = vld [vmem:[%s266 + $0x54] sm:$0xf]
  %v289 = vld [vmem:[%s266 + $0x58] sm:$0xf]
  %v290 = vld [vmem:[%s266 + $0x5c] sm:$0xf]
  %v291 = vld [vmem:[%s266 + $0x60] sm:$0xf]
  %v292 = vld [vmem:[%s266 + $0x64] sm:$0xf]
  %v293 = vld [vmem:[%s266 + $0x68] sm:$0xf]
  %v294 = vld [vmem:[%s266 + $0x6c] sm:$0xf]
  %v295 = vld [vmem:[%s266 + $0x70] sm:$0xf]
  %v296 = vld [vmem:[%s266 + $0x74] sm:$0xf]
  %v297 = vld [vmem:[%s266 + $0x78] sm:$0xf]
  %v298 = vld [vmem:[%s266 + $0x7c] sm:$0xf]
  %v299 = vld [vmem:[%s266 + $0x80] sm:$0xf]
  %v300 = vld [vmem:[%s266 + $0x84] sm:$0xf]
  %v301 = vld [vmem:[%s266 + $0x88] sm:$0xf]
  %v302 = vld [vmem:[%s266 + $0x8c] sm:$0xf]
  %v339 = vunpack.c.l.b16 %v267
  %v340 = vunpack.c.l.b16 %v268
  %v341 = vunpack.c.l.b16 %v269
  %v342 = vunpack.c.l.b16 %v270
  %v343 = vunpack.c.l.b16 %v271
  %v344 = vunpack.c.l.b16 %v272
  %v345 = vunpack.c.l.b16 %v273
  %v346 = vunpack.c.l.b16 %v274
  %v347 = vunpack.c.l.b16 %v275
  %v348 = vunpack.c.l.b16 %v276
  %v349 = vunpack.c.l.b16 %v277
  %v350 = vunpack.c.l.b16 %v278
  %v351 = vunpack.c.l.b16 %v279
  %v352 = vunpack.c.l.b16 %v280
  %v353 = vunpack.c.l.b16 %v281
  %v354 = vunpack.c.l.b16 %v282
  %v355 = vunpack.c.l.b16 %v283
  %v356 = vunpack.c.l.b16 %v284
  %v357 = vunpack.c.l.b16 %v285
  %v358 = vunpack.c.l.b16 %v286
  %v359 = vunpack.c.l.b16 %v287
  %v360 = vunpack.c.l.b16 %v288
  %v361 = vunpack.c.l.b16 %v289
  %v362 = vunpack.c.l.b16 %v290
  %v363 = vunpack.c.l.b16 %v291
  %v364 = vunpack.c.l.b16 %v292
  %v365 = vunpack.c.l.b16 %v293
  %v366 = vunpack.c.l.b16 %v294
  %v367 = vunpack.c.l.b16 %v295
  %v368 = vunpack.c.l.b16 %v296
  %v369 = vunpack.c.l.b16 %v297
  %v370 = vunpack.c.l.b16 %v298
  %v371 = vunpack.c.l.b16 %v299
  %v372 = vunpack.c.l.b16 %v300
  %v373 = vunpack.c.l.b16 %v301
  %v374 = vunpack.c.l.b16 %v302
  %v375 = vpack.c.b16 %v340, %v339
  %v376 = vpack.c.b16 %v342, %v341
  %v377 = vpack.c.b16 %v344, %v343
  %v378 = vpack.c.b16 %v346, %v345
  %v379 = vpack.c.b16 %v348, %v347
  %v380 = vpack.c.b16 %v350, %v349
  %v381 = vpack.c.b16 %v352, %v351
  %v382 = vpack.c.b16 %v354, %v353
  %v383 = vpack.c.b16 %v356, %v355
  %v384 = vpack.c.b16 %v358, %v357
  %v385 = vpack.c.b16 %v360, %v359
  %v386 = vpack.c.b16 %v362, %v361
  %v387 = vpack.c.b16 %v364, %v363
  %v388 = vpack.c.b16 %v366, %v365
  %v389 = vpack.c.b16 %v368, %v367
  %v390 = vpack.c.b16 %v370, %v369
  %v391 = vpack.c.b16 %v372, %v371
  %v392 = vpack.c.b16 %v374, %v373
  %411 = vmatprep.subr.bf16.mxu0 0
  %412 = vmatpush1.bf16.msra.mxu0 %v375
  %413 = vmatprep.subr.bf16.mxu0 0
  %414 = vmatpush1.bf16.msra.mxu0 %v376
  %415 = vmatprep.subr.bf16.mxu0 0
  %416 = vmatpush1.bf16.msra.mxu0 %v377
  %417 = vmatprep.subr.bf16.mxu0 0
  %418 = vmatpush1.bf16.msra.mxu0 %v378
  %419 = vmatprep.subr.bf16.mxu0 0
  %420 = vmatpush1.bf16.msra.mxu0 %v379
  %421 = vmatprep.subr.bf16.mxu0 0
  %422 = vmatpush1.bf16.msra.mxu0 %v380
  %423 = vmatprep.subr.bf16.mxu0 0
  %424 = vmatpush1.bf16.msra.mxu0 %v381
  %425 = vmatprep.subr.bf16.mxu0 0
  %426 = vmatpush1.bf16.msra.mxu0 %v382
  %427 = vmatprep.subr.bf16.mxu0 0
  %428 = vmatpush1.bf16.msra.mxu0 %v383
  %429 = vmatprep.subr.bf16.mxu0 0
  %430 = vmatpush1.bf16.msra.mxu0 %v384
  %431 = vmatprep.subr.bf16.mxu0 0
  %432 = vmatpush1.bf16.msra.mxu0 %v385
  %433 = vmatprep.subr.bf16.mxu0 0
  %434 = vmatpush1.bf16.msra.mxu0 %v386
  %435 = vmatprep.subr.bf16.mxu0 0
  %436 = vmatpush1.bf16.msra.mxu0 %v387
  %437 = vmatprep.subr.bf16.mxu0 0
  %438 = vmatpush1.bf16.msra.mxu0 %v388
  %439 = vmatprep.subr.bf16.mxu0 0
  %440 = vmatpush1.bf16.msra.mxu0 %v389
  %441 = vmatprep.subr.bf16.mxu0 0
  %442 = vmatpush1.bf16.msra.mxu0 %v390
  %443 = vmatprep.mubr.bf16.mxu0 %v66
  %444 = vmatmul.mubr.bf16.gmra.mrb[0].mxu0 %v65
  %v445 = vpop.f32.mrb[0].mxu0
  %v446 = vadd.f32 %v58, %v445
  %v447 = vpop.f32.mrb[0].mxu0
  %v448 = vpop.f32.mrb[0].mxu0
  %v449 = vpop.f32.mrb[0].mxu0
  %450 = vdwg.mxu0
  %451 = vmatprep.subr.bf16.mxu0 0
  %452 = vmatpush1.bf16.msra.mxu0 %v391
  %453 = vmatprep.subr.bf16.mxu0 0
  %454 = vmatpush1.bf16.msra.mxu0 %v392
  %455 = vmatprep.subr.bf16.mxu0 0
  %456 = vmatpush1.bf16.msra.mxu0 0
  %457 = vmatprep.subr.bf16.mxu0 0
  %458 = vmatpush1.bf16.msra.mxu0 0
  %459 = vmatprep.subr.bf16.mxu0 0
  %460 = vmatpush1.bf16.msra.mxu0 0
  %461 = vmatprep.subr.bf16.mxu0 0
  %462 = vmatpush1.bf16.msra.mxu0 0
  %463 = vmatprep.subr.bf16.mxu0 0
  %464 = vmatpush1.bf16.msra.mxu0 0
  %465 = vmatprep.subr.bf16.mxu0 0
  %466 = vmatpush1.bf16.msra.mxu0 0
  %467 = vmatprep.subr.bf16.mxu0 0
  %468 = vmatpush1.bf16.msra.mxu0 0
  %469 = vmatprep.subr.bf16.mxu0 0
  %470 = vmatpush1.bf16.msra.mxu0 0
  %471 = vmatprep.subr.bf16.mxu0 0
  %472 = vmatpush1.bf16.msra.mxu0 0
  %473 = vmatprep.subr.bf16.mxu0 0
  %474 = vmatpush1.bf16.msra.mxu0 0
  %475 = vmatprep.subr.bf16.mxu0 0
  %476 = vmatpush1.bf16.msra.mxu0 0
  %477 = vmatprep.subr.bf16.mxu0 0
  %478 = vmatpush1.bf16.msra.mxu0 0
  %479 = vmatprep.subr.bf16.mxu0 0
  %480 = vmatpush1.bf16.msra.mxu0 0
  %481 = vmatprep.subr.bf16.mxu0 0
  %482 = vmatpush1.bf16.msra.mxu0 0
  %483 = vmatprep.mubr.bf16.mxu0 0
  %484 = vmatmul.mubr.bf16.gmra.mrb[0].mxu0 %v180
  %v485 = vpop.f32.mrb[0].mxu0
  %v486 = vadd.f32 %v446, %v485
  %v487 = vpop.f32.mrb[0].mxu0
  %v488 = vpop.f32.mrb[0].mxu0
  %v489 = vpop.f32.mrb[0].mxu0
  %490 = vdwg.mxu0
  %v491 = vmax.f32 %v486, 0.0
  %v492 = vpack.c.bf16 %v491, %v491
  %v494 = vunpack.c.l.b16 %v492
  %v495 = vpack.c.b16 %v494, %v494
  %496 = vrot.lane.b32.xlu0 %v495, 16
  %v497 = vpop.permute.xlu0 %496
  %vm499 = vcmask 257152
  %500 = vst.msk [vmem:[%s3] sm:$0xf] %vm499, %v497
  %s501 = scalar_lea.vmem %s1, 288
  %v502 = vld [vmem:[%s501] sm:$0xf]
  %v503 = vld [vmem:[%s501 + $0x4] sm:$0xf]
  %v504 = vld [vmem:[%s501 + $0x8] sm:$0xf]
  %v505 = vld [vmem:[%s501 + $0xc] sm:$0xf]
  %v506 = vld [vmem:[%s501 + $0x10] sm:$0xf]
  %v507 = vld [vmem:[%s501 + $0x14] sm:$0xf]
  %v508 = vld [vmem:[%s501 + $0x18] sm:$0xf]
  %v509 = vld [vmem:[%s501 + $0x1c] sm:$0xf]
  %v510 = vld [vmem:[%s501 + $0x20] sm:$0xf]
  %v511 = vld [vmem:[%s501 + $0x24] sm:$0xf]
  %v512 = vld [vmem:[%s501 + $0x28] sm:$0xf]
  %v513 = vld [vmem:[%s501 + $0x2c] sm:$0xf]
  %v514 = vld [vmem:[%s501 + $0x30] sm:$0xf]
  %v515 = vld [vmem:[%s501 + $0x34] sm:$0xf]
  %v516 = vld [vmem:[%s501 + $0x38] sm:$0xf]
  %v517 = vld [vmem:[%s501 + $0x3c] sm:$0xf]
  %v518 = vld [vmem:[%s501 + $0x40] sm:$0xf]
  %v519 = vld [vmem:[%s501 + $0x44] sm:$0xf]
  %v520 = vld [vmem:[%s501 + $0x48] sm:$0xf]
  %v521 = vld [vmem:[%s501 + $0x4c] sm:$0xf]
  %v522 = vld [vmem:[%s501 + $0x50] sm:$0xf]
  %v523 = vld [vmem:[%s501 + $0x54] sm:$0xf]
  %v524 = vld [vmem:[%s501 + $0x58] sm:$0xf]
  %v525 = vld [vmem:[%s501 + $0x5c] sm:$0xf]
  %v526 = vld [vmem:[%s501 + $0x60] sm:$0xf]
  %v527 = vld [vmem:[%s501 + $0x64] sm:$0xf]
  %v528 = vld [vmem:[%s501 + $0x68] sm:$0xf]
  %v529 = vld [vmem:[%s501 + $0x6c] sm:$0xf]
  %v530 = vld [vmem:[%s501 + $0x70] sm:$0xf]
  %v531 = vld [vmem:[%s501 + $0x74] sm:$0xf]
  %v532 = vld [vmem:[%s501 + $0x78] sm:$0xf]
  %v533 = vld [vmem:[%s501 + $0x7c] sm:$0xf]
  %v534 = vld [vmem:[%s501 + $0x80] sm:$0xf]
  %v535 = vld [vmem:[%s501 + $0x84] sm:$0xf]
  %v536 = vld [vmem:[%s501 + $0x88] sm:$0xf]
  %v537 = vld [vmem:[%s501 + $0x8c] sm:$0xf]
  %v574 = vunpack.c.l.b16 %v502
  %v575 = vunpack.c.l.b16 %v503
  %v576 = vunpack.c.l.b16 %v504
  %v577 = vunpack.c.l.b16 %v505
  %v578 = vunpack.c.l.b16 %v506
  %v579 = vunpack.c.l.b16 %v507
  %v580 = vunpack.c.l.b16 %v508
  %v581 = vunpack.c.l.b16 %v509
  %v582 = vunpack.c.l.b16 %v510
  %v583 = vunpack.c.l.b16 %v511
  %v584 = vunpack.c.l.b16 %v512
  %v585 = vunpack.c.l.b16 %v513
  %v586 = vunpack.c.l.b16 %v514
  %v587 = vunpack.c.l.b16 %v515
  %v588 = vunpack.c.l.b16 %v516
  %v589 = vunpack.c.l.b16 %v517
  %v590 = vunpack.c.l.b16 %v518
  %v591 = vunpack.c.l.b16 %v519
  %v592 = vunpack.c.l.b16 %v520
  %v593 = vunpack.c.l.b16 %v521
  %v594 = vunpack.c.l.b16 %v522
  %v595 = vunpack.c.l.b16 %v523
  %v596 = vunpack.c.l.b16 %v524
  %v597 = vunpack.c.l.b16 %v525
  %v598 = vunpack.c.l.b16 %v526
  %v599 = vunpack.c.l.b16 %v527
  %v600 = vunpack.c.l.b16 %v528
  %v601 = vunpack.c.l.b16 %v529
  %v602 = vunpack.c.l.b16 %v530
  %v603 = vunpack.c.l.b16 %v531
  %v604 = vunpack.c.l.b16 %v532
  %v605 = vunpack.c.l.b16 %v533
  %v606 = vunpack.c.l.b16 %v534
  %v607 = vunpack.c.l.b16 %v535
  %v608 = vunpack.c.l.b16 %v536
  %v609 = vunpack.c.l.b16 %v537
  %v610 = vpack.c.b16 %v575, %v574
  %v611 = vpack.c.b16 %v577, %v576
  %v612 = vpack.c.b16 %v579, %v578
  %v613 = vpack.c.b16 %v581, %v580
  %v614 = vpack.c.b16 %v583, %v582
  %v615 = vpack.c.b16 %v585, %v584
  %v616 = vpack.c.b16 %v587, %v586
  %v617 = vpack.c.b16 %v589, %v588
  %v618 = vpack.c.b16 %v591, %v590
  %v619 = vpack.c.b16 %v593, %v592
  %v620 = vpack.c.b16 %v595, %v594
  %v621 = vpack.c.b16 %v597, %v596
  %v622 = vpack.c.b16 %v599, %v598
  %v623 = vpack.c.b16 %v601, %v600
  %v624 = vpack.c.b16 %v603, %v602
  %v625 = vpack.c.b16 %v605, %v604
  %v626 = vpack.c.b16 %v607, %v606
  %v627 = vpack.c.b16 %v609, %v608
  %646 = vmatprep.subr.bf16.mxu0 0
  %647 = vmatpush1.bf16.msra.mxu0 %v610
  %648 = vmatprep.subr.bf16.mxu0 0
  %649 = vmatpush1.bf16.msra.mxu0 %v611
  %650 = vmatprep.subr.bf16.mxu0 0
  %651 = vmatpush1.bf16.msra.mxu0 %v612
  %652 = vmatprep.subr.bf16.mxu0 0
  %653 = vmatpush1.bf16.msra.mxu0 %v613
  %654 = vmatprep.subr.bf16.mxu0 0
  %655 = vmatpush1.bf16.msra.mxu0 %v614
  %656 = vmatprep.subr.bf16.mxu0 0
  %657 = vmatpush1.bf16.msra.mxu0 %v615
  %658 = vmatprep.subr.bf16.mxu0 0
  %659 = vmatpush1.bf16.msra.mxu0 %v616
  %660 = vmatprep.subr.bf16.mxu0 0
  %661 = vmatpush1.bf16.msra.mxu0 %v617
  %662 = vmatprep.subr.bf16.mxu0 0
  %663 = vmatpush1.bf16.msra.mxu0 %v618
  %664 = vmatprep.subr.bf16.mxu0 0
  %665 = vmatpush1.bf16.msra.mxu0 %v619
  %666 = vmatprep.subr.bf16.mxu0 0
  %667 = vmatpush1.bf16.msra.mxu0 %v620
  %668 = vmatprep.subr.bf16.mxu0 0
  %669 = vmatpush1.bf16.msra.mxu0 %v621
  %670 = vmatprep.subr.bf16.mxu0 0
  %671 = vmatpush1.bf16.msra.mxu0 %v622
  %672 = vmatprep.subr.bf16.mxu0 0
  %673 = vmatpush1.bf16.msra.mxu0 %v623
  %674 = vmatprep.subr.bf16.mxu0 0
  %675 = vmatpush1.bf16.msra.mxu0 %v624
  %676 = vmatprep.subr.bf16.mxu0 0
  %677 = vmatpush1.bf16.msra.mxu0 %v625
  %678 = vmatprep.mubr.bf16.mxu0 %v66
  %679 = vmatmul.mubr.bf16.gmra.mrb[0].mxu0 %v65
  %v680 = vpop.f32.mrb[0].mxu0
  %v681 = vadd.f32 %v58, %v680
  %v682 = vpop.f32.mrb[0].mxu0
  %v683 = vpop.f32.mrb[0].mxu0
  %v684 = vpop.f32.mrb[0].mxu0
  %685 = vdwg.mxu0
  %686 = vmatprep.subr.bf16.mxu0 0
  %687 = vmatpush1.bf16.msra.mxu0 %v626
  %688 = vmatprep.subr.bf16.mxu0 0
  %689 = vmatpush1.bf16.msra.mxu0 %v627
  %690 = vmatprep.subr.bf16.mxu0 0
  %691 = vmatpush1.bf16.msra.mxu0 0
  %692 = vmatprep.subr.bf16.mxu0 0
  %693 = vmatpush1.bf16.msra.mxu0 0
  %694 = vmatprep.subr.bf16.mxu0 0
  %695 = vmatpush1.bf16.msra.mxu0 0
  %696 = vmatprep.subr.bf16.mxu0 0
  %697 = vmatpush1.bf16.msra.mxu0 0
  %698 = vmatprep.subr.bf16.mxu0 0
  %699 = vmatpush1.bf16.msra.mxu0 0
  %700 = vmatprep.subr.bf16.mxu0 0
  %701 = vmatpush1.bf16.msra.mxu0 0
  %702 = vmatprep.subr.bf16.mxu0 0
  %703 = vmatpush1.bf16.msra.mxu0 0
  %704 = vmatprep.subr.bf16.mxu0 0
  %705 = vmatpush1.bf16.msra.mxu0 0
  %706 = vmatprep.subr.bf16.mxu0 0
  %707 = vmatpush1.bf16.msra.mxu0 0
  %708 = vmatprep.subr.bf16.mxu0 0
  %709 = vmatpush1.bf16.msra.mxu0 0
  %710 = vmatprep.subr.bf16.mxu0 0
  %711 = vmatpush1.bf16.msra.mxu0 0
  %712 = vmatprep.subr.bf16.mxu0 0
  %713 = vmatpush1.bf16.msra.mxu0 0
  %714 = vmatprep.subr.bf16.mxu0 0
  %715 = vmatpush1.bf16.msra.mxu0 0
  %716 = vmatprep.subr.bf16.mxu0 0
  %717 = vmatpush1.bf16.msra.mxu0 0
  %718 = vmatprep.mubr.bf16.mxu0 0
  %719 = vmatmul.mubr.bf16.gmra.mrb[0].mxu0 %v180
  %v720 = vpop.f32.mrb[0].mxu0
  %v721 = vadd.f32 %v681, %v720
  %v722 = vpop.f32.mrb[0].mxu0
  %v723 = vpop.f32.mrb[0].mxu0
  %v724 = vpop.f32.mrb[0].mxu0
  %725 = vdwg.mxu0
  %v726 = vmax.f32 %v721, 0.0
  %v727 = vpack.c.bf16 %v726, %v726
  %v729 = vunpack.c.l.b16 %v727
  %v730 = vpack.c.b16 %v729, %v729
  %731 = vrot.lane.b32.xlu0 %v730, 32
  %v732 = vpop.permute.xlu0 %731
  %vm734 = vcmask 388352
  %735 = vst.msk [vmem:[%s3] sm:$0xf] %vm734, %v732
  %s736 = scalar_lea.vmem %s1, 432
  %v737 = vld [vmem:[%s736] sm:$0xf]
  %v738 = vld [vmem:[%s736 + $0x4] sm:$0xf]
  %v739 = vld [vmem:[%s736 + $0x8] sm:$0xf]
  %v740 = vld [vmem:[%s736 + $0xc] sm:$0xf]
  %v741 = vld [vmem:[%s736 + $0x10] sm:$0xf]
  %v742 = vld [vmem:[%s736 + $0x14] sm:$0xf]
  %v743 = vld [vmem:[%s736 + $0x18] sm:$0xf]
  %v744 = vld [vmem:[%s736 + $0x1c] sm:$0xf]
  %v745 = vld [vmem:[%s736 + $0x20] sm:$0xf]
  %v746 = vld [vmem:[%s736 + $0x24] sm:$0xf]
  %v747 = vld [vmem:[%s736 + $0x28] sm:$0xf]
  %v748 = vld [vmem:[%s736 + $0x2c] sm:$0xf]
  %v749 = vld [vmem:[%s736 + $0x30] sm:$0xf]
  %v750 = vld [vmem:[%s736 + $0x34] sm:$0xf]
  %v751 = vld [vmem:[%s736 + $0x38] sm:$0xf]
  %v752 = vld [vmem:[%s736 + $0x3c] sm:$0xf]
  %v753 = vld [vmem:[%s736 + $0x40] sm:$0xf]
  %v754 = vld [vmem:[%s736 + $0x44] sm:$0xf]
  %v755 = vld [vmem:[%s736 + $0x48] sm:$0xf]
  %v756 = vld [vmem:[%s736 + $0x4c] sm:$0xf]
  %v757 = vld [vmem:[%s736 + $0x50] sm:$0xf]
  %v758 = vld [vmem:[%s736 + $0x54] sm:$0xf]
  %v759 = vld [vmem:[%s736 + $0x58] sm:$0xf]
  %v760 = vld [vmem:[%s736 + $0x5c] sm:$0xf]
  %v761 = vld [vmem:[%s736 + $0x60] sm:$0xf]
  %v762 = vld [vmem:[%s736 + $0x64] sm:$0xf]
  %v763 = vld [vmem:[%s736 + $0x68] sm:$0xf]
  %v764 = vld [vmem:[%s736 + $0x6c] sm:$0xf]
  %v765 = vld [vmem:[%s736 + $0x70] sm:$0xf]
  %v766 = vld [vmem:[%s736 + $0x74] sm:$0xf]
  %v767 = vld [vmem:[%s736 + $0x78] sm:$0xf]
  %v768 = vld [vmem:[%s736 + $0x7c] sm:$0xf]
  %v769 = vld [vmem:[%s736 + $0x80] sm:$0xf]
  %v770 = vld [vmem:[%s736 + $0x84] sm:$0xf]
  %v771 = vld [vmem:[%s736 + $0x88] sm:$0xf]
  %v772 = vld [vmem:[%s736 + $0x8c] sm:$0xf]
  %v809 = vunpack.c.l.b16 %v737
  %v810 = vunpack.c.l.b16 %v738
  %v811 = vunpack.c.l.b16 %v739
  %v812 = vunpack.c.l.b16 %v740
  %v813 = vunpack.c.l.b16 %v741
  %v814 = vunpack.c.l.b16 %v742
  %v815 = vunpack.c.l.b16 %v743
  %v816 = vunpack.c.l.b16 %v744
  %v817 = vunpack.c.l.b16 %v745
  %v818 = vunpack.c.l.b16 %v746
  %v819 = vunpack.c.l.b16 %v747
  %v820 = vunpack.c.l.b16 %v748
  %v821 = vunpack.c.l.b16 %v749
  %v822 = vunpack.c.l.b16 %v750
  %v823 = vunpack.c.l.b16 %v751
  %v824 = vunpack.c.l.b16 %v752
  %v825 = vunpack.c.l.b16 %v753
  %v826 = vunpack.c.l.b16 %v754
  %v827 = vunpack.c.l.b16 %v755
  %v828 = vunpack.c.l.b16 %v756
  %v829 = vunpack.c.l.b16 %v757
  %v830 = vunpack.c.l.b16 %v758
  %v831 = vunpack.c.l.b16 %v759
  %v832 = vunpack.c.l.b16 %v760
  %v833 = vunpack.c.l.b16 %v761
  %v834 = vunpack.c.l.b16 %v762
  %v835 = vunpack.c.l.b16 %v763
  %v836 = vunpack.c.l.b16 %v764
  %v837 = vunpack.c.l.b16 %v765
  %v838 = vunpack.c.l.b16 %v766
  %v839 = vunpack.c.l.b16 %v767
  %v840 = vunpack.c.l.b16 %v768
  %v841 = vunpack.c.l.b16 %v769
  %v842 = vunpack.c.l.b16 %v770
  %v843 = vunpack.c.l.b16 %v771
  %v844 = vunpack.c.l.b16 %v772
  %v845 = vpack.c.b16 %v810, %v809
  %v846 = vpack.c.b16 %v812, %v811
  %v847 = vpack.c.b16 %v814, %v813
  %v848 = vpack.c.b16 %v816, %v815
  %v849 = vpack.c.b16 %v818, %v817
  %v850 = vpack.c.b16 %v820, %v819
  %v851 = vpack.c.b16 %v822, %v821
  %v852 = vpack.c.b16 %v824, %v823
  %v853 = vpack.c.b16 %v826, %v825
  %v854 = vpack.c.b16 %v828, %v827
  %v855 = vpack.c.b16 %v830, %v829
  %v856 = vpack.c.b16 %v832, %v831
  %v857 = vpack.c.b16 %v834, %v833
  %v858 = vpack.c.b16 %v836, %v835
  %v859 = vpack.c.b16 %v838, %v837
  %v860 = vpack.c.b16 %v840, %v839
  %v861 = vpack.c.b16 %v842, %v841
  %v862 = vpack.c.b16 %v844, %v843
  %881 = vmatprep.subr.bf16.mxu0 0
  %882 = vmatpush1.bf16.msra.mxu0 %v845
  %883 = vmatprep.subr.bf16.mxu0 0
  %884 = vmatpush1.bf16.msra.mxu0 %v846
  %885 = vmatprep.subr.bf16.mxu0 0
  %886 = vmatpush1.bf16.msra.mxu0 %v847
  %887 = vmatprep.subr.bf16.mxu0 0
  %888 = vmatpush1.bf16.msra.mxu0 %v848
  %889 = vmatprep.subr.bf16.mxu0 0
  %890 = vmatpush1.bf16.msra.mxu0 %v849
  %891 = vmatprep.subr.bf16.mxu0 0
  %892 = vmatpush1.bf16.msra.mxu0 %v850
  %893 = vmatprep.subr.bf16.mxu0 0
  %894 = vmatpush1.bf16.msra.mxu0 %v851
  %895 = vmatprep.subr.bf16.mxu0 0
  %896 = vmatpush1.bf16.msra.mxu0 %v852
  %897 = vmatprep.subr.bf16.mxu0 0
  %898 = vmatpush1.bf16.msra.mxu0 %v853
  %899 = vmatprep.subr.bf16.mxu0 0
  %900 = vmatpush1.bf16.msra.mxu0 %v854
  %901 = vmatprep.subr.bf16.mxu0 0
  %902 = vmatpush1.bf16.msra.mxu0 %v855
  %903 = vmatprep.subr.bf16.mxu0 0
  %904 = vmatpush1.bf16.msra.mxu0 %v856
  %905 = vmatprep.subr.bf16.mxu0 0
  %906 = vmatpush1.bf16.msra.mxu0 %v857
  %907 = vmatprep.subr.bf16.mxu0 0
  %908 = vmatpush1.bf16.msra.mxu0 %v858
  %909 = vmatprep.subr.bf16.mxu0 0
  %910 = vmatpush1.bf16.msra.mxu0 %v859
  %911 = vmatprep.subr.bf16.mxu0 0
  %912 = vmatpush1.bf16.msra.mxu0 %v860
  %913 = vmatprep.mubr.bf16.mxu0 %v66
  %914 = vmatmul.mubr.bf16.gmra.mrb[0].mxu0 %v65
  %v915 = vpop.f32.mrb[0].mxu0
  %v916 = vadd.f32 %v58, %v915
  %v917 = vpop.f32.mrb[0].mxu0
  %v918 = vpop.f32.mrb[0].mxu0
  %v919 = vpop.f32.mrb[0].mxu0
  %920 = vdwg.mxu0
  %921 = vmatprep.subr.bf16.mxu0 0
  %922 = vmatpush1.bf16.msra.mxu0 %v861
  %923 = vmatprep.subr.bf16.mxu0 0
  %924 = vmatpush1.bf16.msra.mxu0 %v862
  %925 = vmatprep.subr.bf16.mxu0 0
  %926 = vmatpush1.bf16.msra.mxu0 0
  %927 = vmatprep.subr.bf16.mxu0 0
  %928 = vmatpush1.bf16.msra.mxu0 0
  %929 = vmatprep.subr.bf16.mxu0 0
  %930 = vmatpush1.bf16.msra.mxu0 0
  %931 = vmatprep.subr.bf16.mxu0 0
  %932 = vmatpush1.bf16.msra.mxu0 0
  %933 = vmatprep.subr.bf16.mxu0 0
  %934 = vmatpush1.bf16.msra.mxu0 0
  %935 = vmatprep.subr.bf16.mxu0 0
  %936 = vmatpush1.bf16.msra.mxu0 0
  %937 = vmatprep.subr.bf16.mxu0 0
  %938 = vmatpush1.bf16.msra.mxu0 0
  %939 = vmatprep.subr.bf16.mxu0 0
  %940 = vmatpush1.bf16.msra.mxu0 0
  %941 = vmatprep.subr.bf16.mxu0 0
  %942 = vmatpush1.bf16.msra.mxu0 0
  %943 = vmatprep.subr.bf16.mxu0 0
  %944 = vmatpush1.bf16.msra.mxu0 0
  %945 = vmatprep.subr.bf16.mxu0 0
  %946 = vmatpush1.bf16.msra.mxu0 0
  %947 = vmatprep.subr.bf16.mxu0 0
  %948 = vmatpush1.bf16.msra.mxu0 0
  %949 = vmatprep.subr.bf16.mxu0 0
  %950 = vmatpush1.bf16.msra.mxu0 0
  %951 = vmatprep.subr.bf16.mxu0 0
  %952 = vmatpush1.bf16.msra.mxu0 0
  %953 = vmatprep.mubr.bf16.mxu0 0
  %954 = vmatmul.mubr.bf16.gmra.mrb[0].mxu0 %v180
  %v955 = vpop.f32.mrb[0].mxu0
  %v956 = vadd.f32 %v916, %v955
  %v957 = vpop.f32.mrb[0].mxu0
  %v958 = vpop.f32.mrb[0].mxu0
  %v959 = vpop.f32.mrb[0].mxu0
  %960 = vdwg.mxu0
  %v961 = vmax.f32 %v956, 0.0
  %v962 = vpack.c.bf16 %v961, %v961
  %v964 = vunpack.c.l.b16 %v962
  %v965 = vpack.c.b16 %v964, %v964
  %966 = vrot.lane.b32.xlu0 %v965, 48
  %v967 = vpop.permute.xlu0 %966
  %vm969 = vcmask 519552
  %970 = vst.msk [vmem:[%s3] sm:$0xf] %vm969, %v967
  // Predicated region
  $region14: #{_lambda_.13} parent=0 // pred_check
    _
  $region15: #{_lambda_.13} parent=0 // pred_check_branch
    %972 = sbr.rel (0) target = $region17
  $region16: #{_lambda_.13} parent=0 // pred_region
    _
  $region17: #{_lambda_.13} parent=0 // pred_fallthru
    _
  // Predicated region
  $region18: #{_lambda_.13} parent=0 // pred_check
    _
  $region19: #{_lambda_.13} parent=0 // pred_check_branch
    %974 = sbr.rel (0) target = $region21
  $region20: #{_lambda_.13} parent=0 // pred_region
    _
  $region21: #{_lambda_.13} parent=0 // pred_fallthru
    _

// kernel: _lambda_.12
$region0: #{_lambda_.12}
  #allocation0 [shape = 'u32[]', space=smem, size = 0x4, offset = 0x4, fixed_abs, tag = 'smem constant byte address 0x4 - core index']
  #allocation1 [shape = 'u32[144,128]{1,0:T(1,128)}', space=vmem, size = 0x12000, scoped, tag = 'internal scratch']
  %s0 = inlined_call_operand.vmem [shape: bf16[2,576], index: 0, kind: input, shape index: {}]
  %s1 = inlined_call_operand.vmem [shape: bf16[4,576,32], index: 1, kind: input, shape index: {}]
  %s2 = inlined_call_operand.vmem [shape: f32[1,32], index: 2, kind: input, shape index: {}]
  %s3 = inlined_call_operand.vmem [shape: bf16[2,128], index: 3, kind: output, shape index: {}]
  %s4 = sld [smem:[#allocation0]]
  $region22: #{_lambda_.12} parent=0
    _
  %s6 = ssub.s32 1, %s4
  %s7 = scalar_select 0, %s6, %s4
  // Predicated region
  $region2: #{_lambda_.12} parent=0 // pred_check
    _
  $region3: #{_lambda_.12} parent=0 // pred_check_branch
    %9 = sbr.rel (0) target = $region5
  $region4: #{_lambda_.12} parent=0 // pred_region
    _
  $region5: #{_lambda_.12} parent=0 // pred_fallthru
    _
  // Predicated region
  $region6: #{_lambda_.12} parent=0 // pred_check
    _
  $region7: #{_lambda_.12} parent=0 // pred_check_branch
    %11 = sbr.rel (0) target = $region9
  $region8: #{_lambda_.12} parent=0 // pred_region
    _
  $region9: #{_lambda_.12} parent=0 // pred_fallthru
    _
  // Predicated region
  $region10: #{_lambda_.12} parent=0 // pred_check
    _
  $region11: #{_lambda_.12} parent=0 // pred_check_branch
    %13 = sbr.rel (0) target = $region13
  $region12: #{_lambda_.12} parent=0 // pred_region
    _
  $region13: #{_lambda_.12} parent=0 // pred_fallthru
    _
  %v15 = vld [vmem:[%s0] sm:$0x1f]
  %v16 = vld [vmem:[%s2] sm:$0x1]
  %v17 = vld [vmem:[%s1] sm:$0xf]
  %v18 = vld [vmem:[%s1 + $0x4] sm:$0xf]
  %v19 = vld [vmem:[%s1 + $0x8] sm:$0xf]
  %v20 = vld [vmem:[%s1 + $0xc] sm:$0xf]
  %v21 = vld [vmem:[%s1 + $0x10] sm:$0xf]
  %v22 = vld [vmem:[%s1 + $0x14] sm:$0xf]
  %v23 = vld [vmem:[%s1 + $0x18] sm:$0xf]
  %v24 = vld [vmem:[%s1 + $0x1c] sm:$0xf]
  %v25 = vld [vmem:[%s1 + $0x20] sm:$0xf]
  %v26 = vld [vmem:[%s1 + $0x24] sm:$0xf]
  %v27 = vld [vmem:[%s1 + $0x28] sm:$0xf]
  %v28 = vld [vmem:[%s1 + $0x2c] sm:$0xf]
  %v29 = vld [vmem:[%s1 + $0x30] sm:$0xf]
  %v30 = vld [vmem:[%s1 + $0x34] sm:$0xf]
  %v31 = vld [vmem:[%s1 + $0x38] sm:$0xf]
  %v32 = vld [vmem:[%s1 + $0x3c] sm:$0xf]
  %v33 = vld [vmem:[%s1 + $0x40] sm:$0xf]
  %v34 = vld [vmem:[%s1 + $0x44] sm:$0xf]
  %v35 = vld [vmem:[%s1 + $0x48] sm:$0xf]
  %v36 = vld [vmem:[%s1 + $0x4c] sm:$0xf]
  %v37 = vld [vmem:[%s1 + $0x50] sm:$0xf]
  %v38 = vld [vmem:[%s1 + $0x54] sm:$0xf]
  %v39 = vld [vmem:[%s1 + $0x58] sm:$0xf]
  %v40 = vld [vmem:[%s1 + $0x5c] sm:$0xf]
  %v41 = vld [vmem:[%s1 + $0x60] sm:$0xf]
  %v42 = vld [vmem:[%s1 + $0x64] sm:$0xf]
  %v43 = vld [vmem:[%s1 + $0x68] sm:$0xf]
  %v44 = vld [vmem:[%s1 + $0x6c] sm:$0xf]
  %v45 = vld [vmem:[%s1 + $0x70] sm:$0xf]
  %v46 = vld [vmem:[%s1 + $0x74] sm:$0xf]
  %v47 = vld [vmem:[%s1 + $0x78] sm:$0xf]
  %v48 = vld [vmem:[%s1 + $0x7c] sm:$0xf]
  %v49 = vld [vmem:[%s1 + $0x80] sm:$0xf]
  %v50 = vld [vmem:[%s1 + $0x84] sm:$0xf]
  %v51 = vld [vmem:[%s1 + $0x88] sm:$0xf]
  %v52 = vld [vmem:[%s1 + $0x8c] sm:$0xf]
  %v53 = vld [vmem:[%s1 + $0x90] sm:$0xf]
  %v54 = vld [vmem:[%s1 + $0x94] sm:$0xf]
  %v55 = vld [vmem:[%s1 + $0x98] sm:$0xf]
  %v56 = vld [vmem:[%s1 + $0x9c] sm:$0xf]
  %v57 = vld [vmem:[%s1 + $0xa0] sm:$0xf]
  %v58 = vld [vmem:[%s1 + $0xa4] sm:$0xf]
  %v59 = vld [vmem:[%s1 + $0xa8] sm:$0xf]
  %v60 = vld [vmem:[%s1 + $0xac] sm:$0xf]
  %v61 = vld [vmem:[%s1 + $0xb0] sm:$0xf]
  %v62 = vld [vmem:[%s1 + $0xb4] sm:$0xf]
  %v63 = vld [vmem:[%s1 + $0xb8] sm:$0xf]
  %v64 = vld [vmem:[%s1 + $0xbc] sm:$0xf]
  %v65 = vld [vmem:[%s1 + $0xc0] sm:$0xf]
  %v66 = vld [vmem:[%s1 + $0xc4] sm:$0xf]
  %v67 = vld [vmem:[%s1 + $0xc8] sm:$0xf]
  %v68 = vld [vmem:[%s1 + $0xcc] sm:$0xf]
  %v69 = vld [vmem:[%s1 + $0xd0] sm:$0xf]
  %v70 = vld [vmem:[%s1 + $0xd4] sm:$0xf]
  %v71 = vld [vmem:[%s1 + $0xd8] sm:$0xf]
  %v72 = vld [vmem:[%s1 + $0xdc] sm:$0xf]
  %v73 = vld [vmem:[%s1 + $0xe0] sm:$0xf]
  %v74 = vld [vmem:[%s1 + $0xe4] sm:$0xf]
  %v75 = vld [vmem:[%s1 + $0xe8] sm:$0xf]
  %v76 = vld [vmem:[%s1 + $0xec] sm:$0xf]
  %v77 = vld [vmem:[%s1 + $0xf0] sm:$0xf]
  %v78 = vld [vmem:[%s1 + $0xf4] sm:$0xf]
  %v79 = vld [vmem:[%s1 + $0xf8] sm:$0xf]
  %v80 = vld [vmem:[%s1 + $0xfc] sm:$0xf]
  %v81 = vld [vmem:[%s1 + $0x100] sm:$0xf]
  %v82 = vld [vmem:[%s1 + $0x104] sm:$0xf]
  %v83 = vld [vmem:[%s1 + $0x108] sm:$0xf]
  %v84 = vld [vmem:[%s1 + $0x10c] sm:$0xf]
  %v85 = vld [vmem:[%s1 + $0x110] sm:$0xf]
  %v86 = vld [vmem:[%s1 + $0x114] sm:$0xf]
  %v87 = vld [vmem:[%s1 + $0x118] sm:$0xf]
  %v88 = vld [vmem:[%s1 + $0x11c] sm:$0xf]
  %v90 = vlaneseq
  %v91 = vshrl.u32 %v90, 7
  %v92 = vsub.s32 0, %v91
  %v93 = vrot.slane %v16, %v92
  %v96 = vcombine.high %v15, %v15
  %v98 = vunpack.c.l.s4 1966171168
  %v99 = vunpack.c.0.s8 %v98
  %v100 = vlaneseq
  %v101 = vshrl.u32 %v100, 7
  %v102 = vsub.s32 %v99, %v101
  %v103 = vrot.slane %v15, %v102
  %v105 = vunpack.c.l.s4 1966171168
  %v106 = vunpack.c.0.s8 %v105
  %v107 = vlaneseq
  %v108 = vshrl.u32 %v107, 7
  %v109 = vsub.s32 %v106, %v108
  %v110 = vrot.slane %v96, %v109
  %v111 = vcombine.high %v103, %v103
  %v113 = vunpack.c.l.s4 1966171168
  %v114 = vunpack.c.0.s8 %v113
  %v115 = vlaneseq
  %v116 = vshrl.u32 %v115, 7
  %v117 = vsub.s32 %v114, %v116
  %v118 = vrot.slane %v103, %v117
  %v120 = vunpack.c.l.s4 1966171168
  %v121 = vunpack.c.0.s8 %v120
  %v122 = vlaneseq
  %v123 = vshrl.u32 %v122, 7
  %v124 = vsub.s32 %v121, %v123
  %v125 = vrot.slane %v110, %v124
  %v127 = vunpack.c.l.s4 1966171168
  %v128 = vunpack.c.0.s8 %v127
  %v129 = vlaneseq
  %v130 = vshrl.u32 %v129, 7
  %v131 = vsub.s32 %v128, %v130
  %v132 = vrot.slane %v111, %v131
  %v133 = vcombine.high %v118, %v118
  %v134 = vcombine.high %v132, %v132
  %v211 = vunpack.c.l.b16 %v17
  %v212 = vunpack.c.l.b16 %v18
  %v213 = vunpack.c.l.b16 %v19
  %v214 = vunpack.c.l.b16 %v20
  %v215 = vunpack.c.l.b16 %v21
  %v216 = vunpack.c.l.b16 %v22
  %v217 = vunpack.c.l.b16 %v23
  %v218 = vunpack.c.l.b16 %v24
  %v219 = vunpack.c.l.b16 %v25
  %v220 = vunpack.c.l.b16 %v26
  %v221 = vunpack.c.l.b16 %v27
  %v222 = vunpack.c.l.b16 %v28
  %v223 = vunpack.c.l.b16 %v29
  %v224 = vunpack.c.l.b16 %v30
  %v225 = vunpack.c.l.b16 %v31
  %v226 = vunpack.c.l.b16 %v32
  %v227 = vunpack.c.l.b16 %v33
  %v228 = vunpack.c.l.b16 %v34
  %v229 = vunpack.c.l.b16 %v35
  %v230 = vunpack.c.l.b16 %v36
  %v231 = vunpack.c.l.b16 %v37
  %v232 = vunpack.c.l.b16 %v38
  %v233 = vunpack.c.l.b16 %v39
  %v234 = vunpack.c.l.b16 %v40
  %v235 = vunpack.c.l.b16 %v41
  %v236 = vunpack.c.l.b16 %v42
  %v237 = vunpack.c.l.b16 %v43
  %v238 = vunpack.c.l.b16 %v44
  %v239 = vunpack.c.l.b16 %v45
  %v240 = vunpack.c.l.b16 %v46
  %v241 = vunpack.c.l.b16 %v47
  %v242 = vunpack.c.l.b16 %v48
  %v243 = vunpack.c.l.b16 %v49
  %v244 = vunpack.c.l.b16 %v50
  %v245 = vunpack.c.l.b16 %v51
  %v246 = vunpack.c.l.b16 %v52
  %v247 = vunpack.c.l.b16 %v53
  %v248 = vunpack.c.l.b16 %v54
  %v249 = vunpack.c.l.b16 %v55
  %v250 = vunpack.c.l.b16 %v56
  %v251 = vunpack.c.l.b16 %v57
  %v252 = vunpack.c.l.b16 %v58
  %v253 = vunpack.c.l.b16 %v59
  %v254 = vunpack.c.l.b16 %v60
  %v255 = vunpack.c.l.b16 %v61
  %v256 = vunpack.c.l.b16 %v62
  %v257 = vunpack.c.l.b16 %v63
  %v258 = vunpack.c.l.b16 %v64
  %v259 = vunpack.c.l.b16 %v65
  %v260 = vunpack.c.l.b16 %v66
  %v261 = vunpack.c.l.b16 %v67
  %v262 = vunpack.c.l.b16 %v68
  %v263 = vunpack.c.l.b16 %v69
  %v264 = vunpack.c.l.b16 %v70
  %v265 = vunpack.c.l.b16 %v71
  %v266 = vunpack.c.l.b16 %v72
  %v267 = vunpack.c.l.b16 %v73
  %v268 = vunpack.c.l.b16 %v74
  %v269 = vunpack.c.l.b16 %v75
  %v270 = vunpack.c.l.b16 %v76
  %v271 = vunpack.c.l.b16 %v77
  %v272 = vunpack.c.l.b16 %v78
  %v273 = vunpack.c.l.b16 %v79
  %v274 = vunpack.c.l.b16 %v80
  %v275 = vunpack.c.l.b16 %v81
  %v276 = vunpack.c.l.b16 %v82
  %v277 = vunpack.c.l.b16 %v83
  %v278 = vunpack.c.l.b16 %v84
  %v279 = vunpack.c.l.b16 %v85
  %v280 = vunpack.c.l.b16 %v86
  %v281 = vunpack.c.l.b16 %v87
  %v282 = vunpack.c.l.b16 %v88
  %v283 = vpack.c.b16 %v212, %v211
  %v284 = vpack.c.b16 %v214, %v213
  %v285 = vpack.c.b16 %v216, %v215
  %v286 = vpack.c.b16 %v218, %v217
  %v287 = vpack.c.b16 %v220, %v219
  %v288 = vpack.c.b16 %v222, %v221
  %v289 = vpack.c.b16 %v224, %v223
  %v290 = vpack.c.b16 %v226, %v225
  %v291 = vpack.c.b16 %v228, %v227
  %v292 = vpack.c.b16 %v230, %v229
  %v293 = vpack.c.b16 %v232, %v231
  %v294 = vpack.c.b16 %v234, %v233
  %v295 = vpack.c.b16 %v236, %v235
  %v296 = vpack.c.b16 %v238, %v237
  %v297 = vpack.c.b16 %v240, %v239
  %v298 = vpack.c.b16 %v242, %v241
  %v299 = vpack.c.b16 %v244, %v243
  %v300 = vpack.c.b16 %v246, %v245
  %v301 = vpack.c.b16 %v248, %v247
  %v302 = vpack.c.b16 %v250, %v249
  %v303 = vpack.c.b16 %v252, %v251
  %v304 = vpack.c.b16 %v254, %v253
  %v305 = vpack.c.b16 %v256, %v255
  %v306 = vpack.c.b16 %v258, %v257
  %v307 = vpack.c.b16 %v260, %v259
  %v308 = vpack.c.b16 %v262, %v261
  %v309 = vpack.c.b16 %v264, %v263
  %v310 = vpack.c.b16 %v266, %v265
  %v311 = vpack.c.b16 %v268, %v267
  %v312 = vpack.c.b16 %v270, %v269
  %v313 = vpack.c.b16 %v272, %v271
  %v314 = vpack.c.b16 %v274, %v273
  %v315 = vpack.c.b16 %v276, %v275
  %v316 = vpack.c.b16 %v278, %v277
  %v317 = vpack.c.b16 %v280, %v279
  %v318 = vpack.c.b16 %v282, %v281
  %vm355 = vcmask 523264
  %v357 = vsel %vm355, %v125, 0
  %359 = vmatprep.subr.bf16.mxu0 0
  %360 = vmatpush1.bf16.msra.mxu0 %v283
  %361 = vmatprep.subr.bf16.mxu0 0
  %362 = vmatpush1.bf16.msra.mxu0 %v284
  %363 = vmatprep.subr.bf16.mxu0 0
  %364 = vmatpush1.bf16.msra.mxu0 %v285
  %365 = vmatprep.subr.bf16.mxu0 0
  %366 = vmatpush1.bf16.msra.mxu0 %v286
  %367 = vmatprep.subr.bf16.mxu0 0
  %368 = vmatpush1.bf16.msra.mxu0 %v287
  %369 = vmatprep.subr.bf16.mxu0 0
  %370 = vmatpush1.bf16.msra.mxu0 %v288
  %371 = vmatprep.subr.bf16.mxu0 0
  %372 = vmatpush1.bf16.msra.mxu0 %v289
  %373 = vmatprep.subr.bf16.mxu0 0
  %374 = vmatpush1.bf16.msra.mxu0 %v290
  %375 = vmatprep.subr.bf16.mxu0 0
  %376 = vmatpush1.bf16.msra.mxu0 %v291
  %377 = vmatprep.subr.bf16.mxu0 0
  %378 = vmatpush1.bf16.msra.mxu0 %v292
  %379 = vmatprep.subr.bf16.mxu0 0
  %380 = vmatpush1.bf16.msra.mxu0 %v293
  %381 = vmatprep.subr.bf16.mxu0 0
  %382 = vmatpush1.bf16.msra.mxu0 %v294
  %383 = vmatprep.subr.bf16.mxu0 0
  %384 = vmatpush1.bf16.msra.mxu0 %v295
  %385 = vmatprep.subr.bf16.mxu0 0
  %386 = vmatpush1.bf16.msra.mxu0 %v296
  %387 = vmatprep.subr.bf16.mxu0 0
  %388 = vmatpush1.bf16.msra.mxu0 %v297
  %389 = vmatprep.subr.bf16.mxu0 0
  %390 = vmatpush1.bf16.msra.mxu0 %v298
  %391 = vmatprep.mubr.bf16.mxu0 %v132
  %392 = vmatmul.mubr.bf16.gmra.mrb[0].mxu0 %v118
  %v393 = vpop.f32.mrb[0].mxu0
  %v394 = vadd.f32 %v93, %v393
  %v395 = vpop.f32.mrb[0].mxu0
  %v396 = vpop.f32.mrb[0].mxu0
  %v397 = vpop.f32.mrb[0].mxu0
  %398 = vdwg.mxu0
  %399 = vmatprep.subr.bf16.mxu0 0
  %400 = vmatpush1.bf16.msra.mxu0 %v299
  %401 = vmatprep.subr.bf16.mxu0 0
  %402 = vmatpush1.bf16.msra.mxu0 %v300
  %403 = vmatprep.subr.bf16.mxu0 0
  %404 = vmatpush1.bf16.msra.mxu0 %v301
  %405 = vmatprep.subr.bf16.mxu0 0
  %406 = vmatpush1.bf16.msra.mxu0 %v302
  %407 = vmatprep.subr.bf16.mxu0 0
  %408 = vmatpush1.bf16.msra.mxu0 %v303
  %409 = vmatprep.subr.bf16.mxu0 0
  %410 = vmatpush1.bf16.msra.mxu0 %v304
  %411 = vmatprep.subr.bf16.mxu0 0
  %412 = vmatpush1.bf16.msra.mxu0 %v305
  %413 = vmatprep.subr.bf16.mxu0 0
  %414 = vmatpush1.bf16.msra.mxu0 %v306
  %415 = vmatprep.subr.bf16.mxu0 0
  %416 = vmatpush1.bf16.msra.mxu0 %v307
  %417 = vmatprep.subr.bf16.mxu0 0
  %418 = vmatpush1.bf16.msra.mxu0 %v308
  %419 = vmatprep.subr.bf16.mxu0 0
  %420 = vmatpush1.bf16.msra.mxu0 %v309
  %421 = vmatprep.subr.bf16.mxu0 0
  %422 = vmatpush1.bf16.msra.mxu0 %v310
  %423 = vmatprep.subr.bf16.mxu0 0
  %424 = vmatpush1.bf16.msra.mxu0 %v311
  %425 = vmatprep.subr.bf16.mxu0 0
  %426 = vmatpush1.bf16.msra.mxu0 %v312
  %427 = vmatprep.subr.bf16.mxu0 0
  %428 = vmatpush1.bf16.msra.mxu0 %v313
  %429 = vmatprep.subr.bf16.mxu0 0
  %430 = vmatpush1.bf16.msra.mxu0 %v314
  %431 = vmatprep.mubr.bf16.mxu0 %v134
  %432 = vmatmul.mubr.bf16.gmra.mrb[0].mxu0 %v133
  %v433 = vpop.f32.mrb[0].mxu0
  %v434 = vadd.f32 %v394, %v433
  %v435 = vpop.f32.mrb[0].mxu0
  %v436 = vpop.f32.mrb[0].mxu0
  %v437 = vpop.f32.mrb[0].mxu0
  %438 = vdwg.mxu0
  %439 = vmatprep.subr.bf16.mxu0 0
  %440 = vmatpush1.bf16.msra.mxu0 %v315
  %441 = vmatprep.subr.bf16.mxu0 0
  %442 = vmatpush1.bf16.msra.mxu0 %v316
  %443 = vmatprep.subr.bf16.mxu0 0
  %444 = vmatpush1.bf16.msra.mxu0 %v317
  %445 = vmatprep.subr.bf16.mxu0 0
  %446 = vmatpush1.bf16.msra.mxu0 %v318
  %447 = vmatprep.subr.bf16.mxu0 0
  %448 = vmatpush1.bf16.msra.mxu0 0
  %449 = vmatprep.subr.bf16.mxu0 0
  %450 = vmatpush1.bf16.msra.mxu0 0
  %451 = vmatprep.subr.bf16.mxu0 0
  %452 = vmatpush1.bf16.msra.mxu0 0
  %453 = vmatprep.subr.bf16.mxu0 0
  %454 = vmatpush1.bf16.msra.mxu0 0
  %455 = vmatprep.subr.bf16.mxu0 0
  %456 = vmatpush1.bf16.msra.mxu0 0
  %457 = vmatprep.subr.bf16.mxu0 0
  %458 = vmatpush1.bf16.msra.mxu0 0
  %459 = vmatprep.subr.bf16.mxu0 0
  %460 = vmatpush1.bf16.msra.mxu0 0
  %461 = vmatprep.subr.bf16.mxu0 0
  %462 = vmatpush1.bf16.msra.mxu0 0
  %463 = vmatprep.subr.bf16.mxu0 0
  %464 = vmatpush1.bf16.msra.mxu0 0
  %465 = vmatprep.subr.bf16.mxu0 0
  %466 = vmatpush1.bf16.msra.mxu0 0
  %467 = vmatprep.subr.bf16.mxu0 0
  %468 = vmatpush1.bf16.msra.mxu0 0
  %469 = vmatprep.subr.bf16.mxu0 0
  %470 = vmatpush1.bf16.msra.mxu0 0
  %471 = vmatprep.mubr.bf16.mxu0 0
  %472 = vmatmul.mubr.bf16.gmra.mrb[0].mxu0 %v357
  %v473 = vpop.f32.mrb[0].mxu0
  %v474 = vadd.f32 %v434, %v473
  %v475 = vpop.f32.mrb[0].mxu0
  %v476 = vpop.f32.mrb[0].mxu0
  %v477 = vpop.f32.mrb[0].mxu0
  %478 = vdwg.mxu0
  %v479 = vmax.f32 %v474, 0.0
  %v480 = vpack.c.bf16 %v479, %v479
  %vm481 = vcmask 253952
  %482 = vst.msk [vmem:[%s3] sm:$0x1] %vm481, %v480
  %s483 = scalar_lea.vmem %s1, 288
  %v484 = vld [vmem:[%s483] sm:$0xf]
  %v485 = vld [vmem:[%s483 + $0x4] sm:$0xf]
  %v486 = vld [vmem:[%s483 + $0x8] sm:$0xf]
  %v487 = vld [vmem:[%s483 + $0xc] sm:$0xf]
  %v488 = vld [vmem:[%s483 + $0x10] sm:$0xf]
  %v489 = vld [vmem:[%s483 + $0x14] sm:$0xf]
  %v490 = vld [vmem:[%s483 + $0x18] sm:$0xf]
  %v491 = vld [vmem:[%s483 + $0x1c] sm:$0xf]
  %v492 = vld [vmem:[%s483 + $0x20] sm:$0xf]
  %v493 = vld [vmem:[%s483 + $0x24] sm:$0xf]
  %v494 = vld [vmem:[%s483 + $0x28] sm:$0xf]
  %v495 = vld [vmem:[%s483 + $0x2c] sm:$0xf]
  %v496 = vld [vmem:[%s483 + $0x30] sm:$0xf]
  %v497 = vld [vmem:[%s483 + $0x34] sm:$0xf]
  %v498 = vld [vmem:[%s483 + $0x38] sm:$0xf]
  %v499 = vld [vmem:[%s483 + $0x3c] sm:$0xf]
  %v500 = vld [vmem:[%s483 + $0x40] sm:$0xf]
  %v501 = vld [vmem:[%s483 + $0x44] sm:$0xf]
  %v502 = vld [vmem:[%s483 + $0x48] sm:$0xf]
  %v503 = vld [vmem:[%s483 + $0x4c] sm:$0xf]
  %v504 = vld [vmem:[%s483 + $0x50] sm:$0xf]
  %v505 = vld [vmem:[%s483 + $0x54] sm:$0xf]
  %v506 = vld [vmem:[%s483 + $0x58] sm:$0xf]
  %v507 = vld [vmem:[%s483 + $0x5c] sm:$0xf]
  %v508 = vld [vmem:[%s483 + $0x60] sm:$0xf]
  %v509 = vld [vmem:[%s483 + $0x64] sm:$0xf]
  %v510 = vld [vmem:[%s483 + $0x68] sm:$0xf]
  %v511 = vld [vmem:[%s483 + $0x6c] sm:$0xf]
  %v512 = vld [vmem:[%s483 + $0x70] sm:$0xf]
  %v513 = vld [vmem:[%s483 + $0x74] sm:$0xf]
  %v514 = vld [vmem:[%s483 + $0x78] sm:$0xf]
  %v515 = vld [vmem:[%s483 + $0x7c] sm:$0xf]
  %v516 = vld [vmem:[%s483 + $0x80] sm:$0xf]
  %v517 = vld [vmem:[%s483 + $0x84] sm:$0xf]
  %v518 = vld [vmem:[%s483 + $0x88] sm:$0xf]
  %v519 = vld [vmem:[%s483 + $0x8c] sm:$0xf]
  %v520 = vld [vmem:[%s483 + $0x90] sm:$0xf]
  %v521 = vld [vmem:[%s483 + $0x94] sm:$0xf]
  %v522 = vld [vmem:[%s483 + $0x98] sm:$0xf]
  %v523 = vld [vmem:[%s483 + $0x9c] sm:$0xf]
  %v524 = vld [vmem:[%s483 + $0xa0] sm:$0xf]
  %v525 = vld [vmem:[%s483 + $0xa4] sm:$0xf]
  %v526 = vld [vmem:[%s483 + $0xa8] sm:$0xf]
  %v527 = vld [vmem:[%s483 + $0xac] sm:$0xf]
  %v528 = vld [vmem:[%s483 + $0xb0] sm:$0xf]
  %v529 = vld [vmem:[%s483 + $0xb4] sm:$0xf]
  %v530 = vld [vmem:[%s483 + $0xb8] sm:$0xf]
  %v531 = vld [vmem:[%s483 + $0xbc] sm:$0xf]
  %v532 = vld [vmem:[%s483 + $0xc0] sm:$0xf]
  %v533 = vld [vmem:[%s483 + $0xc4] sm:$0xf]
  %v534 = vld [vmem:[%s483 + $0xc8] sm:$0xf]
  %v535 = vld [vmem:[%s483 + $0xcc] sm:$0xf]
  %v536 = vld [vmem:[%s483 + $0xd0] sm:$0xf]
  %v537 = vld [vmem:[%s483 + $0xd4] sm:$0xf]
  %v538 = vld [vmem:[%s483 + $0xd8] sm:$0xf]
  %v539 = vld [vmem:[%s483 + $0xdc] sm:$0xf]
  %v540 = vld [vmem:[%s483 + $0xe0] sm:$0xf]
  %v541 = vld [vmem:[%s483 + $0xe4] sm:$0xf]
  %v542 = vld [vmem:[%s483 + $0xe8] sm:$0xf]
  %v543 = vld [vmem:[%s483 + $0xec] sm:$0xf]
  %v544 = vld [vmem:[%s483 + $0xf0] sm:$0xf]
  %v545 = vld [vmem:[%s483 + $0xf4] sm:$0xf]
  %v546 = vld [vmem:[%s483 + $0xf8] sm:$0xf]
  %v547 = vld [vmem:[%s483 + $0xfc] sm:$0xf]
  %v548 = vld [vmem:[%s483 + $0x100] sm:$0xf]
  %v549 = vld [vmem:[%s483 + $0x104] sm:$0xf]
  %v550 = vld [vmem:[%s483 + $0x108] sm:$0xf]
  %v551 = vld [vmem:[%s483 + $0x10c] sm:$0xf]
  %v552 = vld [vmem:[%s483 + $0x110] sm:$0xf]
  %v553 = vld [vmem:[%s483 + $0x114] sm:$0xf]
  %v554 = vld [vmem:[%s483 + $0x118] sm:$0xf]
  %v555 = vld [vmem:[%s483 + $0x11c] sm:$0xf]
  %v628 = vunpack.c.l.b16 %v484
  %v629 = vunpack.c.l.b16 %v485
  %v630 = vunpack.c.l.b16 %v486
  %v631 = vunpack.c.l.b16 %v487
  %v632 = vunpack.c.l.b16 %v488
  %v633 = vunpack.c.l.b16 %v489
  %v634 = vunpack.c.l.b16 %v490
  %v635 = vunpack.c.l.b16 %v491
  %v636 = vunpack.c.l.b16 %v492
  %v637 = vunpack.c.l.b16 %v493
  %v638 = vunpack.c.l.b16 %v494
  %v639 = vunpack.c.l.b16 %v495
  %v640 = vunpack.c.l.b16 %v496
  %v641 = vunpack.c.l.b16 %v497
  %v642 = vunpack.c.l.b16 %v498
  %v643 = vunpack.c.l.b16 %v499
  %v644 = vunpack.c.l.b16 %v500
  %v645 = vunpack.c.l.b16 %v501
  %v646 = vunpack.c.l.b16 %v502
  %v647 = vunpack.c.l.b16 %v503
  %v648 = vunpack.c.l.b16 %v504
  %v649 = vunpack.c.l.b16 %v505
  %v650 = vunpack.c.l.b16 %v506
  %v651 = vunpack.c.l.b16 %v507
  %v652 = vunpack.c.l.b16 %v508
  %v653 = vunpack.c.l.b16 %v509
  %v654 = vunpack.c.l.b16 %v510
  %v655 = vunpack.c.l.b16 %v511
  %v656 = vunpack.c.l.b16 %v512
  %v657 = vunpack.c.l.b16 %v513
  %v658 = vunpack.c.l.b16 %v514
  %v659 = vunpack.c.l.b16 %v515
  %v660 = vunpack.c.l.b16 %v516
  %v661 = vunpack.c.l.b16 %v517
  %v662 = vunpack.c.l.b16 %v518
  %v663 = vunpack.c.l.b16 %v519
  %v664 = vunpack.c.l.b16 %v520
  %v665 = vunpack.c.l.b16 %v521
  %v666 = vunpack.c.l.b16 %v522
  %v667 = vunpack.c.l.b16 %v523
  %v668 = vunpack.c.l.b16 %v524
  %v669 = vunpack.c.l.b16 %v525
  %v670 = vunpack.c.l.b16 %v526
  %v671 = vunpack.c.l.b16 %v527
  %v672 = vunpack.c.l.b16 %v528
  %v673 = vunpack.c.l.b16 %v529
  %v674 = vunpack.c.l.b16 %v530
  %v675 = vunpack.c.l.b16 %v531
  %v676 = vunpack.c.l.b16 %v532
  %v677 = vunpack.c.l.b16 %v533
  %v678 = vunpack.c.l.b16 %v534
  %v679 = vunpack.c.l.b16 %v535
  %v680 = vunpack.c.l.b16 %v536
  %v681 = vunpack.c.l.b16 %v537
  %v682 = vunpack.c.l.b16 %v538
  %v683 = vunpack.c.l.b16 %v539
  %v684 = vunpack.c.l.b16 %v540
  %v685 = vunpack.c.l.b16 %v541
  %v686 = vunpack.c.l.b16 %v542
  %v687 = vunpack.c.l.b16 %v543
  %v688 = vunpack.c.l.b16 %v544
  %v689 = vunpack.c.l.b16 %v545
  %v690 = vunpack.c.l.b16 %v546
  %v691 = vunpack.c.l.b16 %v547
  %v692 = vunpack.c.l.b16 %v548
  %v693 = vunpack.c.l.b16 %v549
  %v694 = vunpack.c.l.b16 %v550
  %v695 = vunpack.c.l.b16 %v551
  %v696 = vunpack.c.l.b16 %v552
  %v697 = vunpack.c.l.b16 %v553
  %v698 = vunpack.c.l.b16 %v554
  %v699 = vunpack.c.l.b16 %v555
  %v700 = vpack.c.b16 %v629, %v628
  %v701 = vpack.c.b16 %v631, %v630
  %v702 = vpack.c.b16 %v633, %v632
  %v703 = vpack.c.b16 %v635, %v634
  %v704 = vpack.c.b16 %v637, %v636
  %v705 = vpack.c.b16 %v639, %v638
  %v706 = vpack.c.b16 %v641, %v640
  %v707 = vpack.c.b16 %v643, %v642
  %v708 = vpack.c.b16 %v645, %v644
  %v709 = vpack.c.b16 %v647, %v646
  %v710 = vpack.c.b16 %v649, %v648
  %v711 = vpack.c.b16 %v651, %v650
  %v712 = vpack.c.b16 %v653, %v652
  %v713 = vpack.c.b16 %v655, %v654
  %v714 = vpack.c.b16 %v657, %v656
  %v715 = vpack.c.b16 %v659, %v658
  %v716 = vpack.c.b16 %v661, %v660
  %v717 = vpack.c.b16 %v663, %v662
  %v718 = vpack.c.b16 %v665, %v664
  %v719 = vpack.c.b16 %v667, %v666
  %v720 = vpack.c.b16 %v669, %v668
  %v721 = vpack.c.b16 %v671, %v670
  %v722 = vpack.c.b16 %v673, %v672
  %v723 = vpack.c.b16 %v675, %v674
  %v724 = vpack.c.b16 %v677, %v676
  %v725 = vpack.c.b16 %v679, %v678
  %v726 = vpack.c.b16 %v681, %v680
  %v727 = vpack.c.b16 %v683, %v682
  %v728 = vpack.c.b16 %v685, %v684
  %v729 = vpack.c.b16 %v687, %v686
  %v730 = vpack.c.b16 %v689, %v688
  %v731 = vpack.c.b16 %v691, %v690
  %v732 = vpack.c.b16 %v693, %v692
  %v733 = vpack.c.b16 %v695, %v694
  %v734 = vpack.c.b16 %v697, %v696
  %v735 = vpack.c.b16 %v699, %v698
  %772 = vmatprep.subr.bf16.mxu0 0
  %773 = vmatpush1.bf16.msra.mxu0 %v700
  %774 = vmatprep.subr.bf16.mxu0 0
  %775 = vmatpush1.bf16.msra.mxu0 %v701
  %776 = vmatprep.subr.bf16.mxu0 0
  %777 = vmatpush1.bf16.msra.mxu0 %v702
  %778 = vmatprep.subr.bf16.mxu0 0
  %779 = vmatpush1.bf16.msra.mxu0 %v703
  %780 = vmatprep.subr.bf16.mxu0 0
  %781 = vmatpush1.bf16.msra.mxu0 %v704
  %782 = vmatprep.subr.bf16.mxu0 0
  %783 = vmatpush1.bf16.msra.mxu0 %v705
  %784 = vmatprep.subr.bf16.mxu0 0
  %785 = vmatpush1.bf16.msra.mxu0 %v706
  %786 = vmatprep.subr.bf16.mxu0 0
  %787 = vmatpush1.bf16.msra.mxu0 %v707
  %788 = vmatprep.subr.bf16.mxu0 0
  %789 = vmatpush1.bf16.msra.mxu0 %v708
  %790 = vmatprep.subr.bf16.mxu0 0
  %791 = vmatpush1.bf16.msra.mxu0 %v709
  %792 = vmatprep.subr.bf16.mxu0 0
  %793 = vmatpush1.bf16.msra.mxu0 %v710
  %794 = vmatprep.subr.bf16.mxu0 0
  %795 = vmatpush1.bf16.msra.mxu0 %v711
  %796 = vmatprep.subr.bf16.mxu0 0
  %797 = vmatpush1.bf16.msra.mxu0 %v712
  %798 = vmatprep.subr.bf16.mxu0 0
  %799 = vmatpush1.bf16.msra.mxu0 %v713
  %800 = vmatprep.subr.bf16.mxu0 0
  %801 = vmatpush1.bf16.msra.mxu0 %v714
  %802 = vmatprep.subr.bf16.mxu0 0
  %803 = vmatpush1.bf16.msra.mxu0 %v715
  %804 = vmatprep.mubr.bf16.mxu0 %v132
  %805 = vmatmul.mubr.bf16.gmra.mrb[0].mxu0 %v118
  %v806 = vpop.f32.mrb[0].mxu0
  %v807 = vadd.f32 %v93, %v806
  %v808 = vpop.f32.mrb[0].mxu0
  %v809 = vpop.f32.mrb[0].mxu0
  %v810 = vpop.f32.mrb[0].mxu0
  %811 = vdwg.mxu0
  %812 = vmatprep.subr.bf16.mxu0 0
  %813 = vmatpush1.bf16.msra.mxu0 %v716
  %814 = vmatprep.subr.bf16.mxu0 0
  %815 = vmatpush1.bf16.msra.mxu0 %v717
  %816 = vmatprep.subr.bf16.mxu0 0
  %817 = vmatpush1.bf16.msra.mxu0 %v718
  %818 = vmatprep.subr.bf16.mxu0 0
  %819 = vmatpush1.bf16.msra.mxu0 %v719
  %820 = vmatprep.subr.bf16.mxu0 0
  %821 = vmatpush1.bf16.msra.mxu0 %v720
  %822 = vmatprep.subr.bf16.mxu0 0
  %823 = vmatpush1.bf16.msra.mxu0 %v721
  %824 = vmatprep.subr.bf16.mxu0 0
  %825 = vmatpush1.bf16.msra.mxu0 %v722
  %826 = vmatprep.subr.bf16.mxu0 0
  %827 = vmatpush1.bf16.msra.mxu0 %v723
  %828 = vmatprep.subr.bf16.mxu0 0
  %829 = vmatpush1.bf16.msra.mxu0 %v724
  %830 = vmatprep.subr.bf16.mxu0 0
  %831 = vmatpush1.bf16.msra.mxu0 %v725
  %832 = vmatprep.subr.bf16.mxu0 0
  %833 = vmatpush1.bf16.msra.mxu0 %v726
  %834 = vmatprep.subr.bf16.mxu0 0
  %835 = vmatpush1.bf16.msra.mxu0 %v727
  %836 = vmatprep.subr.bf16.mxu0 0
  %837 = vmatpush1.bf16.msra.mxu0 %v728
  %838 = vmatprep.subr.bf16.mxu0 0
  %839 = vmatpush1.bf16.msra.mxu0 %v729
  %840 = vmatprep.subr.bf16.mxu0 0
  %841 = vmatpush1.bf16.msra.mxu0 %v730
  %842 = vmatprep.subr.bf16.mxu0 0
  %843 = vmatpush1.bf16.msra.mxu0 %v731
  %844 = vmatprep.mubr.bf16.mxu0 %v134
  %845 = vmatmul.mubr.bf16.gmra.mrb[0].mxu0 %v133
  %v846 = vpop.f32.mrb[0].mxu0
  %v847 = vadd.f32 %v807, %v846
  %v848 = vpop.f32.mrb[0].mxu0
  %v849 = vpop.f32.mrb[0].mxu0
  %v850 = vpop.f32.mrb[0].mxu0
  %851 = vdwg.mxu0
  %852 = vmatprep.subr.bf16.mxu0 0
  %853 = vmatpush1.bf16.msra.mxu0 %v732
  %854 = vmatprep.subr.bf16.mxu0 0
  %855 = vmatpush1.bf16.msra.mxu0 %v733
  %856 = vmatprep.subr.bf16.mxu0 0
  %857 = vmatpush1.bf16.msra.mxu0 %v734
  %858 = vmatprep.subr.bf16.mxu0 0
  %859 = vmatpush1.bf16.msra.mxu0 %v735
  %860 = vmatprep.subr.bf16.mxu0 0
  %861 = vmatpush1.bf16.msra.mxu0 0
  %862 = vmatprep.subr.bf16.mxu0 0
  %863 = vmatpush1.bf16.msra.mxu0 0
  %864 = vmatprep.subr.bf16.mxu0 0
  %865 = vmatpush1.bf16.msra.mxu0 0
  %866 = vmatprep.subr.bf16.mxu0 0
  %867 = vmatpush1.bf16.msra.mxu0 0
  %868 = vmatprep.subr.bf16.mxu0 0
  %869 = vmatpush1.bf16.msra.mxu0 0
  %870 = vmatprep.subr.bf16.mxu0 0
  %871 = vmatpush1.bf16.msra.mxu0 0
  %872 = vmatprep.subr.bf16.mxu0 0
  %873 = vmatpush1.bf16.msra.mxu0 0
  %874 = vmatprep.subr.bf16.mxu0 0
  %875 = vmatpush1.bf16.msra.mxu0 0
  %876 = vmatprep.subr.bf16.mxu0 0
  %877 = vmatpush1.bf16.msra.mxu0 0
  %878 = vmatprep.subr.bf16.mxu0 0
  %879 = vmatpush1.bf16.msra.mxu0 0
  %880 = vmatprep.subr.bf16.mxu0 0
  %881 = vmatpush1.bf16.msra.mxu0 0
  %882 = vmatprep.subr.bf16.mxu0 0
  %883 = vmatpush1.bf16.msra.mxu0 0
  %884 = vmatprep.mubr.bf16.mxu0 0
  %885 = vmatmul.mubr.bf16.gmra.mrb[0].mxu0 %v357
  %v886 = vpop.f32.mrb[0].mxu0
  %v887 = vadd.f32 %v847, %v886
  %v888 = vpop.f32.mrb[0].mxu0
  %v889 = vpop.f32.mrb[0].mxu0
  %v890 = vpop.f32.mrb[0].mxu0
  %891 = vdwg.mxu0
  %v892 = vmax.f32 %v887, 0.0
  %v893 = vpack.c.bf16 %v892, %v892
  %v896 = vunpack.c.l.s4 1966171168
  %v897 = vunpack.c.0.s8 %v896
  %v898 = vlaneseq
  %v899 = vshrl.u32 %v898, 7
  %v900 = vsub.s32 %v897, %v899
  %v901 = vrot.slane %v893, %v900
  %v903 = vunpack.c.l.s4 1966171168
  %v904 = vunpack.c.0.s8 %v903
  %v905 = vlaneseq
  %v906 = vshrl.u32 %v905, 7
  %v907 = vsub.s32 %v904, %v906
  %v908 = vrot.slane %v901, %v907
  %909 = vrot.lane.b32.xlu0 %v908, 32
  %v910 = vpop.permute.xlu0 %909
  %vm912 = vcmask 516352
  %913 = vst.msk [vmem:[%s3] sm:$0x1] %vm912, %v910
  %s914 = scalar_lea.vmem %s1, 576
  %v915 = vld [vmem:[%s914] sm:$0xf]
  %v916 = vld [vmem:[%s914 + $0x4] sm:$0xf]
  %v917 = vld [vmem:[%s914 + $0x8] sm:$0xf]
  %v918 = vld [vmem:[%s914 + $0xc] sm:$0xf]
  %v919 = vld [vmem:[%s914 + $0x10] sm:$0xf]
  %v920 = vld [vmem:[%s914 + $0x14] sm:$0xf]
  %v921 = vld [vmem:[%s914 + $0x18] sm:$0xf]
  %v922 = vld [vmem:[%s914 + $0x1c] sm:$0xf]
  %v923 = vld [vmem:[%s914 + $0x20] sm:$0xf]
  %v924 = vld [vmem:[%s914 + $0x24] sm:$0xf]
  %v925 = vld [vmem:[%s914 + $0x28] sm:$0xf]
  %v926 = vld [vmem:[%s914 + $0x2c] sm:$0xf]
  %v927 = vld [vmem:[%s914 + $0x30] sm:$0xf]
  %v928 = vld [vmem:[%s914 + $0x34] sm:$0xf]
  %v929 = vld [vmem:[%s914 + $0x38] sm:$0xf]
  %v930 = vld [vmem:[%s914 + $0x3c] sm:$0xf]
  %v931 = vld [vmem:[%s914 + $0x40] sm:$0xf]
  %v932 = vld [vmem:[%s914 + $0x44] sm:$0xf]
  %v933 = vld [vmem:[%s914 + $0x48] sm:$0xf]
  %v934 = vld [vmem:[%s914 + $0x4c] sm:$0xf]
  %v935 = vld [vmem:[%s914 + $0x50] sm:$0xf]
  %v936 = vld [vmem:[%s914 + $0x54] sm:$0xf]
  %v937 = vld [vmem:[%s914 + $0x58] sm:$0xf]
  %v938 = vld [vmem:[%s914 + $0x5c] sm:$0xf]
  %v939 = vld [vmem:[%s914 + $0x60] sm:$0xf]
  %v940 = vld [vmem:[%s914 + $0x64] sm:$0xf]
  %v941 = vld [vmem:[%s914 + $0x68] sm:$0xf]
  %v942 = vld [vmem:[%s914 + $0x6c] sm:$0xf]
  %v943 = vld [vmem:[%s914 + $0x70] sm:$0xf]
  %v944 = vld [vmem:[%s914 + $0x74] sm:$0xf]
  %v945 = vld [vmem:[%s914 + $0x78] sm:$0xf]
  %v946 = vld [vmem:[%s914 + $0x7c] sm:$0xf]
  %v947 = vld [vmem:[%s914 + $0x80] sm:$0xf]
  %v948 = vld [vmem:[%s914 + $0x84] sm:$0xf]
  %v949 = vld [vmem:[%s914 + $0x88] sm:$0xf]
  %v950 = vld [vmem:[%s914 + $0x8c] sm:$0xf]
  %v951 = vld [vmem:[%s914 + $0x90] sm:$0xf]
  %v952 = vld [vmem:[%s914 + $0x94] sm:$0xf]
  %v953 = vld [vmem:[%s914 + $0x98] sm:$0xf]
  %v954 = vld [vmem:[%s914 + $0x9c] sm:$0xf]
  %v955 = vld [vmem:[%s914 + $0xa0] sm:$0xf]
  %v956 = vld [vmem:[%s914 + $0xa4] sm:$0xf]
  %v957 = vld [vmem:[%s914 + $0xa8] sm:$0xf]
  %v958 = vld [vmem:[%s914 + $0xac] sm:$0xf]
  %v959 = vld [vmem:[%s914 + $0xb0] sm:$0xf]
  %v960 = vld [vmem:[%s914 + $0xb4] sm:$0xf]
  %v961 = vld [vmem:[%s914 + $0xb8] sm:$0xf]
  %v962 = vld [vmem:[%s914 + $0xbc] sm:$0xf]
  %v963 = vld [vmem:[%s914 + $0xc0] sm:$0xf]
  %v964 = vld [vmem:[%s914 + $0xc4] sm:$0xf]
  %v965 = vld [vmem:[%s914 + $0xc8] sm:$0xf]
  %v966 = vld [vmem:[%s914 + $0xcc] sm:$0xf]
  %v967 = vld [vmem:[%s914 + $0xd0] sm:$0xf]
  %v968 = vld [vmem:[%s914 + $0xd4] sm:$0xf]
  %v969 = vld [vmem:[%s914 + $0xd8] sm:$0xf]
  %v970 = vld [vmem:[%s914 + $0xdc] sm:$0xf]
  %v971 = vld [vmem:[%s914 + $0xe0] sm:$0xf]
  %v972 = vld [vmem:[%s914 + $0xe4] sm:$0xf]
  %v973 = vld [vmem:[%s914 + $0xe8] sm:$0xf]
  %v974 = vld [vmem:[%s914 + $0xec] sm:$0xf]
  %v975 = vld [vmem:[%s914 + $0xf0] sm:$0xf]
  %v976 = vld [vmem:[%s914 + $0xf4] sm:$0xf]
  %v977 = vld [vmem:[%s914 + $0xf8] sm:$0xf]
  %v978 = vld [vmem:[%s914 + $0xfc] sm:$0xf]
  %v979 = vld [vmem:[%s914 + $0x100] sm:$0xf]
  %v980 = vld [vmem:[%s914 + $0x104] sm:$0xf]
  %v981 = vld [vmem:[%s914 + $0x108] sm:$0xf]
  %v982 = vld [vmem:[%s914 + $0x10c] sm:$0xf]
  %v983 = vld [vmem:[%s914 + $0x110] sm:$0xf]
  %v984 = vld [vmem:[%s914 + $0x114] sm:$0xf]
  %v985 = vld [vmem:[%s914 + $0x118] sm:$0xf]
  %v986 = vld [vmem:[%s914 + $0x11c] sm:$0xf]
  %v1059 = vunpack.c.l.b16 %v915
  %v1060 = vunpack.c.l.b16 %v916
  %v1061 = vunpack.c.l.b16 %v917
  %v1062 = vunpack.c.l.b16 %v918
  %v1063 = vunpack.c.l.b16 %v919
  %v1064 = vunpack.c.l.b16 %v920
  %v1065 = vunpack.c.l.b16 %v921
  %v1066 = vunpack.c.l.b16 %v922
  %v1067 = vunpack.c.l.b16 %v923
  %v1068 = vunpack.c.l.b16 %v924
  %v1069 = vunpack.c.l.b16 %v925
  %v1070 = vunpack.c.l.b16 %v926
  %v1071 = vunpack.c.l.b16 %v927
  %v1072 = vunpack.c.l.b16 %v928
  %v1073 = vunpack.c.l.b16 %v929
  %v1074 = vunpack.c.l.b16 %v930
  %v1075 = vunpack.c.l.b16 %v931
  %v1076 = vunpack.c.l.b16 %v932
  %v1077 = vunpack.c.l.b16 %v933
  %v1078 = vunpack.c.l.b16 %v934
  %v1079 = vunpack.c.l.b16 %v935
  %v1080 = vunpack.c.l.b16 %v936
  %v1081 = vunpack.c.l.b16 %v937
  %v1082 = vunpack.c.l.b16 %v938
  %v1083 = vunpack.c.l.b16 %v939
  %v1084 = vunpack.c.l.b16 %v940
  %v1085 = vunpack.c.l.b16 %v941
  %v1086 = vunpack.c.l.b16 %v942
  %v1087 = vunpack.c.l.b16 %v943
  %v1088 = vunpack.c.l.b16 %v944
  %v1089 = vunpack.c.l.b16 %v945
  %v1090 = vunpack.c.l.b16 %v946
  %v1091 = vunpack.c.l.b16 %v947
  %v1092 = vunpack.c.l.b16 %v948
  %v1093 = vunpack.c.l.b16 %v949
  %v1094 = vunpack.c.l.b16 %v950
  %v1095 = vunpack.c.l.b16 %v951
  %v1096 = vunpack.c.l.b16 %v952
  %v1097 = vunpack.c.l.b16 %v953
  %v1098 = vunpack.c.l.b16 %v954
  %v1099 = vunpack.c.l.b16 %v955
  %v1100 = vunpack.c.l.b16 %v956
  %v1101 = vunpack.c.l.b16 %v957
  %v1102 = vunpack.c.l.b16 %v958
  %v1103 = vunpack.c.l.b16 %v959
  %v1104 = vunpack.c.l.b16 %v960
  %v1105 = vunpack.c.l.b16 %v961
  %v1106 = vunpack.c.l.b16 %v962
  %v1107 = vunpack.c.l.b16 %v963
  %v1108 = vunpack.c.l.b16 %v964
  %v1109 = vunpack.c.l.b16 %v965
  %v1110 = vunpack.c.l.b16 %v966
  %v1111 = vunpack.c.l.b16 %v967
  %v1112 = vunpack.c.l.b16 %v968
  %v1113 = vunpack.c.l.b16 %v969
  %v1114 = vunpack.c.l.b16 %v970
  %v1115 = vunpack.c.l.b16 %v971
  %v1116 = vunpack.c.l.b16 %v972
  %v1117 = vunpack.c.l.b16 %v973
  %v1118 = vunpack.c.l.b16 %v974
  %v1119 = vunpack.c.l.b16 %v975
  %v1120 = vunpack.c.l.b16 %v976
  %v1121 = vunpack.c.l.b16 %v977
  %v1122 = vunpack.c.l.b16 %v978
  %v1123 = vunpack.c.l.b16 %v979
  %v1124 = vunpack.c.l.b16 %v980
  %v1125 = vunpack.c.l.b16 %v981
  %v1126 = vunpack.c.l.b16 %v982
  %v1127 = vunpack.c.l.b16 %v983
  %v1128 = vunpack.c.l.b16 %v984
  %v1129 = vunpack.c.l.b16 %v985
  %v1130 = vunpack.c.l.b16 %v986
  %v1131 = vpack.c.b16 %v1060, %v1059
  %v1132 = vpack.c.b16 %v1062, %v1061
  %v1133 = vpack.c.b16 %v1064, %v1063
  %v1134 = vpack.c.b16 %v1066, %v1065
  %v1135 = vpack.c.b16 %v1068, %v1067
  %v1136 = vpack.c.b16 %v1070, %v1069
  %v1137 = vpack.c.b16 %v1072, %v1071
  %v1138 = vpack.c.b16 %v1074, %v1073
  %v1139 = vpack.c.b16 %v1076, %v1075
  %v1140 = vpack.c.b16 %v1078, %v1077
  %v1141 = vpack.c.b16 %v1080, %v1079
  %v1142 = vpack.c.b16 %v1082, %v1081
  %v1143 = vpack.c.b16 %v1084, %v1083
  %v1144 = vpack.c.b16 %v1086, %v1085
  %v1145 = vpack.c.b16 %v1088, %v1087
  %v1146 = vpack.c.b16 %v1090, %v1089
  %v1147 = vpack.c.b16 %v1092, %v1091
  %v1148 = vpack.c.b16 %v1094, %v1093
  %v1149 = vpack.c.b16 %v1096, %v1095
  %v1150 = vpack.c.b16 %v1098, %v1097
  %v1151 = vpack.c.b16 %v1100, %v1099
  %v1152 = vpack.c.b16 %v1102, %v1101
  %v1153 = vpack.c.b16 %v1104, %v1103
  %v1154 = vpack.c.b16 %v1106, %v1105
  %v1155 = vpack.c.b16 %v1108, %v1107
  %v1156 = vpack.c.b16 %v1110, %v1109
  %v1157 = vpack.c.b16 %v1112, %v1111
  %v1158 = vpack.c.b16 %v1114, %v1113
  %v1159 = vpack.c.b16 %v1116, %v1115
  %v1160 = vpack.c.b16 %v1118, %v1117
  %v1161 = vpack.c.b16 %v1120, %v1119
  %v1162 = vpack.c.b16 %v1122, %v1121
  %v1163 = vpack.c.b16 %v1124, %v1123
  %v1164 = vpack.c.b16 %v1126, %v1125
  %v1165 = vpack.c.b16 %v1128, %v1127
  %v1166 = vpack.c.b16 %v1130, %v1129
  %1203 = vmatprep.subr.bf16.mxu0 0
  %1204 = vmatpush1.bf16.msra.mxu0 %v1131
  %1205 = vmatprep.subr.bf16.mxu0 0
  %1206 = vmatpush1.bf16.msra.mxu0 %v1132
  %1207 = vmatprep.subr.bf16.mxu0 0
  %1208 = vmatpush1.bf16.msra.mxu0 %v1133
  %1209 = vmatprep.subr.bf16.mxu0 0
  %1210 = vmatpush1.bf16.msra.mxu0 %v1134
  %1211 = vmatprep.subr.bf16.mxu0 0
  %1212 = vmatpush1.bf16.msra.mxu0 %v1135
  %1213 = vmatprep.subr.bf16.mxu0 0
  %1214 = vmatpush1.bf16.msra.mxu0 %v1136
  %1215 = vmatprep.subr.bf16.mxu0 0
  %1216 = vmatpush1.bf16.msra.mxu0 %v1137
  %1217 = vmatprep.subr.bf16.mxu0 0
  %1218 = vmatpush1.bf16.msra.mxu0 %v1138
  %1219 = vmatprep.subr.bf16.mxu0 0
  %1220 = vmatpush1.bf16.msra.mxu0 %v1139
  %1221 = vmatprep.subr.bf16.mxu0 0
  %1222 = vmatpush1.bf16.msra.mxu0 %v1140
  %1223 = vmatprep.subr.bf16.mxu0 0
  %1224 = vmatpush1.bf16.msra.mxu0 %v1141
  %1225 = vmatprep.subr.bf16.mxu0 0
  %1226 = vmatpush1.bf16.msra.mxu0 %v1142
  %1227 = vmatprep.subr.bf16.mxu0 0
  %1228 = vmatpush1.bf16.msra.mxu0 %v1143
  %1229 = vmatprep.subr.bf16.mxu0 0
  %1230 = vmatpush1.bf16.msra.mxu0 %v1144
  %1231 = vmatprep.subr.bf16.mxu0 0
  %1232 = vmatpush1.bf16.msra.mxu0 %v1145
  %1233 = vmatprep.subr.bf16.mxu0 0
  %1234 = vmatpush1.bf16.msra.mxu0 %v1146
  %1235 = vmatprep.mubr.bf16.mxu0 %v132
  %1236 = vmatmul.mubr.bf16.gmra.mrb[0].mxu0 %v118
  %v1237 = vpop.f32.mrb[0].mxu0
  %v1238 = vadd.f32 %v93, %v1237
  %v1239 = vpop.f32.mrb[0].mxu0
  %v1240 = vpop.f32.mrb[0].mxu0
  %v1241 = vpop.f32.mrb[0].mxu0
  %1242 = vdwg.mxu0
  %1243 = vmatprep.subr.bf16.mxu0 0
  %1244 = vmatpush1.bf16.msra.mxu0 %v1147
  %1245 = vmatprep.subr.bf16.mxu0 0
  %1246 = vmatpush1.bf16.msra.mxu0 %v1148
  %1247 = vmatprep.subr.bf16.mxu0 0
  %1248 = vmatpush1.bf16.msra.mxu0 %v1149
  %1249 = vmatprep.subr.bf16.mxu0 0
  %1250 = vmatpush1.bf16.msra.mxu0 %v1150
  %1251 = vmatprep.subr.bf16.mxu0 0
  %1252 = vmatpush1.bf16.msra.mxu0 %v1151
  %1253 = vmatprep.subr.bf16.mxu0 0
  %1254 = vmatpush1.bf16.msra.mxu0 %v1152
  %1255 = vmatprep.subr.bf16.mxu0 0
  %1256 = vmatpush1.bf16.msra.mxu0 %v1153
  %1257 = vmatprep.subr.bf16.mxu0 0
  %1258 = vmatpush1.bf16.msra.mxu0 %v1154
  %1259 = vmatprep.subr.bf16.mxu0 0
  %1260 = vmatpush1.bf16.msra.mxu0 %v1155
  %1261 = vmatprep.subr.bf16.mxu0 0
  %1262 = vmatpush1.bf16.msra.mxu0 %v1156
  %1263 = vmatprep.subr.bf16.mxu0 0
  %1264 = vmatpush1.bf16.msra.mxu0 %v1157
  %1265 = vmatprep.subr.bf16.mxu0 0
  %1266 = vmatpush1.bf16.msra.mxu0 %v1158
  %1267 = vmatprep.subr.bf16.mxu0 0
  %1268 = vmatpush1.bf16.msra.mxu0 %v1159
  %1269 = vmatprep.subr.bf16.mxu0 0
  %1270 = vmatpush1.bf16.msra.mxu0 %v1160
  %1271 = vmatprep.subr.bf16.mxu0 0
  %1272 = vmatpush1.bf16.msra.mxu0 %v1161
  %1273 = vmatprep.subr.bf16.mxu0 0
  %1274 = vmatpush1.bf16.msra.mxu0 %v1162
  %1275 = vmatprep.mubr.bf16.mxu0 %v134
  %1276 = vmatmul.mubr.bf16.gmra.mrb[0].mxu0 %v133
  %v1277 = vpop.f32.mrb[0].mxu0
  %v1278 = vadd.f32 %v1238, %v1277
  %v1279 = vpop.f32.mrb[0].mxu0
  %v1280 = vpop.f32.mrb[0].mxu0
  %v1281 = vpop.f32.mrb[0].mxu0
  %1282 = vdwg.mxu0
  %1283 = vmatprep.subr.bf16.mxu0 0
  %1284 = vmatpush1.bf16.msra.mxu0 %v1163
  %1285 = vmatprep.subr.bf16.mxu0 0
  %1286 = vmatpush1.bf16.msra.mxu0 %v1164
  %1287 = vmatprep.subr.bf16.mxu0 0
  %1288 = vmatpush1.bf16.msra.mxu0 %v1165
  %1289 = vmatprep.subr.bf16.mxu0 0
  %1290 = vmatpush1.bf16.msra.mxu0 %v1166
  %1291 = vmatprep.subr.bf16.mxu0 0
  %1292 = vmatpush1.bf16.msra.mxu0 0
  %1293 = vmatprep.subr.bf16.mxu0 0
  %1294 = vmatpush1.bf16.msra.mxu0 0
  %1295 = vmatprep.subr.bf16.mxu0 0
  %1296 = vmatpush1.bf16.msra.mxu0 0
  %1297 = vmatprep.subr.bf16.mxu0 0
  %1298 = vmatpush1.bf16.msra.mxu0 0
  %1299 = vmatprep.subr.bf16.mxu0 0
  %1300 = vmatpush1.bf16.msra.mxu0 0
  %1301 = vmatprep.subr.bf16.mxu0 0
  %1302 = vmatpush1.bf16.msra.mxu0 0
  %1303 = vmatprep.subr.bf16.mxu0 0
  %1304 = vmatpush1.bf16.msra.mxu0 0
  %1305 = vmatprep.subr.bf16.mxu0 0
  %1306 = vmatpush1.bf16.msra.mxu0 0
  %1307 = vmatprep.subr.bf16.mxu0 0
  %1308 = vmatpush1.bf16.msra.mxu0 0
  %1309 = vmatprep.subr.bf16.mxu0 0
  %1310 = vmatpush1.bf16.msra.mxu0 0
  %1311 = vmatprep.subr.bf16.mxu0 0
  %1312 = vmatpush1.bf16.msra.mxu0 0
  %1313 = vmatprep.subr.bf16.mxu0 0
  %1314 = vmatpush1.bf16.msra.mxu0 0
  %1315 = vmatprep.mubr.bf16.mxu0 0
  %1316 = vmatmul.mubr.bf16.gmra.mrb[0].mxu0 %v357
  %v1317 = vpop.f32.mrb[0].mxu0
  %v1318 = vadd.f32 %v1278, %v1317
  %v1319 = vpop.f32.mrb[0].mxu0
  %v1320 = vpop.f32.mrb[0].mxu0
  %v1321 = vpop.f32.mrb[0].mxu0
  %1322 = vdwg.mxu0
  %v1323 = vmax.f32 %v1318, 0.0
  %v1324 = vpack.c.bf16 %v1323, %v1323
  %v1327 = vunpack.c.l.s4 1966171168
  %v1328 = vunpack.c.0.s8 %v1327
  %v1329 = vlaneseq
  %v1330 = vshrl.u32 %v1329, 7
  %v1331 = vsub.s32 %v1328, %v1330
  %v1332 = vrot.slane %v1324, %v1331
  %v1334 = vunpack.c.l.s4 1966171168
  %v1335 = vunpack.c.0.s8 %v1334
  %v1336 = vlaneseq
  %v1337 = vshrl.u32 %v1336, 7
  %v1338 = vsub.s32 %v1335, %v1337
  %v1339 = vrot.slane %v1332, %v1338
  %1340 = vrot.lane.b32.xlu0 %v1339, 64
  %v1341 = vpop.permute.xlu0 %1340
  %vm1343 = vcmask 778752
  %1344 = vst.msk [vmem:[%s3] sm:$0x1] %vm1343, %v1341
  %s1345 = scalar_lea.vmem %s1, 864
  %v1346 = vld [vmem:[%s1345] sm:$0xf]
  %v1347 = vld [vmem:[%s1345 + $0x4] sm:$0xf]
  %v1348 = vld [vmem:[%s1345 + $0x8] sm:$0xf]
  %v1349 = vld [vmem:[%s1345 + $0xc] sm:$0xf]
  %v1350 = vld [vmem:[%s1345 + $0x10] sm:$0xf]
  %v1351 = vld [vmem:[%s1345 + $0x14] sm:$0xf]
  %v1352 = vld [vmem:[%s1345 + $0x18] sm:$0xf]
  %v1353 = vld [vmem:[%s1345 + $0x1c] sm:$0xf]
  %v1354 = vld [vmem:[%s1345 + $0x20] sm:$0xf]
  %v1355 = vld [vmem:[%s1345 + $0x24] sm:$0xf]
  %v1356 = vld [vmem:[%s1345 + $0x28] sm:$0xf]
  %v1357 = vld [vmem:[%s1345 + $0x2c] sm:$0xf]
  %v1358 = vld [vmem:[%s1345 + $0x30] sm:$0xf]
  %v1359 = vld [vmem:[%s1345 + $0x34] sm:$0xf]
  %v1360 = vld [vmem:[%s1345 + $0x38] sm:$0xf]
  %v1361 = vld [vmem:[%s1345 + $0x3c] sm:$0xf]
  %v1362 = vld [vmem:[%s1345 + $0x40] sm:$0xf]
  %v1363 = vld [vmem:[%s1345 + $0x44] sm:$0xf]
  %v1364 = vld [vmem:[%s1345 + $0x48] sm:$0xf]
  %v1365 = vld [vmem:[%s1345 + $0x4c] sm:$0xf]
  %v1366 = vld [vmem:[%s1345 + $0x50] sm:$0xf]
  %v1367 = vld [vmem:[%s1345 + $0x54] sm:$0xf]
  %v1368 = vld [vmem:[%s1345 + $0x58] sm:$0xf]
  %v1369 = vld [vmem:[%s1345 + $0x5c] sm:$0xf]
  %v1370 = vld [vmem:[%s1345 + $0x60] sm:$0xf]
  %v1371 = vld [vmem:[%s1345 + $0x64] sm:$0xf]
  %v1372 = vld [vmem:[%s1345 + $0x68] sm:$0xf]
  %v1373 = vld [vmem:[%s1345 + $0x6c] sm:$0xf]
  %v1374 = vld [vmem:[%s1345 + $0x70] sm:$0xf]
  %v1375 = vld [vmem:[%s1345 + $0x74] sm:$0xf]
  %v1376 = vld [vmem:[%s1345 + $0x78] sm:$0xf]
  %v1377 = vld [vmem:[%s1345 + $0x7c] sm:$0xf]
  %v1378 = vld [vmem:[%s1345 + $0x80] sm:$0xf]
  %v1379 = vld [vmem:[%s1345 + $0x84] sm:$0xf]
  %v1380 = vld [vmem:[%s1345 + $0x88] sm:$0xf]
  %v1381 = vld [vmem:[%s1345 + $0x8c] sm:$0xf]
  %v1382 = vld [vmem:[%s1345 + $0x90] sm:$0xf]
  %v1383 = vld [vmem:[%s1345 + $0x94] sm:$0xf]
  %v1384 = vld [vmem:[%s1345 + $0x98] sm:$0xf]
  %v1385 = vld [vmem:[%s1345 + $0x9c] sm:$0xf]
  %v1386 = vld [vmem:[%s1345 + $0xa0] sm:$0xf]
  %v1387 = vld [vmem:[%s1345 + $0xa4] sm:$0xf]
  %v1388 = vld [vmem:[%s1345 + $0xa8] sm:$0xf]
  %v1389 = vld [vmem:[%s1345 + $0xac] sm:$0xf]
  %v1390 = vld [vmem:[%s1345 + $0xb0] sm:$0xf]
  %v1391 = vld [vmem:[%s1345 + $0xb4] sm:$0xf]
  %v1392 = vld [vmem:[%s1345 + $0xb8] sm:$0xf]
  %v1393 = vld [vmem:[%s1345 + $0xbc] sm:$0xf]
  %v1394 = vld [vmem:[%s1345 + $0xc0] sm:$0xf]
  %v1395 = vld [vmem:[%s1345 + $0xc4] sm:$0xf]
  %v1396 = vld [vmem:[%s1345 + $0xc8] sm:$0xf]
  %v1397 = vld [vmem:[%s1345 + $0xcc] sm:$0xf]
  %v1398 = vld [vmem:[%s1345 + $0xd0] sm:$0xf]
  %v1399 = vld [vmem:[%s1345 + $0xd4] sm:$0xf]
  %v1400 = vld [vmem:[%s1345 + $0xd8] sm:$0xf]
  %v1401 = vld [vmem:[%s1345 + $0xdc] sm:$0xf]
  %v1402 = vld [vmem:[%s1345 + $0xe0] sm:$0xf]
  %v1403 = vld [vmem:[%s1345 + $0xe4] sm:$0xf]
  %v1404 = vld [vmem:[%s1345 + $0xe8] sm:$0xf]
  %v1405 = vld [vmem:[%s1345 + $0xec] sm:$0xf]
  %v1406 = vld [vmem:[%s1345 + $0xf0] sm:$0xf]
  %v1407 = vld [vmem:[%s1345 + $0xf4] sm:$0xf]
  %v1408 = vld [vmem:[%s1345 + $0xf8] sm:$0xf]
  %v1409 = vld [vmem:[%s1345 + $0xfc] sm:$0xf]
  %v1410 = vld [vmem:[%s1345 + $0x100] sm:$0xf]
  %v1411 = vld [vmem:[%s1345 + $0x104] sm:$0xf]
  %v1412 = vld [vmem:[%s1345 + $0x108] sm:$0xf]
  %v1413 = vld [vmem:[%s1345 + $0x10c] sm:$0xf]
  %v1414 = vld [vmem:[%s1345 + $0x110] sm:$0xf]
  %v1415 = vld [vmem:[%s1345 + $0x114] sm:$0xf]
  %v1416 = vld [vmem:[%s1345 + $0x118] sm:$0xf]
  %v1417 = vld [vmem:[%s1345 + $0x11c] sm:$0xf]
  %v1490 = vunpack.c.l.b16 %v1346
  %v1491 = vunpack.c.l.b16 %v1347
  %v1492 = vunpack.c.l.b16 %v1348
  %v1493 = vunpack.c.l.b16 %v1349
  %v1494 = vunpack.c.l.b16 %v1350
  %v1495 = vunpack.c.l.b16 %v1351
  %v1496 = vunpack.c.l.b16 %v1352
  %v1497 = vunpack.c.l.b16 %v1353
  %v1498 = vunpack.c.l.b16 %v1354
  %v1499 = vunpack.c.l.b16 %v1355
  %v1500 = vunpack.c.l.b16 %v1356
  %v1501 = vunpack.c.l.b16 %v1357
  %v1502 = vunpack.c.l.b16 %v1358
  %v1503 = vunpack.c.l.b16 %v1359
  %v1504 = vunpack.c.l.b16 %v1360
  %v1505 = vunpack.c.l.b16 %v1361
  %v1506 = vunpack.c.l.b16 %v1362
  %v1507 = vunpack.c.l.b16 %v1363
  %v1508 = vunpack.c.l.b16 %v1364
  %v1509 = vunpack.c.l.b16 %v1365
  %v1510 = vunpack.c.l.b16 %v1366
  %v1511 = vunpack.c.l.b16 %v1367
  %v1512 = vunpack.c.l.b16 %v1368
  %v1513 = vunpack.c.l.b16 %v1369
  %v1514 = vunpack.c.l.b16 %v1370
  %v1515 = vunpack.c.l.b16 %v1371
  %v1516 = vunpack.c.l.b16 %v1372
  %v1517 = vunpack.c.l.b16 %v1373
  %v1518 = vunpack.c.l.b16 %v1374
  %v1519 = vunpack.c.l.b16 %v1375
  %v1520 = vunpack.c.l.b16 %v1376
  %v1521 = vunpack.c.l.b16 %v1377
  %v1522 = vunpack.c.l.b16 %v1378
  %v1523 = vunpack.c.l.b16 %v1379
  %v1524 = vunpack.c.l.b16 %v1380
  %v1525 = vunpack.c.l.b16 %v1381
  %v1526 = vunpack.c.l.b16 %v1382
  %v1527 = vunpack.c.l.b16 %v1383
  %v1528 = vunpack.c.l.b16 %v1384
  %v1529 = vunpack.c.l.b16 %v1385
  %v1530 = vunpack.c.l.b16 %v1386
  %v1531 = vunpack.c.l.b16 %v1387
  %v1532 = vunpack.c.l.b16 %v1388
  %v1533 = vunpack.c.l.b16 %v1389
  %v1534 = vunpack.c.l.b16 %v1390
  %v1535 = vunpack.c.l.b16 %v1391
  %v1536 = vunpack.c.l.b16 %v1392
  %v1537 = vunpack.c.l.b16 %v1393
  %v1538 = vunpack.c.l.b16 %v1394
  %v1539 = vunpack.c.l.b16 %v1395
  %v1540 = vunpack.c.l.b16 %v1396
  %v1541 = vunpack.c.l.b16 %v1397
  %v1542 = vunpack.c.l.b16 %v1398
  %v1543 = vunpack.c.l.b16 %v1399
  %v1544 = vunpack.c.l.b16 %v1400
  %v1545 = vunpack.c.l.b16 %v1401
  %v1546 = vunpack.c.l.b16 %v1402
  %v1547 = vunpack.c.l.b16 %v1403
  %v1548 = vunpack.c.l.b16 %v1404
  %v1549 = vunpack.c.l.b16 %v1405
  %v1550 = vunpack.c.l.b16 %v1406
  %v1551 = vunpack.c.l.b16 %v1407
  %v1552 = vunpack.c.l.b16 %v1408
  %v1553 = vunpack.c.l.b16 %v1409
  %v1554 = vunpack.c.l.b16 %v1410
  %v1555 = vunpack.c.l.b16 %v1411
  %v1556 = vunpack.c.l.b16 %v1412
  %v1557 = vunpack.c.l.b16 %v1413
  %v1558 = vunpack.c.l.b16 %v1414
  %v1559 = vunpack.c.l.b16 %v1415
  %v1560 = vunpack.c.l.b16 %v1416
  %v1561 = vunpack.c.l.b16 %v1417
  %v1562 = vpack.c.b16 %v1491, %v1490
  %v1563 = vpack.c.b16 %v1493, %v1492
  %v1564 = vpack.c.b16 %v1495, %v1494
  %v1565 = vpack.c.b16 %v1497, %v1496
  %v1566 = vpack.c.b16 %v1499, %v1498
  %v1567 = vpack.c.b16 %v1501, %v1500
  %v1568 = vpack.c.b16 %v1503, %v1502
  %v1569 = vpack.c.b16 %v1505, %v1504
  %v1570 = vpack.c.b16 %v1507, %v1506
  %v1571 = vpack.c.b16 %v1509, %v1508
  %v1572 = vpack.c.b16 %v1511, %v1510
  %v1573 = vpack.c.b16 %v1513, %v1512
  %v1574 = vpack.c.b16 %v1515, %v1514
  %v1575 = vpack.c.b16 %v1517, %v1516
  %v1576 = vpack.c.b16 %v1519, %v1518
  %v1577 = vpack.c.b16 %v1521, %v1520
  %v1578 = vpack.c.b16 %v1523, %v1522
  %v1579 = vpack.c.b16 %v1525, %v1524
  %v1580 = vpack.c.b16 %v1527, %v1526
  %v1581 = vpack.c.b16 %v1529, %v1528
  %v1582 = vpack.c.b16 %v1531, %v1530
  %v1583 = vpack.c.b16 %v1533, %v1532
  %v1584 = vpack.c.b16 %v1535, %v1534
  %v1585 = vpack.c.b16 %v1537, %v1536
  %v1586 = vpack.c.b16 %v1539, %v1538
  %v1587 = vpack.c.b16 %v1541, %v1540
  %v1588 = vpack.c.b16 %v1543, %v1542
  %v1589 = vpack.c.b16 %v1545, %v1544
  %v1590 = vpack.c.b16 %v1547, %v1546
  %v1591 = vpack.c.b16 %v1549, %v1548
  %v1592 = vpack.c.b16 %v1551, %v1550
  %v1593 = vpack.c.b16 %v1553, %v1552
  %v1594 = vpack.c.b16 %v1555, %v1554
  %v1595 = vpack.c.b16 %v1557, %v1556
  %v1596 = vpack.c.b16 %v1559, %v1558
  %v1597 = vpack.c.b16 %v1561, %v1560
  %1634 = vmatprep.subr.bf16.mxu0 0
  %1635 = vmatpush1.bf16.msra.mxu0 %v1562
  %1636 = vmatprep.subr.bf16.mxu0 0
  %1637 = vmatpush1.bf16.msra.mxu0 %v1563
  %1638 = vmatprep.subr.bf16.mxu0 0
  %1639 = vmatpush1.bf16.msra.mxu0 %v1564
  %1640 = vmatprep.subr.bf16.mxu0 0
  %1641 = vmatpush1.bf16.msra.mxu0 %v1565
  %1642 = vmatprep.subr.bf16.mxu0 0
  %1643 = vmatpush1.bf16.msra.mxu0 %v1566
  %1644 = vmatprep.subr.bf16.mxu0 0
  %1645 = vmatpush1.bf16.msra.mxu0 %v1567
  %1646 = vmatprep.subr.bf16.mxu0 0
  %1647 = vmatpush1.bf16.msra.mxu0 %v1568
  %1648 = vmatprep.subr.bf16.mxu0 0
  %1649 = vmatpush1.bf16.msra.mxu0 %v1569
  %1650 = vmatprep.subr.bf16.mxu0 0
  %1651 = vmatpush1.bf16.msra.mxu0 %v1570
  %1652 = vmatprep.subr.bf16.mxu0 0
  %1653 = vmatpush1.bf16.msra.mxu0 %v1571
  %1654 = vmatprep.subr.bf16.mxu0 0
  %1655 = vmatpush1.bf16.msra.mxu0 %v1572
  %1656 = vmatprep.subr.bf16.mxu0 0
  %1657 = vmatpush1.bf16.msra.mxu0 %v1573
  %1658 = vmatprep.subr.bf16.mxu0 0
  %1659 = vmatpush1.bf16.msra.mxu0 %v1574
  %1660 = vmatprep.subr.bf16.mxu0 0
  %1661 = vmatpush1.bf16.msra.mxu0 %v1575
  %1662 = vmatprep.subr.bf16.mxu0 0
  %1663 = vmatpush1.bf16.msra.mxu0 %v1576
  %1664 = vmatprep.subr.bf16.mxu0 0
  %1665 = vmatpush1.bf16.msra.mxu0 %v1577
  %1666 = vmatprep.mubr.bf16.mxu0 %v132
  %1667 = vmatmul.mubr.bf16.gmra.mrb[0].mxu0 %v118
  %v1668 = vpop.f32.mrb[0].mxu0
  %v1669 = vadd.f32 %v93, %v1668
  %v1670 = vpop.f32.mrb[0].mxu0
  %v1671 = vpop.f32.mrb[0].mxu0
  %v1672 = vpop.f32.mrb[0].mxu0
  %1673 = vdwg.mxu0
  %1674 = vmatprep.subr.bf16.mxu0 0
  %1675 = vmatpush1.bf16.msra.mxu0 %v1578
  %1676 = vmatprep.subr.bf16.mxu0 0
  %1677 = vmatpush1.bf16.msra.mxu0 %v1579
  %1678 = vmatprep.subr.bf16.mxu0 0
  %1679 = vmatpush1.bf16.msra.mxu0 %v1580
  %1680 = vmatprep.subr.bf16.mxu0 0
  %1681 = vmatpush1.bf16.msra.mxu0 %v1581
  %1682 = vmatprep.subr.bf16.mxu0 0
  %1683 = vmatpush1.bf16.msra.mxu0 %v1582
  %1684 = vmatprep.subr.bf16.mxu0 0
  %1685 = vmatpush1.bf16.msra.mxu0 %v1583
  %1686 = vmatprep.subr.bf16.mxu0 0
  %1687 = vmatpush1.bf16.msra.mxu0 %v1584
  %1688 = vmatprep.subr.bf16.mxu0 0
  %1689 = vmatpush1.bf16.msra.mxu0 %v1585
  %1690 = vmatprep.subr.bf16.mxu0 0
  %1691 = vmatpush1.bf16.msra.mxu0 %v1586
  %1692 = vmatprep.subr.bf16.mxu0 0
  %1693 = vmatpush1.bf16.msra.mxu0 %v1587
  %1694 = vmatprep.subr.bf16.mxu0 0
  %1695 = vmatpush1.bf16.msra.mxu0 %v1588
  %1696 = vmatprep.subr.bf16.mxu0 0
  %1697 = vmatpush1.bf16.msra.mxu0 %v1589
  %1698 = vmatprep.subr.bf16.mxu0 0
  %1699 = vmatpush1.bf16.msra.mxu0 %v1590
  %1700 = vmatprep.subr.bf16.mxu0 0
  %1701 = vmatpush1.bf16.msra.mxu0 %v1591
  %1702 = vmatprep.subr.bf16.mxu0 0
  %1703 = vmatpush1.bf16.msra.mxu0 %v1592
  %1704 = vmatprep.subr.bf16.mxu0 0
  %1705 = vmatpush1.bf16.msra.mxu0 %v1593
  %1706 = vmatprep.mubr.bf16.mxu0 %v134
  %1707 = vmatmul.mubr.bf16.gmra.mrb[0].mxu0 %v133
  %v1708 = vpop.f32.mrb[0].mxu0
  %v1709 = vadd.f32 %v1669, %v1708
  %v1710 = vpop.f32.mrb[0].mxu0
  %v1711 = vpop.f32.mrb[0].mxu0
  %v1712 = vpop.f32.mrb[0].mxu0
  %1713 = vdwg.mxu0
  %1714 = vmatprep.subr.bf16.mxu0 0
  %1715 = vmatpush1.bf16.msra.mxu0 %v1594
  %1716 = vmatprep.subr.bf16.mxu0 0
  %1717 = vmatpush1.bf16.msra.mxu0 %v1595
  %1718 = vmatprep.subr.bf16.mxu0 0
  %1719 = vmatpush1.bf16.msra.mxu0 %v1596
  %1720 = vmatprep.subr.bf16.mxu0 0
  %1721 = vmatpush1.bf16.msra.mxu0 %v1597
  %1722 = vmatprep.subr.bf16.mxu0 0
  %1723 = vmatpush1.bf16.msra.mxu0 0
  %1724 = vmatprep.subr.bf16.mxu0 0
  %1725 = vmatpush1.bf16.msra.mxu0 0
  %1726 = vmatprep.subr.bf16.mxu0 0
  %1727 = vmatpush1.bf16.msra.mxu0 0
  %1728 = vmatprep.subr.bf16.mxu0 0
  %1729 = vmatpush1.bf16.msra.mxu0 0
  %1730 = vmatprep.subr.bf16.mxu0 0
  %1731 = vmatpush1.bf16.msra.mxu0 0
  %1732 = vmatprep.subr.bf16.mxu0 0
  %1733 = vmatpush1.bf16.msra.mxu0 0
  %1734 = vmatprep.subr.bf16.mxu0 0
  %1735 = vmatpush1.bf16.msra.mxu0 0
  %1736 = vmatprep.subr.bf16.mxu0 0
  %1737 = vmatpush1.bf16.msra.mxu0 0
  %1738 = vmatprep.subr.bf16.mxu0 0
  %1739 = vmatpush1.bf16.msra.mxu0 0
  %1740 = vmatprep.subr.bf16.mxu0 0
  %1741 = vmatpush1.bf16.msra.mxu0 0
  %1742 = vmatprep.subr.bf16.mxu0 0
  %1743 = vmatpush1.bf16.msra.mxu0 0
  %1744 = vmatprep.subr.bf16.mxu0 0
  %1745 = vmatpush1.bf16.msra.mxu0 0
  %1746 = vmatprep.mubr.bf16.mxu0 0
  %1747 = vmatmul.mubr.bf16.gmra.mrb[0].mxu0 %v357
  %v1748 = vpop.f32.mrb[0].mxu0
  %v1749 = vadd.f32 %v1709, %v1748
  %v1750 = vpop.f32.mrb[0].mxu0
  %v1751 = vpop.f32.mrb[0].mxu0
  %v1752 = vpop.f32.mrb[0].mxu0
  %1753 = vdwg.mxu0
  %v1754 = vmax.f32 %v1749, 0.0
  %v1755 = vpack.c.bf16 %v1754, %v1754
  %v1758 = vunpack.c.l.s4 1966171168
  %v1759 = vunpack.c.0.s8 %v1758
  %v1760 = vlaneseq
  %v1761 = vshrl.u32 %v1760, 7
  %v1762 = vsub.s32 %v1759, %v1761
  %v1763 = vrot.slane %v1755, %v1762
  %v1765 = vunpack.c.l.s4 1966171168
  %v1766 = vunpack.c.0.s8 %v1765
  %v1767 = vlaneseq
  %v1768 = vshrl.u32 %v1767, 7
  %v1769 = vsub.s32 %v1766, %v1768
  %v1770 = vrot.slane %v1763, %v1769
  %1771 = vrot.lane.b32.xlu0 %v1770, 96
  %v1772 = vpop.permute.xlu0 %1771
  %vm1774 = vcmask 1041152
  %1775 = vst.msk [vmem:[%s3] sm:$0x1] %vm1774, %v1772
  // Predicated region
  $region14: #{_lambda_.12} parent=0 // pred_check
    _
  $region15: #{_lambda_.12} parent=0 // pred_check_branch
    %1777 = sbr.rel (0) target = $region17
  $region16: #{_lambda_.12} parent=0 // pred_region
    _
  $region17: #{_lambda_.12} parent=0 // pred_fallthru
    _
  // Predicated region
  $region18: #{_lambda_.12} parent=0 // pred_check
    _
  $region19: #{_lambda_.12} parent=0 // pred_check_branch
    %1779 = sbr.rel (0) target = $region21
  $region20: #{_lambda_.12} parent=0 // pred_region
    _
  $region21: #{_lambda_.12} parent=0 // pred_fallthru
    _

// kernel: _lambda_.14
$region0: #{_lambda_.14}
  #allocation0 [shape = 'u32[]', space=smem, size = 0x4, offset = 0x4, fixed_abs, tag = 'smem constant byte address 0x4 - core index']
  #allocation1 [shape = 'u32[144,128]{1,0:T(1,128)}', space=vmem, size = 0x12000, scoped, tag = 'internal scratch']
  %s0 = inlined_call_operand.vmem [shape: bf16[32,144], index: 0, kind: input, shape index: {}]
  %s1 = inlined_call_operand.vmem [shape: bf16[4,144,8], index: 1, kind: input, shape index: {}]
  %s2 = inlined_call_operand.vmem [shape: f32[1,8], index: 2, kind: input, shape index: {}]
  %s3 = inlined_call_operand.vmem [shape: bf16[32,32], index: 3, kind: output, shape index: {}]
  %s4 = sld [smem:[#allocation0]]
  $region22: #{_lambda_.14} parent=0
    _
  %s6 = ssub.s32 1, %s4
  %s7 = scalar_select 0, %s6, %s4
  // Predicated region
  $region2: #{_lambda_.14} parent=0 // pred_check
    _
  $region3: #{_lambda_.14} parent=0 // pred_check_branch
    %9 = sbr.rel (0) target = $region5
  $region4: #{_lambda_.14} parent=0 // pred_region
    _
  $region5: #{_lambda_.14} parent=0 // pred_fallthru
    _
  // Predicated region
  $region6: #{_lambda_.14} parent=0 // pred_check
    _
  $region7: #{_lambda_.14} parent=0 // pred_check_branch
    %11 = sbr.rel (0) target = $region9
  $region8: #{_lambda_.14} parent=0 // pred_region
    _
  $region9: #{_lambda_.14} parent=0 // pred_fallthru
    _
  // Predicated region
  $region10: #{_lambda_.14} parent=0 // pred_check
    _
  $region11: #{_lambda_.14} parent=0 // pred_check_branch
    %13 = sbr.rel (0) target = $region13
  $region12: #{_lambda_.14} parent=0 // pred_region
    _
  $region13: #{_lambda_.14} parent=0 // pred_fallthru
    _
  %v15 = vld [vmem:[%s0] sm:$0xff]
  %v16 = vld [vmem:[%s0 + $0x8] sm:$0xff]
  %v17 = vld [vmem:[%s0 + $0x10] sm:$0xff]
  %v18 = vld [vmem:[%s0 + $0x18] sm:$0xff]
  %v19 = vld [vmem:[%s2] sm:$0x1]
  %v20 = vld [vmem:[%s1] sm:$0xf]
  %v21 = vld [vmem:[%s1 + $0x4] sm:$0xf]
  %v22 = vld [vmem:[%s1 + $0x8] sm:$0xf]
  %v23 = vld [vmem:[%s1 + $0xc] sm:$0xf]
  %v24 = vld [vmem:[%s1 + $0x10] sm:$0xf]
  %v25 = vld [vmem:[%s1 + $0x14] sm:$0xf]
  %v26 = vld [vmem:[%s1 + $0x18] sm:$0xf]
  %v27 = vld [vmem:[%s1 + $0x1c] sm:$0xf]
  %v28 = vld [vmem:[%s1 + $0x20] sm:$0xf]
  %v29 = vld [vmem:[%s1 + $0x24] sm:$0xf]
  %v30 = vld [vmem:[%s1 + $0x28] sm:$0xf]
  %v31 = vld [vmem:[%s1 + $0x2c] sm:$0xf]
  %v32 = vld [vmem:[%s1 + $0x30] sm:$0xf]
  %v33 = vld [vmem:[%s1 + $0x34] sm:$0xf]
  %v34 = vld [vmem:[%s1 + $0x38] sm:$0xf]
  %v35 = vld [vmem:[%s1 + $0x3c] sm:$0xf]
  %v36 = vld [vmem:[%s1 + $0x40] sm:$0xf]
  %v37 = vld [vmem:[%s1 + $0x44] sm:$0xf]
  %v39 = vlaneseq
  %v40 = vshrl.u32 %v39, 7
  %v41 = vsub.s32 0, %v40
  %v42 = vrot.slane %v19, %v41
  %v48 = vunpack.c.l.b16 %v15
  %v49 = vunpack.c.h.b16 %v15
  %v50 = vunpack.c.l.b16 %v16
  %v51 = vunpack.c.h.b16 %v16
  %v52 = vunpack.c.l.b16 %v17
  %v53 = vunpack.c.h.b16 %v17
  %v54 = vunpack.c.l.b16 %v18
  %v55 = vunpack.c.h.b16 %v18
  %v56 = vpack.c.b16 %v50, %v48
  %v57 = vpack.c.b16 %v51, %v49
  %v58 = vpack.c.b16 %v54, %v52
  %v59 = vpack.c.b16 %v55, %v53
  %v80 = vunpack.c.l.b16 %v20
  %v81 = vunpack.c.l.b16 %v21
  %v82 = vunpack.c.l.b16 %v22
  %v83 = vunpack.c.l.b16 %v23
  %v84 = vunpack.c.l.b16 %v24
  %v85 = vunpack.c.l.b16 %v25
  %v86 = vunpack.c.l.b16 %v26
  %v87 = vunpack.c.l.b16 %v27
  %v88 = vunpack.c.l.b16 %v28
  %v89 = vunpack.c.l.b16 %v29
  %v90 = vunpack.c.l.b16 %v30
  %v91 = vunpack.c.l.b16 %v31
  %v92 = vunpack.c.l.b16 %v32
  %v93 = vunpack.c.l.b16 %v33
  %v94 = vunpack.c.l.b16 %v34
  %v95 = vunpack.c.l.b16 %v35
  %v96 = vunpack.c.l.b16 %v36
  %v97 = vunpack.c.l.b16 %v37
  %v98 = vpack.c.b16 %v81, %v80
  %v99 = vpack.c.b16 %v83, %v82
  %v100 = vpack.c.b16 %v85, %v84
  %v101 = vpack.c.b16 %v87, %v86
  %v102 = vpack.c.b16 %v89, %v88
  %v103 = vpack.c.b16 %v91, %v90
  %v104 = vpack.c.b16 %v93, %v92
  %v105 = vpack.c.b16 %v95, %v94
  %v106 = vpack.c.b16 %v97, %v96
  %vm116 = vcmask 130048
  %v118 = vsel %vm116, %v57, 0
  %v121 = vsel %vm116, %v59, 0
  %123 = vmatprep.subr.bf16.mxu0 0
  %124 = vmatpush1.bf16.msra.mxu0 %v98
  %125 = vmatprep.subr.bf16.mxu0 0
  %126 = vmatpush1.bf16.msra.mxu0 %v99
  %127 = vmatprep.subr.bf16.mxu0 0
  %128 = vmatpush1.bf16.msra.mxu0 %v100
  %129 = vmatprep.subr.bf16.mxu0 0
  %130 = vmatpush1.bf16.msra.mxu0 %v101
  %131 = vmatprep.subr.bf16.mxu0 0
  %132 = vmatpush1.bf16.msra.mxu0 %v102
  %133 = vmatprep.subr.bf16.mxu0 0
  %134 = vmatpush1.bf16.msra.mxu0 %v103
  %135 = vmatprep.subr.bf16.mxu0 0
  %136 = vmatpush1.bf16.msra.mxu0 %v104
  %137 = vmatprep.subr.bf16.mxu0 0
  %138 = vmatpush1.bf16.msra.mxu0 %v105
  %139 = vmatprep.subr.bf16.mxu0 0
  %140 = vmatpush1.bf16.msra.mxu0 %v106
  %141 = vmatprep.subr.bf16.mxu0 0
  %142 = vmatpush1.bf16.msra.mxu0 0
  %143 = vmatprep.subr.bf16.mxu0 0
  %144 = vmatpush1.bf16.msra.mxu0 0
  %145 = vmatprep.subr.bf16.mxu0 0
  %146 = vmatpush1.bf16.msra.mxu0 0
  %147 = vmatprep.subr.bf16.mxu0 0
  %148 = vmatpush1.bf16.msra.mxu0 0
  %149 = vmatprep.subr.bf16.mxu0 0
  %150 = vmatpush1.bf16.msra.mxu0 0
  %151 = vmatprep.subr.bf16.mxu0 0
  %152 = vmatpush1.bf16.msra.mxu0 0
  %153 = vmatprep.subr.bf16.mxu0 0
  %154 = vmatpush1.bf16.msra.mxu0 0
  %155 = vmatprep.mubr.bf16.mxu0 %v118
  %156 = vmatmul.mubr.bf16.gmra.mrb[0].mxu0 %v56
  %v157 = vpop.f32.mrb[0].mxu0
  %v158 = vadd.f32 %v42, %v157
  %v159 = vpop.f32.mrb[0].mxu0
  %v160 = vpop.f32.mrb[0].mxu0
  %v161 = vadd.f32 %v42, %v160
  %v162 = vpop.f32.mrb[0].mxu0
  %163 = vmatprep.mubr.bf16.mxu0 %v121
  %164 = vmatmul.mubr.bf16.gmra.mrb[0].mxu0 %v58
  %v165 = vpop.f32.mrb[0].mxu0
  %v166 = vadd.f32 %v42, %v165
  %v167 = vpop.f32.mrb[0].mxu0
  %v168 = vpop.f32.mrb[0].mxu0
  %v169 = vadd.f32 %v42, %v168
  %v170 = vpop.f32.mrb[0].mxu0
  %171 = vdwg.mxu0
  %v172 = vmax.f32 %v158, 0.0
  %v173 = vmax.f32 %v161, 0.0
  %v174 = vmax.f32 %v166, 0.0
  %v175 = vmax.f32 %v169, 0.0
  %v176 = vpack.c.bf16 %v173, %v172
  %v177 = vpack.c.bf16 %v175, %v174
  %v180 = vunpack.c.l.b16 %v176
  %v181 = vunpack.c.h.b16 %v176
  %v182 = vunpack.c.l.b16 %v177
  %v183 = vunpack.c.h.b16 %v177
  %v184 = vpack.c.b16 %v180, %v180
  %v185 = vpack.c.b16 %v181, %v181
  %v186 = vpack.c.b16 %v182, %v182
  %v187 = vpack.c.b16 %v183, %v183
  %vm192 = vcmask 60416
  %193 = vst.msk [vmem:[%s3] sm:$0xf] %vm192, %v184
  %194 = vst.msk [vmem:[%s3 + $0x4] sm:$0xf] %vm192, %v185
  %195 = vst.msk [vmem:[%s3 + $0x8] sm:$0xf] %vm192, %v186
  %196 = vst.msk [vmem:[%s3 + $0xc] sm:$0xf] %vm192, %v187
  %s197 = scalar_lea.vmem %s1, 72
  %v198 = vld [vmem:[%s197] sm:$0xf]
  %v199 = vld [vmem:[%s197 + $0x4] sm:$0xf]
  %v200 = vld [vmem:[%s197 + $0x8] sm:$0xf]
  %v201 = vld [vmem:[%s197 + $0xc] sm:$0xf]
  %v202 = vld [vmem:[%s197 + $0x10] sm:$0xf]
  %v203 = vld [vmem:[%s197 + $0x14] sm:$0xf]
  %v204 = vld [vmem:[%s197 + $0x18] sm:$0xf]
  %v205 = vld [vmem:[%s197 + $0x1c] sm:$0xf]
  %v206 = vld [vmem:[%s197 + $0x20] sm:$0xf]
  %v207 = vld [vmem:[%s197 + $0x24] sm:$0xf]
  %v208 = vld [vmem:[%s197 + $0x28] sm:$0xf]
  %v209 = vld [vmem:[%s197 + $0x2c] sm:$0xf]
  %v210 = vld [vmem:[%s197 + $0x30] sm:$0xf]
  %v211 = vld [vmem:[%s197 + $0x34] sm:$0xf]
  %v212 = vld [vmem:[%s197 + $0x38] sm:$0xf]
  %v213 = vld [vmem:[%s197 + $0x3c] sm:$0xf]
  %v214 = vld [vmem:[%s197 + $0x40] sm:$0xf]
  %v215 = vld [vmem:[%s197 + $0x44] sm:$0xf]
  %v234 = vunpack.c.l.b16 %v198
  %v235 = vunpack.c.l.b16 %v199
  %v236 = vunpack.c.l.b16 %v200
  %v237 = vunpack.c.l.b16 %v201
  %v238 = vunpack.c.l.b16 %v202
  %v239 = vunpack.c.l.b16 %v203
  %v240 = vunpack.c.l.b16 %v204
  %v241 = vunpack.c.l.b16 %v205
  %v242 = vunpack.c.l.b16 %v206
  %v243 = vunpack.c.l.b16 %v207
  %v244 = vunpack.c.l.b16 %v208
  %v245 = vunpack.c.l.b16 %v209
  %v246 = vunpack.c.l.b16 %v210
  %v247 = vunpack.c.l.b16 %v211
  %v248 = vunpack.c.l.b16 %v212
  %v249 = vunpack.c.l.b16 %v213
  %v250 = vunpack.c.l.b16 %v214
  %v251 = vunpack.c.l.b16 %v215
  %v252 = vpack.c.b16 %v235, %v234
  %v253 = vpack.c.b16 %v237, %v236
  %v254 = vpack.c.b16 %v239, %v238
  %v255 = vpack.c.b16 %v241, %v240
  %v256 = vpack.c.b16 %v243, %v242
  %v257 = vpack.c.b16 %v245, %v244
  %v258 = vpack.c.b16 %v247, %v246
  %v259 = vpack.c.b16 %v249, %v248
  %v260 = vpack.c.b16 %v251, %v250
  %270 = vmatprep.subr.bf16.mxu0 0
  %271 = vmatpush1.bf16.msra.mxu0 %v252
  %272 = vmatprep.subr.bf16.mxu0 0
  %273 = vmatpush1.bf16.msra.mxu0 %v253
  %274 = vmatprep.subr.bf16.mxu0 0
  %275 = vmatpush1.bf16.msra.mxu0 %v254
  %276 = vmatprep.subr.bf16.mxu0 0
  %277 = vmatpush1.bf16.msra.mxu0 %v255
  %278 = vmatprep.subr.bf16.mxu0 0
  %279 = vmatpush1.bf16.msra.mxu0 %v256
  %280 = vmatprep.subr.bf16.mxu0 0
  %281 = vmatpush1.bf16.msra.mxu0 %v257
  %282 = vmatprep.subr.bf16.mxu0 0
  %283 = vmatpush1.bf16.msra.mxu0 %v258
  %284 = vmatprep.subr.bf16.mxu0 0
  %285 = vmatpush1.bf16.msra.mxu0 %v259
  %286 = vmatprep.subr.bf16.mxu0 0
  %287 = vmatpush1.bf16.msra.mxu0 %v260
  %288 = vmatprep.subr.bf16.mxu0 0
  %289 = vmatpush1.bf16.msra.mxu0 0
  %290 = vmatprep.subr.bf16.mxu0 0
  %291 = vmatpush1.bf16.msra.mxu0 0
  %292 = vmatprep.subr.bf16.mxu0 0
  %293 = vmatpush1.bf16.msra.mxu0 0
  %294 = vmatprep.subr.bf16.mxu0 0
  %295 = vmatpush1.bf16.msra.mxu0 0
  %296 = vmatprep.subr.bf16.mxu0 0
  %297 = vmatpush1.bf16.msra.mxu0 0
  %298 = vmatprep.subr.bf16.mxu0 0
  %299 = vmatpush1.bf16.msra.mxu0 0
  %300 = vmatprep.subr.bf16.mxu0 0
  %301 = vmatpush1.bf16.msra.mxu0 0
  %302 = vmatprep.mubr.bf16.mxu0 %v118
  %303 = vmatmul.mubr.bf16.gmra.mrb[0].mxu0 %v56
  %v304 = vpop.f32.mrb[0].mxu0
  %v305 = vadd.f32 %v42, %v304
  %v306 = vpop.f32.mrb[0].mxu0
  %v307 = vpop.f32.mrb[0].mxu0
  %v308 = vadd.f32 %v42, %v307
  %v309 = vpop.f32.mrb[0].mxu0
  %310 = vmatprep.mubr.bf16.mxu0 %v121
  %311 = vmatmul.mubr.bf16.gmra.mrb[0].mxu0 %v58
  %v312 = vpop.f32.mrb[0].mxu0
  %v313 = vadd.f32 %v42, %v312
  %v314 = vpop.f32.mrb[0].mxu0
  %v315 = vpop.f32.mrb[0].mxu0
  %v316 = vadd.f32 %v42, %v315
  %v317 = vpop.f32.mrb[0].mxu0
  %318 = vdwg.mxu0
  %v319 = vmax.f32 %v305, 0.0
  %v320 = vmax.f32 %v308, 0.0
  %v321 = vmax.f32 %v313, 0.0
  %v322 = vmax.f32 %v316, 0.0
  %v323 = vpack.c.bf16 %v320, %v319
  %v324 = vpack.c.bf16 %v322, %v321
  %v327 = vunpack.c.l.b16 %v323
  %v328 = vunpack.c.h.b16 %v323
  %v329 = vunpack.c.l.b16 %v324
  %v330 = vunpack.c.h.b16 %v324
  %v331 = vpack.c.b16 %v327, %v327
  %v332 = vpack.c.b16 %v328, %v328
  %v333 = vpack.c.b16 %v329, %v329
  %v334 = vpack.c.b16 %v330, %v330
  %335 = vrot.lane.b32.xlu0 %v331, 8
  %v336 = vpop.permute.xlu0 %335
  %337 = vrot.lane.b32.xlu0 %v332, 8
  %v338 = vpop.permute.xlu0 %337
  %339 = vrot.lane.b32.xlu0 %v333, 8
  %v340 = vpop.permute.xlu0 %339
  %341 = vrot.lane.b32.xlu0 %v334, 8
  %v342 = vpop.permute.xlu0 %341
  %vm347 = vcmask 126016
  %348 = vst.msk [vmem:[%s3] sm:$0xf] %vm347, %v336
  %349 = vst.msk [vmem:[%s3 + $0x4] sm:$0xf] %vm347, %v338
  %350 = vst.msk [vmem:[%s3 + $0x8] sm:$0xf] %vm347, %v340
  %351 = vst.msk [vmem:[%s3 + $0xc] sm:$0xf] %vm347, %v342
  %s352 = scalar_lea.vmem %s1, 144
  %v353 = vld [vmem:[%s352] sm:$0xf]
  %v354 = vld [vmem:[%s352 + $0x4] sm:$0xf]
  %v355 = vld [vmem:[%s352 + $0x8] sm:$0xf]
  %v356 = vld [vmem:[%s352 + $0xc] sm:$0xf]
  %v357 = vld [vmem:[%s352 + $0x10] sm:$0xf]
  %v358 = vld [vmem:[%s352 + $0x14] sm:$0xf]
  %v359 = vld [vmem:[%s352 + $0x18] sm:$0xf]
  %v360 = vld [vmem:[%s352 + $0x1c] sm:$0xf]
  %v361 = vld [vmem:[%s352 + $0x20] sm:$0xf]
  %v362 = vld [vmem:[%s352 + $0x24] sm:$0xf]
  %v363 = vld [vmem:[%s352 + $0x28] sm:$0xf]
  %v364 = vld [vmem:[%s352 + $0x2c] sm:$0xf]
  %v365 = vld [vmem:[%s352 + $0x30] sm:$0xf]
  %v366 = vld [vmem:[%s352 + $0x34] sm:$0xf]
  %v367 = vld [vmem:[%s352 + $0x38] sm:$0xf]
  %v368 = vld [vmem:[%s352 + $0x3c] sm:$0xf]
  %v369 = vld [vmem:[%s352 + $0x40] sm:$0xf]
  %v370 = vld [vmem:[%s352 + $0x44] sm:$0xf]
  %v389 = vunpack.c.l.b16 %v353
  %v390 = vunpack.c.l.b16 %v354
  %v391 = vunpack.c.l.b16 %v355
  %v392 = vunpack.c.l.b16 %v356
  %v393 = vunpack.c.l.b16 %v357
  %v394 = vunpack.c.l.b16 %v358
  %v395 = vunpack.c.l.b16 %v359
  %v396 = vunpack.c.l.b16 %v360
  %v397 = vunpack.c.l.b16 %v361
  %v398 = vunpack.c.l.b16 %v362
  %v399 = vunpack.c.l.b16 %v363
  %v400 = vunpack.c.l.b16 %v364
  %v401 = vunpack.c.l.b16 %v365
  %v402 = vunpack.c.l.b16 %v366
  %v403 = vunpack.c.l.b16 %v367
  %v404 = vunpack.c.l.b16 %v368
  %v405 = vunpack.c.l.b16 %v369
  %v406 = vunpack.c.l.b16 %v370
  %v407 = vpack.c.b16 %v390, %v389
  %v408 = vpack.c.b16 %v392, %v391
  %v409 = vpack.c.b16 %v394, %v393
  %v410 = vpack.c.b16 %v396, %v395
  %v411 = vpack.c.b16 %v398, %v397
  %v412 = vpack.c.b16 %v400, %v399
  %v413 = vpack.c.b16 %v402, %v401
  %v414 = vpack.c.b16 %v404, %v403
  %v415 = vpack.c.b16 %v406, %v405
  %425 = vmatprep.subr.bf16.mxu0 0
  %426 = vmatpush1.bf16.msra.mxu0 %v407
  %427 = vmatprep.subr.bf16.mxu0 0
  %428 = vmatpush1.bf16.msra.mxu0 %v408
  %429 = vmatprep.subr.bf16.mxu0 0
  %430 = vmatpush1.bf16.msra.mxu0 %v409
  %431 = vmatprep.subr.bf16.mxu0 0
  %432 = vmatpush1.bf16.msra.mxu0 %v410
  %433 = vmatprep.subr.bf16.mxu0 0
  %434 = vmatpush1.bf16.msra.mxu0 %v411
  %435 = vmatprep.subr.bf16.mxu0 0
  %436 = vmatpush1.bf16.msra.mxu0 %v412
  %437 = vmatprep.subr.bf16.mxu0 0
  %438 = vmatpush1.bf16.msra.mxu0 %v413
  %439 = vmatprep.subr.bf16.mxu0 0
  %440 = vmatpush1.bf16.msra.mxu0 %v414
  %441 = vmatprep.subr.bf16.mxu0 0
  %442 = vmatpush1.bf16.msra.mxu0 %v415
  %443 = vmatprep.subr.bf16.mxu0 0
  %444 = vmatpush1.bf16.msra.mxu0 0
  %445 = vmatprep.subr.bf16.mxu0 0
  %446 = vmatpush1.bf16.msra.mxu0 0
  %447 = vmatprep.subr.bf16.mxu0 0
  %448 = vmatpush1.bf16.msra.mxu0 0
  %449 = vmatprep.subr.bf16.mxu0 0
  %450 = vmatpush1.bf16.msra.mxu0 0
  %451 = vmatprep.subr.bf16.mxu0 0
  %452 = vmatpush1.bf16.msra.mxu0 0
  %453 = vmatprep.subr.bf16.mxu0 0
  %454 = vmatpush1.bf16.msra.mxu0 0
  %455 = vmatprep.subr.bf16.mxu0 0
  %456 = vmatpush1.bf16.msra.mxu0 0
  %457 = vmatprep.mubr.bf16.mxu0 %v118
  %458 = vmatmul.mubr.bf16.gmra.mrb[0].mxu0 %v56
  %v459 = vpop.f32.mrb[0].mxu0
  %v460 = vadd.f32 %v42, %v459
  %v461 = vpop.f32.mrb[0].mxu0
  %v462 = vpop.f32.mrb[0].mxu0
  %v463 = vadd.f32 %v42, %v462
  %v464 = vpop.f32.mrb[0].mxu0
  %465 = vmatprep.mubr.bf16.mxu0 %v121
  %466 = vmatmul.mubr.bf16.gmra.mrb[0].mxu0 %v58
  %v467 = vpop.f32.mrb[0].mxu0
  %v468 = vadd.f32 %v42, %v467
  %v469 = vpop.f32.mrb[0].mxu0
  %v470 = vpop.f32.mrb[0].mxu0
  %v471 = vadd.f32 %v42, %v470
  %v472 = vpop.f32.mrb[0].mxu0
  %473 = vdwg.mxu0
  %v474 = vmax.f32 %v460, 0.0
  %v475 = vmax.f32 %v463, 0.0
  %v476 = vmax.f32 %v468, 0.0
  %v477 = vmax.f32 %v471, 0.0
  %v478 = vpack.c.bf16 %v475, %v474
  %v479 = vpack.c.bf16 %v477, %v476
  %v482 = vunpack.c.l.b16 %v478
  %v483 = vunpack.c.h.b16 %v478
  %v484 = vunpack.c.l.b16 %v479
  %v485 = vunpack.c.h.b16 %v479
  %v486 = vpack.c.b16 %v482, %v482
  %v487 = vpack.c.b16 %v483, %v483
  %v488 = vpack.c.b16 %v484, %v484
  %v489 = vpack.c.b16 %v485, %v485
  %490 = vrot.lane.b32.xlu0 %v486, 16
  %v491 = vpop.permute.xlu0 %490
  %492 = vrot.lane.b32.xlu0 %v487, 16
  %v493 = vpop.permute.xlu0 %492
  %494 = vrot.lane.b32.xlu0 %v488, 16
  %v495 = vpop.permute.xlu0 %494
  %496 = vrot.lane.b32.xlu0 %v489, 16
  %v497 = vpop.permute.xlu0 %496
  %vm502 = vcmask 191616
  %503 = vst.msk [vmem:[%s3] sm:$0xf] %vm502, %v491
  %504 = vst.msk [vmem:[%s3 + $0x4] sm:$0xf] %vm502, %v493
  %505 = vst.msk [vmem:[%s3 + $0x8] sm:$0xf] %vm502, %v495
  %506 = vst.msk [vmem:[%s3 + $0xc] sm:$0xf] %vm502, %v497
  %s507 = scalar_lea.vmem %s1, 216
  %v508 = vld [vmem:[%s507] sm:$0xf]
  %v509 = vld [vmem:[%s507 + $0x4] sm:$0xf]
  %v510 = vld [vmem:[%s507 + $0x8] sm:$0xf]
  %v511 = vld [vmem:[%s507 + $0xc] sm:$0xf]
  %v512 = vld [vmem:[%s507 + $0x10] sm:$0xf]
  %v513 = vld [vmem:[%s507 + $0x14] sm:$0xf]
  %v514 = vld [vmem:[%s507 + $0x18] sm:$0xf]
  %v515 = vld [vmem:[%s507 + $0x1c] sm:$0xf]
  %v516 = vld [vmem:[%s507 + $0x20] sm:$0xf]
  %v517 = vld [vmem:[%s507 + $0x24] sm:$0xf]
  %v518 = vld [vmem:[%s507 + $0x28] sm:$0xf]
  %v519 = vld [vmem:[%s507 + $0x2c] sm:$0xf]
  %v520 = vld [vmem:[%s507 + $0x30] sm:$0xf]
  %v521 = vld [vmem:[%s507 + $0x34] sm:$0xf]
  %v522 = vld [vmem:[%s507 + $0x38] sm:$0xf]
  %v523 = vld [vmem:[%s507 + $0x3c] sm:$0xf]
  %v524 = vld [vmem:[%s507 + $0x40] sm:$0xf]
  %v525 = vld [vmem:[%s507 + $0x44] sm:$0xf]
  %v544 = vunpack.c.l.b16 %v508
  %v545 = vunpack.c.l.b16 %v509
  %v546 = vunpack.c.l.b16 %v510
  %v547 = vunpack.c.l.b16 %v511
  %v548 = vunpack.c.l.b16 %v512
  %v549 = vunpack.c.l.b16 %v513
  %v550 = vunpack.c.l.b16 %v514
  %v551 = vunpack.c.l.b16 %v515
  %v552 = vunpack.c.l.b16 %v516
  %v553 = vunpack.c.l.b16 %v517
  %v554 = vunpack.c.l.b16 %v518
  %v555 = vunpack.c.l.b16 %v519
  %v556 = vunpack.c.l.b16 %v520
  %v557 = vunpack.c.l.b16 %v521
  %v558 = vunpack.c.l.b16 %v522
  %v559 = vunpack.c.l.b16 %v523
  %v560 = vunpack.c.l.b16 %v524
  %v561 = vunpack.c.l.b16 %v525
  %v562 = vpack.c.b16 %v545, %v544
  %v563 = vpack.c.b16 %v547, %v546
  %v564 = vpack.c.b16 %v549, %v548
  %v565 = vpack.c.b16 %v551, %v550
  %v566 = vpack.c.b16 %v553, %v552
  %v567 = vpack.c.b16 %v555, %v554
  %v568 = vpack.c.b16 %v557, %v556
  %v569 = vpack.c.b16 %v559, %v558
  %v570 = vpack.c.b16 %v561, %v560
  %580 = vmatprep.subr.bf16.mxu0 0
  %581 = vmatpush1.bf16.msra.mxu0 %v562
  %582 = vmatprep.subr.bf16.mxu0 0
  %583 = vmatpush1.bf16.msra.mxu0 %v563
  %584 = vmatprep.subr.bf16.mxu0 0
  %585 = vmatpush1.bf16.msra.mxu0 %v564
  %586 = vmatprep.subr.bf16.mxu0 0
  %587 = vmatpush1.bf16.msra.mxu0 %v565
  %588 = vmatprep.subr.bf16.mxu0 0
  %589 = vmatpush1.bf16.msra.mxu0 %v566
  %590 = vmatprep.subr.bf16.mxu0 0
  %591 = vmatpush1.bf16.msra.mxu0 %v567
  %592 = vmatprep.subr.bf16.mxu0 0
  %593 = vmatpush1.bf16.msra.mxu0 %v568
  %594 = vmatprep.subr.bf16.mxu0 0
  %595 = vmatpush1.bf16.msra.mxu0 %v569
  %596 = vmatprep.subr.bf16.mxu0 0
  %597 = vmatpush1.bf16.msra.mxu0 %v570
  %598 = vmatprep.subr.bf16.mxu0 0
  %599 = vmatpush1.bf16.msra.mxu0 0
  %600 = vmatprep.subr.bf16.mxu0 0
  %601 = vmatpush1.bf16.msra.mxu0 0
  %602 = vmatprep.subr.bf16.mxu0 0
  %603 = vmatpush1.bf16.msra.mxu0 0
  %604 = vmatprep.subr.bf16.mxu0 0
  %605 = vmatpush1.bf16.msra.mxu0 0
  %606 = vmatprep.subr.bf16.mxu0 0
  %607 = vmatpush1.bf16.msra.mxu0 0
  %608 = vmatprep.subr.bf16.mxu0 0
  %609 = vmatpush1.bf16.msra.mxu0 0
  %610 = vmatprep.subr.bf16.mxu0 0
  %611 = vmatpush1.bf16.msra.mxu0 0
  %612 = vmatprep.mubr.bf16.mxu0 %v118
  %613 = vmatmul.mubr.bf16.gmra.mrb[0].mxu0 %v56
  %v614 = vpop.f32.mrb[0].mxu0
  %v615 = vadd.f32 %v42, %v614
  %v616 = vpop.f32.mrb[0].mxu0
  %v617 = vpop.f32.mrb[0].mxu0
  %v618 = vadd.f32 %v42, %v617
  %v619 = vpop.f32.mrb[0].mxu0
  %620 = vmatprep.mubr.bf16.mxu0 %v121
  %621 = vmatmul.mubr.bf16.gmra.mrb[0].mxu0 %v58
  %v622 = vpop.f32.mrb[0].mxu0
  %v623 = vadd.f32 %v42, %v622
  %v624 = vpop.f32.mrb[0].mxu0
  %v625 = vpop.f32.mrb[0].mxu0
  %v626 = vadd.f32 %v42, %v625
  %v627 = vpop.f32.mrb[0].mxu0
  %628 = vdwg.mxu0
  %v629 = vmax.f32 %v615, 0.0
  %v630 = vmax.f32 %v618, 0.0
  %v631 = vmax.f32 %v623, 0.0
  %v632 = vmax.f32 %v626, 0.0
  %v633 = vpack.c.bf16 %v630, %v629
  %v634 = vpack.c.bf16 %v632, %v631
  %v637 = vunpack.c.l.b16 %v633
  %v638 = vunpack.c.h.b16 %v633
  %v639 = vunpack.c.l.b16 %v634
  %v640 = vunpack.c.h.b16 %v634
  %v641 = vpack.c.b16 %v637, %v637
  %v642 = vpack.c.b16 %v638, %v638
  %v643 = vpack.c.b16 %v639, %v639
  %v644 = vpack.c.b16 %v640, %v640
  %645 = vrot.lane.b32.xlu0 %v641, 24
  %v646 = vpop.permute.xlu0 %645
  %647 = vrot.lane.b32.xlu0 %v642, 24
  %v648 = vpop.permute.xlu0 %647
  %649 = vrot.lane.b32.xlu0 %v643, 24
  %v650 = vpop.permute.xlu0 %649
  %651 = vrot.lane.b32.xlu0 %v644, 24
  %v652 = vpop.permute.xlu0 %651
  %vm657 = vcmask 257216
  %658 = vst.msk [vmem:[%s3] sm:$0xf] %vm657, %v646
  %659 = vst.msk [vmem:[%s3 + $0x4] sm:$0xf] %vm657, %v648
  %660 = vst.msk [vmem:[%s3 + $0x8] sm:$0xf] %vm657, %v650
  %661 = vst.msk [vmem:[%s3 + $0xc] sm:$0xf] %vm657, %v652
  // Predicated region
  $region14: #{_lambda_.14} parent=0 // pred_check
    _
  $region15: #{_lambda_.14} parent=0 // pred_check_branch
    %663 = sbr.rel (0) target = $region17
  $region16: #{_lambda_.14} parent=0 // pred_region
    _
  $region17: #{_lambda_.14} parent=0 // pred_fallthru
    _
  // Predicated region
  $region18: #{_lambda_.14} parent=0 // pred_check
    _
  $region19: #{_lambda_.14} parent=0 // pred_check_branch
    %665 = sbr.rel (0) target = $region21
  $region20: #{_lambda_.14} parent=0 // pred_region
    _
  $region21: #{_lambda_.14} parent=0 // pred_fallthru
    _

// kernel: _lambda_.15
$region0: #{_lambda_.15}
  #allocation0 [shape = 'u32[]', space=smem, size = 0x4, offset = 0x4, fixed_abs, tag = 'smem constant byte address 0x4 - core index']
  #allocation1 [shape = 'u32[144,128]{1,0:T(1,128)}', space=vmem, size = 0x12000, scoped, tag = 'internal scratch']
  %s0 = inlined_call_operand.vmem [shape: bf16[128,72], index: 0, kind: input, shape index: {}]
  %s1 = inlined_call_operand.vmem [shape: bf16[4,72,3], index: 1, kind: input, shape index: {}]
  %s2 = inlined_call_operand.vmem [shape: f32[1,3], index: 2, kind: input, shape index: {}]
  %s3 = inlined_call_operand.vmem [shape: f32[128,12], index: 3, kind: output, shape index: {}]
  %s4 = sld [smem:[#allocation0]]
  $region22: #{_lambda_.15} parent=0
    _
  %s6 = ssub.s32 1, %s4
  %s7 = scalar_select 0, %s6, %s4
  // Predicated region
  $region2: #{_lambda_.15} parent=0 // pred_check
    _
  $region3: #{_lambda_.15} parent=0 // pred_check_branch
    %9 = sbr.rel (0) target = $region5
  $region4: #{_lambda_.15} parent=0 // pred_region
    _
  $region5: #{_lambda_.15} parent=0 // pred_fallthru
    _
  // Predicated region
  $region6: #{_lambda_.15} parent=0 // pred_check
    _
  $region7: #{_lambda_.15} parent=0 // pred_check_branch
    %11 = sbr.rel (0) target = $region9
  $region8: #{_lambda_.15} parent=0 // pred_region
    _
  $region9: #{_lambda_.15} parent=0 // pred_fallthru
    _
  // Predicated region
  $region10: #{_lambda_.15} parent=0 // pred_check
    _
  $region11: #{_lambda_.15} parent=0 // pred_check_branch
    %13 = sbr.rel (0) target = $region13
  $region12: #{_lambda_.15} parent=0 // pred_region
    _
  $region13: #{_lambda_.15} parent=0 // pred_fallthru
    _
  %v15 = vld [vmem:[%s0] sm:$0xf]
  %v16 = vld [vmem:[%s0 + $0x4] sm:$0xf]
  %v17 = vld [vmem:[%s0 + $0x8] sm:$0xf]
  %v18 = vld [vmem:[%s0 + $0xc] sm:$0xf]
  %v19 = vld [vmem:[%s0 + $0x10] sm:$0xf]
  %v20 = vld [vmem:[%s0 + $0x14] sm:$0xf]
  %v21 = vld [vmem:[%s0 + $0x18] sm:$0xf]
  %v22 = vld [vmem:[%s0 + $0x1c] sm:$0xf]
  %v23 = vld [vmem:[%s0 + $0x20] sm:$0xf]
  %v24 = vld [vmem:[%s0 + $0x24] sm:$0xf]
  %v25 = vld [vmem:[%s0 + $0x28] sm:$0xf]
  %v26 = vld [vmem:[%s0 + $0x2c] sm:$0xf]
  %v27 = vld [vmem:[%s0 + $0x30] sm:$0xf]
  %v28 = vld [vmem:[%s0 + $0x34] sm:$0xf]
  %v29 = vld [vmem:[%s0 + $0x38] sm:$0xf]
  %v30 = vld [vmem:[%s0 + $0x3c] sm:$0xf]
  %v31 = vld [vmem:[%s2] sm:$0x1]
  %v32 = vld [vmem:[%s1] sm:$0xf]
  %v33 = vld [vmem:[%s1 + $0x4] sm:$0xf]
  %v34 = vld [vmem:[%s1 + $0x8] sm:$0xf]
  %v35 = vld [vmem:[%s1 + $0xc] sm:$0xf]
  %v36 = vld [vmem:[%s1 + $0x10] sm:$0xf]
  %v37 = vld [vmem:[%s1 + $0x14] sm:$0xf]
  %v38 = vld [vmem:[%s1 + $0x18] sm:$0xf]
  %v39 = vld [vmem:[%s1 + $0x1c] sm:$0xf]
  %v40 = vld [vmem:[%s1 + $0x20] sm:$0xf]
  %v42 = vlaneseq
  %v43 = vshrl.u32 %v42, 7
  %v44 = vsub.s32 0, %v43
  %v45 = vrot.slane %v31, %v44
  %v63 = vunpack.c.l.b16 %v15
  %v64 = vunpack.c.l.b16 %v16
  %v65 = vunpack.c.l.b16 %v17
  %v66 = vunpack.c.l.b16 %v18
  %v67 = vunpack.c.l.b16 %v19
  %v68 = vunpack.c.l.b16 %v20
  %v69 = vunpack.c.l.b16 %v21
  %v70 = vunpack.c.l.b16 %v22
  %v71 = vunpack.c.l.b16 %v23
  %v72 = vunpack.c.l.b16 %v24
  %v73 = vunpack.c.l.b16 %v25
  %v74 = vunpack.c.l.b16 %v26
  %v75 = vunpack.c.l.b16 %v27
  %v76 = vunpack.c.l.b16 %v28
  %v77 = vunpack.c.l.b16 %v29
  %v78 = vunpack.c.l.b16 %v30
  %v79 = vpack.c.b16 %v64, %v63
  %v80 = vpack.c.b16 %v66, %v65
  %v81 = vpack.c.b16 %v68, %v67
  %v82 = vpack.c.b16 %v70, %v69
  %v83 = vpack.c.b16 %v72, %v71
  %v84 = vpack.c.b16 %v74, %v73
  %v85 = vpack.c.b16 %v76, %v75
  %v86 = vpack.c.b16 %v78, %v77
  %v96 = vunpack.c.l.b16 %v32
  %v97 = vunpack.c.l.b16 %v33
  %v98 = vunpack.c.l.b16 %v34
  %v99 = vunpack.c.l.b16 %v35
  %v100 = vunpack.c.l.b16 %v36
  %v101 = vunpack.c.l.b16 %v37
  %v102 = vunpack.c.l.b16 %v38
  %v103 = vunpack.c.l.b16 %v39
  %v104 = vunpack.c.l.b16 %v40
  %v105 = vpack.c.b16 %v97, %v96
  %v106 = vpack.c.b16 %v99, %v98
  %v107 = vpack.c.b16 %v101, %v100
  %v108 = vpack.c.b16 %v103, %v102
  %v109 = vpack.c.b16 %v104, %v104
  %vm114 = vcmask 588800
  %v116 = vsel %vm114, %v79, 0
  %v119 = vsel %vm114, %v80, 0
  %v122 = vsel %vm114, %v81, 0
  %v125 = vsel %vm114, %v82, 0
  %v128 = vsel %vm114, %v83, 0
  %v131 = vsel %vm114, %v84, 0
  %v134 = vsel %vm114, %v85, 0
  %v137 = vsel %vm114, %v86, 0
  %vm139 = vcmask 1043456
  %v141 = vsel %vm139, %v109, 0
  %143 = vmatprep.subr.bf16.mxu0 0
  %144 = vmatpush1.bf16.msra.mxu0 %v105
  %145 = vmatprep.subr.bf16.mxu0 0
  %146 = vmatpush1.bf16.msra.mxu0 %v106
  %147 = vmatprep.subr.bf16.mxu0 0
  %148 = vmatpush1.bf16.msra.mxu0 %v107
  %149 = vmatprep.subr.bf16.mxu0 0
  %150 = vmatpush1.bf16.msra.mxu0 %v108
  %151 = vmatprep.subr.bf16.mxu0 0
  %152 = vmatpush1.bf16.msra.mxu0 %v141
  %153 = vmatprep.subr.bf16.mxu0 0
  %154 = vmatpush1.bf16.msra.mxu0 0
  %155 = vmatprep.subr.bf16.mxu0 0
  %156 = vmatpush1.bf16.msra.mxu0 0
  %157 = vmatprep.subr.bf16.mxu0 0
  %158 = vmatpush1.bf16.msra.mxu0 0
  %159 = vmatprep.subr.bf16.mxu0 0
  %160 = vmatpush1.bf16.msra.mxu0 0
  %161 = vmatprep.subr.bf16.mxu0 0
  %162 = vmatpush1.bf16.msra.mxu0 0
  %163 = vmatprep.subr.bf16.mxu0 0
  %164 = vmatpush1.bf16.msra.mxu0 0
  %165 = vmatprep.subr.bf16.mxu0 0
  %166 = vmatpush1.bf16.msra.mxu0 0
  %167 = vmatprep.subr.bf16.mxu0 0
  %168 = vmatpush1.bf16.msra.mxu0 0
  %169 = vmatprep.subr.bf16.mxu0 0
  %170 = vmatpush1.bf16.msra.mxu0 0
  %171 = vmatprep.subr.bf16.mxu0 0
  %172 = vmatpush1.bf16.msra.mxu0 0
  %173 = vmatprep.subr.bf16.mxu0 0
  %174 = vmatpush1.bf16.msra.mxu0 0
  %175 = vmatprep.mubr.bf16.mxu0 0
  %176 = vmatmul.mubr.bf16.gmra.mrb[0].mxu0 %v116
  %v177 = vpop.f32.mrb[0].mxu0
  %v178 = vadd.f32 %v45, %v177
  %v179 = vpop.f32.mrb[0].mxu0
  %v180 = vpop.f32.mrb[0].mxu0
  %v181 = vadd.f32 %v45, %v180
  %v182 = vpop.f32.mrb[0].mxu0
  %183 = vmatprep.mubr.bf16.mxu0 0
  %184 = vmatmul.mubr.bf16.gmra.mrb[0].mxu0 %v119
  %v185 = vpop.f32.mrb[0].mxu0
  %v186 = vadd.f32 %v45, %v185
  %v187 = vpop.f32.mrb[0].mxu0
  %v188 = vpop.f32.mrb[0].mxu0
  %v189 = vadd.f32 %v45, %v188
  %v190 = vpop.f32.mrb[0].mxu0
  %191 = vmatprep.mubr.bf16.mxu0 0
  %192 = vmatmul.mubr.bf16.gmra.mrb[0].mxu0 %v122
  %v193 = vpop.f32.mrb[0].mxu0
  %v194 = vadd.f32 %v45, %v193
  %v195 = vpop.f32.mrb[0].mxu0
  %v196 = vpop.f32.mrb[0].mxu0
  %v197 = vadd.f32 %v45, %v196
  %v198 = vpop.f32.mrb[0].mxu0
  %199 = vmatprep.mubr.bf16.mxu0 0
  %200 = vmatmul.mubr.bf16.gmra.mrb[0].mxu0 %v125
  %v201 = vpop.f32.mrb[0].mxu0
  %v202 = vadd.f32 %v45, %v201
  %v203 = vpop.f32.mrb[0].mxu0
  %v204 = vpop.f32.mrb[0].mxu0
  %v205 = vadd.f32 %v45, %v204
  %v206 = vpop.f32.mrb[0].mxu0
  %207 = vmatprep.mubr.bf16.mxu0 0
  %208 = vmatmul.mubr.bf16.gmra.mrb[0].mxu0 %v128
  %v209 = vpop.f32.mrb[0].mxu0
  %v210 = vadd.f32 %v45, %v209
  %v211 = vpop.f32.mrb[0].mxu0
  %v212 = vpop.f32.mrb[0].mxu0
  %v213 = vadd.f32 %v45, %v212
  %v214 = vpop.f32.mrb[0].mxu0
  %215 = vmatprep.mubr.bf16.mxu0 0
  %216 = vmatmul.mubr.bf16.gmra.mrb[0].mxu0 %v131
  %v217 = vpop.f32.mrb[0].mxu0
  %v218 = vadd.f32 %v45, %v217
  %v219 = vpop.f32.mrb[0].mxu0
  %v220 = vpop.f32.mrb[0].mxu0
  %v221 = vadd.f32 %v45, %v220
  %v222 = vpop.f32.mrb[0].mxu0
  %223 = vmatprep.mubr.bf16.mxu0 0
  %224 = vmatmul.mubr.bf16.gmra.mrb[0].mxu0 %v134
  %v225 = vpop.f32.mrb[0].mxu0
  %v226 = vadd.f32 %v45, %v225
  %v227 = vpop.f32.mrb[0].mxu0
  %v228 = vpop.f32.mrb[0].mxu0
  %v229 = vadd.f32 %v45, %v228
  %v230 = vpop.f32.mrb[0].mxu0
  %231 = vmatprep.mubr.bf16.mxu0 0
  %232 = vmatmul.mubr.bf16.gmra.mrb[0].mxu0 %v137
  %v233 = vpop.f32.mrb[0].mxu0
  %v234 = vadd.f32 %v45, %v233
  %v235 = vpop.f32.mrb[0].mxu0
  %v236 = vpop.f32.mrb[0].mxu0
  %v237 = vadd.f32 %v45, %v236
  %v238 = vpop.f32.mrb[0].mxu0
  %239 = vdwg.mxu0
  %v240 = vmax.f32 %v178, 0.0
  %v241 = vmax.f32 %v181, 0.0
  %v242 = vmax.f32 %v186, 0.0
  %v243 = vmax.f32 %v189, 0.0
  %v244 = vmax.f32 %v194, 0.0
  %v245 = vmax.f32 %v197, 0.0
  %v246 = vmax.f32 %v202, 0.0
  %v247 = vmax.f32 %v205, 0.0
  %v248 = vmax.f32 %v210, 0.0
  %v249 = vmax.f32 %v213, 0.0
  %v250 = vmax.f32 %v218, 0.0
  %v251 = vmax.f32 %v221, 0.0
  %v252 = vmax.f32 %v226, 0.0
  %v253 = vmax.f32 %v229, 0.0
  %v254 = vmax.f32 %v234, 0.0
  %v255 = vmax.f32 %v237, 0.0
  %v256 = vxor.u32 %v240, 2147483648
  %v257 = vxor.u32 %v241, 2147483648
  %v258 = vxor.u32 %v242, 2147483648
  %v259 = vxor.u32 %v243, 2147483648
  %v260 = vxor.u32 %v244, 2147483648
  %v261 = vxor.u32 %v245, 2147483648
  %v262 = vxor.u32 %v246, 2147483648
  %v263 = vxor.u32 %v247, 2147483648
  %v264 = vxor.u32 %v248, 2147483648
  %v265 = vxor.u32 %v249, 2147483648
  %v266 = vxor.u32 %v250, 2147483648
  %v267 = vxor.u32 %v251, 2147483648
  %v268 = vxor.u32 %v252, 2147483648
  %v269 = vxor.u32 %v253, 2147483648
  %v270 = vxor.u32 %v254, 2147483648
  %v271 = vxor.u32 %v255, 2147483648
  %v272 = vmul.f32 %v256, 1.442695
  %v273 = vpow.pop %v272
  %v274 = vmul.f32 %v257, 1.442695
  %v275 = vpow.pop %v274
  %v276 = vmul.f32 %v258, 1.442695
  %v277 = vpow.pop %v276
  %v278 = vmul.f32 %v259, 1.442695
  %v279 = vpow.pop %v278
  %v280 = vmul.f32 %v260, 1.442695
  %v281 = vpow.pop %v280
  %v282 = vmul.f32 %v261, 1.442695
  %v283 = vpow.pop %v282
  %v284 = vmul.f32 %v262, 1.442695
  %v285 = vpow.pop %v284
  %v286 = vmul.f32 %v263, 1.442695
  %v287 = vpow.pop %v286
  %v288 = vmul.f32 %v264, 1.442695
  %v289 = vpow.pop %v288
  %v290 = vmul.f32 %v265, 1.442695
  %v291 = vpow.pop %v290
  %v292 = vmul.f32 %v266, 1.442695
  %v293 = vpow.pop %v292
  %v294 = vmul.f32 %v267, 1.442695
  %v295 = vpow.pop %v294
  %v296 = vmul.f32 %v268, 1.442695
  %v297 = vpow.pop %v296
  %v298 = vmul.f32 %v269, 1.442695
  %v299 = vpow.pop %v298
  %v300 = vmul.f32 %v270, 1.442695
  %v301 = vpow.pop %v300
  %v302 = vmul.f32 %v271, 1.442695
  %v303 = vpow.pop %v302
  %v304 = vadd.f32 %v273, 1.0
  %v305 = vadd.f32 %v275, 1.0
  %v306 = vadd.f32 %v277, 1.0
  %v307 = vadd.f32 %v279, 1.0
  %v308 = vadd.f32 %v281, 1.0
  %v309 = vadd.f32 %v283, 1.0
  %v310 = vadd.f32 %v285, 1.0
  %v311 = vadd.f32 %v287, 1.0
  %v312 = vadd.f32 %v289, 1.0
  %v313 = vadd.f32 %v291, 1.0
  %v314 = vadd.f32 %v293, 1.0
  %v315 = vadd.f32 %v295, 1.0
  %v316 = vadd.f32 %v297, 1.0
  %v317 = vadd.f32 %v299, 1.0
  %v318 = vadd.f32 %v301, 1.0
  %v319 = vadd.f32 %v303, 1.0
  %v320 = vrcp.pop %v304
  %v321 = vmul.f32 1.0, %v320
  %v322 = vrcp.pop %v305
  %v323 = vmul.f32 1.0, %v322
  %v324 = vrcp.pop %v306
  %v325 = vmul.f32 1.0, %v324
  %v326 = vrcp.pop %v307
  %v327 = vmul.f32 1.0, %v326
  %v328 = vrcp.pop %v308
  %v329 = vmul.f32 1.0, %v328
  %v330 = vrcp.pop %v309
  %v331 = vmul.f32 1.0, %v330
  %v332 = vrcp.pop %v310
  %v333 = vmul.f32 1.0, %v332
  %v334 = vrcp.pop %v311
  %v335 = vmul.f32 1.0, %v334
  %v336 = vrcp.pop %v312
  %v337 = vmul.f32 1.0, %v336
  %v338 = vrcp.pop %v313
  %v339 = vmul.f32 1.0, %v338
  %v340 = vrcp.pop %v314
  %v341 = vmul.f32 1.0, %v340
  %v342 = vrcp.pop %v315
  %v343 = vmul.f32 1.0, %v342
  %v344 = vrcp.pop %v316
  %v345 = vmul.f32 1.0, %v344
  %v346 = vrcp.pop %v317
  %v347 = vmul.f32 1.0, %v346
  %v348 = vrcp.pop %v318
  %v349 = vmul.f32 1.0, %v348
  %v350 = vrcp.pop %v319
  %v351 = vmul.f32 1.0, %v350
  %vm352 = vcmask 23552
  %353 = vst.msk [vmem:[%s3] sm:$0xff] %vm352, %v321
  %354 = vst.msk [vmem:[%s3 + $0x8] sm:$0xff] %vm352, %v323
  %355 = vst.msk [vmem:[%s3 + $0x10] sm:$0xff] %vm352, %v325
  %356 = vst.msk [vmem:[%s3 + $0x18] sm:$0xff] %vm352, %v327
  %357 = vst.msk [vmem:[%s3 + $0x20] sm:$0xff] %vm352, %v329
  %358 = vst.msk [vmem:[%s3 + $0x28] sm:$0xff] %vm352, %v331
  %359 = vst.msk [vmem:[%s3 + $0x30] sm:$0xff] %vm352, %v333
  %360 = vst.msk [vmem:[%s3 + $0x38] sm:$0xff] %vm352, %v335
  %361 = vst.msk [vmem:[%s3 + $0x40] sm:$0xff] %vm352, %v337
  %362 = vst.msk [vmem:[%s3 + $0x48] sm:$0xff] %vm352, %v339
  %363 = vst.msk [vmem:[%s3 + $0x50] sm:$0xff] %vm352, %v341
  %364 = vst.msk [vmem:[%s3 + $0x58] sm:$0xff] %vm352, %v343
  %365 = vst.msk [vmem:[%s3 + $0x60] sm:$0xff] %vm352, %v345
  %366 = vst.msk [vmem:[%s3 + $0x68] sm:$0xff] %vm352, %v347
  %367 = vst.msk [vmem:[%s3 + $0x70] sm:$0xff] %vm352, %v349
  %368 = vst.msk [vmem:[%s3 + $0x78] sm:$0xff] %vm352, %v351
  %s369 = scalar_lea.vmem %s1, 36
  %v370 = vld [vmem:[%s369] sm:$0xf]
  %v371 = vld [vmem:[%s369 + $0x4] sm:$0xf]
  %v372 = vld [vmem:[%s369 + $0x8] sm:$0xf]
  %v373 = vld [vmem:[%s369 + $0xc] sm:$0xf]
  %v374 = vld [vmem:[%s369 + $0x10] sm:$0xf]
  %v375 = vld [vmem:[%s369 + $0x14] sm:$0xf]
  %v376 = vld [vmem:[%s369 + $0x18] sm:$0xf]
  %v377 = vld [vmem:[%s369 + $0x1c] sm:$0xf]
  %v378 = vld [vmem:[%s369 + $0x20] sm:$0xf]
  %v388 = vunpack.c.l.b16 %v370
  %v389 = vunpack.c.l.b16 %v371
  %v390 = vunpack.c.l.b16 %v372
  %v391 = vunpack.c.l.b16 %v373
  %v392 = vunpack.c.l.b16 %v374
  %v393 = vunpack.c.l.b16 %v375
  %v394 = vunpack.c.l.b16 %v376
  %v395 = vunpack.c.l.b16 %v377
  %v396 = vunpack.c.l.b16 %v378
  %v397 = vpack.c.b16 %v389, %v388
  %v398 = vpack.c.b16 %v391, %v390
  %v399 = vpack.c.b16 %v393, %v392
  %v400 = vpack.c.b16 %v395, %v394
  %v401 = vpack.c.b16 %v396, %v396
  %v407 = vsel %vm139, %v401, 0
  %409 = vmatprep.subr.bf16.mxu0 0
  %410 = vmatpush1.bf16.msra.mxu0 %v397
  %411 = vmatprep.subr.bf16.mxu0 0
  %412 = vmatpush1.bf16.msra.mxu0 %v398
  %413 = vmatprep.subr.bf16.mxu0 0
  %414 = vmatpush1.bf16.msra.mxu0 %v399
  %415 = vmatprep.subr.bf16.mxu0 0
  %416 = vmatpush1.bf16.msra.mxu0 %v400
  %417 = vmatprep.subr.bf16.mxu0 0
  %418 = vmatpush1.bf16.msra.mxu0 %v407
  %419 = vmatprep.subr.bf16.mxu0 0
  %420 = vmatpush1.bf16.msra.mxu0 0
  %421 = vmatprep.subr.bf16.mxu0 0
  %422 = vmatpush1.bf16.msra.mxu0 0
  %423 = vmatprep.subr.bf16.mxu0 0
  %424 = vmatpush1.bf16.msra.mxu0 0
  %425 = vmatprep.subr.bf16.mxu0 0
  %426 = vmatpush1.bf16.msra.mxu0 0
  %427 = vmatprep.subr.bf16.mxu0 0
  %428 = vmatpush1.bf16.msra.mxu0 0
  %429 = vmatprep.subr.bf16.mxu0 0
  %430 = vmatpush1.bf16.msra.mxu0 0
  %431 = vmatprep.subr.bf16.mxu0 0
  %432 = vmatpush1.bf16.msra.mxu0 0
  %433 = vmatprep.subr.bf16.mxu0 0
  %434 = vmatpush1.bf16.msra.mxu0 0
  %435 = vmatprep.subr.bf16.mxu0 0
  %436 = vmatpush1.bf16.msra.mxu0 0
  %437 = vmatprep.subr.bf16.mxu0 0
  %438 = vmatpush1.bf16.msra.mxu0 0
  %439 = vmatprep.subr.bf16.mxu0 0
  %440 = vmatpush1.bf16.msra.mxu0 0
  %441 = vmatprep.mubr.bf16.mxu0 0
  %442 = vmatmul.mubr.bf16.gmra.mrb[0].mxu0 %v116
  %v443 = vpop.f32.mrb[0].mxu0
  %v444 = vadd.f32 %v45, %v443
  %v445 = vpop.f32.mrb[0].mxu0
  %v446 = vpop.f32.mrb[0].mxu0
  %v447 = vadd.f32 %v45, %v446
  %v448 = vpop.f32.mrb[0].mxu0
  %449 = vmatprep.mubr.bf16.mxu0 0
  %450 = vmatmul.mubr.bf16.gmra.mrb[0].mxu0 %v119
  %v451 = vpop.f32.mrb[0].mxu0
  %v452 = vadd.f32 %v45, %v451
  %v453 = vpop.f32.mrb[0].mxu0
  %v454 = vpop.f32.mrb[0].mxu0
  %v455 = vadd.f32 %v45, %v454
  %v456 = vpop.f32.mrb[0].mxu0
  %457 = vmatprep.mubr.bf16.mxu0 0
  %458 = vmatmul.mubr.bf16.gmra.mrb[0].mxu0 %v122
  %v459 = vpop.f32.mrb[0].mxu0
  %v460 = vadd.f32 %v45, %v459
  %v461 = vpop.f32.mrb[0].mxu0
  %v462 = vpop.f32.mrb[0].mxu0
  %v463 = vadd.f32 %v45, %v462
  %v464 = vpop.f32.mrb[0].mxu0
  %465 = vmatprep.mubr.bf16.mxu0 0
  %466 = vmatmul.mubr.bf16.gmra.mrb[0].mxu0 %v125
  %v467 = vpop.f32.mrb[0].mxu0
  %v468 = vadd.f32 %v45, %v467
  %v469 = vpop.f32.mrb[0].mxu0
  %v470 = vpop.f32.mrb[0].mxu0
  %v471 = vadd.f32 %v45, %v470
  %v472 = vpop.f32.mrb[0].mxu0
  %473 = vmatprep.mubr.bf16.mxu0 0
  %474 = vmatmul.mubr.bf16.gmra.mrb[0].mxu0 %v128
  %v475 = vpop.f32.mrb[0].mxu0
  %v476 = vadd.f32 %v45, %v475
  %v477 = vpop.f32.mrb[0].mxu0
  %v478 = vpop.f32.mrb[0].mxu0
  %v479 = vadd.f32 %v45, %v478
  %v480 = vpop.f32.mrb[0].mxu0
  %481 = vmatprep.mubr.bf16.mxu0 0
  %482 = vmatmul.mubr.bf16.gmra.mrb[0].mxu0 %v131
  %v483 = vpop.f32.mrb[0].mxu0
  %v484 = vadd.f32 %v45, %v483
  %v485 = vpop.f32.mrb[0].mxu0
  %v486 = vpop.f32.mrb[0].mxu0
  %v487 = vadd.f32 %v45, %v486
  %v488 = vpop.f32.mrb[0].mxu0
  %489 = vmatprep.mubr.bf16.mxu0 0
  %490 = vmatmul.mubr.bf16.gmra.mrb[0].mxu0 %v134
  %v491 = vpop.f32.mrb[0].mxu0
  %v492 = vadd.f32 %v45, %v491
  %v493 = vpop.f32.mrb[0].mxu0
  %v494 = vpop.f32.mrb[0].mxu0
  %v495 = vadd.f32 %v45, %v494
  %v496 = vpop.f32.mrb[0].mxu0
  %497 = vmatprep.mubr.bf16.mxu0 0
  %498 = vmatmul.mubr.bf16.gmra.mrb[0].mxu0 %v137
  %v499 = vpop.f32.mrb[0].mxu0
  %v500 = vadd.f32 %v45, %v499
  %v501 = vpop.f32.mrb[0].mxu0
  %v502 = vpop.f32.mrb[0].mxu0
  %v503 = vadd.f32 %v45, %v502
  %v504 = vpop.f32.mrb[0].mxu0
  %505 = vdwg.mxu0
  %v506 = vmax.f32 %v444, 0.0
  %v507 = vmax.f32 %v447, 0.0
  %v508 = vmax.f32 %v452, 0.0
  %v509 = vmax.f32 %v455, 0.0
  %v510 = vmax.f32 %v460, 0.0
  %v511 = vmax.f32 %v463, 0.0
  %v512 = vmax.f32 %v468, 0.0
  %v513 = vmax.f32 %v471, 0.0
  %v514 = vmax.f32 %v476, 0.0
  %v515 = vmax.f32 %v479, 0.0
  %v516 = vmax.f32 %v484, 0.0
  %v517 = vmax.f32 %v487, 0.0
  %v518 = vmax.f32 %v492, 0.0
  %v519 = vmax.f32 %v495, 0.0
  %v520 = vmax.f32 %v500, 0.0
  %v521 = vmax.f32 %v503, 0.0
  %v522 = vxor.u32 %v506, 2147483648
  %v523 = vxor.u32 %v507, 2147483648
  %v524 = vxor.u32 %v508, 2147483648
  %v525 = vxor.u32 %v509, 2147483648
  %v526 = vxor.u32 %v510, 2147483648
  %v527 = vxor.u32 %v511, 2147483648
  %v528 = vxor.u32 %v512, 2147483648
  %v529 = vxor.u32 %v513, 2147483648
  %v530 = vxor.u32 %v514, 2147483648
  %v531 = vxor.u32 %v515, 2147483648
  %v532 = vxor.u32 %v516, 2147483648
  %v533 = vxor.u32 %v517, 2147483648
  %v534 = vxor.u32 %v518, 2147483648
  %v535 = vxor.u32 %v519, 2147483648
  %v536 = vxor.u32 %v520, 2147483648
  %v537 = vxor.u32 %v521, 2147483648
  %v538 = vmul.f32 %v522, 1.442695
  %v539 = vpow.pop %v538
  %v540 = vmul.f32 %v523, 1.442695
  %v541 = vpow.pop %v540
  %v542 = vmul.f32 %v524, 1.442695
  %v543 = vpow.pop %v542
  %v544 = vmul.f32 %v525, 1.442695
  %v545 = vpow.pop %v544
  %v546 = vmul.f32 %v526, 1.442695
  %v547 = vpow.pop %v546
  %v548 = vmul.f32 %v527, 1.442695
  %v549 = vpow.pop %v548
  %v550 = vmul.f32 %v528, 1.442695
  %v551 = vpow.pop %v550
  %v552 = vmul.f32 %v529, 1.442695
  %v553 = vpow.pop %v552
  %v554 = vmul.f32 %v530, 1.442695
  %v555 = vpow.pop %v554
  %v556 = vmul.f32 %v531, 1.442695
  %v557 = vpow.pop %v556
  %v558 = vmul.f32 %v532, 1.442695
  %v559 = vpow.pop %v558
  %v560 = vmul.f32 %v533, 1.442695
  %v561 = vpow.pop %v560
  %v562 = vmul.f32 %v534, 1.442695
  %v563 = vpow.pop %v562
  %v564 = vmul.f32 %v535, 1.442695
  %v565 = vpow.pop %v564
  %v566 = vmul.f32 %v536, 1.442695
  %v567 = vpow.pop %v566
  %v568 = vmul.f32 %v537, 1.442695
  %v569 = vpow.pop %v568
  %v570 = vadd.f32 %v539, 1.0
  %v571 = vadd.f32 %v541, 1.0
  %v572 = vadd.f32 %v543, 1.0
  %v573 = vadd.f32 %v545, 1.0
  %v574 = vadd.f32 %v547, 1.0
  %v575 = vadd.f32 %v549, 1.0
  %v576 = vadd.f32 %v551, 1.0
  %v577 = vadd.f32 %v553, 1.0
  %v578 = vadd.f32 %v555, 1.0
  %v579 = vadd.f32 %v557, 1.0
  %v580 = vadd.f32 %v559, 1.0
  %v581 = vadd.f32 %v561, 1.0
  %v582 = vadd.f32 %v563, 1.0
  %v583 = vadd.f32 %v565, 1.0
  %v584 = vadd.f32 %v567, 1.0
  %v585 = vadd.f32 %v569, 1.0
  %v586 = vrcp.pop %v570
  %v587 = vmul.f32 1.0, %v586
  %v588 = vrcp.pop %v571
  %v589 = vmul.f32 1.0, %v588
  %v590 = vrcp.pop %v572
  %v591 = vmul.f32 1.0, %v590
  %v592 = vrcp.pop %v573
  %v593 = vmul.f32 1.0, %v592
  %v594 = vrcp.pop %v574
  %v595 = vmul.f32 1.0, %v594
  %v596 = vrcp.pop %v575
  %v597 = vmul.f32 1.0, %v596
  %v598 = vrcp.pop %v576
  %v599 = vmul.f32 1.0, %v598
  %v600 = vrcp.pop %v577
  %v601 = vmul.f32 1.0, %v600
  %v602 = vrcp.pop %v578
  %v603 = vmul.f32 1.0, %v602
  %v604 = vrcp.pop %v579
  %v605 = vmul.f32 1.0, %v604
  %v606 = vrcp.pop %v580
  %v607 = vmul.f32 1.0, %v606
  %v608 = vrcp.pop %v581
  %v609 = vmul.f32 1.0, %v608
  %v610 = vrcp.pop %v582
  %v611 = vmul.f32 1.0, %v610
  %v612 = vrcp.pop %v583
  %v613 = vmul.f32 1.0, %v612
  %v614 = vrcp.pop %v584
  %v615 = vmul.f32 1.0, %v614
  %v616 = vrcp.pop %v585
  %v617 = vmul.f32 1.0, %v616
  %634 = vrot.lane.b32.xlu0 %v587, 3
  %v635 = vpop.permute.xlu0 %634
  %636 = vrot.lane.b32.xlu0 %v589, 3
  %v637 = vpop.permute.xlu0 %636
  %638 = vrot.lane.b32.xlu0 %v591, 3
  %v639 = vpop.permute.xlu0 %638
  %640 = vrot.lane.b32.xlu0 %v593, 3
  %v641 = vpop.permute.xlu0 %640
  %642 = vrot.lane.b32.xlu0 %v595, 3
  %v643 = vpop.permute.xlu0 %642
  %644 = vrot.lane.b32.xlu0 %v597, 3
  %v645 = vpop.permute.xlu0 %644
  %646 = vrot.lane.b32.xlu0 %v599, 3
  %v647 = vpop.permute.xlu0 %646
  %648 = vrot.lane.b32.xlu0 %v601, 3
  %v649 = vpop.permute.xlu0 %648
  %650 = vrot.lane.b32.xlu0 %v603, 3
  %v651 = vpop.permute.xlu0 %650
  %652 = vrot.lane.b32.xlu0 %v605, 3
  %v653 = vpop.permute.xlu0 %652
  %654 = vrot.lane.b32.xlu0 %v607, 3
  %v655 = vpop.permute.xlu0 %654
  %656 = vrot.lane.b32.xlu0 %v609, 3
  %v657 = vpop.permute.xlu0 %656
  %658 = vrot.lane.b32.xlu0 %v611, 3
  %v659 = vpop.permute.xlu0 %658
  %660 = vrot.lane.b32.xlu0 %v613, 3
  %v661 = vpop.permute.xlu0 %660
  %662 = vrot.lane.b32.xlu0 %v615, 3
  %v663 = vpop.permute.xlu0 %662
  %664 = vrot.lane.b32.xlu0 %v617, 3
  %v665 = vpop.permute.xlu0 %664
  %vm682 = vcmask 48152
  %683 = vst.msk [vmem:[%s3] sm:$0xff] %vm682, %v635
  %684 = vst.msk [vmem:[%s3 + $0x8] sm:$0xff] %vm682, %v637
  %685 = vst.msk [vmem:[%s3 + $0x10] sm:$0xff] %vm682, %v639
  %686 = vst.msk [vmem:[%s3 + $0x18] sm:$0xff] %vm682, %v641
  %687 = vst.msk [vmem:[%s3 + $0x20] sm:$0xff] %vm682, %v643
  %688 = vst.msk [vmem:[%s3 + $0x28] sm:$0xff] %vm682, %v645
  %689 = vst.msk [vmem:[%s3 + $0x30] sm:$0xff] %vm682, %v647
  %690 = vst.msk [vmem:[%s3 + $0x38] sm:$0xff] %vm682, %v649
  %691 = vst.msk [vmem:[%s3 + $0x40] sm:$0xff] %vm682, %v651
  %692 = vst.msk [vmem:[%s3 + $0x48] sm:$0xff] %vm682, %v653
  %693 = vst.msk [vmem:[%s3 + $0x50] sm:$0xff] %vm682, %v655
  %694 = vst.msk [vmem:[%s3 + $0x58] sm:$0xff] %vm682, %v657
  %695 = vst.msk [vmem:[%s3 + $0x60] sm:$0xff] %vm682, %v659
  %696 = vst.msk [vmem:[%s3 + $0x68] sm:$0xff] %vm682, %v661
  %697 = vst.msk [vmem:[%s3 + $0x70] sm:$0xff] %vm682, %v663
  %698 = vst.msk [vmem:[%s3 + $0x78] sm:$0xff] %vm682, %v665
  %s699 = scalar_lea.vmem %s1, 72
  %v700 = vld [vmem:[%s699] sm:$0xf]
  %v701 = vld [vmem:[%s699 + $0x4] sm:$0xf]
  %v702 = vld [vmem:[%s699 + $0x8] sm:$0xf]
  %v703 = vld [vmem:[%s699 + $0xc] sm:$0xf]
  %v704 = vld [vmem:[%s699 + $0x10] sm:$0xf]
  %v705 = vld [vmem:[%s699 + $0x14] sm:$0xf]
  %v706 = vld [vmem:[%s699 + $0x18] sm:$0xf]
  %v707 = vld [vmem:[%s699 + $0x1c] sm:$0xf]
  %v708 = vld [vmem:[%s699 + $0x20] sm:$0xf]
  %v718 = vunpack.c.l.b16 %v700
  %v719 = vunpack.c.l.b16 %v701
  %v720 = vunpack.c.l.b16 %v702
  %v721 = vunpack.c.l.b16 %v703
  %v722 = vunpack.c.l.b16 %v704
  %v723 = vunpack.c.l.b16 %v705
  %v724 = vunpack.c.l.b16 %v706
  %v725 = vunpack.c.l.b16 %v707
  %v726 = vunpack.c.l.b16 %v708
  %v727 = vpack.c.b16 %v719, %v718
  %v728 = vpack.c.b16 %v721, %v720
  %v729 = vpack.c.b16 %v723, %v722
  %v730 = vpack.c.b16 %v725, %v724
  %v731 = vpack.c.b16 %v726, %v726
  %v737 = vsel %vm139, %v731, 0
  %739 = vmatprep.subr.bf16.mxu0 0
  %740 = vmatpush1.bf16.msra.mxu0 %v727
  %741 = vmatprep.subr.bf16.mxu0 0
  %742 = vmatpush1.bf16.msra.mxu0 %v728
  %743 = vmatprep.subr.bf16.mxu0 0
  %744 = vmatpush1.bf16.msra.mxu0 %v729
  %745 = vmatprep.subr.bf16.mxu0 0
  %746 = vmatpush1.bf16.msra.mxu0 %v730
  %747 = vmatprep.subr.bf16.mxu0 0
  %748 = vmatpush1.bf16.msra.mxu0 %v737
  %749 = vmatprep.subr.bf16.mxu0 0
  %750 = vmatpush1.bf16.msra.mxu0 0
  %751 = vmatprep.subr.bf16.mxu0 0
  %752 = vmatpush1.bf16.msra.mxu0 0
  %753 = vmatprep.subr.bf16.mxu0 0
  %754 = vmatpush1.bf16.msra.mxu0 0
  %755 = vmatprep.subr.bf16.mxu0 0
  %756 = vmatpush1.bf16.msra.mxu0 0
  %757 = vmatprep.subr.bf16.mxu0 0
  %758 = vmatpush1.bf16.msra.mxu0 0
  %759 = vmatprep.subr.bf16.mxu0 0
  %760 = vmatpush1.bf16.msra.mxu0 0
  %761 = vmatprep.subr.bf16.mxu0 0
  %762 = vmatpush1.bf16.msra.mxu0 0
  %763 = vmatprep.subr.bf16.mxu0 0
  %764 = vmatpush1.bf16.msra.mxu0 0
  %765 = vmatprep.subr.bf16.mxu0 0
  %766 = vmatpush1.bf16.msra.mxu0 0
  %767 = vmatprep.subr.bf16.mxu0 0
  %768 = vmatpush1.bf16.msra.mxu0 0
  %769 = vmatprep.subr.bf16.mxu0 0
  %770 = vmatpush1.bf16.msra.mxu0 0
  %771 = vmatprep.mubr.bf16.mxu0 0
  %772 = vmatmul.mubr.bf16.gmra.mrb[0].mxu0 %v116
  %v773 = vpop.f32.mrb[0].mxu0
  %v774 = vadd.f32 %v45, %v773
  %v775 = vpop.f32.mrb[0].mxu0
  %v776 = vpop.f32.mrb[0].mxu0
  %v777 = vadd.f32 %v45, %v776
  %v778 = vpop.f32.mrb[0].mxu0
  %779 = vmatprep.mubr.bf16.mxu0 0
  %780 = vmatmul.mubr.bf16.gmra.mrb[0].mxu0 %v119
  %v781 = vpop.f32.mrb[0].mxu0
  %v782 = vadd.f32 %v45, %v781
  %v783 = vpop.f32.mrb[0].mxu0
  %v784 = vpop.f32.mrb[0].mxu0
  %v785 = vadd.f32 %v45, %v784
  %v786 = vpop.f32.mrb[0].mxu0
  %787 = vmatprep.mubr.bf16.mxu0 0
  %788 = vmatmul.mubr.bf16.gmra.mrb[0].mxu0 %v122
  %v789 = vpop.f32.mrb[0].mxu0
  %v790 = vadd.f32 %v45, %v789
  %v791 = vpop.f32.mrb[0].mxu0
  %v792 = vpop.f32.mrb[0].mxu0
  %v793 = vadd.f32 %v45, %v792
  %v794 = vpop.f32.mrb[0].mxu0
  %795 = vmatprep.mubr.bf16.mxu0 0
  %796 = vmatmul.mubr.bf16.gmra.mrb[0].mxu0 %v125
  %v797 = vpop.f32.mrb[0].mxu0
  %v798 = vadd.f32 %v45, %v797
  %v799 = vpop.f32.mrb[0].mxu0
  %v800 = vpop.f32.mrb[0].mxu0
  %v801 = vadd.f32 %v45, %v800
  %v802 = vpop.f32.mrb[0].mxu0
  %803 = vmatprep.mubr.bf16.mxu0 0
  %804 = vmatmul.mubr.bf16.gmra.mrb[0].mxu0 %v128
  %v805 = vpop.f32.mrb[0].mxu0
  %v806 = vadd.f32 %v45, %v805
  %v807 = vpop.f32.mrb[0].mxu0
  %v808 = vpop.f32.mrb[0].mxu0
  %v809 = vadd.f32 %v45, %v808
  %v810 = vpop.f32.mrb[0].mxu0
  %811 = vmatprep.mubr.bf16.mxu0 0
  %812 = vmatmul.mubr.bf16.gmra.mrb[0].mxu0 %v131
  %v813 = vpop.f32.mrb[0].mxu0
  %v814 = vadd.f32 %v45, %v813
  %v815 = vpop.f32.mrb[0].mxu0
  %v816 = vpop.f32.mrb[0].mxu0
  %v817 = vadd.f32 %v45, %v816
  %v818 = vpop.f32.mrb[0].mxu0
  %819 = vmatprep.mubr.bf16.mxu0 0
  %820 = vmatmul.mubr.bf16.gmra.mrb[0].mxu0 %v134
  %v821 = vpop.f32.mrb[0].mxu0
  %v822 = vadd.f32 %v45, %v821
  %v823 = vpop.f32.mrb[0].mxu0
  %v824 = vpop.f32.mrb[0].mxu0
  %v825 = vadd.f32 %v45, %v824
  %v826 = vpop.f32.mrb[0].mxu0
  %827 = vmatprep.mubr.bf16.mxu0 0
  %828 = vmatmul.mubr.bf16.gmra.mrb[0].mxu0 %v137
  %v829 = vpop.f32.mrb[0].mxu0
  %v830 = vadd.f32 %v45, %v829
  %v831 = vpop.f32.mrb[0].mxu0
  %v832 = vpop.f32.mrb[0].mxu0
  %v833 = vadd.f32 %v45, %v832
  %v834 = vpop.f32.mrb[0].mxu0
  %835 = vdwg.mxu0
  %v836 = vmax.f32 %v774, 0.0
  %v837 = vmax.f32 %v777, 0.0
  %v838 = vmax.f32 %v782, 0.0
  %v839 = vmax.f32 %v785, 0.0
  %v840 = vmax.f32 %v790, 0.0
  %v841 = vmax.f32 %v793, 0.0
  %v842 = vmax.f32 %v798, 0.0
  %v843 = vmax.f32 %v801, 0.0
  %v844 = vmax.f32 %v806, 0.0
  %v845 = vmax.f32 %v809, 0.0
  %v846 = vmax.f32 %v814, 0.0
  %v847 = vmax.f32 %v817, 0.0
  %v848 = vmax.f32 %v822, 0.0
  %v849 = vmax.f32 %v825, 0.0
  %v850 = vmax.f32 %v830, 0.0
  %v851 = vmax.f32 %v833, 0.0
  %v852 = vxor.u32 %v836, 2147483648
  %v853 = vxor.u32 %v837, 2147483648
  %v854 = vxor.u32 %v838, 2147483648
  %v855 = vxor.u32 %v839, 2147483648
  %v856 = vxor.u32 %v840, 2147483648
  %v857 = vxor.u32 %v841, 2147483648
  %v858 = vxor.u32 %v842, 2147483648
  %v859 = vxor.u32 %v843, 2147483648
  %v860 = vxor.u32 %v844, 2147483648
  %v861 = vxor.u32 %v845, 2147483648
  %v862 = vxor.u32 %v846, 2147483648
  %v863 = vxor.u32 %v847, 2147483648
  %v864 = vxor.u32 %v848, 2147483648
  %v865 = vxor.u32 %v849, 2147483648
  %v866 = vxor.u32 %v850, 2147483648
  %v867 = vxor.u32 %v851, 2147483648
  %v868 = vmul.f32 %v852, 1.442695
  %v869 = vpow.pop %v868
  %v870 = vmul.f32 %v853, 1.442695
  %v871 = vpow.pop %v870
  %v872 = vmul.f32 %v854, 1.442695
  %v873 = vpow.pop %v872
  %v874 = vmul.f32 %v855, 1.442695
  %v875 = vpow.pop %v874
  %v876 = vmul.f32 %v856, 1.442695
  %v877 = vpow.pop %v876
  %v878 = vmul.f32 %v857, 1.442695
  %v879 = vpow.pop %v878
  %v880 = vmul.f32 %v858, 1.442695
  %v881 = vpow.pop %v880
  %v882 = vmul.f32 %v859, 1.442695
  %v883 = vpow.pop %v882
  %v884 = vmul.f32 %v860, 1.442695
  %v885 = vpow.pop %v884
  %v886 = vmul.f32 %v861, 1.442695
  %v887 = vpow.pop %v886
  %v888 = vmul.f32 %v862, 1.442695
  %v889 = vpow.pop %v888
  %v890 = vmul.f32 %v863, 1.442695
  %v891 = vpow.pop %v890
  %v892 = vmul.f32 %v864, 1.442695
  %v893 = vpow.pop %v892
  %v894 = vmul.f32 %v865, 1.442695
  %v895 = vpow.pop %v894
  %v896 = vmul.f32 %v866, 1.442695
  %v897 = vpow.pop %v896
  %v898 = vmul.f32 %v867, 1.442695
  %v899 = vpow.pop %v898
  %v900 = vadd.f32 %v869, 1.0
  %v901 = vadd.f32 %v871, 1.0
  %v902 = vadd.f32 %v873, 1.0
  %v903 = vadd.f32 %v875, 1.0
  %v904 = vadd.f32 %v877, 1.0
  %v905 = vadd.f32 %v879, 1.0
  %v906 = vadd.f32 %v881, 1.0
  %v907 = vadd.f32 %v883, 1.0
  %v908 = vadd.f32 %v885, 1.0
  %v909 = vadd.f32 %v887, 1.0
  %v910 = vadd.f32 %v889, 1.0
  %v911 = vadd.f32 %v891, 1.0
  %v912 = vadd.f32 %v893, 1.0
  %v913 = vadd.f32 %v895, 1.0
  %v914 = vadd.f32 %v897, 1.0
  %v915 = vadd.f32 %v899, 1.0
  %v916 = vrcp.pop %v900
  %v917 = vmul.f32 1.0, %v916
  %v918 = vrcp.pop %v901
  %v919 = vmul.f32 1.0, %v918
  %v920 = vrcp.pop %v902
  %v921 = vmul.f32 1.0, %v920
  %v922 = vrcp.pop %v903
  %v923 = vmul.f32 1.0, %v922
  %v924 = vrcp.pop %v904
  %v925 = vmul.f32 1.0, %v924
  %v926 = vrcp.pop %v905
  %v927 = vmul.f32 1.0, %v926
  %v928 = vrcp.pop %v906
  %v929 = vmul.f32 1.0, %v928
  %v930 = vrcp.pop %v907
  %v931 = vmul.f32 1.0, %v930
  %v932 = vrcp.pop %v908
  %v933 = vmul.f32 1.0, %v932
  %v934 = vrcp.pop %v909
  %v935 = vmul.f32 1.0, %v934
  %v936 = vrcp.pop %v910
  %v937 = vmul.f32 1.0, %v936
  %v938 = vrcp.pop %v911
  %v939 = vmul.f32 1.0, %v938
  %v940 = vrcp.pop %v912
  %v941 = vmul.f32 1.0, %v940
  %v942 = vrcp.pop %v913
  %v943 = vmul.f32 1.0, %v942
  %v944 = vrcp.pop %v914
  %v945 = vmul.f32 1.0, %v944
  %v946 = vrcp.pop %v915
  %v947 = vmul.f32 1.0, %v946
  %964 = vrot.lane.b32.xlu0 %v917, 6
  %v965 = vpop.permute.xlu0 %964
  %966 = vrot.lane.b32.xlu0 %v919, 6
  %v967 = vpop.permute.xlu0 %966
  %968 = vrot.lane.b32.xlu0 %v921, 6
  %v969 = vpop.permute.xlu0 %968
  %970 = vrot.lane.b32.xlu0 %v923, 6
  %v971 = vpop.permute.xlu0 %970
  %972 = vrot.lane.b32.xlu0 %v925, 6
  %v973 = vpop.permute.xlu0 %972
  %974 = vrot.lane.b32.xlu0 %v927, 6
  %v975 = vpop.permute.xlu0 %974
  %976 = vrot.lane.b32.xlu0 %v929, 6
  %v977 = vpop.permute.xlu0 %976
  %978 = vrot.lane.b32.xlu0 %v931, 6
  %v979 = vpop.permute.xlu0 %978
  %980 = vrot.lane.b32.xlu0 %v933, 6
  %v981 = vpop.permute.xlu0 %980
  %982 = vrot.lane.b32.xlu0 %v935, 6
  %v983 = vpop.permute.xlu0 %982
  %984 = vrot.lane.b32.xlu0 %v937, 6
  %v985 = vpop.permute.xlu0 %984
  %986 = vrot.lane.b32.xlu0 %v939, 6
  %v987 = vpop.permute.xlu0 %986
  %988 = vrot.lane.b32.xlu0 %v941, 6
  %v989 = vpop.permute.xlu0 %988
  %990 = vrot.lane.b32.xlu0 %v943, 6
  %v991 = vpop.permute.xlu0 %990
  %992 = vrot.lane.b32.xlu0 %v945, 6
  %v993 = vpop.permute.xlu0 %992
  %994 = vrot.lane.b32.xlu0 %v947, 6
  %v995 = vpop.permute.xlu0 %994
  %vm1012 = vcmask 72752
  %1013 = vst.msk [vmem:[%s3] sm:$0xff] %vm1012, %v965
  %1014 = vst.msk [vmem:[%s3 + $0x8] sm:$0xff] %vm1012, %v967
  %1015 = vst.msk [vmem:[%s3 + $0x10] sm:$0xff] %vm1012, %v969
  %1016 = vst.msk [vmem:[%s3 + $0x18] sm:$0xff] %vm1012, %v971
  %1017 = vst.msk [vmem:[%s3 + $0x20] sm:$0xff] %vm1012, %v973
  %1018 = vst.msk [vmem:[%s3 + $0x28] sm:$0xff] %vm1012, %v975
  %1019 = vst.msk [vmem:[%s3 + $0x30] sm:$0xff] %vm1012, %v977
  %1020 = vst.msk [vmem:[%s3 + $0x38] sm:$0xff] %vm1012, %v979
  %1021 = vst.msk [vmem:[%s3 + $0x40] sm:$0xff] %vm1012, %v981
  %1022 = vst.msk [vmem:[%s3 + $0x48] sm:$0xff] %vm1012, %v983
  %1023 = vst.msk [vmem:[%s3 + $0x50] sm:$0xff] %vm1012, %v985
  %1024 = vst.msk [vmem:[%s3 + $0x58] sm:$0xff] %vm1012, %v987
  %1025 = vst.msk [vmem:[%s3 + $0x60] sm:$0xff] %vm1012, %v989
  %1026 = vst.msk [vmem:[%s3 + $0x68] sm:$0xff] %vm1012, %v991
  %1027 = vst.msk [vmem:[%s3 + $0x70] sm:$0xff] %vm1012, %v993
  %1028 = vst.msk [vmem:[%s3 + $0x78] sm:$0xff] %vm1012, %v995
  %s1029 = scalar_lea.vmem %s1, 108
  %v1030 = vld [vmem:[%s1029] sm:$0xf]
  %v1031 = vld [vmem:[%s1029 + $0x4] sm:$0xf]
  %v1032 = vld [vmem:[%s1029 + $0x8] sm:$0xf]
  %v1033 = vld [vmem:[%s1029 + $0xc] sm:$0xf]
  %v1034 = vld [vmem:[%s1029 + $0x10] sm:$0xf]
  %v1035 = vld [vmem:[%s1029 + $0x14] sm:$0xf]
  %v1036 = vld [vmem:[%s1029 + $0x18] sm:$0xf]
  %v1037 = vld [vmem:[%s1029 + $0x1c] sm:$0xf]
  %v1038 = vld [vmem:[%s1029 + $0x20] sm:$0xf]
  %v1048 = vunpack.c.l.b16 %v1030
  %v1049 = vunpack.c.l.b16 %v1031
  %v1050 = vunpack.c.l.b16 %v1032
  %v1051 = vunpack.c.l.b16 %v1033
  %v1052 = vunpack.c.l.b16 %v1034
  %v1053 = vunpack.c.l.b16 %v1035
  %v1054 = vunpack.c.l.b16 %v1036
  %v1055 = vunpack.c.l.b16 %v1037
  %v1056 = vunpack.c.l.b16 %v1038
  %v1057 = vpack.c.b16 %v1049, %v1048
  %v1058 = vpack.c.b16 %v1051, %v1050
  %v1059 = vpack.c.b16 %v1053, %v1052
  %v1060 = vpack.c.b16 %v1055, %v1054
  %v1061 = vpack.c.b16 %v1056, %v1056
  %v1067 = vsel %vm139, %v1061, 0
  %1069 = vmatprep.subr.bf16.mxu0 0
  %1070 = vmatpush1.bf16.msra.mxu0 %v1057
  %1071 = vmatprep.subr.bf16.mxu0 0
  %1072 = vmatpush1.bf16.msra.mxu0 %v1058
  %1073 = vmatprep.subr.bf16.mxu0 0
  %1074 = vmatpush1.bf16.msra.mxu0 %v1059
  %1075 = vmatprep.subr.bf16.mxu0 0
  %1076 = vmatpush1.bf16.msra.mxu0 %v1060
  %1077 = vmatprep.subr.bf16.mxu0 0
  %1078 = vmatpush1.bf16.msra.mxu0 %v1067
  %1079 = vmatprep.subr.bf16.mxu0 0
  %1080 = vmatpush1.bf16.msra.mxu0 0
  %1081 = vmatprep.subr.bf16.mxu0 0
  %1082 = vmatpush1.bf16.msra.mxu0 0
  %1083 = vmatprep.subr.bf16.mxu0 0
  %1084 = vmatpush1.bf16.msra.mxu0 0
  %1085 = vmatprep.subr.bf16.mxu0 0
  %1086 = vmatpush1.bf16.msra.mxu0 0
  %1087 = vmatprep.subr.bf16.mxu0 0
  %1088 = vmatpush1.bf16.msra.mxu0 0
  %1089 = vmatprep.subr.bf16.mxu0 0
  %1090 = vmatpush1.bf16.msra.mxu0 0
  %1091 = vmatprep.subr.bf16.mxu0 0
  %1092 = vmatpush1.bf16.msra.mxu0 0
  %1093 = vmatprep.subr.bf16.mxu0 0
  %1094 = vmatpush1.bf16.msra.mxu0 0
  %1095 = vmatprep.subr.bf16.mxu0 0
  %1096 = vmatpush1.bf16.msra.mxu0 0
  %1097 = vmatprep.subr.bf16.mxu0 0
  %1098 = vmatpush1.bf16.msra.mxu0 0
  %1099 = vmatprep.subr.bf16.mxu0 0
  %1100 = vmatpush1.bf16.msra.mxu0 0
  %1101 = vmatprep.mubr.bf16.mxu0 0
  %1102 = vmatmul.mubr.bf16.gmra.mrb[0].mxu0 %v116
  %v1103 = vpop.f32.mrb[0].mxu0
  %v1104 = vadd.f32 %v45, %v1103
  %v1105 = vpop.f32.mrb[0].mxu0
  %v1106 = vpop.f32.mrb[0].mxu0
  %v1107 = vadd.f32 %v45, %v1106
  %v1108 = vpop.f32.mrb[0].mxu0
  %1109 = vmatprep.mubr.bf16.mxu0 0
  %1110 = vmatmul.mubr.bf16.gmra.mrb[0].mxu0 %v119
  %v1111 = vpop.f32.mrb[0].mxu0
  %v1112 = vadd.f32 %v45, %v1111
  %v1113 = vpop.f32.mrb[0].mxu0
  %v1114 = vpop.f32.mrb[0].mxu0
  %v1115 = vadd.f32 %v45, %v1114
  %v1116 = vpop.f32.mrb[0].mxu0
  %1117 = vmatprep.mubr.bf16.mxu0 0
  %1118 = vmatmul.mubr.bf16.gmra.mrb[0].mxu0 %v122
  %v1119 = vpop.f32.mrb[0].mxu0
  %v1120 = vadd.f32 %v45, %v1119
  %v1121 = vpop.f32.mrb[0].mxu0
  %v1122 = vpop.f32.mrb[0].mxu0
  %v1123 = vadd.f32 %v45, %v1122
  %v1124 = vpop.f32.mrb[0].mxu0
  %1125 = vmatprep.mubr.bf16.mxu0 0
  %1126 = vmatmul.mubr.bf16.gmra.mrb[0].mxu0 %v125
  %v1127 = vpop.f32.mrb[0].mxu0
  %v1128 = vadd.f32 %v45, %v1127
  %v1129 = vpop.f32.mrb[0].mxu0
  %v1130 = vpop.f32.mrb[0].mxu0
  %v1131 = vadd.f32 %v45, %v1130
  %v1132 = vpop.f32.mrb[0].mxu0
  %1133 = vmatprep.mubr.bf16.mxu0 0
  %1134 = vmatmul.mubr.bf16.gmra.mrb[0].mxu0 %v128
  %v1135 = vpop.f32.mrb[0].mxu0
  %v1136 = vadd.f32 %v45, %v1135
  %v1137 = vpop.f32.mrb[0].mxu0
  %v1138 = vpop.f32.mrb[0].mxu0
  %v1139 = vadd.f32 %v45, %v1138
  %v1140 = vpop.f32.mrb[0].mxu0
  %1141 = vmatprep.mubr.bf16.mxu0 0
  %1142 = vmatmul.mubr.bf16.gmra.mrb[0].mxu0 %v131
  %v1143 = vpop.f32.mrb[0].mxu0
  %v1144 = vadd.f32 %v45, %v1143
  %v1145 = vpop.f32.mrb[0].mxu0
  %v1146 = vpop.f32.mrb[0].mxu0
  %v1147 = vadd.f32 %v45, %v1146
  %v1148 = vpop.f32.mrb[0].mxu0
  %1149 = vmatprep.mubr.bf16.mxu0 0
  %1150 = vmatmul.mubr.bf16.gmra.mrb[0].mxu0 %v134
  %v1151 = vpop.f32.mrb[0].mxu0
  %v1152 = vadd.f32 %v45, %v1151
  %v1153 = vpop.f32.mrb[0].mxu0
  %v1154 = vpop.f32.mrb[0].mxu0
  %v1155 = vadd.f32 %v45, %v1154
  %v1156 = vpop.f32.mrb[0].mxu0
  %1157 = vmatprep.mubr.bf16.mxu0 0
  %1158 = vmatmul.mubr.bf16.gmra.mrb[0].mxu0 %v137
  %v1159 = vpop.f32.mrb[0].mxu0
  %v1160 = vadd.f32 %v45, %v1159
  %v1161 = vpop.f32.mrb[0].mxu0
  %v1162 = vpop.f32.mrb[0].mxu0
  %v1163 = vadd.f32 %v45, %v1162
  %v1164 = vpop.f32.mrb[0].mxu0
  %1165 = vdwg.mxu0
  %v1166 = vmax.f32 %v1104, 0.0
  %v1167 = vmax.f32 %v1107, 0.0
  %v1168 = vmax.f32 %v1112, 0.0
  %v1169 = vmax.f32 %v1115, 0.0
  %v1170 = vmax.f32 %v1120, 0.0
  %v1171 = vmax.f32 %v1123, 0.0
  %v1172 = vmax.f32 %v1128, 0.0
  %v1173 = vmax.f32 %v1131, 0.0
  %v1174 = vmax.f32 %v1136, 0.0
  %v1175 = vmax.f32 %v1139, 0.0
  %v1176 = vmax.f32 %v1144, 0.0
  %v1177 = vmax.f32 %v1147, 0.0
  %v1178 = vmax.f32 %v1152, 0.0
  %v1179 = vmax.f32 %v1155, 0.0
  %v1180 = vmax.f32 %v1160, 0.0
  %v1181 = vmax.f32 %v1163, 0.0
  %v1182 = vxor.u32 %v1166, 2147483648
  %v1183 = vxor.u32 %v1167, 2147483648
  %v1184 = vxor.u32 %v1168, 2147483648
  %v1185 = vxor.u32 %v1169, 2147483648
  %v1186 = vxor.u32 %v1170, 2147483648
  %v1187 = vxor.u32 %v1171, 2147483648
  %v1188 = vxor.u32 %v1172, 2147483648
  %v1189 = vxor.u32 %v1173, 2147483648
  %v1190 = vxor.u32 %v1174, 2147483648
  %v1191 = vxor.u32 %v1175, 2147483648
  %v1192 = vxor.u32 %v1176, 2147483648
  %v1193 = vxor.u32 %v1177, 2147483648
  %v1194 = vxor.u32 %v1178, 2147483648
  %v1195 = vxor.u32 %v1179, 2147483648
  %v1196 = vxor.u32 %v1180, 2147483648
  %v1197 = vxor.u32 %v1181, 2147483648
  %v1198 = vmul.f32 %v1182, 1.442695
  %v1199 = vpow.pop %v1198
  %v1200 = vmul.f32 %v1183, 1.442695
  %v1201 = vpow.pop %v1200
  %v1202 = vmul.f32 %v1184, 1.442695
  %v1203 = vpow.pop %v1202
  %v1204 = vmul.f32 %v1185, 1.442695
  %v1205 = vpow.pop %v1204
  %v1206 = vmul.f32 %v1186, 1.442695
  %v1207 = vpow.pop %v1206
  %v1208 = vmul.f32 %v1187, 1.442695
  %v1209 = vpow.pop %v1208
  %v1210 = vmul.f32 %v1188, 1.442695
  %v1211 = vpow.pop %v1210
  %v1212 = vmul.f32 %v1189, 1.442695
  %v1213 = vpow.pop %v1212
  %v1214 = vmul.f32 %v1190, 1.442695
  %v1215 = vpow.pop %v1214
  %v1216 = vmul.f32 %v1191, 1.442695
  %v1217 = vpow.pop %v1216
  %v1218 = vmul.f32 %v1192, 1.442695
  %v1219 = vpow.pop %v1218
  %v1220 = vmul.f32 %v1193, 1.442695
  %v1221 = vpow.pop %v1220
  %v1222 = vmul.f32 %v1194, 1.442695
  %v1223 = vpow.pop %v1222
  %v1224 = vmul.f32 %v1195, 1.442695
  %v1225 = vpow.pop %v1224
  %v1226 = vmul.f32 %v1196, 1.442695
  %v1227 = vpow.pop %v1226
  %v1228 = vmul.f32 %v1197, 1.442695
  %v1229 = vpow.pop %v1228
  %v1230 = vadd.f32 %v1199, 1.0
  %v1231 = vadd.f32 %v1201, 1.0
  %v1232 = vadd.f32 %v1203, 1.0
  %v1233 = vadd.f32 %v1205, 1.0
  %v1234 = vadd.f32 %v1207, 1.0
  %v1235 = vadd.f32 %v1209, 1.0
  %v1236 = vadd.f32 %v1211, 1.0
  %v1237 = vadd.f32 %v1213, 1.0
  %v1238 = vadd.f32 %v1215, 1.0
  %v1239 = vadd.f32 %v1217, 1.0
  %v1240 = vadd.f32 %v1219, 1.0
  %v1241 = vadd.f32 %v1221, 1.0
  %v1242 = vadd.f32 %v1223, 1.0
  %v1243 = vadd.f32 %v1225, 1.0
  %v1244 = vadd.f32 %v1227, 1.0
  %v1245 = vadd.f32 %v1229, 1.0
  %v1246 = vrcp.pop %v1230
  %v1247 = vmul.f32 1.0, %v1246
  %v1248 = vrcp.pop %v1231
  %v1249 = vmul.f32 1.0, %v1248
  %v1250 = vrcp.pop %v1232
  %v1251 = vmul.f32 1.0, %v1250
  %v1252 = vrcp.pop %v1233
  %v1253 = vmul.f32 1.0, %v1252
  %v1254 = vrcp.pop %v1234
  %v1255 = vmul.f32 1.0, %v1254
  %v1256 = vrcp.pop %v1235
  %v1257 = vmul.f32 1.0, %v1256
  %v1258 = vrcp.pop %v1236
  %v1259 = vmul.f32 1.0, %v1258
  %v1260 = vrcp.pop %v1237
  %v1261 = vmul.f32 1.0, %v1260
  %v1262 = vrcp.pop %v1238
  %v1263 = vmul.f32 1.0, %v1262
  %v1264 = vrcp.pop %v1239
  %v1265 = vmul.f32 1.0, %v1264
  %v1266 = vrcp.pop %v1240
  %v1267 = vmul.f32 1.0, %v1266
  %v1268 = vrcp.pop %v1241
  %v1269 = vmul.f32 1.0, %v1268
  %v1270 = vrcp.pop %v1242
  %v1271 = vmul.f32 1.0, %v1270
  %v1272 = vrcp.pop %v1243
  %v1273 = vmul.f32 1.0, %v1272
  %v1274 = vrcp.pop %v1244
  %v1275 = vmul.f32 1.0, %v1274
  %v1276 = vrcp.pop %v1245
  %v1277 = vmul.f32 1.0, %v1276
  %1294 = vrot.lane.b32.xlu0 %v1247, 9
  %v1295 = vpop.permute.xlu0 %1294
  %1296 = vrot.lane.b32.xlu0 %v1249, 9
  %v1297 = vpop.permute.xlu0 %1296
  %1298 = vrot.lane.b32.xlu0 %v1251, 9
  %v1299 = vpop.permute.xlu0 %1298
  %1300 = vrot.lane.b32.xlu0 %v1253, 9
  %v1301 = vpop.permute.xlu0 %1300
  %1302 = vrot.lane.b32.xlu0 %v1255, 9
  %v1303 = vpop.permute.xlu0 %1302
  %1304 = vrot.lane.b32.xlu0 %v1257, 9
  %v1305 = vpop.permute.xlu0 %1304
  %1306 = vrot.lane.b32.xlu0 %v1259, 9
  %v1307 = vpop.permute.xlu0 %1306
  %1308 = vrot.lane.b32.xlu0 %v1261, 9
  %v1309 = vpop.permute.xlu0 %1308
  %1310 = vrot.lane.b32.xlu0 %v1263, 9
  %v1311 = vpop.permute.xlu0 %1310
  %1312 = vrot.lane.b32.xlu0 %v1265, 9
  %v1313 = vpop.permute.xlu0 %1312
  %1314 = vrot.lane.b32.xlu0 %v1267, 9
  %v1315 = vpop.permute.xlu0 %1314
  %1316 = vrot.lane.b32.xlu0 %v1269, 9
  %v1317 = vpop.permute.xlu0 %1316
  %1318 = vrot.lane.b32.xlu0 %v1271, 9
  %v1319 = vpop.permute.xlu0 %1318
  %1320 = vrot.lane.b32.xlu0 %v1273, 9
  %v1321 = vpop.permute.xlu0 %1320
  %1322 = vrot.lane.b32.xlu0 %v1275, 9
  %v1323 = vpop.permute.xlu0 %1322
  %1324 = vrot.lane.b32.xlu0 %v1277, 9
  %v1325 = vpop.permute.xlu0 %1324
  %vm1342 = vcmask 97352
  %1343 = vst.msk [vmem:[%s3] sm:$0xff] %vm1342, %v1295
  %1344 = vst.msk [vmem:[%s3 + $0x8] sm:$0xff] %vm1342, %v1297
  %1345 = vst.msk [vmem:[%s3 + $0x10] sm:$0xff] %vm1342, %v1299
  %1346 = vst.msk [vmem:[%s3 + $0x18] sm:$0xff] %vm1342, %v1301
  %1347 = vst.msk [vmem:[%s3 + $0x20] sm:$0xff] %vm1342, %v1303
  %1348 = vst.msk [vmem:[%s3 + $0x28] sm:$0xff] %vm1342, %v1305
  %1349 = vst.msk [vmem:[%s3 + $0x30] sm:$0xff] %vm1342, %v1307
  %1350 = vst.msk [vmem:[%s3 + $0x38] sm:$0xff] %vm1342, %v1309
  %1351 = vst.msk [vmem:[%s3 + $0x40] sm:$0xff] %vm1342, %v1311
  %1352 = vst.msk [vmem:[%s3 + $0x48] sm:$0xff] %vm1342, %v1313
  %1353 = vst.msk [vmem:[%s3 + $0x50] sm:$0xff] %vm1342, %v1315
  %1354 = vst.msk [vmem:[%s3 + $0x58] sm:$0xff] %vm1342, %v1317
  %1355 = vst.msk [vmem:[%s3 + $0x60] sm:$0xff] %vm1342, %v1319
  %1356 = vst.msk [vmem:[%s3 + $0x68] sm:$0xff] %vm1342, %v1321
  %1357 = vst.msk [vmem:[%s3 + $0x70] sm:$0xff] %vm1342, %v1323
  %1358 = vst.msk [vmem:[%s3 + $0x78] sm:$0xff] %vm1342, %v1325
  // Predicated region
  $region14: #{_lambda_.15} parent=0 // pred_check
    _
  $region15: #{_lambda_.15} parent=0 // pred_check_branch
    %1360 = sbr.rel (0) target = $region17
  $region16: #{_lambda_.15} parent=0 // pred_region
    _
  $region17: #{_lambda_.15} parent=0 // pred_fallthru
    _
  // Predicated region
  $region18: #{_lambda_.15} parent=0 // pred_check
    _
  $region19: #{_lambda_.15} parent=0 // pred_check_branch
    %1362 = sbr.rel (0) target = $region21
  $region20: #{_lambda_.15} parent=0 // pred_region
    _
  $region21: #{_lambda_.15} parent=0 // pred_fallthru
    _

</llo_original>
